<compile_context>
chip_gen: v6e
topology: v6e:2x2x1
jax: 0.10.0
libtpu: 0.0.40
codegen_flags: <defaults>
</compile_context>

<pallas_src>
import math

import jax
import jax.numpy as jnp
from jax.experimental import pallas as pl
from jax.experimental.pallas import tpu as pltpu


def _round_up(v, m):
    return (v + m - 1) // m * m


def _pick_tile(n, cap, multiple=1):
    """Largest divisor of n that is <= cap and a multiple of `multiple`."""
    for t in range(min(n, cap), 0, -1):
        if n % t == 0 and t % multiple == 0:
            return t
    return n


# ----------------------------------------------------------------------------
# Kernel 1: fused matmul  y = (x @ w) [* scale] [+ bias] [-> PReLU(alpha)]
# bf16 MXU operands, f32 accumulation, epilogue in f32, store in out_dtype.
# Used for: in_proj / (x_proj+dt_proj folded) / out_proj and the Resblock 1x1
# conv + BN.  K (the feature dim) is never padded; only weight N is padded.
# ----------------------------------------------------------------------------
def _mm_kernel_factory(has_scale, has_bias, has_prelu):
    def kernel(*refs):
        x_ref, w_ref = refs[0], refs[1]
        i = 2
        scale_ref = bias_ref = alpha_ref = None
        if has_scale:
            scale_ref = refs[i]; i += 1
        if has_bias:
            bias_ref = refs[i]; i += 1
        if has_prelu:
            alpha_ref = refs[i]; i += 1
        o_ref = refs[i]

        acc = jnp.dot(x_ref[...], w_ref[...], preferred_element_type=jnp.float32)
        if has_scale:
            acc = acc * scale_ref[...]
        if has_bias:
            acc = acc + bias_ref[...]
        if has_prelu:
            a = alpha_ref[0, 0]
            acc = jnp.where(acc >= 0.0, acc, a * acc)
        o_ref[...] = acc.astype(o_ref.dtype)

    return kernel


def fused_matmul(x, w, scale=None, bias=None, alpha=None,
                 out_dtype=jnp.float32, keep_n_pad=False, block_m=512):
    # TODO(synk): add a K-tiling + VMEM f32 accumulator path for very large K.
    M, K = x.shape
    N = w.shape[1]
    Np = _round_up(N, 128)                 # lane-dense output stores
    tm = min(block_m, _round_up(M, 8))
    Mp = _round_up(M, tm)
    nm = Mp // tm

    xb = x if x.dtype == jnp.bfloat16 else x.astype(jnp.bfloat16)
    if Mp != M:
        xb = jnp.pad(xb, ((0, Mp - M), (0, 0)))
    wb = jnp.pad(jnp.asarray(w, jnp.float32), ((0, 0), (0, Np - N))).astype(jnp.bfloat16)

    in_specs = [
        pl.BlockSpec((tm, K), lambda i: (i, 0)),     # K == full dim (unpadded)
        pl.BlockSpec((K, Np), lambda i: (0, 0)),
    ]
    args = [xb, wb]
    if scale is not None:
        in_specs.append(pl.BlockSpec((1, Np), lambda i: (0, 0)))
        args.append(jnp.pad(jnp.asarray(scale, jnp.float32).reshape(1, N),
                            ((0, 0), (0, Np - N))))
    if bias is not None:
        in_specs.append(pl.BlockSpec((1, Np), lambda i: (0, 0)))
        args.append(jnp.pad(jnp.asarray(bias, jnp.float32).reshape(1, N),
                            ((0, 0), (0, Np - N))))
    if alpha is not None:
        in_specs.append(pl.BlockSpec(memory_space=pltpu.MemorySpace.SMEM))
        args.append(jnp.asarray(alpha, jnp.float32).reshape(1, 1))

    out = pl.pallas_call(
        _mm_kernel_factory(scale is not None, bias is not None, alpha is not None),
        out_shape=jax.ShapeDtypeStruct((Mp, Np), out_dtype),
        grid=(nm,),
        in_specs=in_specs,
        out_specs=pl.BlockSpec((tm, Np), lambda i: (i, 0)),
        compiler_params=pltpu.CompilerParams(dimension_semantics=("parallel",)),
    )(*args)
    out = out[:M]
    if not keep_n_pad:
        out = out[:, :N]
    return out


# ----------------------------------------------------------------------------
# Kernel 2: 3x3 conv (padding=1) + BN affine + PReLU [+ fused residual add].
# Row-tiled grid (B, S1//TH); per tile the kernel builds an im2col slab
# (TH*S2r, 9*Cin) in-register and issues ONE deep MXU matmul.
# TODO(synk): for very large images switch to a row-haloed input BlockSpec
# instead of a whole-image block (v7x 64 MiB VMEM).
# ----------------------------------------------------------------------------
def _conv3x3_kernel_factory(S2, TH, Cinp, has_res):
    def kernel(*refs):
        x_ref, w_ref, scale_ref, bias_ref, alpha_ref = refs[:5]
        i = 5
        res_ref = None
        if has_res:
            res_ref = refs[i]; i += 1
        o_ref = refs[i]

        S2r = o_ref.shape[2]
        Coutp = o_ref.shape[3]
        r0 = pl.program_id(1) * TH

        pieces = []
        for dy in range(3):
            for dx in range(3):
                pieces.append(x_ref[0, pl.ds(r0 + dy, TH), dx:dx + S2r, :Cinp])
        slab = jnp.concatenate(pieces, axis=-1).reshape(TH * S2r, 9 * Cinp)

        acc = jnp.dot(slab, w_ref[...], preferred_element_type=jnp.float32)
        acc = acc * scale_ref[...] + bias_ref[...]
        a = alpha_ref[0, 0]
        acc = jnp.where(acc >= 0.0, acc, a * acc)
        acc = acc.reshape(TH, S2r, Coutp)
        if S2r != S2:
            # keep padded width columns exactly zero so a chained conv sees
            # valid zero-padding there
            col = jax.lax.broadcasted_iota(jnp.int32, (TH, S2r, Coutp), 1)
            acc = jnp.where(col < S2, acc, 0.0)
        if has_res:
            acc = acc + res_ref[0].astype(jnp.float32)
        o_ref[0] = acc.astype(o_ref.dtype)

    return kernel


def conv3x3_bn_prelu(x, w9, scale, bias, alpha, residual=None,
                     out_dtype=jnp.float32, row_tile_cap=64):
    """x: (B, S1, S2, Cx) channel-last; only the first cin = w9.shape[0]//9
    channels are used (extra lane-padding channels from an upstream kernel are
    ignored in-kernel, so no host-side slice/re-pad between chained convs).
    Output keeps lane-dense padding (B, S1, S2r, Coutp); caller slices."""
    B, S1, S2, Cx = x.shape
    cin = w9.shape[0] // 9
    cout = w9.shape[1]
    Cinp = _round_up(cin, 8)
    Coutp = _round_up(cout, 128)
    S2r = _round_up(S2, 8)
    TH = _pick_tile(S1, row_tile_cap)

    cpad = max(0, Cinp - Cx)
    xp = jnp.pad(x, ((0, 0), (1, 1), (1, 1 + S2r - S2), (0, cpad)))
    if xp.dtype != jnp.bfloat16:
        xp = xp.astype(jnp.bfloat16)
    Cx_p = xp.shape[3]

    wp = jnp.pad(jnp.asarray(w9, jnp.float32).reshape(9, cin, cout),
                 ((0, 0), (0, Cinp - cin), (0, Coutp - cout))
                 ).reshape(9 * Cinp, Coutp).astype(jnp.bfloat16)
    scale_p = jnp.pad(jnp.asarray(scale, jnp.float32).reshape(1, cout),
                      ((0, 0), (0, Coutp - cout)))
    bias_p = jnp.pad(jnp.asarray(bias, jnp.float32).reshape(1, cout),
                     ((0, 0), (0, Coutp - cout)))
    alpha_p = jnp.asarray(alpha, jnp.float32).reshape(1, 1)

    in_specs = [
        pl.BlockSpec((1, S1 + 2, S2r + 2, Cx_p), lambda b, j: (b, 0, 0, 0)),
        pl.BlockSpec((9 * Cinp, Coutp), lambda b, j: (0, 0)),
        pl.BlockSpec((1, Coutp), lambda b, j: (0, 0)),
        pl.BlockSpec((1, Coutp), lambda b, j: (0, 0)),
        pl.BlockSpec(memory_space=pltpu.MemorySpace.SMEM),
    ]
    args = [xp, wp, scale_p, bias_p, alpha_p]
    if residual is not None:
        r = jnp.asarray(residual, jnp.float32)
        if r.shape[2] != S2r:
            r = jnp.pad(r, ((0, 0), (0, 0), (0, S2r - r.shape[2]), (0, 0)))
        if r.shape[3] != Coutp:
            r = jnp.pad(r, ((0, 0), (0, 0), (0, 0), (0, Coutp - r.shape[3])))
        in_specs.append(pl.BlockSpec((1, TH, S2r, Coutp), lambda b, j: (b, j, 0, 0)))
        args.append(r)

    return pl.pallas_call(
        _conv3x3_kernel_factory(S2, TH, Cinp, residual is not None),
        out_shape=jax.ShapeDtypeStruct((B, S1, S2r, Coutp), out_dtype),
        grid=(B, S1 // TH),
        in_specs=in_specs,
        out_specs=pl.BlockSpec((1, TH, S2r, Coutp), lambda b, j: (b, j, 0, 0)),
        compiler_params=pltpu.CompilerParams(
            dimension_semantics=("parallel", "parallel")),
    )(*args)


# ----------------------------------------------------------------------------
# Kernel 3: Mamba causal depthwise conv1d (kernel=4, groups=d_inner) + SiLU.
# Seq-tiled grid; one 8-aligned dynamic load of (tile + halo) per step, taps
# are static slices of the loaded value.  Exact sigmoid.
# ----------------------------------------------------------------------------
def _dwconv_silu_kernel_factory(TL, K, halo):
    def kernel(x_ref, w_ref, b_ref, o_ref):
        t0 = pl.multiple_of(pl.program_id(1) * TL, 8)
        di = o_ref.shape[2]
        xs = x_ref[0, pl.ds(t0, TL + halo), :].astype(jnp.float32)
        acc = jnp.zeros((TL, di), jnp.float32) + b_ref[...]
        for k in range(K):                       # static unroll over taps
            acc = acc + xs[k:k + TL, :] * w_ref[k:k + 1, :]
        o_ref[0] = (acc * (1.0 / (1.0 + jnp.exp(-acc)))).astype(o_ref.dtype)  # SiLU

    return kernel


def causal_dwconv_silu(x, w, b, out_dtype=jnp.bfloat16, seq_tile_cap=1024):
    Bn, L, di = x.shape                 # L is a multiple of 8 (caller pads)
    K = w.shape[0]
    halo = _round_up(K - 1, 8)          # rounded so in-kernel loads stay 8-row aligned
    TL = _pick_tile(L, seq_tile_cap, multiple=8)
    xp = jnp.pad(x, ((0, 0), (K - 1, halo - (K - 1)), (0, 0)))   # causal pad + slack
    return pl.pallas_call(
        _dwconv_silu_kernel_factory(TL, K, halo),
        out_shape=jax.ShapeDtypeStruct((Bn, L, di), out_dtype),
        grid=(Bn, L // TL),
        in_specs=[
            pl.BlockSpec((1, L + halo, di), lambda bb, j: (bb, 0, 0)),
            pl.BlockSpec((K, di), lambda bb, j: (0, 0)),
            pl.BlockSpec((1, di), lambda bb, j: (0, 0)),
        ],
        out_specs=pl.BlockSpec((1, TL, di), lambda bb, j: (bb, j, 0)),
        compiler_params=pltpu.CompilerParams(
            dimension_semantics=("parallel", "parallel")),
    )(xp, jnp.asarray(w, jnp.float32), jnp.asarray(b, jnp.float32))


# ----------------------------------------------------------------------------
# Kernel 4: Mamba selective scan.
#   delta = softplus(dt_raw);  h_t = exp(delta*A) * h_{t-1} + delta*B_t*u_t
#   y_t = C_t . h_t + D*u_t ;  y_t *= silu(z_t)
# Grid = (batch "parallel", seq-block "arbitrary"); h carried in VMEM scratch.
# Per 8-step chunk all vectorizable work (softplus, silu, delta*u, exp(delta*A),
# B/C transposes) is hoisted; the serial loop is a single VPU multiply-add on h
# plus an XLU reduction; chunk y rows are collected in a VMEM scratch and
# stored densely.
# ----------------------------------------------------------------------------
def _mamba_scan_kernel(u_ref, dt_ref, b_ref, c_ref, z_ref, at_ref, d_ref,
                       y_ref, h_s, yc_s):
    TC = yc_s.shape[0]
    TB = u_ref.shape[1]

    @pl.when(pl.program_id(1) == 0)
    def _init():
        h_s[...] = jnp.zeros_like(h_s)

    at = at_ref[...]                      # (ds, di) == A^T where A = -exp(A_log)
    dvec = d_ref[...]                     # (1, di)

    def chunk(ci, carry):
        t0 = pl.multiple_of(ci * TC, TC)
        u_c = u_ref[0, pl.ds(t0, TC), :].astype(jnp.float32)    # (TC, di)
        dt_c = dt_ref[0, pl.ds(t0, TC), :].astype(jnp.float32)  # (TC, di)
        z_c = z_ref[0, pl.ds(t0, TC), :].astype(jnp.float32)    # (TC, di)
        b_c = b_ref[0, pl.ds(t0, TC), :].astype(jnp.float32)    # (TC, ds)
        c_c = c_ref[0, pl.ds(t0, TC), :].astype(jnp.float32)    # (TC, ds)

        # ---- chunk-vectorized work (off the serial critical path) ----
        delta = jnp.where(dt_c > 20.0, dt_c,
                          jnp.log(1.0 + jnp.exp(jnp.minimum(dt_c, 20.0))))  # softplus
        du = delta * u_c                                        # (TC, di)
        gate = z_c * (1.0 / (1.0 + jnp.exp(-z_c)))              # exact SiLU(z)
        dA = jnp.exp(delta[:, None, :] * at[None, :, :])        # (TC, ds, di)
        bT = b_c.T                                              # (ds, TC)
        cT = c_c.T                                              # (ds, TC)

        # ---- serial recurrence: only h's multiply-add + a reduction per step ----
        h = h_s[...]                                            # (ds, di)
        for t in range(TC):                                     # static unroll
            h = dA[t] * h + bT[:, t:t + 1] * du[t:t + 1, :]
            y_t = jnp.sum(h * cT[:, t:t + 1], axis=0, keepdims=True)   # (1, di)
            yc_s[pl.ds(t, 1), :] = y_t
        h_s[...] = h

        y_ref[0, pl.ds(t0, TC), :] = (
            (yc_s[...] + dvec * u_c) * gate).astype(y_ref.dtype)
        return carry

    jax.lax.fori_loop(0, TB // TC, chunk, 0)


def mamba_selective_scan(u, dtraw, Bm, Cm, z, A_t, D,
                         out_dtype=jnp.float32, seq_block_cap=1024):
    # TODO(synk): pack several batch elements along lanes (lanes = G*di) and/or
    # reformulate as a Mamba2-style chunked associative scan for higher
    # lane/MXU utilization when di is small.
    Bn, Lp, di = u.shape
    ds = Bm.shape[2]
    TC = 8
    TB = _pick_tile(Lp, seq_block_cap, multiple=TC)
    f32 = jnp.float32
    return pl.pallas_call(
        _mamba_scan_kernel,
        out_shape=jax.ShapeDtypeStruct((Bn, Lp, di), out_dtype),
        grid=(Bn, Lp // TB),
        in_specs=[
            pl.BlockSpec((1, TB, di), lambda b, s: (b, s, 0)),   # u
            pl.BlockSpec((1, TB, di), lambda b, s: (b, s, 0)),   # dt (pre-softplus)
            pl.BlockSpec((1, TB, ds), lambda b, s: (b, s, 0)),   # B
            pl.BlockSpec((1, TB, ds), lambda b, s: (b, s, 0)),   # C
            pl.BlockSpec((1, TB, di), lambda b, s: (b, s, 0)),   # z
            pl.BlockSpec((ds, di), lambda b, s: (0, 0)),         # A^T
            pl.BlockSpec((1, di), lambda b, s: (0, 0)),          # D
        ],
        out_specs=pl.BlockSpec((1, TB, di), lambda b, s: (b, s, 0)),
        scratch_shapes=[pltpu.VMEM((ds, di), f32), pltpu.VMEM((TC, di), f32)],
        compiler_params=pltpu.CompilerParams(
            dimension_semantics=("parallel", "arbitrary")),
    )(u, dtraw, Bm, Cm, z, jnp.asarray(A_t, f32), jnp.asarray(D, f32))


# ----------------------------------------------------------------------------
# Forward pass glue
# ----------------------------------------------------------------------------
def mcc_block_forward(x, p):
    B, C, H, W = x.shape
    assert H == W, ("MccBlock's final residual add (Conv(B,oc,W,H) + "
                    "Resblock(B,oc,H,W)) requires H == W")
    out_c = p["w_res"].shape[1]
    di = p["w_in"].shape[1] // 2
    ds = p["A_t"].shape[0]
    dt_rank = p["w_dt"].shape[0]
    L = H * W
    Lp = _round_up(L, 8)

    # One NCHW -> channel-last pass; the flattened rows feed BOTH the Resblock
    # 1x1 conv and the Mamba in_proj.
    x_cl = jnp.transpose(x, (0, 2, 3, 1))                      # (B, H, W, C)
    x_rows = x_cl.reshape(B * L, C).astype(jnp.bfloat16)

    # ---- Resblock: Conv2d(in_c, out_c, 1, bias=False) + BatchNorm2d ----
    # Keep lane-dense N padding so it can be fed straight into the second 3x3
    # conv as a fused residual (no host-side re-pad / separate add pass).
    res_cl = fused_matmul(x_rows, p["w_res"], scale=p["res_scale"],
                          bias=p["res_bias"], keep_n_pad=True
                          ).reshape(B, H, W, -1)               # (B, H, W, Coutp) f32

    # ---- SSM branch: Mamba(in_c, d_state=16, expand=2) + PReLU ----
    if Lp != L:
        rows_in = jnp.pad(x_rows.reshape(B, L, C),
                          ((0, 0), (0, Lp - L), (0, 0))).reshape(B * Lp, C)
    else:
        rows_in = x_rows
    xz = fused_matmul(rows_in, p["w_in"], out_dtype=jnp.bfloat16)   # in_proj (no bias)
    x_in = xz[:, :di].reshape(B, Lp, di)
    z_gate = xz[:, di:2 * di].reshape(B, Lp, di)

    u = causal_dwconv_silu(x_in, p["conv_w"], p["conv_b"])          # (B, Lp, di) bf16

    # x_proj and dt_proj are back-to-back linears with no nonlinearity between
    # them -> fold dt_proj into x_proj so one matmul emits dt_raw | B | C.
    w_x = jnp.asarray(p["w_x"], jnp.float32)
    w_comb = jnp.concatenate(
        [w_x[:, :dt_rank] @ jnp.asarray(p["w_dt"], jnp.float32), w_x[:, dt_rank:]],
        axis=1)                                                     # (di, di + 2*ds)
    bias_comb = jnp.concatenate([jnp.asarray(p["dt_bias"], jnp.float32),
                                 jnp.zeros((2 * ds,), jnp.float32)])
    xdbl = fused_matmul(u.reshape(B * Lp, di), w_comb, bias=bias_comb)   # f32
    dtraw = xdbl[:, :di].reshape(B, Lp, di)
    Bm = xdbl[:, di:di + ds].reshape(B, Lp, ds)
    Cm = xdbl[:, di + ds:di + 2 * ds].reshape(B, Lp, ds)

    # NOTE: padded tail timesteps (L..Lp-1) are scanned but the scan runs
    # forward and h is not carried across calls, so they only affect the
    # discarded tail outputs.
    y = mamba_selective_scan(u, dtraw, Bm, Cm, z_gate, p["A_t"], p["D"],
                             out_dtype=jnp.bfloat16)[:, :L, :]
    ssm = fused_matmul(y.reshape(B * L, di), p["w_out"],
                       alpha=p["prelu_ssm"], out_dtype=jnp.bfloat16)    # out_proj + PReLU

    # x.reshape(B,H,W,C).transpose(1,3) -> NCHW (B,C,W,H); channel-last (B,W,H,C)
    conv_in = jnp.transpose(ssm.reshape(B, H, W, C), (0, 2, 1, 3))

    # ---- Conv branch: [3x3 conv + BN + PReLU] x2, Dropout (eval -> identity),
    #      Resblock residual fused into the second conv's epilogue. ----
    c1 = conv3x3_bn_prelu(conv_in, p["w_c1"], p["bn1_scale"], p["bn1_bias"],
                          p["prelu_c1"], out_dtype=jnp.bfloat16)
    c2 = conv3x3_bn_prelu(c1, p["w_c2"], p["bn2_scale"], p["bn2_bias"],
                          p["prelu_c2"], residual=res_cl, out_dtype=jnp.float32)

    # Single final layout pass: slice lane/width padding and transpose to NCHW.
    return jnp.transpose(c2[:, :, :H, :out_c], (0, 3, 1, 2))    # (B, out_c, W, H)


# ----------------------------------------------------------------------------
# Deterministic parameter init (shapes follow the module __init__; values synthetic)
# ----------------------------------------------------------------------------
def init_params(key, in_c, out_c, d_state=16, expand=2, d_conv=4):
    d_model = in_c
    di = expand * d_model
    dt_rank = math.ceil(d_model / 16)
    ks = jax.random.split(key, 24)
    nrm = lambda k, s, sc: jax.random.normal(k, s, jnp.float32) * sc

    def bn(k1, k2, k3, k4, n):
        g = jax.random.uniform(k1, (n,), jnp.float32, 0.8, 1.2)
        b = nrm(k2, (n,), 0.1)
        rm = nrm(k3, (n,), 0.1)
        rv = jax.random.uniform(k4, (n,), jnp.float32, 0.5, 1.5)
        scale = g / jnp.sqrt(rv + 1e-5)
        return scale, b - rm * scale

    p = {}
    # Mamba
    p["w_in"] = nrm(ks[0], (d_model, 2 * di), 0.2)           # in_proj.weight^T
    p["conv_w"] = nrm(ks[1], (d_conv, di), 0.3)              # depthwise conv taps (K, di)
    p["conv_b"] = nrm(ks[2], (1, di), 0.1)
    p["w_x"] = nrm(ks[3], (di, dt_rank + 2 * d_state), 0.2)  # x_proj.weight^T
    p["w_dt"] = nrm(ks[4], (dt_rank, di), 0.5)               # dt_proj.weight^T
    p["dt_bias"] = nrm(ks[5], (di,), 0.1)
    A = jnp.tile(jnp.arange(1, d_state + 1, dtype=jnp.float32)[None, :], (di, 1))
    p["A_t"] = (-A).T                                        # A = -exp(A_log), A_log=log(1..ds)
    p["D"] = jnp.ones((1, di), jnp.float32)
    p["w_out"] = nrm(ks[6], (di, d_model), 0.2)              # out_proj.weight^T
    p["prelu_ssm"] = jnp.array(0.25, jnp.float32)
    # Resblock
    p["w_res"] = nrm(ks[7], (in_c, out_c), 0.3)              # 1x1 conv weight^T
    p["res_scale"], p["res_bias"] = bn(ks[8], ks[9], ks[10], ks[11], out_c)
    # Conv branch (weights stored (ky, kx, cin) row order -> (9*cin, cout))
    wc1 = nrm(ks[12], (out_c, in_c, 3, 3), 0.2)
    p["w_c1"] = wc1.transpose(2, 3, 1, 0).reshape(9 * in_c, out_c)
    p["bn1_scale"], p["bn1_bias"] = bn(ks[13], ks[14], ks[15], ks[16], out_c)
    p["prelu_c1"] = jnp.array(0.25, jnp.float32)
    wc2 = nrm(ks[17], (out_c, out_c, 3, 3), 0.2)
    p["w_c2"] = wc2.transpose(2, 3, 1, 0).reshape(9 * out_c, out_c)
    p["bn2_scale"], p["bn2_bias"] = bn(ks[18], ks[19], ks[20], ks[21], out_c)
    p["prelu_c2"] = jnp.array(0.25, jnp.float32)
    return p


if __name__ == "__main__":
    key = jax.random.PRNGKey(0)
    in_c, out_c, B, H, W = 4, 8, 2, 16, 16
    kx, kp = jax.random.split(key)
    x = jax.random.normal(kx, (B, in_c, H, W), jnp.float32)
    params = init_params(kp, in_c, out_c)

    fwd = jax.jit(mcc_block_forward)
    out = fwd(x, params)
    jax.block_until_ready(out)
    assert out.shape == (B, out_c, W, H)
    assert bool(jnp.all(jnp.isfinite(out)))
    print("KERNEL_OK")
</pallas_src>

<mosaic_0001>
module attributes {stable_mosaic.version = 11 : i64} {
  func.func @kernel(%arg0: i32, %arg1: memref<512x4xbf16, #tpu.memory_space<vmem>>, %arg2: memref<4x128xbf16, #tpu.memory_space<vmem>>, %arg3: memref<512x128xbf16, #tpu.memory_space<vmem>>) attributes {dimension_semantics = [#tpu.dimension_semantics<parallel>], iteration_bounds = array<i64: 1>, scalar_prefetch = 0 : i64, scratch_operands = 0 : i64, tpu.core_type = #tpu.core_type<tc>, window_params = [{transform_indices = @transform_0, window_bounds = array<i64: 512, 4>}, {pipeline_mode = #tpu.pipeline_mode<synchronous>, transform_indices = @transform_1, window_bounds = array<i64: 4, 128>}, {transform_indices = @transform_2, window_bounds = array<i64: 512, 128>}]} {
    %c0 = arith.constant 0 : index
    %c0_0 = arith.constant 0 : index
    %0 = vector.load %arg1[%c0, %c0_0] : memref<512x4xbf16, #tpu.memory_space<vmem>>, vector<512x4xbf16>
    %c0_1 = arith.constant 0 : index
    %c0_2 = arith.constant 0 : index
    %1 = vector.load %arg2[%c0_1, %c0_2] : memref<4x128xbf16, #tpu.memory_space<vmem>>, vector<4x128xbf16>
    %cst = arith.constant dense<0.000000e+00> : vector<512x128xf32>
    %2 = tpu.matmul %0, %1, %cst {dimension_numbers = #tpu.dot_dimension_numbers<[1], [0], [0], [1], [0, 0, 1, 1], [], []>} : vector<512x4xbf16>, vector<4x128xbf16>, vector<512x128xf32> -> vector<512x128xf32>
    %3 = arith.truncf %2 : vector<512x128xf32> to vector<512x128xbf16>
    %c0_3 = arith.constant 0 : index
    %c0_4 = arith.constant 0 : index
    %4 = vector.load %arg3[%c0_3, %c0_4] : memref<512x128xbf16, #tpu.memory_space<vmem>>, vector<512x128xbf16>
    tpu.vector_store %arg3[%c0_3, %c0_4], %3 {strides = array<i32>} : memref<512x128xbf16, #tpu.memory_space<vmem>>, vector<512x128xbf16>,
    return
  }
  func.func @transform_0(%arg0: i32) -> (i32, i32) {
    %c0_i32 = arith.constant 0 : i32
    %c0_i32_0 = arith.constant 0 : i32
    return %arg0, %c0_i32 : i32, i32
  }
  func.func @transform_1(%arg0: i32) -> (i32, i32) {
    %c0_i32 = arith.constant 0 : i32
    %c0_i32_0 = arith.constant 0 : i32
    %c0_i32_1 = arith.constant 0 : i32
    return %c0_i32, %c0_i32_0 : i32, i32
  }
  func.func @transform_2(%arg0: i32) -> (i32, i32) {
    %c0_i32 = arith.constant 0 : i32
    %c0_i32_0 = arith.constant 0 : i32
    return %arg0, %c0_i32 : i32, i32
  }
}

module attributes {stable_mosaic.version = 11 : i64} {
  func.func @kernel(%arg0: i32, %arg1: i32, %arg2: memref<1x264x8xbf16, #tpu.memory_space<vmem>>, %arg3: memref<4x8xf32, #tpu.memory_space<vmem>>, %arg4: memref<1x8xf32, #tpu.memory_space<vmem>>, %arg5: memref<1x256x8xbf16, #tpu.memory_space<vmem>>) attributes {dimension_semantics = [#tpu.dimension_semantics<parallel>, #tpu.dimension_semantics<parallel>], iteration_bounds = array<i64: 2, 1>, scalar_prefetch = 0 : i64, scratch_operands = 0 : i64, tpu.core_type = #tpu.core_type<tc>, window_params = [{transform_indices = @transform_0, window_bounds = array<i64: 1, 264, 8>}, {pipeline_mode = #tpu.pipeline_mode<synchronous>, transform_indices = @transform_1, window_bounds = array<i64: 4, 8>}, {pipeline_mode = #tpu.pipeline_mode<synchronous>, transform_indices = @transform_2, window_bounds = array<i64: 1, 8>}, {transform_indices = @transform_3, window_bounds = array<i64: 1, 256, 8>}]} {
    %c256_i32 = arith.constant 256 : i32
    %0 = arith.muli %arg1, %c256_i32 : i32
    %1 = tpu.assume_multiple %0, 8 : i32
    %c0 = arith.constant 0 : index
    %2 = arith.index_cast %1 : i32 to index
    %c0_0 = arith.constant 0 : index
    %3 = vector.load %arg2[%c0, %2, %c0_0] : memref<1x264x8xbf16, #tpu.memory_space<vmem>>, vector<1x264x8xbf16>
    %4 = vector.shape_cast %3 : vector<1x264x8xbf16> to vector<264x8xbf16>
    %5 = arith.extf %4 : vector<264x8xbf16> to vector<264x8xf32>
    %cst = arith.constant 0.000000e+00 : f32
    %6 = vector.broadcast %cst : f32 to vector<256x8xf32>
    %c0_1 = arith.constant 0 : index
    %c0_2 = arith.constant 0 : index
    %7 = vector.load %arg4[%c0_1, %c0_2] : memref<1x8xf32, #tpu.memory_space<vmem>>, vector<1x8xf32>
    %8 = vector.broadcast %7 : vector<1x8xf32> to vector<256x8xf32>
    %9 = arith.addf %6, %8 : vector<256x8xf32>
    %10 = vector.extract_strided_slice %5 {offsets = [0, 0], sizes = [256, 8], strides = [1, 1]} : vector<264x8xf32> to vector<256x8xf32>
    %c0_3 = arith.constant 0 : index
    %c0_4 = arith.constant 0 : index
    %11 = vector.load %arg3[%c0_3, %c0_4] : memref<4x8xf32, #tpu.memory_space<vmem>>, vector<1x8xf32>
    %12 = vector.broadcast %11 : vector<1x8xf32> to vector<256x8xf32>
    %13 = arith.mulf %10, %12 : vector<256x8xf32>
    %14 = arith.addf %9, %13 : vector<256x8xf32>
    %15 = vector.extract_strided_slice %5 {offsets = [1, 0], sizes = [256, 8], strides = [1, 1]} : vector<264x8xf32> to vector<256x8xf32>
    %c1 = arith.constant 1 : index
    %c0_5 = arith.constant 0 : index
    %16 = vector.load %arg3[%c1, %c0_5] : memref<4x8xf32, #tpu.memory_space<vmem>>, vector<1x8xf32>
    %17 = vector.broadcast %16 : vector<1x8xf32> to vector<256x8xf32>
    %18 = arith.mulf %15, %17 : vector<256x8xf32>
    %19 = arith.addf %14, %18 : vector<256x8xf32>
    %20 = vector.extract_strided_slice %5 {offsets = [2, 0], sizes = [256, 8], strides = [1, 1]} : vector<264x8xf32> to vector<256x8xf32>
    %c2 = arith.constant 2 : index
    %c0_6 = arith.constant 0 : index
    %21 = vector.load %arg3[%c2, %c0_6] : memref<4x8xf32, #tpu.memory_space<vmem>>, vector<1x8xf32>
    %22 = vector.broadcast %21 : vector<1x8xf32> to vector<256x8xf32>
    %23 = arith.mulf %20, %22 : vector<256x8xf32>
    %24 = arith.addf %19, %23 : vector<256x8xf32>
    %25 = vector.extract_strided_slice %5 {offsets = [3, 0], sizes = [256, 8], strides = [1, 1]} : vector<264x8xf32> to vector<256x8xf32>
    %c3 = arith.constant 3 : index
    %c0_7 = arith.constant 0 : index
    %26 = vector.load %arg3[%c3, %c0_7] : memref<4x8xf32, #tpu.memory_space<vmem>>, vector<1x8xf32>
    %27 = vector.broadcast %26 : vector<1x8xf32> to vector<256x8xf32>
    %28 = arith.mulf %25, %27 : vector<256x8xf32>
    %29 = arith.addf %24, %28 : vector<256x8xf32>
    %cst_8 = arith.constant 0.000000e+00 : f32
    %30 = vector.broadcast %cst_8 : f32 to vector<256x8xf32>
    %31 = arith.subf %30, %29 : vector<256x8xf32>
    %32 = math.exp %31 : vector<256x8xf32>
    %cst_9 = arith.constant 1.000000e+00 : f32
    %33 = vector.broadcast %cst_9 : f32 to vector<256x8xf32>
    %34 = arith.addf %33, %32 : vector<256x8xf32>
    %cst_10 = arith.constant 1.000000e+00 : f32
    %35 = vector.broadcast %cst_10 : f32 to vector<256x8xf32>
    %36 = arith.divf %35, %34 : vector<256x8xf32>
    %37 = arith.mulf %29, %36 : vector<256x8xf32>
    %38 = arith.truncf %37 : vector<256x8xf32> to vector<256x8xbf16>
    %c0_11 = arith.constant 0 : index
    %c0_12 = arith.constant 0 : index
    %c0_13 = arith.constant 0 : index
    %39 = vector.load %arg5[%c0_11, %c0_12, %c0_13] : memref<1x256x8xbf16, #tpu.memory_space<vmem>>, vector<1x256x8xbf16>
    %40 = vector.shape_cast %39 : vector<1x256x8xbf16> to vector<256x8xbf16>
    %41 = vector.shape_cast %38 : vector<256x8xbf16> to vector<1x256x8xbf16>
    tpu.vector_store %arg5[%c0_11, %c0_12, %c0_13], %41 {strides = array<i32>} : memref<1x256x8xbf16, #tpu.memory_space<vmem>>, vector<1x256x8xbf16>,
    return
  }
  func.func @transform_0(%arg0: i32, %arg1: i32) -> (i32, i32, i32) {
    %c0_i32 = arith.constant 0 : i32
    %c0_i32_0 = arith.constant 0 : i32
    %c0_i32_1 = arith.constant 0 : i32
    return %arg0, %c0_i32, %c0_i32_0 : i32, i32, i32
  }
  func.func @transform_1(%arg0: i32, %arg1: i32) -> (i32, i32) {
    %c0_i32 = arith.constant 0 : i32
    %c0_i32_0 = arith.constant 0 : i32
    %c0_i32_1 = arith.constant 0 : i32
    return %c0_i32, %c0_i32_0 : i32, i32
  }
  func.func @transform_2(%arg0: i32, %arg1: i32) -> (i32, i32) {
    %c0_i32 = arith.constant 0 : i32
    %c0_i32_0 = arith.constant 0 : i32
    %c0_i32_1 = arith.constant 0 : i32
    return %c0_i32, %c0_i32_0 : i32, i32
  }
  func.func @transform_3(%arg0: i32, %arg1: i32) -> (i32, i32, i32) {
    %c0_i32 = arith.constant 0 : i32
    %c0_i32_0 = arith.constant 0 : i32
    return %arg0, %arg1, %c0_i32 : i32, i32, i32
  }
}

module attributes {stable_mosaic.version = 11 : i64} {
  func.func @kernel(%arg0: i32, %arg1: memref<512x8xbf16, #tpu.memory_space<vmem>>, %arg2: memref<8x128xbf16, #tpu.memory_space<vmem>>, %arg3: memref<1x128xf32, #tpu.memory_space<vmem>>, %arg4: memref<512x128xf32, #tpu.memory_space<vmem>>) attributes {dimension_semantics = [#tpu.dimension_semantics<parallel>], iteration_bounds = array<i64: 1>, scalar_prefetch = 0 : i64, scratch_operands = 0 : i64, tpu.core_type = #tpu.core_type<tc>, window_params = [{transform_indices = @transform_0, window_bounds = array<i64: 512, 8>}, {pipeline_mode = #tpu.pipeline_mode<synchronous>, transform_indices = @transform_1, window_bounds = array<i64: 8, 128>}, {pipeline_mode = #tpu.pipeline_mode<synchronous>, transform_indices = @transform_2, window_bounds = array<i64: 1, 128>}, {transform_indices = @transform_3, window_bounds = array<i64: 512, 128>}]} {
    %c0 = arith.constant 0 : index
    %c0_0 = arith.constant 0 : index
    %0 = vector.load %arg1[%c0, %c0_0] : memref<512x8xbf16, #tpu.memory_space<vmem>>, vector<512x8xbf16>
    %c0_1 = arith.constant 0 : index
    %c0_2 = arith.constant 0 : index
    %1 = vector.load %arg2[%c0_1, %c0_2] : memref<8x128xbf16, #tpu.memory_space<vmem>>, vector<8x128xbf16>
    %cst = arith.constant dense<0.000000e+00> : vector<512x128xf32>
    %2 = tpu.matmul %0, %1, %cst {dimension_numbers = #tpu.dot_dimension_numbers<[1], [0], [0], [1], [0, 0, 1, 1], [], []>} : vector<512x8xbf16>, vector<8x128xbf16>, vector<512x128xf32> -> vector<512x128xf32>
    %c0_3 = arith.constant 0 : index
    %c0_4 = arith.constant 0 : index
    %3 = vector.load %arg3[%c0_3, %c0_4] : memref<1x128xf32, #tpu.memory_space<vmem>>, vector<1x128xf32>
    %4 = vector.broadcast %3 : vector<1x128xf32> to vector<512x128xf32>
    %5 = arith.addf %2, %4 : vector<512x128xf32>
    %c0_5 = arith.constant 0 : index
    %c0_6 = arith.constant 0 : index
    %6 = vector.load %arg4[%c0_5, %c0_6] : memref<512x128xf32, #tpu.memory_space<vmem>>, vector<512x128xf32>
    tpu.vector_store %arg4[%c0_5, %c0_6], %5 {strides = array<i32>} : memref<512x128xf32, #tpu.memory_space<vmem>>, vector<512x128xf32>,
    return
  }
  func.func @transform_0(%arg0: i32) -> (i32, i32) {
    %c0_i32 = arith.constant 0 : i32
    %c0_i32_0 = arith.constant 0 : i32
    return %arg0, %c0_i32 : i32, i32
  }
  func.func @transform_1(%arg0: i32) -> (i32, i32) {
    %c0_i32 = arith.constant 0 : i32
    %c0_i32_0 = arith.constant 0 : i32
    %c0_i32_1 = arith.constant 0 : i32
    return %c0_i32, %c0_i32_0 : i32, i32
  }
  func.func @transform_2(%arg0: i32) -> (i32, i32) {
    %c0_i32 = arith.constant 0 : i32
    %c0_i32_0 = arith.constant 0 : i32
    %c0_i32_1 = arith.constant 0 : i32
    return %c0_i32, %c0_i32_0 : i32, i32
  }
  func.func @transform_3(%arg0: i32) -> (i32, i32) {
    %c0_i32 = arith.constant 0 : i32
    %c0_i32_0 = arith.constant 0 : i32
    return %arg0, %c0_i32 : i32, i32
  }
}

module attributes {stable_mosaic.version = 11 : i64} {
  func.func @_mamba_scan_kernel(%arg0: i32, %arg1: i32, %arg2: memref<1x256x8xbf16, #tpu.memory_space<vmem>>, %arg3: memref<1x256x8xf32, #tpu.memory_space<vmem>>, %arg4: memref<1x256x16xf32, #tpu.memory_space<vmem>>, %arg5: memref<1x256x16xf32, #tpu.memory_space<vmem>>, %arg6: memref<1x256x8xbf16, #tpu.memory_space<vmem>>, %arg7: memref<16x8xf32, #tpu.memory_space<vmem>>, %arg8: memref<1x8xf32, #tpu.memory_space<vmem>>, %arg9: memref<1x256x8xbf16, #tpu.memory_space<vmem>>, %arg10: memref<16x8xf32, #tpu.memory_space<vmem>>, %arg11: memref<8x8xf32, #tpu.memory_space<vmem>>) attributes {dimension_semantics = [#tpu.dimension_semantics<parallel>, #tpu.dimension_semantics<arbitrary>], iteration_bounds = array<i64: 2, 1>, scalar_prefetch = 0 : i64, scratch_operands = 2 : i64, tpu.core_type = #tpu.core_type<tc>, window_params = [{transform_indices = @transform_0, window_bounds = array<i64: 1, 256, 8>}, {transform_indices = @transform_1, window_bounds = array<i64: 1, 256, 8>}, {transform_indices = @transform_2, window_bounds = array<i64: 1, 256, 16>}, {transform_indices = @transform_3, window_bounds = array<i64: 1, 256, 16>}, {transform_indices = @transform_4, window_bounds = array<i64: 1, 256, 8>}, {pipeline_mode = #tpu.pipeline_mode<synchronous>, transform_indices = @transform_5, window_bounds = array<i64: 16, 8>}, {pipeline_mode = #tpu.pipeline_mode<synchronous>, transform_indices = @transform_6, window_bounds = array<i64: 1, 8>}, {transform_indices = @transform_7, window_bounds = array<i64: 1, 256, 8>}]} {
    %c0_i32 = arith.constant 0 : i32
    %0 = arith.cmpi eq, %arg1, %c0_i32 : i32
    %1 = arith.extui %0 : i1 to i32
    %c0_i32_0 = arith.constant 0 : i32
    %2 = arith.cmpi ne, %1, %c0_i32_0 : i32
    scf.if %2 {
      %cst = arith.constant 0.000000e+00 : f32
      %6 = vector.broadcast %cst : f32 to vector<16x8xf32>
      %c0_6 = arith.constant 0 : index
      %c0_7 = arith.constant 0 : index
      %7 = vector.load %arg10[%c0_6, %c0_7] : memref<16x8xf32, #tpu.memory_space<vmem>>, vector<16x8xf32>
      tpu.vector_store %arg10[%c0_6, %c0_7], %6 {strides = array<i32>} : memref<16x8xf32, #tpu.memory_space<vmem>>, vector<16x8xf32>,
    } else {
    }
    %c0 = arith.constant 0 : index
    %c0_1 = arith.constant 0 : index
    %3 = vector.load %arg7[%c0, %c0_1] : memref<16x8xf32, #tpu.memory_space<vmem>>, vector<16x8xf32>
    %c0_2 = arith.constant 0 : index
    %c0_3 = arith.constant 0 : index
    %4 = vector.load %arg8[%c0_2, %c0_3] : memref<1x8xf32, #tpu.memory_space<vmem>>, vector<1x8xf32>
    %c0_i32_4 = arith.constant 0 : i32
    %c32_i32 = arith.constant 32 : i32
    %5 = arith.addi %c0_i32_4, %c32_i32 : i32
    %c1_i32 = arith.constant 1 : i32
    scf.for %arg12 = %c0_i32_4 to %5 step %c1_i32  : i32 {
      %c8_i32 = arith.constant 8 : i32
      %6 = arith.muli %arg12, %c8_i32 : i32
      %7 = tpu.assume_multiple %6, 8 : i32
      %c0_6 = arith.constant 0 : index
      %8 = arith.index_cast %7 : i32 to index
      %c0_7 = arith.constant 0 : index
      %9 = vector.load %arg2[%c0_6, %8, %c0_7] : memref<1x256x8xbf16, #tpu.memory_space<vmem>>, vector<1x8x8xbf16>
      %10 = vector.shape_cast %9 : vector<1x8x8xbf16> to vector<8x8xbf16>
      %11 = arith.extf %10 : vector<8x8xbf16> to vector<8x8xf32>
      %c0_8 = arith.constant 0 : index
      %12 = arith.index_cast %7 : i32 to index
      %c0_9 = arith.constant 0 : index
      %13 = vector.load %arg3[%c0_8, %12, %c0_9] : memref<1x256x8xf32, #tpu.memory_space<vmem>>, vector<1x8x8xf32>
      %14 = vector.shape_cast %13 : vector<1x8x8xf32> to vector<8x8xf32>
      %c0_10 = arith.constant 0 : index
      %15 = arith.index_cast %7 : i32 to index
      %c0_11 = arith.constant 0 : index
      %16 = vector.load %arg6[%c0_10, %15, %c0_11] : memref<1x256x8xbf16, #tpu.memory_space<vmem>>, vector<1x8x8xbf16>
      %17 = vector.shape_cast %16 : vector<1x8x8xbf16> to vector<8x8xbf16>
      %18 = arith.extf %17 : vector<8x8xbf16> to vector<8x8xf32>
      %c0_12 = arith.constant 0 : index
      %19 = arith.index_cast %7 : i32 to index
      %c0_13 = arith.constant 0 : index
      %20 = vector.load %arg4[%c0_12, %19, %c0_13] : memref<1x256x16xf32, #tpu.memory_space<vmem>>, vector<1x8x16xf32>
      %21 = vector.shape_cast %20 : vector<1x8x16xf32> to vector<8x16xf32>
      %c0_14 = arith.constant 0 : index
      %22 = arith.index_cast %7 : i32 to index
      %c0_15 = arith.constant 0 : index
      %23 = vector.load %arg5[%c0_14, %22, %c0_15] : memref<1x256x16xf32, #tpu.memory_space<vmem>>, vector<1x8x16xf32>
      %24 = vector.shape_cast %23 : vector<1x8x16xf32> to vector<8x16xf32>
      %cst = arith.constant 2.000000e+01 : f32
      %25 = vector.broadcast %cst : f32 to vector<8x8xf32>
      %26 = arith.cmpf ogt, %14, %25 : vector<8x8xf32>
      %cst_16 = arith.constant 2.000000e+01 : f32
      %27 = vector.broadcast %cst_16 : f32 to vector<8x8xf32>
      %28 = arith.minimumf %14, %27 : vector<8x8xf32>
      %29 = math.exp %28 : vector<8x8xf32>
      %cst_17 = arith.constant 1.000000e+00 : f32
      %30 = vector.broadcast %cst_17 : f32 to vector<8x8xf32>
      %31 = arith.addf %30, %29 : vector<8x8xf32>
      %32 = math.log %31 : vector<8x8xf32>
      %33 = arith.select %26, %14, %32 : vector<8x8xi1>, vector<8x8xf32>
      %34 = arith.mulf %33, %11 : vector<8x8xf32>
      %cst_18 = arith.constant 0.000000e+00 : f32
      %35 = vector.broadcast %cst_18 : f32 to vector<8x8xf32>
      %36 = arith.subf %35, %18 : vector<8x8xf32>
      %37 = math.exp %36 : vector<8x8xf32>
      %cst_19 = arith.constant 1.000000e+00 : f32
      %38 = vector.broadcast %cst_19 : f32 to vector<8x8xf32>
      %39 = arith.addf %38, %37 : vector<8x8xf32>
      %cst_20 = arith.constant 1.000000e+00 : f32
      %40 = vector.broadcast %cst_20 : f32 to vector<8x8xf32>
      %41 = arith.divf %40, %39 : vector<8x8xf32>
      %42 = arith.mulf %18, %41 : vector<8x8xf32>
      %43 = vector.shape_cast %33 : vector<8x8xf32> to vector<8x1x8xf32>
      %44 = vector.shape_cast %3 : vector<16x8xf32> to vector<1x16x8xf32>
      %45 = vector.broadcast %43 : vector<8x1x8xf32> to vector<8x16x8xf32>
      %46 = vector.broadcast %44 : vector<1x16x8xf32> to vector<8x16x8xf32>
      %47 = arith.mulf %45, %46 : vector<8x16x8xf32>
      %48 = math.exp %47 : vector<8x16x8xf32>
      %49 = tpu.transpose %21, [1, 0] : vector<8x16xf32> -> vector<16x8xf32>
      %50 = tpu.transpose %24, [1, 0] : vector<8x16xf32> -> vector<16x8xf32>
      %c0_21 = arith.constant 0 : index
      %c0_22 = arith.constant 0 : index
      %51 = vector.load %arg10[%c0_21, %c0_22] : memref<16x8xf32, #tpu.memory_space<vmem>>, vector<16x8xf32>
      %52 = vector.extract_strided_slice %48 {offsets = [0, 0, 0], sizes = [1, 16, 8], strides = [1, 1, 1]} : vector<8x16x8xf32> to vector<1x16x8xf32>
      %53 = vector.shape_cast %52 : vector<1x16x8xf32> to vector<16x8xf32>
      %54 = arith.mulf %53, %51 : vector<16x8xf32>
      %55 = vector.extract_strided_slice %49 {offsets = [0, 0], sizes = [16, 1], strides = [1, 1]} : vector<16x8xf32> to vector<16x1xf32>
      %56 = vector.extract_strided_slice %34 {offsets = [0, 0], sizes = [1, 8], strides = [1, 1]} : vector<8x8xf32> to vector<1x8xf32>
      %57 = vector.broadcast %55 : vector<16x1xf32> to vector<16x8xf32>
      %58 = vector.broadcast %56 : vector<1x8xf32> to vector<16x8xf32>
      %59 = arith.mulf %57, %58 : vector<16x8xf32>
      %60 = arith.addf %54, %59 : vector<16x8xf32>
      %61 = vector.extract_strided_slice %50 {offsets = [0, 0], sizes = [16, 1], strides = [1, 1]} : vector<16x8xf32> to vector<16x1xf32>
      %62 = vector.broadcast %61 : vector<16x1xf32> to vector<16x8xf32>
      %63 = arith.mulf %60, %62 : vector<16x8xf32>
      %cst_23 = arith.constant dense<0.000000e+00> : vector<8xf32>
      %64 = vector.multi_reduction <add>, %63, %cst_23 [0] : vector<16x8xf32> to vector<8xf32>
      %65 = vector.shape_cast %64 : vector<8xf32> to vector<1x8xf32>
      %c0_24 = arith.constant 0 : index
      %c0_25 = arith.constant 0 : index
      %66 = vector.load %arg11[%c0_24, %c0_25] : memref<8x8xf32, #tpu.memory_space<vmem>>, vector<1x8xf32>
      tpu.vector_store %arg11[%c0_24, %c0_25], %65 {strides = array<i32>} : memref<8x8xf32, #tpu.memory_space<vmem>>, vector<1x8xf32>,
      %67 = vector.extract_strided_slice %48 {offsets = [1, 0, 0], sizes = [1, 16, 8], strides = [1, 1, 1]} : vector<8x16x8xf32> to vector<1x16x8xf32>
      %68 = vector.shape_cast %67 : vector<1x16x8xf32> to vector<16x8xf32>
      %69 = arith.mulf %68, %60 : vector<16x8xf32>
      %70 = vector.extract_strided_slice %49 {offsets = [0, 1], sizes = [16, 1], strides = [1, 1]} : vector<16x8xf32> to vector<16x1xf32>
      %71 = vector.extract_strided_slice %34 {offsets = [1, 0], sizes = [1, 8], strides = [1, 1]} : vector<8x8xf32> to vector<1x8xf32>
      %72 = vector.broadcast %70 : vector<16x1xf32> to vector<16x8xf32>
      %73 = vector.broadcast %71 : vector<1x8xf32> to vector<16x8xf32>
      %74 = arith.mulf %72, %73 : vector<16x8xf32>
      %75 = arith.addf %69, %74 : vector<16x8xf32>
      %76 = vector.extract_strided_slice %50 {offsets = [0, 1], sizes = [16, 1], strides = [1, 1]} : vector<16x8xf32> to vector<16x1xf32>
      %77 = vector.broadcast %76 : vector<16x1xf32> to vector<16x8xf32>
      %78 = arith.mulf %75, %77 : vector<16x8xf32>
      %cst_26 = arith.constant dense<0.000000e+00> : vector<8xf32>
      %79 = vector.multi_reduction <add>, %78, %cst_26 [0] : vector<16x8xf32> to vector<8xf32>
      %80 = vector.shape_cast %79 : vector<8xf32> to vector<1x8xf32>
      %c1 = arith.constant 1 : index
      %c0_27 = arith.constant 0 : index
      %81 = vector.load %arg11[%c1, %c0_27] : memref<8x8xf32, #tpu.memory_space<vmem>>, vector<1x8xf32>
      tpu.vector_store %arg11[%c1, %c0_27], %80 {strides = array<i32>} : memref<8x8xf32, #tpu.memory_space<vmem>>, vector<1x8xf32>,
      %82 = vector.extract_strided_slice %48 {offsets = [2, 0, 0], sizes = [1, 16, 8], strides = [1, 1, 1]} : vector<8x16x8xf32> to vector<1x16x8xf32>
      %83 = vector.shape_cast %82 : vector<1x16x8xf32> to vector<16x8xf32>
      %84 = arith.mulf %83, %75 : vector<16x8xf32>
      %85 = vector.extract_strided_slice %49 {offsets = [0, 2], sizes = [16, 1], strides = [1, 1]} : vector<16x8xf32> to vector<16x1xf32>
      %86 = vector.extract_strided_slice %34 {offsets = [2, 0], sizes = [1, 8], strides = [1, 1]} : vector<8x8xf32> to vector<1x8xf32>
      %87 = vector.broadcast %85 : vector<16x1xf32> to vector<16x8xf32>
      %88 = vector.broadcast %86 : vector<1x8xf32> to vector<16x8xf32>
      %89 = arith.mulf %87, %88 : vector<16x8xf32>
      %90 = arith.addf %84, %89 : vector<16x8xf32>
      %91 = vector.extract_strided_slice %50 {offsets = [0, 2], sizes = [16, 1], strides = [1, 1]} : vector<16x8xf32> to vector<16x1xf32>
      %92 = vector.broadcast %91 : vector<16x1xf32> to vector<16x8xf32>
      %93 = arith.mulf %90, %92 : vector<16x8xf32>
      %cst_28 = arith.constant dense<0.000000e+00> : vector<8xf32>
      %94 = vector.multi_reduction <add>, %93, %cst_28 [0] : vector<16x8xf32> to vector<8xf32>
      %95 = vector.shape_cast %94 : vector<8xf32> to vector<1x8xf32>
      %c2 = arith.constant 2 : index
      %c0_29 = arith.constant 0 : index
      %96 = vector.load %arg11[%c2, %c0_29] : memref<8x8xf32, #tpu.memory_space<vmem>>, vector<1x8xf32>
      tpu.vector_store %arg11[%c2, %c0_29], %95 {strides = array<i32>} : memref<8x8xf32, #tpu.memory_space<vmem>>, vector<1x8xf32>,
      %97 = vector.extract_strided_slice %48 {offsets = [3, 0, 0], sizes = [1, 16, 8], strides = [1, 1, 1]} : vector<8x16x8xf32> to vector<1x16x8xf32>
      %98 = vector.shape_cast %97 : vector<1x16x8xf32> to vector<16x8xf32>
      %99 = arith.mulf %98, %90 : vector<16x8xf32>
      %100 = vector.extract_strided_slice %49 {offsets = [0, 3], sizes = [16, 1], strides = [1, 1]} : vector<16x8xf32> to vector<16x1xf32>
      %101 = vector.extract_strided_slice %34 {offsets = [3, 0], sizes = [1, 8], strides = [1, 1]} : vector<8x8xf32> to vector<1x8xf32>
      %102 = vector.broadcast %100 : vector<16x1xf32> to vector<16x8xf32>
      %103 = vector.broadcast %101 : vector<1x8xf32> to vector<16x8xf32>
      %104 = arith.mulf %102, %103 : vector<16x8xf32>
      %105 = arith.addf %99, %104 : vector<16x8xf32>
      %106 = vector.extract_strided_slice %50 {offsets = [0, 3], sizes = [16, 1], strides = [1, 1]} : vector<16x8xf32> to vector<16x1xf32>
      %107 = vector.broadcast %106 : vector<16x1xf32> to vector<16x8xf32>
      %108 = arith.mulf %105, %107 : vector<16x8xf32>
      %cst_30 = arith.constant dense<0.000000e+00> : vector<8xf32>
      %109 = vector.multi_reduction <add>, %108, %cst_30 [0] : vector<16x8xf32> to vector<8xf32>
      %110 = vector.shape_cast %109 : vector<8xf32> to vector<1x8xf32>
      %c3 = arith.constant 3 : index
      %c0_31 = arith.constant 0 : index
      %111 = vector.load %arg11[%c3, %c0_31] : memref<8x8xf32, #tpu.memory_space<vmem>>, vector<1x8xf32>
      tpu.vector_store %arg11[%c3, %c0_31], %110 {strides = array<i32>} : memref<8x8xf32, #tpu.memory_space<vmem>>, vector<1x8xf32>,
      %112 = vector.extract_strided_slice %48 {offsets = [4, 0, 0], sizes = [1, 16, 8], strides = [1, 1, 1]} : vector<8x16x8xf32> to vector<1x16x8xf32>
      %113 = vector.shape_cast %112 : vector<1x16x8xf32> to vector<16x8xf32>
      %114 = arith.mulf %113, %105 : vector<16x8xf32>
      %115 = vector.extract_strided_slice %49 {offsets = [0, 4], sizes = [16, 1], strides = [1, 1]} : vector<16x8xf32> to vector<16x1xf32>
      %116 = vector.extract_strided_slice %34 {offsets = [4, 0], sizes = [1, 8], strides = [1, 1]} : vector<8x8xf32> to vector<1x8xf32>
      %117 = vector.broadcast %115 : vector<16x1xf32> to vector<16x8xf32>
      %118 = vector.broadcast %116 : vector<1x8xf32> to vector<16x8xf32>
      %119 = arith.mulf %117, %118 : vector<16x8xf32>
      %120 = arith.addf %114, %119 : vector<16x8xf32>
      %121 = vector.extract_strided_slice %50 {offsets = [0, 4], sizes = [16, 1], strides = [1, 1]} : vector<16x8xf32> to vector<16x1xf32>
      %122 = vector.broadcast %121 : vector<16x1xf32> to vector<16x8xf32>
      %123 = arith.mulf %120, %122 : vector<16x8xf32>
      %cst_32 = arith.constant dense<0.000000e+00> : vector<8xf32>
      %124 = vector.multi_reduction <add>, %123, %cst_32 [0] : vector<16x8xf32> to vector<8xf32>
      %125 = vector.shape_cast %124 : vector<8xf32> to vector<1x8xf32>
      %c4 = arith.constant 4 : index
      %c0_33 = arith.constant 0 : index
      %126 = vector.load %arg11[%c4, %c0_33] : memref<8x8xf32, #tpu.memory_space<vmem>>, vector<1x8xf32>
      tpu.vector_store %arg11[%c4, %c0_33], %125 {strides = array<i32>} : memref<8x8xf32, #tpu.memory_space<vmem>>, vector<1x8xf32>,
      %127 = vector.extract_strided_slice %48 {offsets = [5, 0, 0], sizes = [1, 16, 8], strides = [1, 1, 1]} : vector<8x16x8xf32> to vector<1x16x8xf32>
      %128 = vector.shape_cast %127 : vector<1x16x8xf32> to vector<16x8xf32>
      %129 = arith.mulf %128, %120 : vector<16x8xf32>
      %130 = vector.extract_strided_slice %49 {offsets = [0, 5], sizes = [16, 1], strides = [1, 1]} : vector<16x8xf32> to vector<16x1xf32>
      %131 = vector.extract_strided_slice %34 {offsets = [5, 0], sizes = [1, 8], strides = [1, 1]} : vector<8x8xf32> to vector<1x8xf32>
      %132 = vector.broadcast %130 : vector<16x1xf32> to vector<16x8xf32>
      %133 = vector.broadcast %131 : vector<1x8xf32> to vector<16x8xf32>
      %134 = arith.mulf %132, %133 : vector<16x8xf32>
      %135 = arith.addf %129, %134 : vector<16x8xf32>
      %136 = vector.extract_strided_slice %50 {offsets = [0, 5], sizes = [16, 1], strides = [1, 1]} : vector<16x8xf32> to vector<16x1xf32>
      %137 = vector.broadcast %136 : vector<16x1xf32> to vector<16x8xf32>
      %138 = arith.mulf %135, %137 : vector<16x8xf32>
      %cst_34 = arith.constant dense<0.000000e+00> : vector<8xf32>
      %139 = vector.multi_reduction <add>, %138, %cst_34 [0] : vector<16x8xf32> to vector<8xf32>
      %140 = vector.shape_cast %139 : vector<8xf32> to vector<1x8xf32>
      %c5 = arith.constant 5 : index
      %c0_35 = arith.constant 0 : index
      %141 = vector.load %arg11[%c5, %c0_35] : memref<8x8xf32, #tpu.memory_space<vmem>>, vector<1x8xf32>
      tpu.vector_store %arg11[%c5, %c0_35], %140 {strides = array<i32>} : memref<8x8xf32, #tpu.memory_space<vmem>>, vector<1x8xf32>,
      %142 = vector.extract_strided_slice %48 {offsets = [6, 0, 0], sizes = [1, 16, 8], strides = [1, 1, 1]} : vector<8x16x8xf32> to vector<1x16x8xf32>
      %143 = vector.shape_cast %142 : vector<1x16x8xf32> to vector<16x8xf32>
      %144 = arith.mulf %143, %135 : vector<16x8xf32>
      %145 = vector.extract_strided_slice %49 {offsets = [0, 6], sizes = [16, 1], strides = [1, 1]} : vector<16x8xf32> to vector<16x1xf32>
      %146 = vector.extract_strided_slice %34 {offsets = [6, 0], sizes = [1, 8], strides = [1, 1]} : vector<8x8xf32> to vector<1x8xf32>
      %147 = vector.broadcast %145 : vector<16x1xf32> to vector<16x8xf32>
      %148 = vector.broadcast %146 : vector<1x8xf32> to vector<16x8xf32>
      %149 = arith.mulf %147, %148 : vector<16x8xf32>
      %150 = arith.addf %144, %149 : vector<16x8xf32>
      %151 = vector.extract_strided_slice %50 {offsets = [0, 6], sizes = [16, 1], strides = [1, 1]} : vector<16x8xf32> to vector<16x1xf32>
      %152 = vector.broadcast %151 : vector<16x1xf32> to vector<16x8xf32>
      %153 = arith.mulf %150, %152 : vector<16x8xf32>
      %cst_36 = arith.constant dense<0.000000e+00> : vector<8xf32>
      %154 = vector.multi_reduction <add>, %153, %cst_36 [0] : vector<16x8xf32> to vector<8xf32>
      %155 = vector.shape_cast %154 : vector<8xf32> to vector<1x8xf32>
      %c6 = arith.constant 6 : index
      %c0_37 = arith.constant 0 : index
      %156 = vector.load %arg11[%c6, %c0_37] : memref<8x8xf32, #tpu.memory_space<vmem>>, vector<1x8xf32>
      tpu.vector_store %arg11[%c6, %c0_37], %155 {strides = array<i32>} : memref<8x8xf32, #tpu.memory_space<vmem>>, vector<1x8xf32>,
      %157 = vector.extract_strided_slice %48 {offsets = [7, 0, 0], sizes = [1, 16, 8], strides = [1, 1, 1]} : vector<8x16x8xf32> to vector<1x16x8xf32>
      %158 = vector.shape_cast %157 : vector<1x16x8xf32> to vector<16x8xf32>
      %159 = arith.mulf %158, %150 : vector<16x8xf32>
      %160 = vector.extract_strided_slice %49 {offsets = [0, 7], sizes = [16, 1], strides = [1, 1]} : vector<16x8xf32> to vector<16x1xf32>
      %161 = vector.extract_strided_slice %34 {offsets = [7, 0], sizes = [1, 8], strides = [1, 1]} : vector<8x8xf32> to vector<1x8xf32>
      %162 = vector.broadcast %160 : vector<16x1xf32> to vector<16x8xf32>
      %163 = vector.broadcast %161 : vector<1x8xf32> to vector<16x8xf32>
      %164 = arith.mulf %162, %163 : vector<16x8xf32>
      %165 = arith.addf %159, %164 : vector<16x8xf32>
      %166 = vector.extract_strided_slice %50 {offsets = [0, 7], sizes = [16, 1], strides = [1, 1]} : vector<16x8xf32> to vector<16x1xf32>
      %167 = vector.broadcast %166 : vector<16x1xf32> to vector<16x8xf32>
      %168 = arith.mulf %165, %167 : vector<16x8xf32>
      %cst_38 = arith.constant dense<0.000000e+00> : vector<8xf32>
      %169 = vector.multi_reduction <add>, %168, %cst_38 [0] : vector<16x8xf32> to vector<8xf32>
      %170 = vector.shape_cast %169 : vector<8xf32> to vector<1x8xf32>
      %c7 = arith.constant 7 : index
      %c0_39 = arith.constant 0 : index
      %171 = vector.load %arg11[%c7, %c0_39] : memref<8x8xf32, #tpu.memory_space<vmem>>, vector<1x8xf32>
      tpu.vector_store %arg11[%c7, %c0_39], %170 {strides = array<i32>} : memref<8x8xf32, #tpu.memory_space<vmem>>, vector<1x8xf32>,
      %c0_40 = arith.constant 0 : index
      %c0_41 = arith.constant 0 : index
      %172 = vector.load %arg10[%c0_40, %c0_41] : memref<16x8xf32, #tpu.memory_space<vmem>>, vector<16x8xf32>
      tpu.vector_store %arg10[%c0_40, %c0_41], %165 {strides = array<i32>} : memref<16x8xf32, #tpu.memory_space<vmem>>, vector<16x8xf32>,
      %c0_42 = arith.constant 0 : index
      %c0_43 = arith.constant 0 : index
      %173 = vector.load %arg11[%c0_42, %c0_43] : memref<8x8xf32, #tpu.memory_space<vmem>>, vector<8x8xf32>
      %174 = vector.broadcast %4 : vector<1x8xf32> to vector<8x8xf32>
      %175 = arith.mulf %174, %11 : vector<8x8xf32>
      %176 = arith.addf %173, %175 : vector<8x8xf32>
      %177 = arith.mulf %176, %42 : vector<8x8xf32>
      %178 = arith.truncf %177 : vector<8x8xf32> to vector<8x8xbf16>
      %c0_44 = arith.constant 0 : index
      %179 = arith.index_cast %7 : i32 to index
      %c0_45 = arith.constant 0 : index
      %180 = vector.load %arg9[%c0_44, %179, %c0_45] : memref<1x256x8xbf16, #tpu.memory_space<vmem>>, vector<1x8x8xbf16>
      %181 = vector.shape_cast %180 : vector<1x8x8xbf16> to vector<8x8xbf16>
      %182 = vector.shape_cast %178 : vector<8x8xbf16> to vector<1x8x8xbf16>
      tpu.vector_store %arg9[%c0_44, %179, %c0_45], %182 {strides = array<i32>} : memref<1x256x8xbf16, #tpu.memory_space<vmem>>, vector<1x8x8xbf16>,
    }
    %c32_i32_5 = arith.constant 32 : i32
    return
  }
  func.func @transform_0(%arg0: i32, %arg1: i32) -> (i32, i32, i32) {
    %c0_i32 = arith.constant 0 : i32
    %c0_i32_0 = arith.constant 0 : i32
    return %arg0, %arg1, %c0_i32 : i32, i32, i32
  }
  func.func @transform_1(%arg0: i32, %arg1: i32) -> (i32, i32, i32) {
    %c0_i32 = arith.constant 0 : i32
    %c0_i32_0 = arith.constant 0 : i32
    return %arg0, %arg1, %c0_i32 : i32, i32, i32
  }
  func.func @transform_2(%arg0: i32, %arg1: i32) -> (i32, i32, i32) {
    %c0_i32 = arith.constant 0 : i32
    %c0_i32_0 = arith.constant 0 : i32
    return %arg0, %arg1, %c0_i32 : i32, i32, i32
  }
  func.func @transform_3(%arg0: i32, %arg1: i32) -> (i32, i32, i32) {
    %c0_i32 = arith.constant 0 : i32
    %c0_i32_0 = arith.constant 0 : i32
    return %arg0, %arg1, %c0_i32 : i32, i32, i32
  }
  func.func @transform_4(%arg0: i32, %arg1: i32) -> (i32, i32, i32) {
    %c0_i32 = arith.constant 0 : i32
    %c0_i32_0 = arith.constant 0 : i32
    return %arg0, %arg1, %c0_i32 : i32, i32, i32
  }
  func.func @transform_5(%arg0: i32, %arg1: i32) -> (i32, i32) {
    %c0_i32 = arith.constant 0 : i32
    %c0_i32_0 = arith.constant 0 : i32
    %c0_i32_1 = arith.constant 0 : i32
    return %c0_i32, %c0_i32_0 : i32, i32
  }
  func.func @transform_6(%arg0: i32, %arg1: i32) -> (i32, i32) {
    %c0_i32 = arith.constant 0 : i32
    %c0_i32_0 = arith.constant 0 : i32
    %c0_i32_1 = arith.constant 0 : i32
    return %c0_i32, %c0_i32_0 : i32, i32
  }
  func.func @transform_7(%arg0: i32, %arg1: i32) -> (i32, i32, i32) {
    %c0_i32 = arith.constant 0 : i32
    %c0_i32_0 = arith.constant 0 : i32
    return %arg0, %arg1, %c0_i32 : i32, i32, i32
  }
}

module attributes {stable_mosaic.version = 11 : i64} {
  func.func @kernel(%arg0: i32, %arg1: memref<512x8xbf16, #tpu.memory_space<vmem>>, %arg2: memref<8x128xbf16, #tpu.memory_space<vmem>>, %arg3: memref<1x1xf32, #tpu.memory_space<smem>>, %arg4: memref<512x128xbf16, #tpu.memory_space<vmem>>) attributes {dimension_semantics = [#tpu.dimension_semantics<parallel>], iteration_bounds = array<i64: 1>, scalar_prefetch = 0 : i64, scratch_operands = 0 : i64, tpu.core_type = #tpu.core_type<tc>, window_params = [{transform_indices = @transform_0, window_bounds = array<i64: 512, 8>}, {pipeline_mode = #tpu.pipeline_mode<synchronous>, transform_indices = @transform_1, window_bounds = array<i64: 8, 128>}, {transform_indices = @transform_2, window_bounds = array<i64: 1, 1>}, {transform_indices = @transform_3, window_bounds = array<i64: 512, 128>}]} {
    %c0 = arith.constant 0 : index
    %c0_0 = arith.constant 0 : index
    %0 = vector.load %arg1[%c0, %c0_0] : memref<512x8xbf16, #tpu.memory_space<vmem>>, vector<512x8xbf16>
    %c0_1 = arith.constant 0 : index
    %c0_2 = arith.constant 0 : index
    %1 = vector.load %arg2[%c0_1, %c0_2] : memref<8x128xbf16, #tpu.memory_space<vmem>>, vector<8x128xbf16>
    %cst = arith.constant dense<0.000000e+00> : vector<512x128xf32>
    %2 = tpu.matmul %0, %1, %cst {dimension_numbers = #tpu.dot_dimension_numbers<[1], [0], [0], [1], [0, 0, 1, 1], [], []>} : vector<512x8xbf16>, vector<8x128xbf16>, vector<512x128xf32> -> vector<512x128xf32>
    %c0_3 = arith.constant 0 : index
    %c0_4 = arith.constant 0 : index
    %3 = memref.load %arg3[%c0_3, %c0_4] : memref<1x1xf32, #tpu.memory_space<smem>>
    %cst_5 = arith.constant 0.000000e+00 : f32
    %4 = vector.broadcast %cst_5 : f32 to vector<512x128xf32>
    %5 = arith.cmpf oge, %2, %4 : vector<512x128xf32>
    %6 = vector.broadcast %3 : f32 to vector<512x128xf32>
    %7 = arith.mulf %6, %2 : vector<512x128xf32>
    %8 = arith.select %5, %2, %7 : vector<512x128xi1>, vector<512x128xf32>
    %9 = arith.truncf %8 : vector<512x128xf32> to vector<512x128xbf16>
    %c0_6 = arith.constant 0 : index
    %c0_7 = arith.constant 0 : index
    %10 = vector.load %arg4[%c0_6, %c0_7] : memref<512x128xbf16, #tpu.memory_space<vmem>>, vector<512x128xbf16>
    tpu.vector_store %arg4[%c0_6, %c0_7], %9 {strides = array<i32>} : memref<512x128xbf16, #tpu.memory_space<vmem>>, vector<512x128xbf16>,
    return
  }
  func.func @transform_0(%arg0: i32) -> (i32, i32) {
    %c0_i32 = arith.constant 0 : i32
    %c0_i32_0 = arith.constant 0 : i32
    return %arg0, %c0_i32 : i32, i32
  }
  func.func @transform_1(%arg0: i32) -> (i32, i32) {
    %c0_i32 = arith.constant 0 : i32
    %c0_i32_0 = arith.constant 0 : i32
    %c0_i32_1 = arith.constant 0 : i32
    return %c0_i32, %c0_i32_0 : i32, i32
  }
  func.func @transform_2(%arg0: i32) -> (i32, i32) {
    %c0_i32 = arith.constant 0 : i32
    %c0_i32_0 = arith.constant 0 : i32
    %c0_i32_1 = arith.constant 0 : i32
    return %c0_i32, %c0_i32_0 : i32, i32
  }
  func.func @transform_3(%arg0: i32) -> (i32, i32) {
    %c0_i32 = arith.constant 0 : i32
    %c0_i32_0 = arith.constant 0 : i32
    return %arg0, %c0_i32 : i32, i32
  }
}

module attributes {stable_mosaic.version = 11 : i64} {
  func.func @kernel(%arg0: i32, %arg1: i32, %arg2: memref<1x18x18x8xbf16, #tpu.memory_space<vmem>>, %arg3: memref<72x128xbf16, #tpu.memory_space<vmem>>, %arg4: memref<1x128xf32, #tpu.memory_space<vmem>>, %arg5: memref<1x128xf32, #tpu.memory_space<vmem>>, %arg6: memref<1x1xf32, #tpu.memory_space<smem>>, %arg7: memref<1x16x16x128xbf16, #tpu.memory_space<vmem>>) attributes {dimension_semantics = [#tpu.dimension_semantics<parallel>, #tpu.dimension_semantics<parallel>], iteration_bounds = array<i64: 2, 1>, scalar_prefetch = 0 : i64, scratch_operands = 0 : i64, tpu.core_type = #tpu.core_type<tc>, window_params = [{transform_indices = @transform_0, window_bounds = array<i64: 1, 18, 18, 8>}, {pipeline_mode = #tpu.pipeline_mode<synchronous>, transform_indices = @transform_1, window_bounds = array<i64: 72, 128>}, {pipeline_mode = #tpu.pipeline_mode<synchronous>, transform_indices = @transform_2, window_bounds = array<i64: 1, 128>}, {pipeline_mode = #tpu.pipeline_mode<synchronous>, transform_indices = @transform_3, window_bounds = array<i64: 1, 128>}, {transform_indices = @transform_4, window_bounds = array<i64: 1, 1>}, {transform_indices = @transform_5, window_bounds = array<i64: 1, 16, 16, 128>}]} {
    %c16_i32 = arith.constant 16 : i32
    %0 = arith.muli %arg1, %c16_i32 : i32
    %c0_i32 = arith.constant 0 : i32
    %1 = arith.addi %0, %c0_i32 : i32
    %c0 = arith.constant 0 : index
    %2 = arith.index_cast %1 : i32 to index
    %c0_0 = arith.constant 0 : index
    %c0_1 = arith.constant 0 : index
    %3 = vector.load %arg2[%c0, %2, %c0_0, %c0_1] : memref<1x18x18x8xbf16, #tpu.memory_space<vmem>>, vector<1x16x16x8xbf16>
    %4 = vector.shape_cast %3 : vector<1x16x16x8xbf16> to vector<16x16x8xbf16>
    %c0_i32_2 = arith.constant 0 : i32
    %5 = arith.addi %0, %c0_i32_2 : i32
    %c0_3 = arith.constant 0 : index
    %6 = arith.index_cast %5 : i32 to index
    %c1 = arith.constant 1 : index
    %c0_4 = arith.constant 0 : index
    %7 = vector.load %arg2[%c0_3, %6, %c1, %c0_4] : memref<1x18x18x8xbf16, #tpu.memory_space<vmem>>, vector<1x16x16x8xbf16>
    %8 = vector.shape_cast %7 : vector<1x16x16x8xbf16> to vector<16x16x8xbf16>
    %c0_i32_5 = arith.constant 0 : i32
    %9 = arith.addi %0, %c0_i32_5 : i32
    %c0_6 = arith.constant 0 : index
    %10 = arith.index_cast %9 : i32 to index
    %c2 = arith.constant 2 : index
    %c0_7 = arith.constant 0 : index
    %11 = vector.load %arg2[%c0_6, %10, %c2, %c0_7] : memref<1x18x18x8xbf16, #tpu.memory_space<vmem>>, vector<1x16x16x8xbf16>
    %12 = vector.shape_cast %11 : vector<1x16x16x8xbf16> to vector<16x16x8xbf16>
    %c1_i32 = arith.constant 1 : i32
    %13 = arith.addi %0, %c1_i32 : i32
    %c0_8 = arith.constant 0 : index
    %14 = arith.index_cast %13 : i32 to index
    %c0_9 = arith.constant 0 : index
    %c0_10 = arith.constant 0 : index
    %15 = vector.load %arg2[%c0_8, %14, %c0_9, %c0_10] : memref<1x18x18x8xbf16, #tpu.memory_space<vmem>>, vector<1x16x16x8xbf16>
    %16 = vector.shape_cast %15 : vector<1x16x16x8xbf16> to vector<16x16x8xbf16>
    %c1_i32_11 = arith.constant 1 : i32
    %17 = arith.addi %0, %c1_i32_11 : i32
    %c0_12 = arith.constant 0 : index
    %18 = arith.index_cast %17 : i32 to index
    %c1_13 = arith.constant 1 : index
    %c0_14 = arith.constant 0 : index
    %19 = vector.load %arg2[%c0_12, %18, %c1_13, %c0_14] : memref<1x18x18x8xbf16, #tpu.memory_space<vmem>>, vector<1x16x16x8xbf16>
    %20 = vector.shape_cast %19 : vector<1x16x16x8xbf16> to vector<16x16x8xbf16>
    %c1_i32_15 = arith.constant 1 : i32
    %21 = arith.addi %0, %c1_i32_15 : i32
    %c0_16 = arith.constant 0 : index
    %22 = arith.index_cast %21 : i32 to index
    %c2_17 = arith.constant 2 : index
    %c0_18 = arith.constant 0 : index
    %23 = vector.load %arg2[%c0_16, %22, %c2_17, %c0_18] : memref<1x18x18x8xbf16, #tpu.memory_space<vmem>>, vector<1x16x16x8xbf16>
    %24 = vector.shape_cast %23 : vector<1x16x16x8xbf16> to vector<16x16x8xbf16>
    %c2_i32 = arith.constant 2 : i32
    %25 = arith.addi %0, %c2_i32 : i32
    %c0_19 = arith.constant 0 : index
    %26 = arith.index_cast %25 : i32 to index
    %c0_20 = arith.constant 0 : index
    %c0_21 = arith.constant 0 : index
    %27 = vector.load %arg2[%c0_19, %26, %c0_20, %c0_21] : memref<1x18x18x8xbf16, #tpu.memory_space<vmem>>, vector<1x16x16x8xbf16>
    %28 = vector.shape_cast %27 : vector<1x16x16x8xbf16> to vector<16x16x8xbf16>
    %c2_i32_22 = arith.constant 2 : i32
    %29 = arith.addi %0, %c2_i32_22 : i32
    %c0_23 = arith.constant 0 : index
    %30 = arith.index_cast %29 : i32 to index
    %c1_24 = arith.constant 1 : index
    %c0_25 = arith.constant 0 : index
    %31 = vector.load %arg2[%c0_23, %30, %c1_24, %c0_25] : memref<1x18x18x8xbf16, #tpu.memory_space<vmem>>, vector<1x16x16x8xbf16>
    %32 = vector.shape_cast %31 : vector<1x16x16x8xbf16> to vector<16x16x8xbf16>
    %c2_i32_26 = arith.constant 2 : i32
    %33 = arith.addi %0, %c2_i32_26 : i32
    %c0_27 = arith.constant 0 : index
    %34 = arith.index_cast %33 : i32 to index
    %c2_28 = arith.constant 2 : index
    %c0_29 = arith.constant 0 : index
    %35 = vector.load %arg2[%c0_27, %34, %c2_28, %c0_29] : memref<1x18x18x8xbf16, #tpu.memory_space<vmem>>, vector<1x16x16x8xbf16>
    %36 = vector.shape_cast %35 : vector<1x16x16x8xbf16> to vector<16x16x8xbf16>
    %37 = tpu.concatenate %4, %8, %12, %16, %20, %24, %28, %32, %36 in 2 : vector<16x16x8xbf16>, vector<16x16x8xbf16>, vector<16x16x8xbf16>, vector<16x16x8xbf16>, vector<16x16x8xbf16>, vector<16x16x8xbf16>, vector<16x16x8xbf16>, vector<16x16x8xbf16>, vector<16x16x8xbf16> -> vector<16x16x72xbf16>
    %38 = vector.shape_cast %37 : vector<16x16x72xbf16> to vector<256x72xbf16>
    %c0_30 = arith.constant 0 : index
    %c0_31 = arith.constant 0 : index
    %39 = vector.load %arg3[%c0_30, %c0_31] : memref<72x128xbf16, #tpu.memory_space<vmem>>, vector<72x128xbf16>
    %cst = arith.constant dense<0.000000e+00> : vector<256x128xf32>
    %40 = tpu.matmul %38, %39, %cst {dimension_numbers = #tpu.dot_dimension_numbers<[1], [0], [0], [1], [0, 0, 1, 1], [], []>} : vector<256x72xbf16>, vector<72x128xbf16>, vector<256x128xf32> -> vector<256x128xf32>
    %c0_32 = arith.constant 0 : index
    %c0_33 = arith.constant 0 : index
    %41 = vector.load %arg4[%c0_32, %c0_33] : memref<1x128xf32, #tpu.memory_space<vmem>>, vector<1x128xf32>
    %42 = vector.broadcast %41 : vector<1x128xf32> to vector<256x128xf32>
    %43 = arith.mulf %40, %42 : vector<256x128xf32>
    %c0_34 = arith.constant 0 : index
    %c0_35 = arith.constant 0 : index
    %44 = vector.load %arg5[%c0_34, %c0_35] : memref<1x128xf32, #tpu.memory_space<vmem>>, vector<1x128xf32>
    %45 = vector.broadcast %44 : vector<1x128xf32> to vector<256x128xf32>
    %46 = arith.addf %43, %45 : vector<256x128xf32>
    %c0_36 = arith.constant 0 : index
    %c0_37 = arith.constant 0 : index
    %47 = memref.load %arg6[%c0_36, %c0_37] : memref<1x1xf32, #tpu.memory_space<smem>>
    %cst_38 = arith.constant 0.000000e+00 : f32
    %48 = vector.broadcast %cst_38 : f32 to vector<256x128xf32>
    %49 = arith.cmpf oge, %46, %48 : vector<256x128xf32>
    %50 = vector.broadcast %47 : f32 to vector<256x128xf32>
    %51 = arith.mulf %50, %46 : vector<256x128xf32>
    %52 = arith.select %49, %46, %51 : vector<256x128xi1>, vector<256x128xf32>
    %53 = vector.shape_cast %52 : vector<256x128xf32> to vector<16x16x128xf32>
    %54 = arith.truncf %53 : vector<16x16x128xf32> to vector<16x16x128xbf16>
    %c0_39 = arith.constant 0 : index
    %c0_40 = arith.constant 0 : index
    %c0_41 = arith.constant 0 : index
    %c0_42 = arith.constant 0 : index
    %55 = vector.load %arg7[%c0_39, %c0_40, %c0_41, %c0_42] : memref<1x16x16x128xbf16, #tpu.memory_space<vmem>>, vector<1x16x16x128xbf16>
    %56 = vector.shape_cast %55 : vector<1x16x16x128xbf16> to vector<16x16x128xbf16>
    %57 = vector.shape_cast %54 : vector<16x16x128xbf16> to vector<1x16x16x128xbf16>
    tpu.vector_store %arg7[%c0_39, %c0_40, %c0_41, %c0_42], %57 {strides = array<i32>} : memref<1x16x16x128xbf16, #tpu.memory_space<vmem>>, vector<1x16x16x128xbf16>,
    return
  }
  func.func @transform_0(%arg0: i32, %arg1: i32) -> (i32, i32, i32, i32) {
    %c0_i32 = arith.constant 0 : i32
    %c0_i32_0 = arith.constant 0 : i32
    %c0_i32_1 = arith.constant 0 : i32
    %c0_i32_2 = arith.constant 0 : i32
    return %arg0, %c0_i32, %c0_i32_0, %c0_i32_1 : i32, i32, i32, i32
  }
  func.func @transform_1(%arg0: i32, %arg1: i32) -> (i32, i32) {
    %c0_i32 = arith.constant 0 : i32
    %c0_i32_0 = arith.constant 0 : i32
    %c0_i32_1 = arith.constant 0 : i32
    return %c0_i32, %c0_i32_0 : i32, i32
  }
  func.func @transform_2(%arg0: i32, %arg1: i32) -> (i32, i32) {
    %c0_i32 = arith.constant 0 : i32
    %c0_i32_0 = arith.constant 0 : i32
    %c0_i32_1 = arith.constant 0 : i32
    return %c0_i32, %c0_i32_0 : i32, i32
  }
  func.func @transform_3(%arg0: i32, %arg1: i32) -> (i32, i32) {
    %c0_i32 = arith.constant 0 : i32
    %c0_i32_0 = arith.constant 0 : i32
    %c0_i32_1 = arith.constant 0 : i32
    return %c0_i32, %c0_i32_0 : i32, i32
  }
  func.func @transform_4(%arg0: i32, %arg1: i32) -> (i32, i32) {
    %c0_i32 = arith.constant 0 : i32
    %c0_i32_0 = arith.constant 0 : i32
    %c0_i32_1 = arith.constant 0 : i32
    return %c0_i32, %c0_i32_0 : i32, i32
  }
  func.func @transform_5(%arg0: i32, %arg1: i32) -> (i32, i32, i32, i32) {
    %c0_i32 = arith.constant 0 : i32
    %c0_i32_0 = arith.constant 0 : i32
    %c0_i32_1 = arith.constant 0 : i32
    return %arg0, %arg1, %c0_i32, %c0_i32_0 : i32, i32, i32, i32
  }
}

module attributes {stable_mosaic.version = 11 : i64} {
  func.func @kernel(%arg0: i32, %arg1: memref<512x4xbf16, #tpu.memory_space<vmem>>, %arg2: memref<4x128xbf16, #tpu.memory_space<vmem>>, %arg3: memref<1x128xf32, #tpu.memory_space<vmem>>, %arg4: memref<1x128xf32, #tpu.memory_space<vmem>>, %arg5: memref<512x128xf32, #tpu.memory_space<vmem>>) attributes {dimension_semantics = [#tpu.dimension_semantics<parallel>], iteration_bounds = array<i64: 1>, scalar_prefetch = 0 : i64, scratch_operands = 0 : i64, tpu.core_type = #tpu.core_type<tc>, window_params = [{transform_indices = @transform_0, window_bounds = array<i64: 512, 4>}, {pipeline_mode = #tpu.pipeline_mode<synchronous>, transform_indices = @transform_1, window_bounds = array<i64: 4, 128>}, {pipeline_mode = #tpu.pipeline_mode<synchronous>, transform_indices = @transform_2, window_bounds = array<i64: 1, 128>}, {pipeline_mode = #tpu.pipeline_mode<synchronous>, transform_indices = @transform_3, window_bounds = array<i64: 1, 128>}, {transform_indices = @transform_4, window_bounds = array<i64: 512, 128>}]} {
    %c0 = arith.constant 0 : index
    %c0_0 = arith.constant 0 : index
    %0 = vector.load %arg1[%c0, %c0_0] : memref<512x4xbf16, #tpu.memory_space<vmem>>, vector<512x4xbf16>
    %c0_1 = arith.constant 0 : index
    %c0_2 = arith.constant 0 : index
    %1 = vector.load %arg2[%c0_1, %c0_2] : memref<4x128xbf16, #tpu.memory_space<vmem>>, vector<4x128xbf16>
    %cst = arith.constant dense<0.000000e+00> : vector<512x128xf32>
    %2 = tpu.matmul %0, %1, %cst {dimension_numbers = #tpu.dot_dimension_numbers<[1], [0], [0], [1], [0, 0, 1, 1], [], []>} : vector<512x4xbf16>, vector<4x128xbf16>, vector<512x128xf32> -> vector<512x128xf32>
    %c0_3 = arith.constant 0 : index
    %c0_4 = arith.constant 0 : index
    %3 = vector.load %arg3[%c0_3, %c0_4] : memref<1x128xf32, #tpu.memory_space<vmem>>, vector<1x128xf32>
    %4 = vector.broadcast %3 : vector<1x128xf32> to vector<512x128xf32>
    %5 = arith.mulf %2, %4 : vector<512x128xf32>
    %c0_5 = arith.constant 0 : index
    %c0_6 = arith.constant 0 : index
    %6 = vector.load %arg4[%c0_5, %c0_6] : memref<1x128xf32, #tpu.memory_space<vmem>>, vector<1x128xf32>
    %7 = vector.broadcast %6 : vector<1x128xf32> to vector<512x128xf32>
    %8 = arith.addf %5, %7 : vector<512x128xf32>
    %c0_7 = arith.constant 0 : index
    %c0_8 = arith.constant 0 : index
    %9 = vector.load %arg5[%c0_7, %c0_8] : memref<512x128xf32, #tpu.memory_space<vmem>>, vector<512x128xf32>
    tpu.vector_store %arg5[%c0_7, %c0_8], %8 {strides = array<i32>} : memref<512x128xf32, #tpu.memory_space<vmem>>, vector<512x128xf32>,
    return
  }
  func.func @transform_0(%arg0: i32) -> (i32, i32) {
    %c0_i32 = arith.constant 0 : i32
    %c0_i32_0 = arith.constant 0 : i32
    return %arg0, %c0_i32 : i32, i32
  }
  func.func @transform_1(%arg0: i32) -> (i32, i32) {
    %c0_i32 = arith.constant 0 : i32
    %c0_i32_0 = arith.constant 0 : i32
    %c0_i32_1 = arith.constant 0 : i32
    return %c0_i32, %c0_i32_0 : i32, i32
  }
  func.func @transform_2(%arg0: i32) -> (i32, i32) {
    %c0_i32 = arith.constant 0 : i32
    %c0_i32_0 = arith.constant 0 : i32
    %c0_i32_1 = arith.constant 0 : i32
    return %c0_i32, %c0_i32_0 : i32, i32
  }
  func.func @transform_3(%arg0: i32) -> (i32, i32) {
    %c0_i32 = arith.constant 0 : i32
    %c0_i32_0 = arith.constant 0 : i32
    %c0_i32_1 = arith.constant 0 : i32
    return %c0_i32, %c0_i32_0 : i32, i32
  }
  func.func @transform_4(%arg0: i32) -> (i32, i32) {
    %c0_i32 = arith.constant 0 : i32
    %c0_i32_0 = arith.constant 0 : i32
    return %arg0, %c0_i32 : i32, i32
  }
}

module attributes {stable_mosaic.version = 11 : i64} {
  func.func @kernel(%arg0: i32, %arg1: i32, %arg2: memref<1x18x18x128xbf16, #tpu.memory_space<vmem>>, %arg3: memref<72x128xbf16, #tpu.memory_space<vmem>>, %arg4: memref<1x128xf32, #tpu.memory_space<vmem>>, %arg5: memref<1x128xf32, #tpu.memory_space<vmem>>, %arg6: memref<1x1xf32, #tpu.memory_space<smem>>, %arg7: memref<1x16x16x128xf32, #tpu.memory_space<vmem>>, %arg8: memref<1x16x16x128xf32, #tpu.memory_space<vmem>>) attributes {dimension_semantics = [#tpu.dimension_semantics<parallel>, #tpu.dimension_semantics<parallel>], iteration_bounds = array<i64: 2, 1>, scalar_prefetch = 0 : i64, scratch_operands = 0 : i64, tpu.core_type = #tpu.core_type<tc>, window_params = [{transform_indices = @transform_0, window_bounds = array<i64: 1, 18, 18, 128>}, {pipeline_mode = #tpu.pipeline_mode<synchronous>, transform_indices = @transform_1, window_bounds = array<i64: 72, 128>}, {pipeline_mode = #tpu.pipeline_mode<synchronous>, transform_indices = @transform_2, window_bounds = array<i64: 1, 128>}, {pipeline_mode = #tpu.pipeline_mode<synchronous>, transform_indices = @transform_3, window_bounds = array<i64: 1, 128>}, {transform_indices = @transform_4, window_bounds = array<i64: 1, 1>}, {transform_indices = @transform_5, window_bounds = array<i64: 1, 16, 16, 128>}, {transform_indices = @transform_6, window_bounds = array<i64: 1, 16, 16, 128>}]} {
    %c16_i32 = arith.constant 16 : i32
    %0 = arith.muli %arg1, %c16_i32 : i32
    %c0_i32 = arith.constant 0 : i32
    %1 = arith.addi %0, %c0_i32 : i32
    %c0 = arith.constant 0 : index
    %2 = arith.index_cast %1 : i32 to index
    %c0_0 = arith.constant 0 : index
    %c0_1 = arith.constant 0 : index
    %3 = vector.load %arg2[%c0, %2, %c0_0, %c0_1] : memref<1x18x18x128xbf16, #tpu.memory_space<vmem>>, vector<1x16x16x8xbf16>
    %4 = vector.shape_cast %3 : vector<1x16x16x8xbf16> to vector<16x16x8xbf16>
    %c0_i32_2 = arith.constant 0 : i32
    %5 = arith.addi %0, %c0_i32_2 : i32
    %c0_3 = arith.constant 0 : index
    %6 = arith.index_cast %5 : i32 to index
    %c1 = arith.constant 1 : index
    %c0_4 = arith.constant 0 : index
    %7 = vector.load %arg2[%c0_3, %6, %c1, %c0_4] : memref<1x18x18x128xbf16, #tpu.memory_space<vmem>>, vector<1x16x16x8xbf16>
    %8 = vector.shape_cast %7 : vector<1x16x16x8xbf16> to vector<16x16x8xbf16>
    %c0_i32_5 = arith.constant 0 : i32
    %9 = arith.addi %0, %c0_i32_5 : i32
    %c0_6 = arith.constant 0 : index
    %10 = arith.index_cast %9 : i32 to index
    %c2 = arith.constant 2 : index
    %c0_7 = arith.constant 0 : index
    %11 = vector.load %arg2[%c0_6, %10, %c2, %c0_7] : memref<1x18x18x128xbf16, #tpu.memory_space<vmem>>, vector<1x16x16x8xbf16>
    %12 = vector.shape_cast %11 : vector<1x16x16x8xbf16> to vector<16x16x8xbf16>
    %c1_i32 = arith.constant 1 : i32
    %13 = arith.addi %0, %c1_i32 : i32
    %c0_8 = arith.constant 0 : index
    %14 = arith.index_cast %13 : i32 to index
    %c0_9 = arith.constant 0 : index
    %c0_10 = arith.constant 0 : index
    %15 = vector.load %arg2[%c0_8, %14, %c0_9, %c0_10] : memref<1x18x18x128xbf16, #tpu.memory_space<vmem>>, vector<1x16x16x8xbf16>
    %16 = vector.shape_cast %15 : vector<1x16x16x8xbf16> to vector<16x16x8xbf16>
    %c1_i32_11 = arith.constant 1 : i32
    %17 = arith.addi %0, %c1_i32_11 : i32
    %c0_12 = arith.constant 0 : index
    %18 = arith.index_cast %17 : i32 to index
    %c1_13 = arith.constant 1 : index
    %c0_14 = arith.constant 0 : index
    %19 = vector.load %arg2[%c0_12, %18, %c1_13, %c0_14] : memref<1x18x18x128xbf16, #tpu.memory_space<vmem>>, vector<1x16x16x8xbf16>
    %20 = vector.shape_cast %19 : vector<1x16x16x8xbf16> to vector<16x16x8xbf16>
    %c1_i32_15 = arith.constant 1 : i32
    %21 = arith.addi %0, %c1_i32_15 : i32
    %c0_16 = arith.constant 0 : index
    %22 = arith.index_cast %21 : i32 to index
    %c2_17 = arith.constant 2 : index
    %c0_18 = arith.constant 0 : index
    %23 = vector.load %arg2[%c0_16, %22, %c2_17, %c0_18] : memref<1x18x18x128xbf16, #tpu.memory_space<vmem>>, vector<1x16x16x8xbf16>
    %24 = vector.shape_cast %23 : vector<1x16x16x8xbf16> to vector<16x16x8xbf16>
    %c2_i32 = arith.constant 2 : i32
    %25 = arith.addi %0, %c2_i32 : i32
    %c0_19 = arith.constant 0 : index
    %26 = arith.index_cast %25 : i32 to index
    %c0_20 = arith.constant 0 : index
    %c0_21 = arith.constant 0 : index
    %27 = vector.load %arg2[%c0_19, %26, %c0_20, %c0_21] : memref<1x18x18x128xbf16, #tpu.memory_space<vmem>>, vector<1x16x16x8xbf16>
    %28 = vector.shape_cast %27 : vector<1x16x16x8xbf16> to vector<16x16x8xbf16>
    %c2_i32_22 = arith.constant 2 : i32
    %29 = arith.addi %0, %c2_i32_22 : i32
    %c0_23 = arith.constant 0 : index
    %30 = arith.index_cast %29 : i32 to index
    %c1_24 = arith.constant 1 : index
    %c0_25 = arith.constant 0 : index
    %31 = vector.load %arg2[%c0_23, %30, %c1_24, %c0_25] : memref<1x18x18x128xbf16, #tpu.memory_space<vmem>>, vector<1x16x16x8xbf16>
    %32 = vector.shape_cast %31 : vector<1x16x16x8xbf16> to vector<16x16x8xbf16>
    %c2_i32_26 = arith.constant 2 : i32
    %33 = arith.addi %0, %c2_i32_26 : i32
    %c0_27 = arith.constant 0 : index
    %34 = arith.index_cast %33 : i32 to index
    %c2_28 = arith.constant 2 : index
    %c0_29 = arith.constant 0 : index
    %35 = vector.load %arg2[%c0_27, %34, %c2_28, %c0_29] : memref<1x18x18x128xbf16, #tpu.memory_space<vmem>>, vector<1x16x16x8xbf16>
    %36 = vector.shape_cast %35 : vector<1x16x16x8xbf16> to vector<16x16x8xbf16>
    %37 = tpu.concatenate %4, %8, %12, %16, %20, %24, %28, %32, %36 in 2 : vector<16x16x8xbf16>, vector<16x16x8xbf16>, vector<16x16x8xbf16>, vector<16x16x8xbf16>, vector<16x16x8xbf16>, vector<16x16x8xbf16>, vector<16x16x8xbf16>, vector<16x16x8xbf16>, vector<16x16x8xbf16> -> vector<16x16x72xbf16>
    %38 = vector.shape_cast %37 : vector<16x16x72xbf16> to vector<256x72xbf16>
    %c0_30 = arith.constant 0 : index
    %c0_31 = arith.constant 0 : index
    %39 = vector.load %arg3[%c0_30, %c0_31] : memref<72x128xbf16, #tpu.memory_space<vmem>>, vector<72x128xbf16>
    %cst = arith.constant dense<0.000000e+00> : vector<256x128xf32>
    %40 = tpu.matmul %38, %39, %cst {dimension_numbers = #tpu.dot_dimension_numbers<[1], [0], [0], [1], [0, 0, 1, 1], [], []>} : vector<256x72xbf16>, vector<72x128xbf16>, vector<256x128xf32> -> vector<256x128xf32>
    %c0_32 = arith.constant 0 : index
    %c0_33 = arith.constant 0 : index
    %41 = vector.load %arg4[%c0_32, %c0_33] : memref<1x128xf32, #tpu.memory_space<vmem>>, vector<1x128xf32>
    %42 = vector.broadcast %41 : vector<1x128xf32> to vector<256x128xf32>
    %43 = arith.mulf %40, %42 : vector<256x128xf32>
    %c0_34 = arith.constant 0 : index
    %c0_35 = arith.constant 0 : index
    %44 = vector.load %arg5[%c0_34, %c0_35] : memref<1x128xf32, #tpu.memory_space<vmem>>, vector<1x128xf32>
    %45 = vector.broadcast %44 : vector<1x128xf32> to vector<256x128xf32>
    %46 = arith.addf %43, %45 : vector<256x128xf32>
    %c0_36 = arith.constant 0 : index
    %c0_37 = arith.constant 0 : index
    %47 = memref.load %arg6[%c0_36, %c0_37] : memref<1x1xf32, #tpu.memory_space<smem>>
    %cst_38 = arith.constant 0.000000e+00 : f32
    %48 = vector.broadcast %cst_38 : f32 to vector<256x128xf32>
    %49 = arith.cmpf oge, %46, %48 : vector<256x128xf32>
    %50 = vector.broadcast %47 : f32 to vector<256x128xf32>
    %51 = arith.mulf %50, %46 : vector<256x128xf32>
    %52 = arith.select %49, %46, %51 : vector<256x128xi1>, vector<256x128xf32>
    %53 = vector.shape_cast %52 : vector<256x128xf32> to vector<16x16x128xf32>
    %c0_39 = arith.constant 0 : index
    %c0_40 = arith.constant 0 : index
    %c0_41 = arith.constant 0 : index
    %c0_42 = arith.constant 0 : index
    %54 = vector.load %arg7[%c0_39, %c0_40, %c0_41, %c0_42] : memref<1x16x16x128xf32, #tpu.memory_space<vmem>>, vector<1x16x16x128xf32>
    %55 = vector.shape_cast %54 : vector<1x16x16x128xf32> to vector<16x16x128xf32>
    %56 = arith.addf %53, %55 : vector<16x16x128xf32>
    %c0_43 = arith.constant 0 : index
    %c0_44 = arith.constant 0 : index
    %c0_45 = arith.constant 0 : index
    %c0_46 = arith.constant 0 : index
    %57 = vector.load %arg8[%c0_43, %c0_44, %c0_45, %c0_46] : memref<1x16x16x128xf32, #tpu.memory_space<vmem>>, vector<1x16x16x128xf32>
    %58 = vector.shape_cast %57 : vector<1x16x16x128xf32> to vector<16x16x128xf32>
    %59 = vector.shape_cast %56 : vector<16x16x128xf32> to vector<1x16x16x128xf32>
    tpu.vector_store %arg8[%c0_43, %c0_44, %c0_45, %c0_46], %59 {strides = array<i32>} : memref<1x16x16x128xf32, #tpu.memory_space<vmem>>, vector<1x16x16x128xf32>,
    return
  }
  func.func @transform_0(%arg0: i32, %arg1: i32) -> (i32, i32, i32, i32) {
    %c0_i32 = arith.constant 0 : i32
    %c0_i32_0 = arith.constant 0 : i32
    %c0_i32_1 = arith.constant 0 : i32
    %c0_i32_2 = arith.constant 0 : i32
    return %arg0, %c0_i32, %c0_i32_0, %c0_i32_1 : i32, i32, i32, i32
  }
  func.func @transform_1(%arg0: i32, %arg1: i32) -> (i32, i32) {
    %c0_i32 = arith.constant 0 : i32
    %c0_i32_0 = arith.constant 0 : i32
    %c0_i32_1 = arith.constant 0 : i32
    return %c0_i32, %c0_i32_0 : i32, i32
  }
  func.func @transform_2(%arg0: i32, %arg1: i32) -> (i32, i32) {
    %c0_i32 = arith.constant 0 : i32
    %c0_i32_0 = arith.constant 0 : i32
    %c0_i32_1 = arith.constant 0 : i32
    return %c0_i32, %c0_i32_0 : i32, i32
  }
  func.func @transform_3(%arg0: i32, %arg1: i32) -> (i32, i32) {
    %c0_i32 = arith.constant 0 : i32
    %c0_i32_0 = arith.constant 0 : i32
    %c0_i32_1 = arith.constant 0 : i32
    return %c0_i32, %c0_i32_0 : i32, i32
  }
  func.func @transform_4(%arg0: i32, %arg1: i32) -> (i32, i32) {
    %c0_i32 = arith.constant 0 : i32
    %c0_i32_0 = arith.constant 0 : i32
    %c0_i32_1 = arith.constant 0 : i32
    return %c0_i32, %c0_i32_0 : i32, i32
  }
  func.func @transform_5(%arg0: i32, %arg1: i32) -> (i32, i32, i32, i32) {
    %c0_i32 = arith.constant 0 : i32
    %c0_i32_0 = arith.constant 0 : i32
    %c0_i32_1 = arith.constant 0 : i32
    return %arg0, %arg1, %c0_i32, %c0_i32_0 : i32, i32, i32, i32
  }
  func.func @transform_6(%arg0: i32, %arg1: i32) -> (i32, i32, i32, i32) {
    %c0_i32 = arith.constant 0 : i32
    %c0_i32_0 = arith.constant 0 : i32
    %c0_i32_1 = arith.constant 0 : i32
    return %arg0, %arg1, %c0_i32, %c0_i32_0 : i32, i32, i32, i32
  }
}

</mosaic_0001>

<llo_original>
// kernel: mcc_block_forward.9
$region0: #{mcc_block_forward.9}
  #allocation0 [shape = 'u32[]', space=smem, size = 0x4, offset = 0x4, fixed_abs, tag = 'smem constant byte address 0x4 - core index']
  #allocation1 [shape = 'u32[144,128]{1,0:T(1,128)}', space=vmem, size = 0x12000, scoped, tag = 'internal scratch']
  %s0 = inlined_call_operand.vmem [shape: bf16[512,4], index: 0, kind: input, shape index: {}]
  %s1 = inlined_call_operand.vmem [shape: bf16[4,128], index: 1, kind: input, shape index: {}]
  %s2 = inlined_call_operand.vmem [shape: bf16[512,128], index: 2, kind: output, shape index: {}]
  %s3 = sld [smem:[#allocation0]]
  $region18: #{mcc_block_forward.9} parent=0
    _
  %s5 = ssub.s32 1, %s3
  %s6 = scalar_select 0, %s5, %s3
  // Predicated region
  $region2: #{mcc_block_forward.9} parent=0 // pred_check
    _
  $region3: #{mcc_block_forward.9} parent=0 // pred_check_branch
    %8 = sbr.rel (0) target = $region5
  $region4: #{mcc_block_forward.9} parent=0 // pred_region
    _
  $region5: #{mcc_block_forward.9} parent=0 // pred_fallthru
    _
  // Predicated region
  $region6: #{mcc_block_forward.9} parent=0 // pred_check
    _
  $region7: #{mcc_block_forward.9} parent=0 // pred_check_branch
    %10 = sbr.rel (0) target = $region9
  $region8: #{mcc_block_forward.9} parent=0 // pred_region
    _
  $region9: #{mcc_block_forward.9} parent=0 // pred_fallthru
    _
  %v12 = vld [vmem:[%s0] sm:$0xf]
  %v13 = vld [vmem:[%s0 + $0x4] sm:$0xf]
  %v14 = vld [vmem:[%s0 + $0x8] sm:$0xf]
  %v15 = vld [vmem:[%s0 + $0xc] sm:$0xf]
  %v16 = vld [vmem:[%s0 + $0x10] sm:$0xf]
  %v17 = vld [vmem:[%s0 + $0x14] sm:$0xf]
  %v18 = vld [vmem:[%s0 + $0x18] sm:$0xf]
  %v19 = vld [vmem:[%s0 + $0x1c] sm:$0xf]
  %v20 = vld [vmem:[%s0 + $0x20] sm:$0xf]
  %v21 = vld [vmem:[%s0 + $0x24] sm:$0xf]
  %v22 = vld [vmem:[%s0 + $0x28] sm:$0xf]
  %v23 = vld [vmem:[%s0 + $0x2c] sm:$0xf]
  %v24 = vld [vmem:[%s0 + $0x30] sm:$0xf]
  %v25 = vld [vmem:[%s0 + $0x34] sm:$0xf]
  %v26 = vld [vmem:[%s0 + $0x38] sm:$0xf]
  %v27 = vld [vmem:[%s0 + $0x3c] sm:$0xf]
  %v28 = vld [vmem:[%s0 + $0x40] sm:$0xf]
  %v29 = vld [vmem:[%s0 + $0x44] sm:$0xf]
  %v30 = vld [vmem:[%s0 + $0x48] sm:$0xf]
  %v31 = vld [vmem:[%s0 + $0x4c] sm:$0xf]
  %v32 = vld [vmem:[%s0 + $0x50] sm:$0xf]
  %v33 = vld [vmem:[%s0 + $0x54] sm:$0xf]
  %v34 = vld [vmem:[%s0 + $0x58] sm:$0xf]
  %v35 = vld [vmem:[%s0 + $0x5c] sm:$0xf]
  %v36 = vld [vmem:[%s0 + $0x60] sm:$0xf]
  %v37 = vld [vmem:[%s0 + $0x64] sm:$0xf]
  %v38 = vld [vmem:[%s0 + $0x68] sm:$0xf]
  %v39 = vld [vmem:[%s0 + $0x6c] sm:$0xf]
  %v40 = vld [vmem:[%s0 + $0x70] sm:$0xf]
  %v41 = vld [vmem:[%s0 + $0x74] sm:$0xf]
  %v42 = vld [vmem:[%s0 + $0x78] sm:$0xf]
  %v43 = vld [vmem:[%s0 + $0x7c] sm:$0xf]
  %v44 = vld [vmem:[%s0 + $0x80] sm:$0xf]
  %v45 = vld [vmem:[%s0 + $0x84] sm:$0xf]
  %v46 = vld [vmem:[%s0 + $0x88] sm:$0xf]
  %v47 = vld [vmem:[%s0 + $0x8c] sm:$0xf]
  %v48 = vld [vmem:[%s0 + $0x90] sm:$0xf]
  %v49 = vld [vmem:[%s0 + $0x94] sm:$0xf]
  %v50 = vld [vmem:[%s0 + $0x98] sm:$0xf]
  %v51 = vld [vmem:[%s0 + $0x9c] sm:$0xf]
  %v52 = vld [vmem:[%s0 + $0xa0] sm:$0xf]
  %v53 = vld [vmem:[%s0 + $0xa4] sm:$0xf]
  %v54 = vld [vmem:[%s0 + $0xa8] sm:$0xf]
  %v55 = vld [vmem:[%s0 + $0xac] sm:$0xf]
  %v56 = vld [vmem:[%s0 + $0xb0] sm:$0xf]
  %v57 = vld [vmem:[%s0 + $0xb4] sm:$0xf]
  %v58 = vld [vmem:[%s0 + $0xb8] sm:$0xf]
  %v59 = vld [vmem:[%s0 + $0xbc] sm:$0xf]
  %v60 = vld [vmem:[%s0 + $0xc0] sm:$0xf]
  %v61 = vld [vmem:[%s0 + $0xc4] sm:$0xf]
  %v62 = vld [vmem:[%s0 + $0xc8] sm:$0xf]
  %v63 = vld [vmem:[%s0 + $0xcc] sm:$0xf]
  %v64 = vld [vmem:[%s0 + $0xd0] sm:$0xf]
  %v65 = vld [vmem:[%s0 + $0xd4] sm:$0xf]
  %v66 = vld [vmem:[%s0 + $0xd8] sm:$0xf]
  %v67 = vld [vmem:[%s0 + $0xdc] sm:$0xf]
  %v68 = vld [vmem:[%s0 + $0xe0] sm:$0xf]
  %v69 = vld [vmem:[%s0 + $0xe4] sm:$0xf]
  %v70 = vld [vmem:[%s0 + $0xe8] sm:$0xf]
  %v71 = vld [vmem:[%s0 + $0xec] sm:$0xf]
  %v72 = vld [vmem:[%s0 + $0xf0] sm:$0xf]
  %v73 = vld [vmem:[%s0 + $0xf4] sm:$0xf]
  %v74 = vld [vmem:[%s0 + $0xf8] sm:$0xf]
  %v75 = vld [vmem:[%s0 + $0xfc] sm:$0xf]
  %v76 = vld [vmem:[%s1] sm:$0x3]
  %v141 = vunpack.c.l.b16 %v12
  %v142 = vunpack.c.l.b16 %v13
  %v143 = vunpack.c.l.b16 %v14
  %v144 = vunpack.c.l.b16 %v15
  %v145 = vunpack.c.l.b16 %v16
  %v146 = vunpack.c.l.b16 %v17
  %v147 = vunpack.c.l.b16 %v18
  %v148 = vunpack.c.l.b16 %v19
  %v149 = vunpack.c.l.b16 %v20
  %v150 = vunpack.c.l.b16 %v21
  %v151 = vunpack.c.l.b16 %v22
  %v152 = vunpack.c.l.b16 %v23
  %v153 = vunpack.c.l.b16 %v24
  %v154 = vunpack.c.l.b16 %v25
  %v155 = vunpack.c.l.b16 %v26
  %v156 = vunpack.c.l.b16 %v27
  %v157 = vunpack.c.l.b16 %v28
  %v158 = vunpack.c.l.b16 %v29
  %v159 = vunpack.c.l.b16 %v30
  %v160 = vunpack.c.l.b16 %v31
  %v161 = vunpack.c.l.b16 %v32
  %v162 = vunpack.c.l.b16 %v33
  %v163 = vunpack.c.l.b16 %v34
  %v164 = vunpack.c.l.b16 %v35
  %v165 = vunpack.c.l.b16 %v36
  %v166 = vunpack.c.l.b16 %v37
  %v167 = vunpack.c.l.b16 %v38
  %v168 = vunpack.c.l.b16 %v39
  %v169 = vunpack.c.l.b16 %v40
  %v170 = vunpack.c.l.b16 %v41
  %v171 = vunpack.c.l.b16 %v42
  %v172 = vunpack.c.l.b16 %v43
  %v173 = vunpack.c.l.b16 %v44
  %v174 = vunpack.c.l.b16 %v45
  %v175 = vunpack.c.l.b16 %v46
  %v176 = vunpack.c.l.b16 %v47
  %v177 = vunpack.c.l.b16 %v48
  %v178 = vunpack.c.l.b16 %v49
  %v179 = vunpack.c.l.b16 %v50
  %v180 = vunpack.c.l.b16 %v51
  %v181 = vunpack.c.l.b16 %v52
  %v182 = vunpack.c.l.b16 %v53
  %v183 = vunpack.c.l.b16 %v54
  %v184 = vunpack.c.l.b16 %v55
  %v185 = vunpack.c.l.b16 %v56
  %v186 = vunpack.c.l.b16 %v57
  %v187 = vunpack.c.l.b16 %v58
  %v188 = vunpack.c.l.b16 %v59
  %v189 = vunpack.c.l.b16 %v60
  %v190 = vunpack.c.l.b16 %v61
  %v191 = vunpack.c.l.b16 %v62
  %v192 = vunpack.c.l.b16 %v63
  %v193 = vunpack.c.l.b16 %v64
  %v194 = vunpack.c.l.b16 %v65
  %v195 = vunpack.c.l.b16 %v66
  %v196 = vunpack.c.l.b16 %v67
  %v197 = vunpack.c.l.b16 %v68
  %v198 = vunpack.c.l.b16 %v69
  %v199 = vunpack.c.l.b16 %v70
  %v200 = vunpack.c.l.b16 %v71
  %v201 = vunpack.c.l.b16 %v72
  %v202 = vunpack.c.l.b16 %v73
  %v203 = vunpack.c.l.b16 %v74
  %v204 = vunpack.c.l.b16 %v75
  %v205 = vpack.c.b16 %v142, %v141
  %v206 = vpack.c.b16 %v144, %v143
  %v207 = vpack.c.b16 %v146, %v145
  %v208 = vpack.c.b16 %v148, %v147
  %v209 = vpack.c.b16 %v150, %v149
  %v210 = vpack.c.b16 %v152, %v151
  %v211 = vpack.c.b16 %v154, %v153
  %v212 = vpack.c.b16 %v156, %v155
  %v213 = vpack.c.b16 %v158, %v157
  %v214 = vpack.c.b16 %v160, %v159
  %v215 = vpack.c.b16 %v162, %v161
  %v216 = vpack.c.b16 %v164, %v163
  %v217 = vpack.c.b16 %v166, %v165
  %v218 = vpack.c.b16 %v168, %v167
  %v219 = vpack.c.b16 %v170, %v169
  %v220 = vpack.c.b16 %v172, %v171
  %v221 = vpack.c.b16 %v174, %v173
  %v222 = vpack.c.b16 %v176, %v175
  %v223 = vpack.c.b16 %v178, %v177
  %v224 = vpack.c.b16 %v180, %v179
  %v225 = vpack.c.b16 %v182, %v181
  %v226 = vpack.c.b16 %v184, %v183
  %v227 = vpack.c.b16 %v186, %v185
  %v228 = vpack.c.b16 %v188, %v187
  %v229 = vpack.c.b16 %v190, %v189
  %v230 = vpack.c.b16 %v192, %v191
  %v231 = vpack.c.b16 %v194, %v193
  %v232 = vpack.c.b16 %v196, %v195
  %v233 = vpack.c.b16 %v198, %v197
  %v234 = vpack.c.b16 %v200, %v199
  %v235 = vpack.c.b16 %v202, %v201
  %v236 = vpack.c.b16 %v204, %v203
  %vm237 = vcmask 31744
  %v239 = vsel %vm237, %v205, 0
  %v242 = vsel %vm237, %v206, 0
  %v245 = vsel %vm237, %v207, 0
  %v248 = vsel %vm237, %v208, 0
  %v251 = vsel %vm237, %v209, 0
  %v254 = vsel %vm237, %v210, 0
  %v257 = vsel %vm237, %v211, 0
  %v260 = vsel %vm237, %v212, 0
  %v263 = vsel %vm237, %v213, 0
  %v266 = vsel %vm237, %v214, 0
  %v269 = vsel %vm237, %v215, 0
  %v272 = vsel %vm237, %v216, 0
  %v275 = vsel %vm237, %v217, 0
  %v278 = vsel %vm237, %v218, 0
  %v281 = vsel %vm237, %v219, 0
  %v284 = vsel %vm237, %v220, 0
  %v287 = vsel %vm237, %v221, 0
  %v290 = vsel %vm237, %v222, 0
  %v293 = vsel %vm237, %v223, 0
  %v296 = vsel %vm237, %v224, 0
  %v299 = vsel %vm237, %v225, 0
  %v302 = vsel %vm237, %v226, 0
  %v305 = vsel %vm237, %v227, 0
  %v308 = vsel %vm237, %v228, 0
  %v311 = vsel %vm237, %v229, 0
  %v314 = vsel %vm237, %v230, 0
  %v317 = vsel %vm237, %v231, 0
  %v320 = vsel %vm237, %v232, 0
  %v323 = vsel %vm237, %v233, 0
  %v326 = vsel %vm237, %v234, 0
  %v329 = vsel %vm237, %v235, 0
  %v332 = vsel %vm237, %v236, 0
  %vm334 = vcmask 1041408
  %v336 = vsel %vm334, %v76, 0
  %338 = vmatprep.subr.bf16.mxu0 0
  %339 = vmatpush1.bf16.msra.mxu0 0
  %340 = vmatprep.subr.bf16.mxu0 0
  %341 = vmatpush1.bf16.msra.mxu0 0
  %342 = vmatprep.subr.bf16.mxu0 0
  %343 = vmatpush1.bf16.msra.mxu0 0
  %344 = vmatprep.subr.bf16.mxu0 0
  %345 = vmatpush1.bf16.msra.mxu0 0
  %346 = vmatprep.subr.bf16.mxu0 0
  %347 = vmatpush1.bf16.msra.mxu0 0
  %348 = vmatprep.subr.bf16.mxu0 0
  %349 = vmatpush1.bf16.msra.mxu0 0
  %350 = vmatprep.subr.bf16.mxu0 0
  %351 = vmatpush1.bf16.msra.mxu0 0
  %352 = vmatprep.subr.bf16.mxu0 0
  %353 = vmatpush1.bf16.msra.mxu0 %v336
  %354 = vmatprep.subr.bf16.mxu0 0
  %355 = vmatpush2.bf16.msra.mxu0 0
  %356 = vmatprep.subr.bf16.mxu0 0
  %357 = vmatpush2.bf16.msra.mxu0 0
  %358 = vmatprep.subr.bf16.mxu0 0
  %359 = vmatpush2.bf16.msra.mxu0 0
  %360 = vmatprep.subr.bf16.mxu0 0
  %361 = vmatpush2.bf16.msra.mxu0 0
  %362 = vmatprep.subr.bf16.mxu0 0
  %363 = vmatpush2.bf16.msra.mxu0 0
  %364 = vmatprep.subr.bf16.mxu0 0
  %365 = vmatpush2.bf16.msra.mxu0 0
  %366 = vmatprep.subr.bf16.mxu0 0
  %367 = vmatpush2.bf16.msra.mxu0 0
  %368 = vmatprep.subr.bf16.mxu0 0
  %369 = vmatpush2.bf16.msra.mxu0 0
  %370 = vmatprep.mubr.bf16.mxu0 0
  %371 = vmatmul.mubr.bf16.gmra.mxu0 %v239
  %v372 = vpop.f32.mrf.mxu0
  %v373 = vadd.f32 0.0, %v372
  %v374 = vpop.f32.mrf.mxu0
  %v375 = vpop.f32.mrf.mxu0
  %v376 = vadd.f32 0.0, %v375
  %v377 = vpop.f32.mrf.mxu0
  %378 = vmatprep.mubr.bf16.mxu0 0
  %379 = vmatmul.mubr.bf16.gmra.mxu0 %v242
  %v380 = vpop.f32.mrf.mxu0
  %v381 = vadd.f32 0.0, %v380
  %v382 = vpop.f32.mrf.mxu0
  %v383 = vpop.f32.mrf.mxu0
  %v384 = vadd.f32 0.0, %v383
  %v385 = vpop.f32.mrf.mxu0
  %386 = vmatprep.mubr.bf16.mxu0 0
  %387 = vmatmul.mubr.bf16.gmra.mxu0 %v245
  %v388 = vpop.f32.mrf.mxu0
  %v389 = vadd.f32 0.0, %v388
  %v390 = vpop.f32.mrf.mxu0
  %v391 = vpop.f32.mrf.mxu0
  %v392 = vadd.f32 0.0, %v391
  %v393 = vpop.f32.mrf.mxu0
  %394 = vmatprep.mubr.bf16.mxu0 0
  %395 = vmatmul.mubr.bf16.gmra.mxu0 %v248
  %v396 = vpop.f32.mrf.mxu0
  %v397 = vadd.f32 0.0, %v396
  %v398 = vpop.f32.mrf.mxu0
  %v399 = vpop.f32.mrf.mxu0
  %v400 = vadd.f32 0.0, %v399
  %v401 = vpop.f32.mrf.mxu0
  %402 = vmatprep.mubr.bf16.mxu0 0
  %403 = vmatmul.mubr.bf16.gmra.mxu0 %v251
  %v404 = vpop.f32.mrf.mxu0
  %v405 = vadd.f32 0.0, %v404
  %v406 = vpop.f32.mrf.mxu0
  %v407 = vpop.f32.mrf.mxu0
  %v408 = vadd.f32 0.0, %v407
  %v409 = vpop.f32.mrf.mxu0
  %410 = vmatprep.mubr.bf16.mxu0 0
  %411 = vmatmul.mubr.bf16.gmra.mxu0 %v254
  %v412 = vpop.f32.mrf.mxu0
  %v413 = vadd.f32 0.0, %v412
  %v414 = vpop.f32.mrf.mxu0
  %v415 = vpop.f32.mrf.mxu0
  %v416 = vadd.f32 0.0, %v415
  %v417 = vpop.f32.mrf.mxu0
  %418 = vmatprep.mubr.bf16.mxu0 0
  %419 = vmatmul.mubr.bf16.gmra.mxu0 %v257
  %v420 = vpop.f32.mrf.mxu0
  %v421 = vadd.f32 0.0, %v420
  %v422 = vpop.f32.mrf.mxu0
  %v423 = vpop.f32.mrf.mxu0
  %v424 = vadd.f32 0.0, %v423
  %v425 = vpop.f32.mrf.mxu0
  %426 = vmatprep.mubr.bf16.mxu0 0
  %427 = vmatmul.mubr.bf16.gmra.mxu0 %v260
  %v428 = vpop.f32.mrf.mxu0
  %v429 = vadd.f32 0.0, %v428
  %v430 = vpop.f32.mrf.mxu0
  %v431 = vpop.f32.mrf.mxu0
  %v432 = vadd.f32 0.0, %v431
  %v433 = vpop.f32.mrf.mxu0
  %434 = vmatprep.mubr.bf16.mxu0 0
  %435 = vmatmul.mubr.bf16.gmra.mxu0 %v263
  %v436 = vpop.f32.mrf.mxu0
  %v437 = vadd.f32 0.0, %v436
  %v438 = vpop.f32.mrf.mxu0
  %v439 = vpop.f32.mrf.mxu0
  %v440 = vadd.f32 0.0, %v439
  %v441 = vpop.f32.mrf.mxu0
  %442 = vmatprep.mubr.bf16.mxu0 0
  %443 = vmatmul.mubr.bf16.gmra.mxu0 %v266
  %v444 = vpop.f32.mrf.mxu0
  %v445 = vadd.f32 0.0, %v444
  %v446 = vpop.f32.mrf.mxu0
  %v447 = vpop.f32.mrf.mxu0
  %v448 = vadd.f32 0.0, %v447
  %v449 = vpop.f32.mrf.mxu0
  %450 = vmatprep.mubr.bf16.mxu0 0
  %451 = vmatmul.mubr.bf16.gmra.mxu0 %v269
  %v452 = vpop.f32.mrf.mxu0
  %v453 = vadd.f32 0.0, %v452
  %v454 = vpop.f32.mrf.mxu0
  %v455 = vpop.f32.mrf.mxu0
  %v456 = vadd.f32 0.0, %v455
  %v457 = vpop.f32.mrf.mxu0
  %458 = vmatprep.mubr.bf16.mxu0 0
  %459 = vmatmul.mubr.bf16.gmra.mxu0 %v272
  %v460 = vpop.f32.mrf.mxu0
  %v461 = vadd.f32 0.0, %v460
  %v462 = vpop.f32.mrf.mxu0
  %v463 = vpop.f32.mrf.mxu0
  %v464 = vadd.f32 0.0, %v463
  %v465 = vpop.f32.mrf.mxu0
  %466 = vmatprep.mubr.bf16.mxu0 0
  %467 = vmatmul.mubr.bf16.gmra.mxu0 %v275
  %v468 = vpop.f32.mrf.mxu0
  %v469 = vadd.f32 0.0, %v468
  %v470 = vpop.f32.mrf.mxu0
  %v471 = vpop.f32.mrf.mxu0
  %v472 = vadd.f32 0.0, %v471
  %v473 = vpop.f32.mrf.mxu0
  %474 = vmatprep.mubr.bf16.mxu0 0
  %475 = vmatmul.mubr.bf16.gmra.mxu0 %v278
  %v476 = vpop.f32.mrf.mxu0
  %v477 = vadd.f32 0.0, %v476
  %v478 = vpop.f32.mrf.mxu0
  %v479 = vpop.f32.mrf.mxu0
  %v480 = vadd.f32 0.0, %v479
  %v481 = vpop.f32.mrf.mxu0
  %482 = vmatprep.mubr.bf16.mxu0 0
  %483 = vmatmul.mubr.bf16.gmra.mxu0 %v281
  %v484 = vpop.f32.mrf.mxu0
  %v485 = vadd.f32 0.0, %v484
  %v486 = vpop.f32.mrf.mxu0
  %v487 = vpop.f32.mrf.mxu0
  %v488 = vadd.f32 0.0, %v487
  %v489 = vpop.f32.mrf.mxu0
  %490 = vmatprep.mubr.bf16.mxu0 0
  %491 = vmatmul.mubr.bf16.gmra.mxu0 %v284
  %v492 = vpop.f32.mrf.mxu0
  %v493 = vadd.f32 0.0, %v492
  %v494 = vpop.f32.mrf.mxu0
  %v495 = vpop.f32.mrf.mxu0
  %v496 = vadd.f32 0.0, %v495
  %v497 = vpop.f32.mrf.mxu0
  %498 = vmatprep.mubr.bf16.mxu0 0
  %499 = vmatmul.mubr.bf16.gmra.mxu0 %v287
  %v500 = vpop.f32.mrf.mxu0
  %v501 = vadd.f32 0.0, %v500
  %v502 = vpop.f32.mrf.mxu0
  %v503 = vpop.f32.mrf.mxu0
  %v504 = vadd.f32 0.0, %v503
  %v505 = vpop.f32.mrf.mxu0
  %506 = vmatprep.mubr.bf16.mxu0 0
  %507 = vmatmul.mubr.bf16.gmra.mxu0 %v290
  %v508 = vpop.f32.mrf.mxu0
  %v509 = vadd.f32 0.0, %v508
  %v510 = vpop.f32.mrf.mxu0
  %v511 = vpop.f32.mrf.mxu0
  %v512 = vadd.f32 0.0, %v511
  %v513 = vpop.f32.mrf.mxu0
  %514 = vmatprep.mubr.bf16.mxu0 0
  %515 = vmatmul.mubr.bf16.gmra.mxu0 %v293
  %v516 = vpop.f32.mrf.mxu0
  %v517 = vadd.f32 0.0, %v516
  %v518 = vpop.f32.mrf.mxu0
  %v519 = vpop.f32.mrf.mxu0
  %v520 = vadd.f32 0.0, %v519
  %v521 = vpop.f32.mrf.mxu0
  %522 = vmatprep.mubr.bf16.mxu0 0
  %523 = vmatmul.mubr.bf16.gmra.mxu0 %v296
  %v524 = vpop.f32.mrf.mxu0
  %v525 = vadd.f32 0.0, %v524
  %v526 = vpop.f32.mrf.mxu0
  %v527 = vpop.f32.mrf.mxu0
  %v528 = vadd.f32 0.0, %v527
  %v529 = vpop.f32.mrf.mxu0
  %530 = vmatprep.mubr.bf16.mxu0 0
  %531 = vmatmul.mubr.bf16.gmra.mxu0 %v299
  %v532 = vpop.f32.mrf.mxu0
  %v533 = vadd.f32 0.0, %v532
  %v534 = vpop.f32.mrf.mxu0
  %v535 = vpop.f32.mrf.mxu0
  %v536 = vadd.f32 0.0, %v535
  %v537 = vpop.f32.mrf.mxu0
  %538 = vmatprep.mubr.bf16.mxu0 0
  %539 = vmatmul.mubr.bf16.gmra.mxu0 %v302
  %v540 = vpop.f32.mrf.mxu0
  %v541 = vadd.f32 0.0, %v540
  %v542 = vpop.f32.mrf.mxu0
  %v543 = vpop.f32.mrf.mxu0
  %v544 = vadd.f32 0.0, %v543
  %v545 = vpop.f32.mrf.mxu0
  %546 = vmatprep.mubr.bf16.mxu0 0
  %547 = vmatmul.mubr.bf16.gmra.mxu0 %v305
  %v548 = vpop.f32.mrf.mxu0
  %v549 = vadd.f32 0.0, %v548
  %v550 = vpop.f32.mrf.mxu0
  %v551 = vpop.f32.mrf.mxu0
  %v552 = vadd.f32 0.0, %v551
  %v553 = vpop.f32.mrf.mxu0
  %554 = vmatprep.mubr.bf16.mxu0 0
  %555 = vmatmul.mubr.bf16.gmra.mxu0 %v308
  %v556 = vpop.f32.mrf.mxu0
  %v557 = vadd.f32 0.0, %v556
  %v558 = vpop.f32.mrf.mxu0
  %v559 = vpop.f32.mrf.mxu0
  %v560 = vadd.f32 0.0, %v559
  %v561 = vpop.f32.mrf.mxu0
  %562 = vmatprep.mubr.bf16.mxu0 0
  %563 = vmatmul.mubr.bf16.gmra.mxu0 %v311
  %v564 = vpop.f32.mrf.mxu0
  %v565 = vadd.f32 0.0, %v564
  %v566 = vpop.f32.mrf.mxu0
  %v567 = vpop.f32.mrf.mxu0
  %v568 = vadd.f32 0.0, %v567
  %v569 = vpop.f32.mrf.mxu0
  %570 = vmatprep.mubr.bf16.mxu0 0
  %571 = vmatmul.mubr.bf16.gmra.mxu0 %v314
  %v572 = vpop.f32.mrf.mxu0
  %v573 = vadd.f32 0.0, %v572
  %v574 = vpop.f32.mrf.mxu0
  %v575 = vpop.f32.mrf.mxu0
  %v576 = vadd.f32 0.0, %v575
  %v577 = vpop.f32.mrf.mxu0
  %578 = vmatprep.mubr.bf16.mxu0 0
  %579 = vmatmul.mubr.bf16.gmra.mxu0 %v317
  %v580 = vpop.f32.mrf.mxu0
  %v581 = vadd.f32 0.0, %v580
  %v582 = vpop.f32.mrf.mxu0
  %v583 = vpop.f32.mrf.mxu0
  %v584 = vadd.f32 0.0, %v583
  %v585 = vpop.f32.mrf.mxu0
  %586 = vmatprep.mubr.bf16.mxu0 0
  %587 = vmatmul.mubr.bf16.gmra.mxu0 %v320
  %v588 = vpop.f32.mrf.mxu0
  %v589 = vadd.f32 0.0, %v588
  %v590 = vpop.f32.mrf.mxu0
  %v591 = vpop.f32.mrf.mxu0
  %v592 = vadd.f32 0.0, %v591
  %v593 = vpop.f32.mrf.mxu0
  %594 = vmatprep.mubr.bf16.mxu0 0
  %595 = vmatmul.mubr.bf16.gmra.mxu0 %v323
  %v596 = vpop.f32.mrf.mxu0
  %v597 = vadd.f32 0.0, %v596
  %v598 = vpop.f32.mrf.mxu0
  %v599 = vpop.f32.mrf.mxu0
  %v600 = vadd.f32 0.0, %v599
  %v601 = vpop.f32.mrf.mxu0
  %602 = vmatprep.mubr.bf16.mxu0 0
  %603 = vmatmul.mubr.bf16.gmra.mxu0 %v326
  %v604 = vpop.f32.mrf.mxu0
  %v605 = vadd.f32 0.0, %v604
  %v606 = vpop.f32.mrf.mxu0
  %v607 = vpop.f32.mrf.mxu0
  %v608 = vadd.f32 0.0, %v607
  %v609 = vpop.f32.mrf.mxu0
  %610 = vmatprep.mubr.bf16.mxu0 0
  %611 = vmatmul.mubr.bf16.gmra.mxu0 %v329
  %v612 = vpop.f32.mrf.mxu0
  %v613 = vadd.f32 0.0, %v612
  %v614 = vpop.f32.mrf.mxu0
  %v615 = vpop.f32.mrf.mxu0
  %v616 = vadd.f32 0.0, %v615
  %v617 = vpop.f32.mrf.mxu0
  %618 = vmatprep.mubr.bf16.mxu0 0
  %619 = vmatmul.mubr.bf16.gmra.mxu0 %v332
  %v620 = vpop.f32.mrf.mxu0
  %v621 = vadd.f32 0.0, %v620
  %v622 = vpop.f32.mrf.mxu0
  %v623 = vpop.f32.mrf.mxu0
  %v624 = vadd.f32 0.0, %v623
  %v625 = vpop.f32.mrf.mxu0
  %626 = vdwg.mxu0
  %v627 = vpack.c.bf16 %v376, %v373
  %v628 = vpack.c.bf16 %v384, %v381
  %v629 = vpack.c.bf16 %v392, %v389
  %v630 = vpack.c.bf16 %v400, %v397
  %v631 = vpack.c.bf16 %v408, %v405
  %v632 = vpack.c.bf16 %v416, %v413
  %v633 = vpack.c.bf16 %v424, %v421
  %v634 = vpack.c.bf16 %v432, %v429
  %v635 = vpack.c.bf16 %v440, %v437
  %v636 = vpack.c.bf16 %v448, %v445
  %v637 = vpack.c.bf16 %v456, %v453
  %v638 = vpack.c.bf16 %v464, %v461
  %v639 = vpack.c.bf16 %v472, %v469
  %v640 = vpack.c.bf16 %v480, %v477
  %v641 = vpack.c.bf16 %v488, %v485
  %v642 = vpack.c.bf16 %v496, %v493
  %v643 = vpack.c.bf16 %v504, %v501
  %v644 = vpack.c.bf16 %v512, %v509
  %v645 = vpack.c.bf16 %v520, %v517
  %v646 = vpack.c.bf16 %v528, %v525
  %v647 = vpack.c.bf16 %v536, %v533
  %v648 = vpack.c.bf16 %v544, %v541
  %v649 = vpack.c.bf16 %v552, %v549
  %v650 = vpack.c.bf16 %v560, %v557
  %v651 = vpack.c.bf16 %v568, %v565
  %v652 = vpack.c.bf16 %v576, %v573
  %v653 = vpack.c.bf16 %v584, %v581
  %v654 = vpack.c.bf16 %v592, %v589
  %v655 = vpack.c.bf16 %v600, %v597
  %v656 = vpack.c.bf16 %v608, %v605
  %v657 = vpack.c.bf16 %v616, %v613
  %v658 = vpack.c.bf16 %v624, %v621
  %v691 = vunpack.c.l.b16 %v627
  %v692 = vunpack.c.h.b16 %v627
  %v693 = vunpack.c.l.b16 %v628
  %v694 = vunpack.c.h.b16 %v628
  %v695 = vunpack.c.l.b16 %v629
  %v696 = vunpack.c.h.b16 %v629
  %v697 = vunpack.c.l.b16 %v630
  %v698 = vunpack.c.h.b16 %v630
  %v699 = vunpack.c.l.b16 %v631
  %v700 = vunpack.c.h.b16 %v631
  %v701 = vunpack.c.l.b16 %v632
  %v702 = vunpack.c.h.b16 %v632
  %v703 = vunpack.c.l.b16 %v633
  %v704 = vunpack.c.h.b16 %v633
  %v705 = vunpack.c.l.b16 %v634
  %v706 = vunpack.c.h.b16 %v634
  %v707 = vunpack.c.l.b16 %v635
  %v708 = vunpack.c.h.b16 %v635
  %v709 = vunpack.c.l.b16 %v636
  %v710 = vunpack.c.h.b16 %v636
  %v711 = vunpack.c.l.b16 %v637
  %v712 = vunpack.c.h.b16 %v637
  %v713 = vunpack.c.l.b16 %v638
  %v714 = vunpack.c.h.b16 %v638
  %v715 = vunpack.c.l.b16 %v639
  %v716 = vunpack.c.h.b16 %v639
  %v717 = vunpack.c.l.b16 %v640
  %v718 = vunpack.c.h.b16 %v640
  %v719 = vunpack.c.l.b16 %v641
  %v720 = vunpack.c.h.b16 %v641
  %v721 = vunpack.c.l.b16 %v642
  %v722 = vunpack.c.h.b16 %v642
  %v723 = vunpack.c.l.b16 %v643
  %v724 = vunpack.c.h.b16 %v643
  %v725 = vunpack.c.l.b16 %v644
  %v726 = vunpack.c.h.b16 %v644
  %v727 = vunpack.c.l.b16 %v645
  %v728 = vunpack.c.h.b16 %v645
  %v729 = vunpack.c.l.b16 %v646
  %v730 = vunpack.c.h.b16 %v646
  %v731 = vunpack.c.l.b16 %v647
  %v732 = vunpack.c.h.b16 %v647
  %v733 = vunpack.c.l.b16 %v648
  %v734 = vunpack.c.h.b16 %v648
  %v735 = vunpack.c.l.b16 %v649
  %v736 = vunpack.c.h.b16 %v649
  %v737 = vunpack.c.l.b16 %v650
  %v738 = vunpack.c.h.b16 %v650
  %v739 = vunpack.c.l.b16 %v651
  %v740 = vunpack.c.h.b16 %v651
  %v741 = vunpack.c.l.b16 %v652
  %v742 = vunpack.c.h.b16 %v652
  %v743 = vunpack.c.l.b16 %v653
  %v744 = vunpack.c.h.b16 %v653
  %v745 = vunpack.c.l.b16 %v654
  %v746 = vunpack.c.h.b16 %v654
  %v747 = vunpack.c.l.b16 %v655
  %v748 = vunpack.c.h.b16 %v655
  %v749 = vunpack.c.l.b16 %v656
  %v750 = vunpack.c.h.b16 %v656
  %v751 = vunpack.c.l.b16 %v657
  %v752 = vunpack.c.h.b16 %v657
  %v753 = vunpack.c.l.b16 %v658
  %v754 = vunpack.c.h.b16 %v658
  %v755 = vpack.c.b16 %v691, %v691
  %v756 = vpack.c.b16 %v692, %v692
  %v757 = vpack.c.b16 %v693, %v693
  %v758 = vpack.c.b16 %v694, %v694
  %v759 = vpack.c.b16 %v695, %v695
  %v760 = vpack.c.b16 %v696, %v696
  %v761 = vpack.c.b16 %v697, %v697
  %v762 = vpack.c.b16 %v698, %v698
  %v763 = vpack.c.b16 %v699, %v699
  %v764 = vpack.c.b16 %v700, %v700
  %v765 = vpack.c.b16 %v701, %v701
  %v766 = vpack.c.b16 %v702, %v702
  %v767 = vpack.c.b16 %v703, %v703
  %v768 = vpack.c.b16 %v704, %v704
  %v769 = vpack.c.b16 %v705, %v705
  %v770 = vpack.c.b16 %v706, %v706
  %v771 = vpack.c.b16 %v707, %v707
  %v772 = vpack.c.b16 %v708, %v708
  %v773 = vpack.c.b16 %v709, %v709
  %v774 = vpack.c.b16 %v710, %v710
  %v775 = vpack.c.b16 %v711, %v711
  %v776 = vpack.c.b16 %v712, %v712
  %v777 = vpack.c.b16 %v713, %v713
  %v778 = vpack.c.b16 %v714, %v714
  %v779 = vpack.c.b16 %v715, %v715
  %v780 = vpack.c.b16 %v716, %v716
  %v781 = vpack.c.b16 %v717, %v717
  %v782 = vpack.c.b16 %v718, %v718
  %v783 = vpack.c.b16 %v719, %v719
  %v784 = vpack.c.b16 %v720, %v720
  %v785 = vpack.c.b16 %v721, %v721
  %v786 = vpack.c.b16 %v722, %v722
  %v787 = vpack.c.b16 %v723, %v723
  %v788 = vpack.c.b16 %v724, %v724
  %v789 = vpack.c.b16 %v725, %v725
  %v790 = vpack.c.b16 %v726, %v726
  %v791 = vpack.c.b16 %v727, %v727
  %v792 = vpack.c.b16 %v728, %v728
  %v793 = vpack.c.b16 %v729, %v729
  %v794 = vpack.c.b16 %v730, %v730
  %v795 = vpack.c.b16 %v731, %v731
  %v796 = vpack.c.b16 %v732, %v732
  %v797 = vpack.c.b16 %v733, %v733
  %v798 = vpack.c.b16 %v734, %v734
  %v799 = vpack.c.b16 %v735, %v735
  %v800 = vpack.c.b16 %v736, %v736
  %v801 = vpack.c.b16 %v737, %v737
  %v802 = vpack.c.b16 %v738, %v738
  %v803 = vpack.c.b16 %v739, %v739
  %v804 = vpack.c.b16 %v740, %v740
  %v805 = vpack.c.b16 %v741, %v741
  %v806 = vpack.c.b16 %v742, %v742
  %v807 = vpack.c.b16 %v743, %v743
  %v808 = vpack.c.b16 %v744, %v744
  %v809 = vpack.c.b16 %v745, %v745
  %v810 = vpack.c.b16 %v746, %v746
  %v811 = vpack.c.b16 %v747, %v747
  %v812 = vpack.c.b16 %v748, %v748
  %v813 = vpack.c.b16 %v749, %v749
  %v814 = vpack.c.b16 %v750, %v750
  %v815 = vpack.c.b16 %v751, %v751
  %v816 = vpack.c.b16 %v752, %v752
  %v817 = vpack.c.b16 %v753, %v753
  %v818 = vpack.c.b16 %v754, %v754
  %883 = vst [vmem:[%s2] sm:$0xf] %v755
  %884 = vst [vmem:[%s2 + $0x4] sm:$0xf] %v756
  %885 = vst [vmem:[%s2 + $0x8] sm:$0xf] %v757
  %886 = vst [vmem:[%s2 + $0xc] sm:$0xf] %v758
  %887 = vst [vmem:[%s2 + $0x10] sm:$0xf] %v759
  %888 = vst [vmem:[%s2 + $0x14] sm:$0xf] %v760
  %889 = vst [vmem:[%s2 + $0x18] sm:$0xf] %v761
  %890 = vst [vmem:[%s2 + $0x1c] sm:$0xf] %v762
  %891 = vst [vmem:[%s2 + $0x20] sm:$0xf] %v763
  %892 = vst [vmem:[%s2 + $0x24] sm:$0xf] %v764
  %893 = vst [vmem:[%s2 + $0x28] sm:$0xf] %v765
  %894 = vst [vmem:[%s2 + $0x2c] sm:$0xf] %v766
  %895 = vst [vmem:[%s2 + $0x30] sm:$0xf] %v767
  %896 = vst [vmem:[%s2 + $0x34] sm:$0xf] %v768
  %897 = vst [vmem:[%s2 + $0x38] sm:$0xf] %v769
  %898 = vst [vmem:[%s2 + $0x3c] sm:$0xf] %v770
  %899 = vst [vmem:[%s2 + $0x40] sm:$0xf] %v771
  %900 = vst [vmem:[%s2 + $0x44] sm:$0xf] %v772
  %901 = vst [vmem:[%s2 + $0x48] sm:$0xf] %v773
  %902 = vst [vmem:[%s2 + $0x4c] sm:$0xf] %v774
  %903 = vst [vmem:[%s2 + $0x50] sm:$0xf] %v775
  %904 = vst [vmem:[%s2 + $0x54] sm:$0xf] %v776
  %905 = vst [vmem:[%s2 + $0x58] sm:$0xf] %v777
  %906 = vst [vmem:[%s2 + $0x5c] sm:$0xf] %v778
  %907 = vst [vmem:[%s2 + $0x60] sm:$0xf] %v779
  %908 = vst [vmem:[%s2 + $0x64] sm:$0xf] %v780
  %909 = vst [vmem:[%s2 + $0x68] sm:$0xf] %v781
  %910 = vst [vmem:[%s2 + $0x6c] sm:$0xf] %v782
  %911 = vst [vmem:[%s2 + $0x70] sm:$0xf] %v783
  %912 = vst [vmem:[%s2 + $0x74] sm:$0xf] %v784
  %913 = vst [vmem:[%s2 + $0x78] sm:$0xf] %v785
  %914 = vst [vmem:[%s2 + $0x7c] sm:$0xf] %v786
  %915 = vst [vmem:[%s2 + $0x80] sm:$0xf] %v787
  %916 = vst [vmem:[%s2 + $0x84] sm:$0xf] %v788
  %917 = vst [vmem:[%s2 + $0x88] sm:$0xf] %v789
  %918 = vst [vmem:[%s2 + $0x8c] sm:$0xf] %v790
  %919 = vst [vmem:[%s2 + $0x90] sm:$0xf] %v791
  %920 = vst [vmem:[%s2 + $0x94] sm:$0xf] %v792
  %921 = vst [vmem:[%s2 + $0x98] sm:$0xf] %v793
  %922 = vst [vmem:[%s2 + $0x9c] sm:$0xf] %v794
  %923 = vst [vmem:[%s2 + $0xa0] sm:$0xf] %v795
  %924 = vst [vmem:[%s2 + $0xa4] sm:$0xf] %v796
  %925 = vst [vmem:[%s2 + $0xa8] sm:$0xf] %v797
  %926 = vst [vmem:[%s2 + $0xac] sm:$0xf] %v798
  %927 = vst [vmem:[%s2 + $0xb0] sm:$0xf] %v799
  %928 = vst [vmem:[%s2 + $0xb4] sm:$0xf] %v800
  %929 = vst [vmem:[%s2 + $0xb8] sm:$0xf] %v801
  %930 = vst [vmem:[%s2 + $0xbc] sm:$0xf] %v802
  %931 = vst [vmem:[%s2 + $0xc0] sm:$0xf] %v803
  %932 = vst [vmem:[%s2 + $0xc4] sm:$0xf] %v804
  %933 = vst [vmem:[%s2 + $0xc8] sm:$0xf] %v805
  %934 = vst [vmem:[%s2 + $0xcc] sm:$0xf] %v806
  %935 = vst [vmem:[%s2 + $0xd0] sm:$0xf] %v807
  %936 = vst [vmem:[%s2 + $0xd4] sm:$0xf] %v808
  %937 = vst [vmem:[%s2 + $0xd8] sm:$0xf] %v809
  %938 = vst [vmem:[%s2 + $0xdc] sm:$0xf] %v810
  %939 = vst [vmem:[%s2 + $0xe0] sm:$0xf] %v811
  %940 = vst [vmem:[%s2 + $0xe4] sm:$0xf] %v812
  %941 = vst [vmem:[%s2 + $0xe8] sm:$0xf] %v813
  %942 = vst [vmem:[%s2 + $0xec] sm:$0xf] %v814
  %943 = vst [vmem:[%s2 + $0xf0] sm:$0xf] %v815
  %944 = vst [vmem:[%s2 + $0xf4] sm:$0xf] %v816
  %945 = vst [vmem:[%s2 + $0xf8] sm:$0xf] %v817
  %946 = vst [vmem:[%s2 + $0xfc] sm:$0xf] %v818
  // Predicated region
  $region10: #{mcc_block_forward.9} parent=0 // pred_check
    _
  $region11: #{mcc_block_forward.9} parent=0 // pred_check_branch
    %948 = sbr.rel (0) target = $region13
  $region12: #{mcc_block_forward.9} parent=0 // pred_region
    _
  $region13: #{mcc_block_forward.9} parent=0 // pred_fallthru
    _
  // Predicated region
  $region14: #{mcc_block_forward.9} parent=0 // pred_check
    _
  $region15: #{mcc_block_forward.9} parent=0 // pred_check_branch
    %950 = sbr.rel (0) target = $region17
  $region16: #{mcc_block_forward.9} parent=0 // pred_region
    _
  $region17: #{mcc_block_forward.9} parent=0 // pred_fallthru
    _

// kernel: mcc_block_forward.10
$region0: #{mcc_block_forward.10}
  #allocation0 [shape = 'u32[]', space=smem, size = 0x4, offset = 0x4, fixed_abs, tag = 'smem constant byte address 0x4 - core index']
  #allocation1 [shape = 'u32[144,128]{1,0:T(1,128)}', space=vmem, size = 0x12000, scoped, tag = 'internal scratch']
  %s0 = inlined_call_operand.vmem [shape: bf16[2,264,8], index: 0, kind: input, shape index: {}]
  %s1 = inlined_call_operand.vmem [shape: f32[4,8], index: 1, kind: input, shape index: {}]
  %s2 = inlined_call_operand.vmem [shape: f32[1,8], index: 2, kind: input, shape index: {}]
  %s3 = inlined_call_operand.vmem [shape: bf16[2,256,8], index: 3, kind: output, shape index: {}]
  %s4 = sld [smem:[#allocation0]]
  $region45: #{mcc_block_forward.10} parent=0
    _
  %s6 = ssub.s32 1, %s4
  %s7 = scalar_select 0, %s6, %s4
  loop: start=0, step=1, limit=4
  $region2: #{mcc_block_forward.10} parent=0 // loop_pre_header
    _
  $region3: #{mcc_block_forward.10} parent=0 // loop_header
    %s9 = sphi 0, %s13
    %p10 = scmp.ge.s32.totalorder %s9, 4
    %s16 = sphi 0, %s28
    %s17 = sphi 0, %s24
    %s18 = sphi 0, %s16
    %s19 = sphi 0, %s17
    %s20 = sphi 0, %s18
    %s21 = sphi 0, %s19
    %s31 = sphi 0, %s33
    %s34 = sphi 0, %s31
    %s35 = sphi 0, %s34
    %s51 = sphi 0, %s35
    %s55 = sphi 0, %s55
    %s57 = sphi 0, %s55
    %s58 = sphi 0, %s57
    %s72 = sphi 0, %s58
    %s76 = sphi 0, %s76
    %s78 = sphi 0, %s76
    %s79 = sphi 0, %s78
    %s93 = sphi 0, %s79
    %s101 = sphi 0, %s103
    %s104 = sphi 0, %s101
    %s105 = sphi 0, %s104
    %s121 = sphi 0, %s105
  $region4: #{mcc_block_forward.10} parent=0 // loop_header_branch
    %12 = sbr.rel (%p10) target = $region8
  $region5: #{mcc_block_forward.10} parent=0 // loop_body
    %s14 = ssub.s32 %s9, 1
    %s15 = ssub.s32 %s9, 2
    %s22 = sadd.s32 1, %s17
    %p23 = scmp.ge.s32.totalorder %s22, 1
    %s24 = scalar_select %p23, 0, %s22
    %s25 = sadd.s32 1, %s16
    %s26 = scalar_select %p23, %s25, %s16
    %p27 = scmp.ge.s32.totalorder %s26, 2
    %s28 = scalar_select %p27, 0, %s26
    %s29 = ssub.s32 %s16, %s28
    %p30 = scmp.eq.s32.totalorder %s29, 0
    %s32 = sadd.s32 %s31, 1
    %s33 = scalar_select %p30, %s31, %s32
    %p36 = pneg %p30
    %p37 = scmp.eq.s32.totalorder %s9, 1
    %p38 = por %p36, %p37
    %p39 = scmp.ne.s32.totalorder %s31, %s34
    %p40 = scmp.eq.s32.totalorder %s9, 0
    %p41 = por %p39, %p40
    %p42 = scmp.ne.s32.totalorder %s31, %s34
    %p43 = scmp.eq.s32.totalorder %s14, 1
    %p44 = por %p42, %p43
    %p45 = scmp.ne.s32.totalorder %s34, %s35
    %p46 = scmp.eq.s32.totalorder %s14, 0
    %p47 = por %p45, %p46
    %p48 = scmp.ne.s32.totalorder %s34, %s35
    %p49 = scmp.eq.s32.totalorder %s15, 1
    %p50 = por %p48, %p49
    %p52 = scmp.ne.s32.totalorder %s35, %s51
    %p53 = scmp.eq.s32.totalorder %s15, 0
    %p54 = por %p52, %p53
    %s56 = sadd.s32 %s55, 1
    %p59 = scmp.eq.s32.totalorder %s9, 1
    %p60 = scmp.ne.s32.totalorder %s55, %s57
    %p61 = scmp.eq.s32.totalorder %s9, 0
    %p62 = por %p60, %p61
    %p63 = scmp.ne.s32.totalorder %s55, %s57
    %p64 = scmp.eq.s32.totalorder %s14, 1
    %p65 = por %p63, %p64
    %p66 = scmp.ne.s32.totalorder %s57, %s58
    %p67 = scmp.eq.s32.totalorder %s14, 0
    %p68 = por %p66, %p67
    %p69 = scmp.ne.s32.totalorder %s57, %s58
    %p70 = scmp.eq.s32.totalorder %s15, 1
    %p71 = por %p69, %p70
    %p73 = scmp.ne.s32.totalorder %s58, %s72
    %p74 = scmp.eq.s32.totalorder %s15, 0
    %p75 = por %p73, %p74
    %s77 = sadd.s32 %s76, 1
    %p80 = scmp.eq.s32.totalorder %s9, 1
    %p81 = scmp.ne.s32.totalorder %s76, %s78
    %p82 = scmp.eq.s32.totalorder %s9, 0
    %p83 = por %p81, %p82
    %p84 = scmp.ne.s32.totalorder %s76, %s78
    %p85 = scmp.eq.s32.totalorder %s14, 1
    %p86 = por %p84, %p85
    %p87 = scmp.ne.s32.totalorder %s78, %s79
    %p88 = scmp.eq.s32.totalorder %s14, 0
    %p89 = por %p87, %p88
    %p90 = scmp.ne.s32.totalorder %s78, %s79
    %p91 = scmp.eq.s32.totalorder %s15, 1
    %p92 = por %p90, %p91
    %p94 = scmp.ne.s32.totalorder %s79, %s93
    %p95 = scmp.eq.s32.totalorder %s15, 0
    %p96 = por %p94, %p95
    %s97 = ssub.s32 %s16, %s28
    %s98 = ssub.s32 %s17, %s24
    %s99 = sor.u32 %s97, %s98
    %p100 = scmp.eq.s32.totalorder %s99, 0
    %s102 = sadd.s32 %s101, 1
    %s103 = scalar_select %p100, %s101, %s102
    %p106 = pneg %p100
    %p107 = scmp.eq.s32.totalorder %s9, 1
    %p108 = por %p106, %p107
    %p109 = scmp.ne.s32.totalorder %s101, %s104
    %p110 = scmp.eq.s32.totalorder %s9, 0
    %p111 = por %p109, %p110
    %p112 = scmp.ne.s32.totalorder %s101, %s104
    %p113 = scmp.eq.s32.totalorder %s14, 1
    %p114 = por %p112, %p113
    %p115 = scmp.ne.s32.totalorder %s104, %s105
    %p116 = scmp.eq.s32.totalorder %s14, 0
    %p117 = por %p115, %p116
    %p118 = scmp.ne.s32.totalorder %s104, %s105
    %p119 = scmp.eq.s32.totalorder %s15, 1
    %p120 = por %p118, %p119
    %p122 = scmp.ne.s32.totalorder %s105, %s121
    %p123 = scmp.eq.s32.totalorder %s15, 0
    %p124 = por %p122, %p123
    %p125 = scmp.le.s32.totalorder 1, %s9
    %p126 = scmp.lt.s32.totalorder %s9, 3
    %p127 = pnand %p125, %p126
    %p128 = pneg %p127
    // Predicated region
    $region9: #{mcc_block_forward.10} parent=5 // pred_check
      _
    $region10: #{mcc_block_forward.10} parent=5 // pred_check_branch
      %130 = sbr.rel (%p127) target = $region12
    $region11: #{mcc_block_forward.10} parent=5 // pred_region
      %s131 = ssub.s32 %s9, 1
      // Predicated region
      $region13: #{mcc_block_forward.10} parent=11 // pred_check
        %p132 = pneg %p68
      $region14: #{mcc_block_forward.10} parent=11 // pred_check_branch
        %134 = sbr.rel (%p132) target = $region16
      $region15: #{mcc_block_forward.10} parent=11 // pred_region
        _
      $region16: #{mcc_block_forward.10} parent=11 // pred_fallthru
        _
      // Predicated region
      $region17: #{mcc_block_forward.10} parent=11 // pred_check
        %p135 = pneg %p89
      $region18: #{mcc_block_forward.10} parent=11 // pred_check_branch
        %137 = sbr.rel (%p135) target = $region20
      $region19: #{mcc_block_forward.10} parent=11 // pred_region
        _
      $region20: #{mcc_block_forward.10} parent=11 // pred_fallthru
        _
    $region12: #{mcc_block_forward.10} parent=5 // pred_fallthru
      _
    %p138 = scmp.lt.s32.totalorder %s9, 2
    // Predicated region
    $region21: #{mcc_block_forward.10} parent=5 // pred_check
      %p139 = pneg %p138
    $region22: #{mcc_block_forward.10} parent=5 // pred_check_branch
      %141 = sbr.rel (%p139) target = $region24
    $region23: #{mcc_block_forward.10} parent=5 // pred_region
      // Predicated region
      $region25: #{mcc_block_forward.10} parent=23 // pred_check
        %p142 = pneg %p41
      $region26: #{mcc_block_forward.10} parent=23 // pred_check_branch
        %144 = sbr.rel (%p142) target = $region28
      $region27: #{mcc_block_forward.10} parent=23 // pred_region
        %p145 = scmp.lt.s32.totalorder %s16, 1
        %s146 = scalar_select %p145, %s16, 1
        %s147 = smul.addr %s146, 33
        %s148 = smul.addr %s147, 4
        %s149 = scalar_lea.vmem %s0, %s148
      $region28: #{mcc_block_forward.10} parent=23 // pred_fallthru
        _
    $region24: #{mcc_block_forward.10} parent=5 // pred_fallthru
      _
    %p150 = scmp.le.s32.totalorder 1, %s9
    %p151 = scmp.lt.s32.totalorder %s9, 3
    %p152 = pnand %p150, %p151
    %p153 = pneg %p152
    // Predicated region
    $region29: #{mcc_block_forward.10} parent=5 // pred_check
      _
    $region30: #{mcc_block_forward.10} parent=5 // pred_check_branch
      %155 = sbr.rel (%p152) target = $region32
    $region31: #{mcc_block_forward.10} parent=5 // pred_region
      %s156 = ssub.s32 %s9, 1
      %p157 = scmp.lt.s32.totalorder %s18, 1
      %s158 = scalar_select %p157, %s18, 1
      %s159 = smul.addr %s158, 33
      %s160 = smul.addr %s159, 4
      %s161 = scalar_lea.vmem %s0, %s160
      %p162 = pneg %p47
      %p163 = pneg %p44
      %p164 = pneg %p68
      %p165 = pneg %p65
      %p166 = pneg %p89
      %p167 = pneg %p86
      %p168 = pneg %p117
      %p169 = pneg %p114
      %s170 = smul.u32 32, %s19
      %p171 = scmp.lt.s32.totalorder %s18, 1
      %s172 = scalar_select %p171, %s18, 1
      %p173 = scmp.lt.s32.totalorder %s170, 31
      %s174 = scalar_select %p173, %s170, 31
      %s175 = smul.addr %s172, 32
      %s176 = sadd.s32 %s174, %s175
      %s177 = smul.addr %s176, 4
      %s178 = scalar_lea.vmem %s3, %s177
      %p179 = scmp.lt.s32.totalorder %s18, 1
      %s180 = scalar_select %p179, %s18, 1
      %s181 = smul.addr %s180, 33
      %s182 = smul.addr %s181, 4
      %s183 = scalar_lea.vmem %s0, %s182
      %s184 = smul.u32 32, %s19
      %p185 = scmp.lt.s32.totalorder %s18, 1
      %s186 = scalar_select %p185, %s18, 1
      %p187 = scmp.lt.s32.totalorder %s184, 31
      %s188 = scalar_select %p187, %s184, 31
      %s189 = smul.addr %s186, 32
      %s190 = sadd.s32 %s188, %s189
      %s191 = smul.addr %s190, 4
      %s192 = scalar_lea.vmem %s3, %s191
      %s193 = smul.u32 32, %s19
      %s194 = smul.u32 %s19, 256
      %s195 = sshra.s32 %s194, 3
      %s196 = sand.u32 %s194, 7
      %s197 = smul.addr %s195, 4
      %s198 = scalar_lea.vmem %s183, %s197
      %v199 = vld [vmem:[%s198] sm:$0xf]
      %v200 = vld [vmem:[%s198 + $0x4] sm:$0xf]
      %v201 = vld [vmem:[%s198 + $0x8] sm:$0xf]
      %v202 = vld [vmem:[%s198 + $0xc] sm:$0xf]
      %v203 = vld [vmem:[%s198 + $0x10] sm:$0xf]
      %v204 = vld [vmem:[%s198 + $0x14] sm:$0xf]
      %v205 = vld [vmem:[%s198 + $0x18] sm:$0xf]
      %v206 = vld [vmem:[%s198 + $0x1c] sm:$0xf]
      %v207 = vld [vmem:[%s198 + $0x20] sm:$0xf]
      %v208 = vld [vmem:[%s198 + $0x24] sm:$0xf]
      %v209 = vld [vmem:[%s198 + $0x28] sm:$0xf]
      %v210 = vld [vmem:[%s198 + $0x2c] sm:$0xf]
      %v211 = vld [vmem:[%s198 + $0x30] sm:$0xf]
      %v212 = vld [vmem:[%s198 + $0x34] sm:$0xf]
      %v213 = vld [vmem:[%s198 + $0x38] sm:$0xf]
      %v214 = vld [vmem:[%s198 + $0x3c] sm:$0xf]
      %v215 = vld [vmem:[%s198 + $0x40] sm:$0xf]
      %v216 = vld [vmem:[%s198 + $0x44] sm:$0xf]
      %v217 = vld [vmem:[%s198 + $0x48] sm:$0xf]
      %v218 = vld [vmem:[%s198 + $0x4c] sm:$0xf]
      %v219 = vld [vmem:[%s198 + $0x50] sm:$0xf]
      %v220 = vld [vmem:[%s198 + $0x54] sm:$0xf]
      %v221 = vld [vmem:[%s198 + $0x58] sm:$0xf]
      %v222 = vld [vmem:[%s198 + $0x5c] sm:$0xf]
      %v223 = vld [vmem:[%s198 + $0x60] sm:$0xf]
      %v224 = vld [vmem:[%s198 + $0x64] sm:$0xf]
      %v225 = vld [vmem:[%s198 + $0x68] sm:$0xf]
      %v226 = vld [vmem:[%s198 + $0x6c] sm:$0xf]
      %v227 = vld [vmem:[%s198 + $0x70] sm:$0xf]
      %v228 = vld [vmem:[%s198 + $0x74] sm:$0xf]
      %v229 = vld [vmem:[%s198 + $0x78] sm:$0xf]
      %v230 = vld [vmem:[%s198 + $0x7c] sm:$0xf]
      %v231 = vld [vmem:[%s198 + $0x80] sm:$0xf]
      %v232 = vunpack.c.l.bf16 %v199
      %v233 = vunpack.c.l.bf16 %v200
      %v234 = vunpack.c.l.bf16 %v201
      %v235 = vunpack.c.l.bf16 %v202
      %v236 = vunpack.c.l.bf16 %v203
      %v237 = vunpack.c.l.bf16 %v204
      %v238 = vunpack.c.l.bf16 %v205
      %v239 = vunpack.c.l.bf16 %v206
      %v240 = vunpack.c.l.bf16 %v207
      %v241 = vunpack.c.l.bf16 %v208
      %v242 = vunpack.c.l.bf16 %v209
      %v243 = vunpack.c.l.bf16 %v210
      %v244 = vunpack.c.l.bf16 %v211
      %v245 = vunpack.c.l.bf16 %v212
      %v246 = vunpack.c.l.bf16 %v213
      %v247 = vunpack.c.l.bf16 %v214
      %v248 = vunpack.c.l.bf16 %v215
      %v249 = vunpack.c.l.bf16 %v216
      %v250 = vunpack.c.l.bf16 %v217
      %v251 = vunpack.c.l.bf16 %v218
      %v252 = vunpack.c.l.bf16 %v219
      %v253 = vunpack.c.l.bf16 %v220
      %v254 = vunpack.c.l.bf16 %v221
      %v255 = vunpack.c.l.bf16 %v222
      %v256 = vunpack.c.l.bf16 %v223
      %v257 = vunpack.c.l.bf16 %v224
      %v258 = vunpack.c.l.bf16 %v225
      %v259 = vunpack.c.l.bf16 %v226
      %v260 = vunpack.c.l.bf16 %v227
      %v261 = vunpack.c.l.bf16 %v228
      %v262 = vunpack.c.l.bf16 %v229
      %v263 = vunpack.c.l.bf16 %v230
      %v264 = vunpack.c.l.bf16 %v231
      %v265 = vld [vmem:[%s2] sm:$0x1]
      %v267 = vlaneseq
      %v268 = vshrl.u32 %v267, 7
      %v269 = vsub.s32 0, %v268
      %v270 = vrot.slane %v265, %v269
      %v272 = vadd.f32 %v270, 0.0
      %v273 = vld [vmem:[%s1] sm:$0x1]
      %v274 = vlaneseq
      %v275 = vshrl.u32 %v274, 7
      %v276 = vsub.s32 0, %v275
      %v277 = vrot.slane %v273, %v276
      %v278 = vmul.f32 %v232, %v277
      %v279 = vmul.f32 %v233, %v277
      %v280 = vmul.f32 %v234, %v277
      %v281 = vmul.f32 %v235, %v277
      %v282 = vmul.f32 %v236, %v277
      %v283 = vmul.f32 %v237, %v277
      %v284 = vmul.f32 %v238, %v277
      %v285 = vmul.f32 %v239, %v277
      %v286 = vmul.f32 %v240, %v277
      %v287 = vmul.f32 %v241, %v277
      %v288 = vmul.f32 %v242, %v277
      %v289 = vmul.f32 %v243, %v277
      %v290 = vmul.f32 %v244, %v277
      %v291 = vmul.f32 %v245, %v277
      %v292 = vmul.f32 %v246, %v277
      %v293 = vmul.f32 %v247, %v277
      %v294 = vmul.f32 %v248, %v277
      %v295 = vmul.f32 %v249, %v277
      %v296 = vmul.f32 %v250, %v277
      %v297 = vmul.f32 %v251, %v277
      %v298 = vmul.f32 %v252, %v277
      %v299 = vmul.f32 %v253, %v277
      %v300 = vmul.f32 %v254, %v277
      %v301 = vmul.f32 %v255, %v277
      %v302 = vmul.f32 %v256, %v277
      %v303 = vmul.f32 %v257, %v277
      %v304 = vmul.f32 %v258, %v277
      %v305 = vmul.f32 %v259, %v277
      %v306 = vmul.f32 %v260, %v277
      %v307 = vmul.f32 %v261, %v277
      %v308 = vmul.f32 %v262, %v277
      %v309 = vmul.f32 %v263, %v277
      %v310 = vadd.f32 %v272, %v278
      %v311 = vadd.f32 %v272, %v279
      %v312 = vadd.f32 %v272, %v280
      %v313 = vadd.f32 %v272, %v281
      %v314 = vadd.f32 %v272, %v282
      %v315 = vadd.f32 %v272, %v283
      %v316 = vadd.f32 %v272, %v284
      %v317 = vadd.f32 %v272, %v285
      %v318 = vadd.f32 %v272, %v286
      %v319 = vadd.f32 %v272, %v287
      %v320 = vadd.f32 %v272, %v288
      %v321 = vadd.f32 %v272, %v289
      %v322 = vadd.f32 %v272, %v290
      %v323 = vadd.f32 %v272, %v291
      %v324 = vadd.f32 %v272, %v292
      %v325 = vadd.f32 %v272, %v293
      %v326 = vadd.f32 %v272, %v294
      %v327 = vadd.f32 %v272, %v295
      %v328 = vadd.f32 %v272, %v296
      %v329 = vadd.f32 %v272, %v297
      %v330 = vadd.f32 %v272, %v298
      %v331 = vadd.f32 %v272, %v299
      %v332 = vadd.f32 %v272, %v300
      %v333 = vadd.f32 %v272, %v301
      %v334 = vadd.f32 %v272, %v302
      %v335 = vadd.f32 %v272, %v303
      %v336 = vadd.f32 %v272, %v304
      %v337 = vadd.f32 %v272, %v305
      %v338 = vadd.f32 %v272, %v306
      %v339 = vadd.f32 %v272, %v307
      %v340 = vadd.f32 %v272, %v308
      %v341 = vadd.f32 %v272, %v309
      %v342 = vld [vmem:[%s1 + $0x1] sm:$0x1]
      %v343 = vlaneseq
      %v344 = vshrl.u32 %v343, 7
      %v345 = vsub.s32 0, %v344
      %v346 = vrot.slane %v342, %v345
      %v347 = vmul.f32 %v232, %v346
      %v348 = vmul.f32 %v233, %v346
      %v349 = vmul.f32 %v234, %v346
      %v350 = vmul.f32 %v235, %v346
      %v351 = vmul.f32 %v236, %v346
      %v352 = vmul.f32 %v237, %v346
      %v353 = vmul.f32 %v238, %v346
      %v354 = vmul.f32 %v239, %v346
      %v355 = vmul.f32 %v240, %v346
      %v356 = vmul.f32 %v241, %v346
      %v357 = vmul.f32 %v242, %v346
      %v358 = vmul.f32 %v243, %v346
      %v359 = vmul.f32 %v244, %v346
      %v360 = vmul.f32 %v245, %v346
      %v361 = vmul.f32 %v246, %v346
      %v362 = vmul.f32 %v247, %v346
      %v363 = vmul.f32 %v248, %v346
      %v364 = vmul.f32 %v249, %v346
      %v365 = vmul.f32 %v250, %v346
      %v366 = vmul.f32 %v251, %v346
      %v367 = vmul.f32 %v252, %v346
      %v368 = vmul.f32 %v253, %v346
      %v369 = vmul.f32 %v254, %v346
      %v370 = vmul.f32 %v255, %v346
      %v371 = vmul.f32 %v256, %v346
      %v372 = vmul.f32 %v257, %v346
      %v373 = vmul.f32 %v258, %v346
      %v374 = vmul.f32 %v259, %v346
      %v375 = vmul.f32 %v260, %v346
      %v376 = vmul.f32 %v261, %v346
      %v377 = vmul.f32 %v262, %v346
      %v378 = vmul.f32 %v263, %v346
      %v379 = vmul.f32 %v264, %v346
      %vm413 = vcmask 1046528
      %v414 = vrot.slane %v347, 1
      %v415 = vrot.slane %v348, 1
      %v416 = vsel %vm413, %v414, %v415
      %v417 = vrot.slane %v349, 1
      %v418 = vsel %vm413, %v415, %v417
      %v419 = vrot.slane %v350, 1
      %v420 = vsel %vm413, %v417, %v419
      %v421 = vrot.slane %v351, 1
      %v422 = vsel %vm413, %v419, %v421
      %v423 = vrot.slane %v352, 1
      %v424 = vsel %vm413, %v421, %v423
      %v425 = vrot.slane %v353, 1
      %v426 = vsel %vm413, %v423, %v425
      %v427 = vrot.slane %v354, 1
      %v428 = vsel %vm413, %v425, %v427
      %v429 = vrot.slane %v355, 1
      %v430 = vsel %vm413, %v427, %v429
      %v431 = vrot.slane %v356, 1
      %v432 = vsel %vm413, %v429, %v431
      %v433 = vrot.slane %v357, 1
      %v434 = vsel %vm413, %v431, %v433
      %v435 = vrot.slane %v358, 1
      %v436 = vsel %vm413, %v433, %v435
      %v437 = vrot.slane %v359, 1
      %v438 = vsel %vm413, %v435, %v437
      %v439 = vrot.slane %v360, 1
      %v440 = vsel %vm413, %v437, %v439
      %v441 = vrot.slane %v361, 1
      %v442 = vsel %vm413, %v439, %v441
      %v443 = vrot.slane %v362, 1
      %v444 = vsel %vm413, %v441, %v443
      %v445 = vrot.slane %v363, 1
      %v446 = vsel %vm413, %v443, %v445
      %v447 = vrot.slane %v364, 1
      %v448 = vsel %vm413, %v445, %v447
      %v449 = vrot.slane %v365, 1
      %v450 = vsel %vm413, %v447, %v449
      %v451 = vrot.slane %v366, 1
      %v452 = vsel %vm413, %v449, %v451
      %v453 = vrot.slane %v367, 1
      %v454 = vsel %vm413, %v451, %v453
      %v455 = vrot.slane %v368, 1
      %v456 = vsel %vm413, %v453, %v455
      %v457 = vrot.slane %v369, 1
      %v458 = vsel %vm413, %v455, %v457
      %v459 = vrot.slane %v370, 1
      %v460 = vsel %vm413, %v457, %v459
      %v461 = vrot.slane %v371, 1
      %v462 = vsel %vm413, %v459, %v461
      %v463 = vrot.slane %v372, 1
      %v464 = vsel %vm413, %v461, %v463
      %v465 = vrot.slane %v373, 1
      %v466 = vsel %vm413, %v463, %v465
      %v467 = vrot.slane %v374, 1
      %v468 = vsel %vm413, %v465, %v467
      %v469 = vrot.slane %v375, 1
      %v470 = vsel %vm413, %v467, %v469
      %v471 = vrot.slane %v376, 1
      %v472 = vsel %vm413, %v469, %v471
      %v473 = vrot.slane %v377, 1
      %v474 = vsel %vm413, %v471, %v473
      %v475 = vrot.slane %v378, 1
      %v476 = vsel %vm413, %v473, %v475
      %v477 = vrot.slane %v379, 1
      %v478 = vsel %vm413, %v475, %v477
      %v511 = vadd.f32 %v310, %v416
      %v512 = vadd.f32 %v311, %v418
      %v513 = vadd.f32 %v312, %v420
      %v514 = vadd.f32 %v313, %v422
      %v515 = vadd.f32 %v314, %v424
      %v516 = vadd.f32 %v315, %v426
      %v517 = vadd.f32 %v316, %v428
      %v518 = vadd.f32 %v317, %v430
      %v519 = vadd.f32 %v318, %v432
      %v520 = vadd.f32 %v319, %v434
      %v521 = vadd.f32 %v320, %v436
      %v522 = vadd.f32 %v321, %v438
      %v523 = vadd.f32 %v322, %v440
      %v524 = vadd.f32 %v323, %v442
      %v525 = vadd.f32 %v324, %v444
      %v526 = vadd.f32 %v325, %v446
      %v527 = vadd.f32 %v326, %v448
      %v528 = vadd.f32 %v327, %v450
      %v529 = vadd.f32 %v328, %v452
      %v530 = vadd.f32 %v329, %v454
      %v531 = vadd.f32 %v330, %v456
      %v532 = vadd.f32 %v331, %v458
      %v533 = vadd.f32 %v332, %v460
      %v534 = vadd.f32 %v333, %v462
      %v535 = vadd.f32 %v334, %v464
      %v536 = vadd.f32 %v335, %v466
      %v537 = vadd.f32 %v336, %v468
      %v538 = vadd.f32 %v337, %v470
      %v539 = vadd.f32 %v338, %v472
      %v540 = vadd.f32 %v339, %v474
      %v541 = vadd.f32 %v340, %v476
      %v542 = vadd.f32 %v341, %v478
      %v543 = vld [vmem:[%s1 + $0x2] sm:$0x1]
      %v544 = vlaneseq
      %v545 = vshrl.u32 %v544, 7
      %v546 = vsub.s32 0, %v545
      %v547 = vrot.slane %v543, %v546
      %v548 = vmul.f32 %v232, %v547
      %v549 = vmul.f32 %v233, %v547
      %v550 = vmul.f32 %v234, %v547
      %v551 = vmul.f32 %v235, %v547
      %v552 = vmul.f32 %v236, %v547
      %v553 = vmul.f32 %v237, %v547
      %v554 = vmul.f32 %v238, %v547
      %v555 = vmul.f32 %v239, %v547
      %v556 = vmul.f32 %v240, %v547
      %v557 = vmul.f32 %v241, %v547
      %v558 = vmul.f32 %v242, %v547
      %v559 = vmul.f32 %v243, %v547
      %v560 = vmul.f32 %v244, %v547
      %v561 = vmul.f32 %v245, %v547
      %v562 = vmul.f32 %v246, %v547
      %v563 = vmul.f32 %v247, %v547
      %v564 = vmul.f32 %v248, %v547
      %v565 = vmul.f32 %v249, %v547
      %v566 = vmul.f32 %v250, %v547
      %v567 = vmul.f32 %v251, %v547
      %v568 = vmul.f32 %v252, %v547
      %v569 = vmul.f32 %v253, %v547
      %v570 = vmul.f32 %v254, %v547
      %v571 = vmul.f32 %v255, %v547
      %v572 = vmul.f32 %v256, %v547
      %v573 = vmul.f32 %v257, %v547
      %v574 = vmul.f32 %v258, %v547
      %v575 = vmul.f32 %v259, %v547
      %v576 = vmul.f32 %v260, %v547
      %v577 = vmul.f32 %v261, %v547
      %v578 = vmul.f32 %v262, %v547
      %v579 = vmul.f32 %v263, %v547
      %v580 = vmul.f32 %v264, %v547
      %vm614 = vcmask 1045504
      %v615 = vrot.slane %v548, 2
      %v616 = vrot.slane %v549, 2
      %v617 = vsel %vm614, %v615, %v616
      %v618 = vrot.slane %v550, 2
      %v619 = vsel %vm614, %v616, %v618
      %v620 = vrot.slane %v551, 2
      %v621 = vsel %vm614, %v618, %v620
      %v622 = vrot.slane %v552, 2
      %v623 = vsel %vm614, %v620, %v622
      %v624 = vrot.slane %v553, 2
      %v625 = vsel %vm614, %v622, %v624
      %v626 = vrot.slane %v554, 2
      %v627 = vsel %vm614, %v624, %v626
      %v628 = vrot.slane %v555, 2
      %v629 = vsel %vm614, %v626, %v628
      %v630 = vrot.slane %v556, 2
      %v631 = vsel %vm614, %v628, %v630
      %v632 = vrot.slane %v557, 2
      %v633 = vsel %vm614, %v630, %v632
      %v634 = vrot.slane %v558, 2
      %v635 = vsel %vm614, %v632, %v634
      %v636 = vrot.slane %v559, 2
      %v637 = vsel %vm614, %v634, %v636
      %v638 = vrot.slane %v560, 2
      %v639 = vsel %vm614, %v636, %v638
      %v640 = vrot.slane %v561, 2
      %v641 = vsel %vm614, %v638, %v640
      %v642 = vrot.slane %v562, 2
      %v643 = vsel %vm614, %v640, %v642
      %v644 = vrot.slane %v563, 2
      %v645 = vsel %vm614, %v642, %v644
      %v646 = vrot.slane %v564, 2
      %v647 = vsel %vm614, %v644, %v646
      %v648 = vrot.slane %v565, 2
      %v649 = vsel %vm614, %v646, %v648
      %v650 = vrot.slane %v566, 2
      %v651 = vsel %vm614, %v648, %v650
      %v652 = vrot.slane %v567, 2
      %v653 = vsel %vm614, %v650, %v652
      %v654 = vrot.slane %v568, 2
      %v655 = vsel %vm614, %v652, %v654
      %v656 = vrot.slane %v569, 2
      %v657 = vsel %vm614, %v654, %v656
      %v658 = vrot.slane %v570, 2
      %v659 = vsel %vm614, %v656, %v658
      %v660 = vrot.slane %v571, 2
      %v661 = vsel %vm614, %v658, %v660
      %v662 = vrot.slane %v572, 2
      %v663 = vsel %vm614, %v660, %v662
      %v664 = vrot.slane %v573, 2
      %v665 = vsel %vm614, %v662, %v664
      %v666 = vrot.slane %v574, 2
      %v667 = vsel %vm614, %v664, %v666
      %v668 = vrot.slane %v575, 2
      %v669 = vsel %vm614, %v666, %v668
      %v670 = vrot.slane %v576, 2
      %v671 = vsel %vm614, %v668, %v670
      %v672 = vrot.slane %v577, 2
      %v673 = vsel %vm614, %v670, %v672
      %v674 = vrot.slane %v578, 2
      %v675 = vsel %vm614, %v672, %v674
      %v676 = vrot.slane %v579, 2
      %v677 = vsel %vm614, %v674, %v676
      %v678 = vrot.slane %v580, 2
      %v679 = vsel %vm614, %v676, %v678
      %v712 = vadd.f32 %v511, %v617
      %v713 = vadd.f32 %v512, %v619
      %v714 = vadd.f32 %v513, %v621
      %v715 = vadd.f32 %v514, %v623
      %v716 = vadd.f32 %v515, %v625
      %v717 = vadd.f32 %v516, %v627
      %v718 = vadd.f32 %v517, %v629
      %v719 = vadd.f32 %v518, %v631
      %v720 = vadd.f32 %v519, %v633
      %v721 = vadd.f32 %v520, %v635
      %v722 = vadd.f32 %v521, %v637
      %v723 = vadd.f32 %v522, %v639
      %v724 = vadd.f32 %v523, %v641
      %v725 = vadd.f32 %v524, %v643
      %v726 = vadd.f32 %v525, %v645
      %v727 = vadd.f32 %v526, %v647
      %v728 = vadd.f32 %v527, %v649
      %v729 = vadd.f32 %v528, %v651
      %v730 = vadd.f32 %v529, %v653
      %v731 = vadd.f32 %v530, %v655
      %v732 = vadd.f32 %v531, %v657
      %v733 = vadd.f32 %v532, %v659
      %v734 = vadd.f32 %v533, %v661
      %v735 = vadd.f32 %v534, %v663
      %v736 = vadd.f32 %v535, %v665
      %v737 = vadd.f32 %v536, %v667
      %v738 = vadd.f32 %v537, %v669
      %v739 = vadd.f32 %v538, %v671
      %v740 = vadd.f32 %v539, %v673
      %v741 = vadd.f32 %v540, %v675
      %v742 = vadd.f32 %v541, %v677
      %v743 = vadd.f32 %v542, %v679
      %v744 = vld [vmem:[%s1 + $0x3] sm:$0x1]
      %v745 = vlaneseq
      %v746 = vshrl.u32 %v745, 7
      %v747 = vsub.s32 0, %v746
      %v748 = vrot.slane %v744, %v747
      %v749 = vmul.f32 %v232, %v748
      %v750 = vmul.f32 %v233, %v748
      %v751 = vmul.f32 %v234, %v748
      %v752 = vmul.f32 %v235, %v748
      %v753 = vmul.f32 %v236, %v748
      %v754 = vmul.f32 %v237, %v748
      %v755 = vmul.f32 %v238, %v748
      %v756 = vmul.f32 %v239, %v748
      %v757 = vmul.f32 %v240, %v748
      %v758 = vmul.f32 %v241, %v748
      %v759 = vmul.f32 %v242, %v748
      %v760 = vmul.f32 %v243, %v748
      %v761 = vmul.f32 %v244, %v748
      %v762 = vmul.f32 %v245, %v748
      %v763 = vmul.f32 %v246, %v748
      %v764 = vmul.f32 %v247, %v748
      %v765 = vmul.f32 %v248, %v748
      %v766 = vmul.f32 %v249, %v748
      %v767 = vmul.f32 %v250, %v748
      %v768 = vmul.f32 %v251, %v748
      %v769 = vmul.f32 %v252, %v748
      %v770 = vmul.f32 %v253, %v748
      %v771 = vmul.f32 %v254, %v748
      %v772 = vmul.f32 %v255, %v748
      %v773 = vmul.f32 %v256, %v748
      %v774 = vmul.f32 %v257, %v748
      %v775 = vmul.f32 %v258, %v748
      %v776 = vmul.f32 %v259, %v748
      %v777 = vmul.f32 %v260, %v748
      %v778 = vmul.f32 %v261, %v748
      %v779 = vmul.f32 %v262, %v748
      %v780 = vmul.f32 %v263, %v748
      %v781 = vmul.f32 %v264, %v748
      %vm815 = vcmask 1044480
      %v816 = vrot.slane %v749, 3
      %v817 = vrot.slane %v750, 3
      %v818 = vsel %vm815, %v816, %v817
      %v819 = vrot.slane %v751, 3
      %v820 = vsel %vm815, %v817, %v819
      %v821 = vrot.slane %v752, 3
      %v822 = vsel %vm815, %v819, %v821
      %v823 = vrot.slane %v753, 3
      %v824 = vsel %vm815, %v821, %v823
      %v825 = vrot.slane %v754, 3
      %v826 = vsel %vm815, %v823, %v825
      %v827 = vrot.slane %v755, 3
      %v828 = vsel %vm815, %v825, %v827
      %v829 = vrot.slane %v756, 3
      %v830 = vsel %vm815, %v827, %v829
      %v831 = vrot.slane %v757, 3
      %v832 = vsel %vm815, %v829, %v831
      %v833 = vrot.slane %v758, 3
      %v834 = vsel %vm815, %v831, %v833
      %v835 = vrot.slane %v759, 3
      %v836 = vsel %vm815, %v833, %v835
      %v837 = vrot.slane %v760, 3
      %v838 = vsel %vm815, %v835, %v837
      %v839 = vrot.slane %v761, 3
      %v840 = vsel %vm815, %v837, %v839
      %v841 = vrot.slane %v762, 3
      %v842 = vsel %vm815, %v839, %v841
      %v843 = vrot.slane %v763, 3
      %v844 = vsel %vm815, %v841, %v843
      %v845 = vrot.slane %v764, 3
      %v846 = vsel %vm815, %v843, %v845
      %v847 = vrot.slane %v765, 3
      %v848 = vsel %vm815, %v845, %v847
      %v849 = vrot.slane %v766, 3
      %v850 = vsel %vm815, %v847, %v849
      %v851 = vrot.slane %v767, 3
      %v852 = vsel %vm815, %v849, %v851
      %v853 = vrot.slane %v768, 3
      %v854 = vsel %vm815, %v851, %v853
      %v855 = vrot.slane %v769, 3
      %v856 = vsel %vm815, %v853, %v855
      %v857 = vrot.slane %v770, 3
      %v858 = vsel %vm815, %v855, %v857
      %v859 = vrot.slane %v771, 3
      %v860 = vsel %vm815, %v857, %v859
      %v861 = vrot.slane %v772, 3
      %v862 = vsel %vm815, %v859, %v861
      %v863 = vrot.slane %v773, 3
      %v864 = vsel %vm815, %v861, %v863
      %v865 = vrot.slane %v774, 3
      %v866 = vsel %vm815, %v863, %v865
      %v867 = vrot.slane %v775, 3
      %v868 = vsel %vm815, %v865, %v867
      %v869 = vrot.slane %v776, 3
      %v870 = vsel %vm815, %v867, %v869
      %v871 = vrot.slane %v777, 3
      %v872 = vsel %vm815, %v869, %v871
      %v873 = vrot.slane %v778, 3
      %v874 = vsel %vm815, %v871, %v873
      %v875 = vrot.slane %v779, 3
      %v876 = vsel %vm815, %v873, %v875
      %v877 = vrot.slane %v780, 3
      %v878 = vsel %vm815, %v875, %v877
      %v879 = vrot.slane %v781, 3
      %v880 = vsel %vm815, %v877, %v879
      %v913 = vadd.f32 %v712, %v818
      %v914 = vadd.f32 %v713, %v820
      %v915 = vadd.f32 %v714, %v822
      %v916 = vadd.f32 %v715, %v824
      %v917 = vadd.f32 %v716, %v826
      %v918 = vadd.f32 %v717, %v828
      %v919 = vadd.f32 %v718, %v830
      %v920 = vadd.f32 %v719, %v832
      %v921 = vadd.f32 %v720, %v834
      %v922 = vadd.f32 %v721, %v836
      %v923 = vadd.f32 %v722, %v838
      %v924 = vadd.f32 %v723, %v840
      %v925 = vadd.f32 %v724, %v842
      %v926 = vadd.f32 %v725, %v844
      %v927 = vadd.f32 %v726, %v846
      %v928 = vadd.f32 %v727, %v848
      %v929 = vadd.f32 %v728, %v850
      %v930 = vadd.f32 %v729, %v852
      %v931 = vadd.f32 %v730, %v854
      %v932 = vadd.f32 %v731, %v856
      %v933 = vadd.f32 %v732, %v858
      %v934 = vadd.f32 %v733, %v860
      %v935 = vadd.f32 %v734, %v862
      %v936 = vadd.f32 %v735, %v864
      %v937 = vadd.f32 %v736, %v866
      %v938 = vadd.f32 %v737, %v868
      %v939 = vadd.f32 %v738, %v870
      %v940 = vadd.f32 %v739, %v872
      %v941 = vadd.f32 %v740, %v874
      %v942 = vadd.f32 %v741, %v876
      %v943 = vadd.f32 %v742, %v878
      %v944 = vadd.f32 %v743, %v880
      %v945 = vsub.f32 0.0, %v913
      %v946 = vsub.f32 0.0, %v914
      %v947 = vsub.f32 0.0, %v915
      %v948 = vsub.f32 0.0, %v916
      %v949 = vsub.f32 0.0, %v917
      %v950 = vsub.f32 0.0, %v918
      %v951 = vsub.f32 0.0, %v919
      %v952 = vsub.f32 0.0, %v920
      %v953 = vsub.f32 0.0, %v921
      %v954 = vsub.f32 0.0, %v922
      %v955 = vsub.f32 0.0, %v923
      %v956 = vsub.f32 0.0, %v924
      %v957 = vsub.f32 0.0, %v925
      %v958 = vsub.f32 0.0, %v926
      %v959 = vsub.f32 0.0, %v927
      %v960 = vsub.f32 0.0, %v928
      %v961 = vsub.f32 0.0, %v929
      %v962 = vsub.f32 0.0, %v930
      %v963 = vsub.f32 0.0, %v931
      %v964 = vsub.f32 0.0, %v932
      %v965 = vsub.f32 0.0, %v933
      %v966 = vsub.f32 0.0, %v934
      %v967 = vsub.f32 0.0, %v935
      %v968 = vsub.f32 0.0, %v936
      %v969 = vsub.f32 0.0, %v937
      %v970 = vsub.f32 0.0, %v938
      %v971 = vsub.f32 0.0, %v939
      %v972 = vsub.f32 0.0, %v940
      %v973 = vsub.f32 0.0, %v941
      %v974 = vsub.f32 0.0, %v942
      %v975 = vsub.f32 0.0, %v943
      %v976 = vsub.f32 0.0, %v944
      %v977 = vmul.f32 %v945, 1.442695
      %v978 = vpow.pop %v977
      %v979 = vmul.f32 %v946, 1.442695
      %v980 = vpow.pop %v979
      %v981 = vmul.f32 %v947, 1.442695
      %v982 = vpow.pop %v981
      %v983 = vmul.f32 %v948, 1.442695
      %v984 = vpow.pop %v983
      %v985 = vmul.f32 %v949, 1.442695
      %v986 = vpow.pop %v985
      %v987 = vmul.f32 %v950, 1.442695
      %v988 = vpow.pop %v987
      %v989 = vmul.f32 %v951, 1.442695
      %v990 = vpow.pop %v989
      %v991 = vmul.f32 %v952, 1.442695
      %v992 = vpow.pop %v991
      %v993 = vmul.f32 %v953, 1.442695
      %v994 = vpow.pop %v993
      %v995 = vmul.f32 %v954, 1.442695
      %v996 = vpow.pop %v995
      %v997 = vmul.f32 %v955, 1.442695
      %v998 = vpow.pop %v997
      %v999 = vmul.f32 %v956, 1.442695
      %v1000 = vpow.pop %v999
      %v1001 = vmul.f32 %v957, 1.442695
      %v1002 = vpow.pop %v1001
      %v1003 = vmul.f32 %v958, 1.442695
      %v1004 = vpow.pop %v1003
      %v1005 = vmul.f32 %v959, 1.442695
      %v1006 = vpow.pop %v1005
      %v1007 = vmul.f32 %v960, 1.442695
      %v1008 = vpow.pop %v1007
      %v1009 = vmul.f32 %v961, 1.442695
      %v1010 = vpow.pop %v1009
      %v1011 = vmul.f32 %v962, 1.442695
      %v1012 = vpow.pop %v1011
      %v1013 = vmul.f32 %v963, 1.442695
      %v1014 = vpow.pop %v1013
      %v1015 = vmul.f32 %v964, 1.442695
      %v1016 = vpow.pop %v1015
      %v1017 = vmul.f32 %v965, 1.442695
      %v1018 = vpow.pop %v1017
      %v1019 = vmul.f32 %v966, 1.442695
      %v1020 = vpow.pop %v1019
      %v1021 = vmul.f32 %v967, 1.442695
      %v1022 = vpow.pop %v1021
      %v1023 = vmul.f32 %v968, 1.442695
      %v1024 = vpow.pop %v1023
      %v1025 = vmul.f32 %v969, 1.442695
      %v1026 = vpow.pop %v1025
      %v1027 = vmul.f32 %v970, 1.442695
      %v1028 = vpow.pop %v1027
      %v1029 = vmul.f32 %v971, 1.442695
      %v1030 = vpow.pop %v1029
      %v1031 = vmul.f32 %v972, 1.442695
      %v1032 = vpow.pop %v1031
      %v1033 = vmul.f32 %v973, 1.442695
      %v1034 = vpow.pop %v1033
      %v1035 = vmul.f32 %v974, 1.442695
      %v1036 = vpow.pop %v1035
      %v1037 = vmul.f32 %v975, 1.442695
      %v1038 = vpow.pop %v1037
      %v1039 = vmul.f32 %v976, 1.442695
      %v1040 = vpow.pop %v1039
      %v1041 = vadd.f32 %v978, 1.0
      %v1042 = vadd.f32 %v980, 1.0
      %v1043 = vadd.f32 %v982, 1.0
      %v1044 = vadd.f32 %v984, 1.0
      %v1045 = vadd.f32 %v986, 1.0
      %v1046 = vadd.f32 %v988, 1.0
      %v1047 = vadd.f32 %v990, 1.0
      %v1048 = vadd.f32 %v992, 1.0
      %v1049 = vadd.f32 %v994, 1.0
      %v1050 = vadd.f32 %v996, 1.0
      %v1051 = vadd.f32 %v998, 1.0
      %v1052 = vadd.f32 %v1000, 1.0
      %v1053 = vadd.f32 %v1002, 1.0
      %v1054 = vadd.f32 %v1004, 1.0
      %v1055 = vadd.f32 %v1006, 1.0
      %v1056 = vadd.f32 %v1008, 1.0
      %v1057 = vadd.f32 %v1010, 1.0
      %v1058 = vadd.f32 %v1012, 1.0
      %v1059 = vadd.f32 %v1014, 1.0
      %v1060 = vadd.f32 %v1016, 1.0
      %v1061 = vadd.f32 %v1018, 1.0
      %v1062 = vadd.f32 %v1020, 1.0
      %v1063 = vadd.f32 %v1022, 1.0
      %v1064 = vadd.f32 %v1024, 1.0
      %v1065 = vadd.f32 %v1026, 1.0
      %v1066 = vadd.f32 %v1028, 1.0
      %v1067 = vadd.f32 %v1030, 1.0
      %v1068 = vadd.f32 %v1032, 1.0
      %v1069 = vadd.f32 %v1034, 1.0
      %v1070 = vadd.f32 %v1036, 1.0
      %v1071 = vadd.f32 %v1038, 1.0
      %v1072 = vadd.f32 %v1040, 1.0
      %v1073 = vrcp.pop %v1041
      %v1074 = vmul.f32 1.0, %v1073
      %v1075 = vrcp.pop %v1042
      %v1076 = vmul.f32 1.0, %v1075
      %v1077 = vrcp.pop %v1043
      %v1078 = vmul.f32 1.0, %v1077
      %v1079 = vrcp.pop %v1044
      %v1080 = vmul.f32 1.0, %v1079
      %v1081 = vrcp.pop %v1045
      %v1082 = vmul.f32 1.0, %v1081
      %v1083 = vrcp.pop %v1046
      %v1084 = vmul.f32 1.0, %v1083
      %v1085 = vrcp.pop %v1047
      %v1086 = vmul.f32 1.0, %v1085
      %v1087 = vrcp.pop %v1048
      %v1088 = vmul.f32 1.0, %v1087
      %v1089 = vrcp.pop %v1049
      %v1090 = vmul.f32 1.0, %v1089
      %v1091 = vrcp.pop %v1050
      %v1092 = vmul.f32 1.0, %v1091
      %v1093 = vrcp.pop %v1051
      %v1094 = vmul.f32 1.0, %v1093
      %v1095 = vrcp.pop %v1052
      %v1096 = vmul.f32 1.0, %v1095
      %v1097 = vrcp.pop %v1053
      %v1098 = vmul.f32 1.0, %v1097
      %v1099 = vrcp.pop %v1054
      %v1100 = vmul.f32 1.0, %v1099
      %v1101 = vrcp.pop %v1055
      %v1102 = vmul.f32 1.0, %v1101
      %v1103 = vrcp.pop %v1056
      %v1104 = vmul.f32 1.0, %v1103
      %v1105 = vrcp.pop %v1057
      %v1106 = vmul.f32 1.0, %v1105
      %v1107 = vrcp.pop %v1058
      %v1108 = vmul.f32 1.0, %v1107
      %v1109 = vrcp.pop %v1059
      %v1110 = vmul.f32 1.0, %v1109
      %v1111 = vrcp.pop %v1060
      %v1112 = vmul.f32 1.0, %v1111
      %v1113 = vrcp.pop %v1061
      %v1114 = vmul.f32 1.0, %v1113
      %v1115 = vrcp.pop %v1062
      %v1116 = vmul.f32 1.0, %v1115
      %v1117 = vrcp.pop %v1063
      %v1118 = vmul.f32 1.0, %v1117
      %v1119 = vrcp.pop %v1064
      %v1120 = vmul.f32 1.0, %v1119
      %v1121 = vrcp.pop %v1065
      %v1122 = vmul.f32 1.0, %v1121
      %v1123 = vrcp.pop %v1066
      %v1124 = vmul.f32 1.0, %v1123
      %v1125 = vrcp.pop %v1067
      %v1126 = vmul.f32 1.0, %v1125
      %v1127 = vrcp.pop %v1068
      %v1128 = vmul.f32 1.0, %v1127
      %v1129 = vrcp.pop %v1069
      %v1130 = vmul.f32 1.0, %v1129
      %v1131 = vrcp.pop %v1070
      %v1132 = vmul.f32 1.0, %v1131
      %v1133 = vrcp.pop %v1071
      %v1134 = vmul.f32 1.0, %v1133
      %v1135 = vrcp.pop %v1072
      %v1136 = vmul.f32 1.0, %v1135
      %v1137 = vmul.f32 %v913, %v1074
      %v1138 = vmul.f32 %v914, %v1076
      %v1139 = vmul.f32 %v915, %v1078
      %v1140 = vmul.f32 %v916, %v1080
      %v1141 = vmul.f32 %v917, %v1082
      %v1142 = vmul.f32 %v918, %v1084
      %v1143 = vmul.f32 %v919, %v1086
      %v1144 = vmul.f32 %v920, %v1088
      %v1145 = vmul.f32 %v921, %v1090
      %v1146 = vmul.f32 %v922, %v1092
      %v1147 = vmul.f32 %v923, %v1094
      %v1148 = vmul.f32 %v924, %v1096
      %v1149 = vmul.f32 %v925, %v1098
      %v1150 = vmul.f32 %v926, %v1100
      %v1151 = vmul.f32 %v927, %v1102
      %v1152 = vmul.f32 %v928, %v1104
      %v1153 = vmul.f32 %v929, %v1106
      %v1154 = vmul.f32 %v930, %v1108
      %v1155 = vmul.f32 %v931, %v1110
      %v1156 = vmul.f32 %v932, %v1112
      %v1157 = vmul.f32 %v933, %v1114
      %v1158 = vmul.f32 %v934, %v1116
      %v1159 = vmul.f32 %v935, %v1118
      %v1160 = vmul.f32 %v936, %v1120
      %v1161 = vmul.f32 %v937, %v1122
      %v1162 = vmul.f32 %v938, %v1124
      %v1163 = vmul.f32 %v939, %v1126
      %v1164 = vmul.f32 %v940, %v1128
      %v1165 = vmul.f32 %v941, %v1130
      %v1166 = vmul.f32 %v942, %v1132
      %v1167 = vmul.f32 %v943, %v1134
      %v1168 = vmul.f32 %v944, %v1136
      %v1169 = vpack.c.bf16 %v1138, %v1137
      %v1170 = vpack.c.bf16 %v1140, %v1139
      %v1171 = vpack.c.bf16 %v1142, %v1141
      %v1172 = vpack.c.bf16 %v1144, %v1143
      %v1173 = vpack.c.bf16 %v1146, %v1145
      %v1174 = vpack.c.bf16 %v1148, %v1147
      %v1175 = vpack.c.bf16 %v1150, %v1149
      %v1176 = vpack.c.bf16 %v1152, %v1151
      %v1177 = vpack.c.bf16 %v1154, %v1153
      %v1178 = vpack.c.bf16 %v1156, %v1155
      %v1179 = vpack.c.bf16 %v1158, %v1157
      %v1180 = vpack.c.bf16 %v1160, %v1159
      %v1181 = vpack.c.bf16 %v1162, %v1161
      %v1182 = vpack.c.bf16 %v1164, %v1163
      %v1183 = vpack.c.bf16 %v1166, %v1165
      %v1184 = vpack.c.bf16 %v1168, %v1167
      %v1201 = vunpack.c.l.b16 %v1169
      %v1202 = vunpack.c.h.b16 %v1169
      %v1203 = vunpack.c.l.b16 %v1170
      %v1204 = vunpack.c.h.b16 %v1170
      %v1205 = vunpack.c.l.b16 %v1171
      %v1206 = vunpack.c.h.b16 %v1171
      %v1207 = vunpack.c.l.b16 %v1172
      %v1208 = vunpack.c.h.b16 %v1172
      %v1209 = vunpack.c.l.b16 %v1173
      %v1210 = vunpack.c.h.b16 %v1173
      %v1211 = vunpack.c.l.b16 %v1174
      %v1212 = vunpack.c.h.b16 %v1174
      %v1213 = vunpack.c.l.b16 %v1175
      %v1214 = vunpack.c.h.b16 %v1175
      %v1215 = vunpack.c.l.b16 %v1176
      %v1216 = vunpack.c.h.b16 %v1176
      %v1217 = vunpack.c.l.b16 %v1177
      %v1218 = vunpack.c.h.b16 %v1177
      %v1219 = vunpack.c.l.b16 %v1178
      %v1220 = vunpack.c.h.b16 %v1178
      %v1221 = vunpack.c.l.b16 %v1179
      %v1222 = vunpack.c.h.b16 %v1179
      %v1223 = vunpack.c.l.b16 %v1180
      %v1224 = vunpack.c.h.b16 %v1180
      %v1225 = vunpack.c.l.b16 %v1181
      %v1226 = vunpack.c.h.b16 %v1181
      %v1227 = vunpack.c.l.b16 %v1182
      %v1228 = vunpack.c.h.b16 %v1182
      %v1229 = vunpack.c.l.b16 %v1183
      %v1230 = vunpack.c.h.b16 %v1183
      %v1231 = vunpack.c.l.b16 %v1184
      %v1232 = vunpack.c.h.b16 %v1184
      %v1233 = vpack.c.b16 %v1201, %v1201
      %v1234 = vpack.c.b16 %v1202, %v1202
      %v1235 = vpack.c.b16 %v1203, %v1203
      %v1236 = vpack.c.b16 %v1204, %v1204
      %v1237 = vpack.c.b16 %v1205, %v1205
      %v1238 = vpack.c.b16 %v1206, %v1206
      %v1239 = vpack.c.b16 %v1207, %v1207
      %v1240 = vpack.c.b16 %v1208, %v1208
      %v1241 = vpack.c.b16 %v1209, %v1209
      %v1242 = vpack.c.b16 %v1210, %v1210
      %v1243 = vpack.c.b16 %v1211, %v1211
      %v1244 = vpack.c.b16 %v1212, %v1212
      %v1245 = vpack.c.b16 %v1213, %v1213
      %v1246 = vpack.c.b16 %v1214, %v1214
      %v1247 = vpack.c.b16 %v1215, %v1215
      %v1248 = vpack.c.b16 %v1216, %v1216
      %v1249 = vpack.c.b16 %v1217, %v1217
      %v1250 = vpack.c.b16 %v1218, %v1218
      %v1251 = vpack.c.b16 %v1219, %v1219
      %v1252 = vpack.c.b16 %v1220, %v1220
      %v1253 = vpack.c.b16 %v1221, %v1221
      %v1254 = vpack.c.b16 %v1222, %v1222
      %v1255 = vpack.c.b16 %v1223, %v1223
      %v1256 = vpack.c.b16 %v1224, %v1224
      %v1257 = vpack.c.b16 %v1225, %v1225
      %v1258 = vpack.c.b16 %v1226, %v1226
      %v1259 = vpack.c.b16 %v1227, %v1227
      %v1260 = vpack.c.b16 %v1228, %v1228
      %v1261 = vpack.c.b16 %v1229, %v1229
      %v1262 = vpack.c.b16 %v1230, %v1230
      %v1263 = vpack.c.b16 %v1231, %v1231
      %v1264 = vpack.c.b16 %v1232, %v1232
      %vm1297 = vcmask 60416
      %1298 = vst.msk [vmem:[%s192] sm:$0xf] %vm1297, %v1233
      %1299 = vst.msk [vmem:[%s192 + $0x4] sm:$0xf] %vm1297, %v1234
      %1300 = vst.msk [vmem:[%s192 + $0x8] sm:$0xf] %vm1297, %v1235
      %1301 = vst.msk [vmem:[%s192 + $0xc] sm:$0xf] %vm1297, %v1236
      %1302 = vst.msk [vmem:[%s192 + $0x10] sm:$0xf] %vm1297, %v1237
      %1303 = vst.msk [vmem:[%s192 + $0x14] sm:$0xf] %vm1297, %v1238
      %1304 = vst.msk [vmem:[%s192 + $0x18] sm:$0xf] %vm1297, %v1239
      %1305 = vst.msk [vmem:[%s192 + $0x1c] sm:$0xf] %vm1297, %v1240
      %1306 = vst.msk [vmem:[%s192 + $0x20] sm:$0xf] %vm1297, %v1241
      %1307 = vst.msk [vmem:[%s192 + $0x24] sm:$0xf] %vm1297, %v1242
      %1308 = vst.msk [vmem:[%s192 + $0x28] sm:$0xf] %vm1297, %v1243
      %1309 = vst.msk [vmem:[%s192 + $0x2c] sm:$0xf] %vm1297, %v1244
      %1310 = vst.msk [vmem:[%s192 + $0x30] sm:$0xf] %vm1297, %v1245
      %1311 = vst.msk [vmem:[%s192 + $0x34] sm:$0xf] %vm1297, %v1246
      %1312 = vst.msk [vmem:[%s192 + $0x38] sm:$0xf] %vm1297, %v1247
      %1313 = vst.msk [vmem:[%s192 + $0x3c] sm:$0xf] %vm1297, %v1248
      %1314 = vst.msk [vmem:[%s192 + $0x40] sm:$0xf] %vm1297, %v1249
      %1315 = vst.msk [vmem:[%s192 + $0x44] sm:$0xf] %vm1297, %v1250
      %1316 = vst.msk [vmem:[%s192 + $0x48] sm:$0xf] %vm1297, %v1251
      %1317 = vst.msk [vmem:[%s192 + $0x4c] sm:$0xf] %vm1297, %v1252
      %1318 = vst.msk [vmem:[%s192 + $0x50] sm:$0xf] %vm1297, %v1253
      %1319 = vst.msk [vmem:[%s192 + $0x54] sm:$0xf] %vm1297, %v1254
      %1320 = vst.msk [vmem:[%s192 + $0x58] sm:$0xf] %vm1297, %v1255
      %1321 = vst.msk [vmem:[%s192 + $0x5c] sm:$0xf] %vm1297, %v1256
      %1322 = vst.msk [vmem:[%s192 + $0x60] sm:$0xf] %vm1297, %v1257
      %1323 = vst.msk [vmem:[%s192 + $0x64] sm:$0xf] %vm1297, %v1258
      %1324 = vst.msk [vmem:[%s192 + $0x68] sm:$0xf] %vm1297, %v1259
      %1325 = vst.msk [vmem:[%s192 + $0x6c] sm:$0xf] %vm1297, %v1260
      %1326 = vst.msk [vmem:[%s192 + $0x70] sm:$0xf] %vm1297, %v1261
      %1327 = vst.msk [vmem:[%s192 + $0x74] sm:$0xf] %vm1297, %v1262
      %1328 = vst.msk [vmem:[%s192 + $0x78] sm:$0xf] %vm1297, %v1263
      %1329 = vst.msk [vmem:[%s192 + $0x7c] sm:$0xf] %vm1297, %v1264
      %s1330 = smul.u32 32, %s19
      %p1331 = scmp.lt.s32.totalorder %s18, 1
      %s1332 = scalar_select %p1331, %s18, 1
      %p1333 = scmp.lt.s32.totalorder %s1330, 31
      %s1334 = scalar_select %p1333, %s1330, 31
      %s1335 = smul.addr %s1332, 32
      %s1336 = sadd.s32 %s1334, %s1335
      %s1337 = smul.addr %s1336, 4
      %s1338 = scalar_lea.vmem %s3, %s1337
      // Predicated region
      $region33: #{mcc_block_forward.10} parent=31 // pred_check
        %p1339 = pneg %p114
      $region34: #{mcc_block_forward.10} parent=31 // pred_check_branch
        %1341 = sbr.rel (%p1339) target = $region36
      $region35: #{mcc_block_forward.10} parent=31 // pred_region
        %s1342 = smul.u32 32, %s19
      $region36: #{mcc_block_forward.10} parent=31 // pred_fallthru
        _
    $region32: #{mcc_block_forward.10} parent=5 // pred_fallthru
      _
    %p1343 = scmp.le.s32.totalorder 2, %s9
    // Predicated region
    $region37: #{mcc_block_forward.10} parent=5 // pred_check
      %p1344 = pneg %p1343
    $region38: #{mcc_block_forward.10} parent=5 // pred_check_branch
      %1346 = sbr.rel (%p1344) target = $region40
    $region39: #{mcc_block_forward.10} parent=5 // pred_region
      %s1347 = ssub.s32 %s9, 2
      // Predicated region
      $region41: #{mcc_block_forward.10} parent=39 // pred_check
        %p1348 = pneg %p120
      $region42: #{mcc_block_forward.10} parent=39 // pred_check_branch
        %1350 = sbr.rel (%p1348) target = $region44
      $region43: #{mcc_block_forward.10} parent=39 // pred_region
        %s1351 = smul.u32 32, %s21
        %p1352 = scmp.lt.s32.totalorder %s20, 1
        %s1353 = scalar_select %p1352, %s20, 1
        %p1354 = scmp.lt.s32.totalorder %s1351, 31
        %s1355 = scalar_select %p1354, %s1351, 31
        %s1356 = smul.addr %s1353, 32
        %s1357 = sadd.s32 %s1355, %s1356
        %s1358 = smul.addr %s1357, 4
        %s1359 = scalar_lea.vmem %s3, %s1358
      $region44: #{mcc_block_forward.10} parent=39 // pred_fallthru
        _
    $region40: #{mcc_block_forward.10} parent=5 // pred_fallthru
      _
  $region6: #{mcc_block_forward.10} parent=0 // loop_footer
    %s13 = sadd.s32 1, %s9
  $region7: #{mcc_block_forward.10} parent=0 // loop_footer_branch
    %8 = sbr.rel target = $region3
  $region8: #{mcc_block_forward.10} parent=0 // loop_exit
    _

// kernel: mcc_block_forward.11
$region0: #{mcc_block_forward.11}
  #allocation0 [shape = 'u32[]', space=smem, size = 0x4, offset = 0x4, fixed_abs, tag = 'smem constant byte address 0x4 - core index']
  #allocation1 [shape = 'u32[144,128]{1,0:T(1,128)}', space=vmem, size = 0x12000, scoped, tag = 'internal scratch']
  %s0 = inlined_call_operand.vmem [shape: bf16[512,8], index: 0, kind: input, shape index: {}]
  %s1 = inlined_call_operand.vmem [shape: bf16[8,128], index: 1, kind: input, shape index: {}]
  %s2 = inlined_call_operand.vmem [shape: f32[1,128], index: 2, kind: input, shape index: {}]
  %s3 = inlined_call_operand.vmem [shape: f32[512,128], index: 3, kind: output, shape index: {}]
  %s4 = sld [smem:[#allocation0]]
  $region22: #{mcc_block_forward.11} parent=0
    _
  %s6 = ssub.s32 1, %s4
  %s7 = scalar_select 0, %s6, %s4
  // Predicated region
  $region2: #{mcc_block_forward.11} parent=0 // pred_check
    _
  $region3: #{mcc_block_forward.11} parent=0 // pred_check_branch
    %9 = sbr.rel (0) target = $region5
  $region4: #{mcc_block_forward.11} parent=0 // pred_region
    _
  $region5: #{mcc_block_forward.11} parent=0 // pred_fallthru
    _
  // Predicated region
  $region6: #{mcc_block_forward.11} parent=0 // pred_check
    _
  $region7: #{mcc_block_forward.11} parent=0 // pred_check_branch
    %11 = sbr.rel (0) target = $region9
  $region8: #{mcc_block_forward.11} parent=0 // pred_region
    _
  $region9: #{mcc_block_forward.11} parent=0 // pred_fallthru
    _
  // Predicated region
  $region10: #{mcc_block_forward.11} parent=0 // pred_check
    _
  $region11: #{mcc_block_forward.11} parent=0 // pred_check_branch
    %13 = sbr.rel (0) target = $region13
  $region12: #{mcc_block_forward.11} parent=0 // pred_region
    _
  $region13: #{mcc_block_forward.11} parent=0 // pred_fallthru
    _
  %v15 = vld [vmem:[%s0] sm:$0xf]
  %v16 = vld [vmem:[%s0 + $0x4] sm:$0xf]
  %v17 = vld [vmem:[%s0 + $0x8] sm:$0xf]
  %v18 = vld [vmem:[%s0 + $0xc] sm:$0xf]
  %v19 = vld [vmem:[%s0 + $0x10] sm:$0xf]
  %v20 = vld [vmem:[%s0 + $0x14] sm:$0xf]
  %v21 = vld [vmem:[%s0 + $0x18] sm:$0xf]
  %v22 = vld [vmem:[%s0 + $0x1c] sm:$0xf]
  %v23 = vld [vmem:[%s0 + $0x20] sm:$0xf]
  %v24 = vld [vmem:[%s0 + $0x24] sm:$0xf]
  %v25 = vld [vmem:[%s0 + $0x28] sm:$0xf]
  %v26 = vld [vmem:[%s0 + $0x2c] sm:$0xf]
  %v27 = vld [vmem:[%s0 + $0x30] sm:$0xf]
  %v28 = vld [vmem:[%s0 + $0x34] sm:$0xf]
  %v29 = vld [vmem:[%s0 + $0x38] sm:$0xf]
  %v30 = vld [vmem:[%s0 + $0x3c] sm:$0xf]
  %v31 = vld [vmem:[%s0 + $0x40] sm:$0xf]
  %v32 = vld [vmem:[%s0 + $0x44] sm:$0xf]
  %v33 = vld [vmem:[%s0 + $0x48] sm:$0xf]
  %v34 = vld [vmem:[%s0 + $0x4c] sm:$0xf]
  %v35 = vld [vmem:[%s0 + $0x50] sm:$0xf]
  %v36 = vld [vmem:[%s0 + $0x54] sm:$0xf]
  %v37 = vld [vmem:[%s0 + $0x58] sm:$0xf]
  %v38 = vld [vmem:[%s0 + $0x5c] sm:$0xf]
  %v39 = vld [vmem:[%s0 + $0x60] sm:$0xf]
  %v40 = vld [vmem:[%s0 + $0x64] sm:$0xf]
  %v41 = vld [vmem:[%s0 + $0x68] sm:$0xf]
  %v42 = vld [vmem:[%s0 + $0x6c] sm:$0xf]
  %v43 = vld [vmem:[%s0 + $0x70] sm:$0xf]
  %v44 = vld [vmem:[%s0 + $0x74] sm:$0xf]
  %v45 = vld [vmem:[%s0 + $0x78] sm:$0xf]
  %v46 = vld [vmem:[%s0 + $0x7c] sm:$0xf]
  %v47 = vld [vmem:[%s0 + $0x80] sm:$0xf]
  %v48 = vld [vmem:[%s0 + $0x84] sm:$0xf]
  %v49 = vld [vmem:[%s0 + $0x88] sm:$0xf]
  %v50 = vld [vmem:[%s0 + $0x8c] sm:$0xf]
  %v51 = vld [vmem:[%s0 + $0x90] sm:$0xf]
  %v52 = vld [vmem:[%s0 + $0x94] sm:$0xf]
  %v53 = vld [vmem:[%s0 + $0x98] sm:$0xf]
  %v54 = vld [vmem:[%s0 + $0x9c] sm:$0xf]
  %v55 = vld [vmem:[%s0 + $0xa0] sm:$0xf]
  %v56 = vld [vmem:[%s0 + $0xa4] sm:$0xf]
  %v57 = vld [vmem:[%s0 + $0xa8] sm:$0xf]
  %v58 = vld [vmem:[%s0 + $0xac] sm:$0xf]
  %v59 = vld [vmem:[%s0 + $0xb0] sm:$0xf]
  %v60 = vld [vmem:[%s0 + $0xb4] sm:$0xf]
  %v61 = vld [vmem:[%s0 + $0xb8] sm:$0xf]
  %v62 = vld [vmem:[%s0 + $0xbc] sm:$0xf]
  %v63 = vld [vmem:[%s0 + $0xc0] sm:$0xf]
  %v64 = vld [vmem:[%s0 + $0xc4] sm:$0xf]
  %v65 = vld [vmem:[%s0 + $0xc8] sm:$0xf]
  %v66 = vld [vmem:[%s0 + $0xcc] sm:$0xf]
  %v67 = vld [vmem:[%s0 + $0xd0] sm:$0xf]
  %v68 = vld [vmem:[%s0 + $0xd4] sm:$0xf]
  %v69 = vld [vmem:[%s0 + $0xd8] sm:$0xf]
  %v70 = vld [vmem:[%s0 + $0xdc] sm:$0xf]
  %v71 = vld [vmem:[%s0 + $0xe0] sm:$0xf]
  %v72 = vld [vmem:[%s0 + $0xe4] sm:$0xf]
  %v73 = vld [vmem:[%s0 + $0xe8] sm:$0xf]
  %v74 = vld [vmem:[%s0 + $0xec] sm:$0xf]
  %v75 = vld [vmem:[%s0 + $0xf0] sm:$0xf]
  %v76 = vld [vmem:[%s0 + $0xf4] sm:$0xf]
  %v77 = vld [vmem:[%s0 + $0xf8] sm:$0xf]
  %v78 = vld [vmem:[%s0 + $0xfc] sm:$0xf]
  %v79 = vld [vmem:[%s1] sm:$0xf]
  %v80 = vld [vmem:[%s2] sm:$0x1]
  %v82 = vlaneseq
  %v83 = vshrl.u32 %v82, 7
  %v84 = vsub.s32 0, %v83
  %v85 = vrot.slane %v80, %v84
  %v151 = vunpack.c.l.b16 %v15
  %v152 = vunpack.c.l.b16 %v16
  %v153 = vunpack.c.l.b16 %v17
  %v154 = vunpack.c.l.b16 %v18
  %v155 = vunpack.c.l.b16 %v19
  %v156 = vunpack.c.l.b16 %v20
  %v157 = vunpack.c.l.b16 %v21
  %v158 = vunpack.c.l.b16 %v22
  %v159 = vunpack.c.l.b16 %v23
  %v160 = vunpack.c.l.b16 %v24
  %v161 = vunpack.c.l.b16 %v25
  %v162 = vunpack.c.l.b16 %v26
  %v163 = vunpack.c.l.b16 %v27
  %v164 = vunpack.c.l.b16 %v28
  %v165 = vunpack.c.l.b16 %v29
  %v166 = vunpack.c.l.b16 %v30
  %v167 = vunpack.c.l.b16 %v31
  %v168 = vunpack.c.l.b16 %v32
  %v169 = vunpack.c.l.b16 %v33
  %v170 = vunpack.c.l.b16 %v34
  %v171 = vunpack.c.l.b16 %v35
  %v172 = vunpack.c.l.b16 %v36
  %v173 = vunpack.c.l.b16 %v37
  %v174 = vunpack.c.l.b16 %v38
  %v175 = vunpack.c.l.b16 %v39
  %v176 = vunpack.c.l.b16 %v40
  %v177 = vunpack.c.l.b16 %v41
  %v178 = vunpack.c.l.b16 %v42
  %v179 = vunpack.c.l.b16 %v43
  %v180 = vunpack.c.l.b16 %v44
  %v181 = vunpack.c.l.b16 %v45
  %v182 = vunpack.c.l.b16 %v46
  %v183 = vunpack.c.l.b16 %v47
  %v184 = vunpack.c.l.b16 %v48
  %v185 = vunpack.c.l.b16 %v49
  %v186 = vunpack.c.l.b16 %v50
  %v187 = vunpack.c.l.b16 %v51
  %v188 = vunpack.c.l.b16 %v52
  %v189 = vunpack.c.l.b16 %v53
  %v190 = vunpack.c.l.b16 %v54
  %v191 = vunpack.c.l.b16 %v55
  %v192 = vunpack.c.l.b16 %v56
  %v193 = vunpack.c.l.b16 %v57
  %v194 = vunpack.c.l.b16 %v58
  %v195 = vunpack.c.l.b16 %v59
  %v196 = vunpack.c.l.b16 %v60
  %v197 = vunpack.c.l.b16 %v61
  %v198 = vunpack.c.l.b16 %v62
  %v199 = vunpack.c.l.b16 %v63
  %v200 = vunpack.c.l.b16 %v64
  %v201 = vunpack.c.l.b16 %v65
  %v202 = vunpack.c.l.b16 %v66
  %v203 = vunpack.c.l.b16 %v67
  %v204 = vunpack.c.l.b16 %v68
  %v205 = vunpack.c.l.b16 %v69
  %v206 = vunpack.c.l.b16 %v70
  %v207 = vunpack.c.l.b16 %v71
  %v208 = vunpack.c.l.b16 %v72
  %v209 = vunpack.c.l.b16 %v73
  %v210 = vunpack.c.l.b16 %v74
  %v211 = vunpack.c.l.b16 %v75
  %v212 = vunpack.c.l.b16 %v76
  %v213 = vunpack.c.l.b16 %v77
  %v214 = vunpack.c.l.b16 %v78
  %v215 = vpack.c.b16 %v152, %v151
  %v216 = vpack.c.b16 %v154, %v153
  %v217 = vpack.c.b16 %v156, %v155
  %v218 = vpack.c.b16 %v158, %v157
  %v219 = vpack.c.b16 %v160, %v159
  %v220 = vpack.c.b16 %v162, %v161
  %v221 = vpack.c.b16 %v164, %v163
  %v222 = vpack.c.b16 %v166, %v165
  %v223 = vpack.c.b16 %v168, %v167
  %v224 = vpack.c.b16 %v170, %v169
  %v225 = vpack.c.b16 %v172, %v171
  %v226 = vpack.c.b16 %v174, %v173
  %v227 = vpack.c.b16 %v176, %v175
  %v228 = vpack.c.b16 %v178, %v177
  %v229 = vpack.c.b16 %v180, %v179
  %v230 = vpack.c.b16 %v182, %v181
  %v231 = vpack.c.b16 %v184, %v183
  %v232 = vpack.c.b16 %v186, %v185
  %v233 = vpack.c.b16 %v188, %v187
  %v234 = vpack.c.b16 %v190, %v189
  %v235 = vpack.c.b16 %v192, %v191
  %v236 = vpack.c.b16 %v194, %v193
  %v237 = vpack.c.b16 %v196, %v195
  %v238 = vpack.c.b16 %v198, %v197
  %v239 = vpack.c.b16 %v200, %v199
  %v240 = vpack.c.b16 %v202, %v201
  %v241 = vpack.c.b16 %v204, %v203
  %v242 = vpack.c.b16 %v206, %v205
  %v243 = vpack.c.b16 %v208, %v207
  %v244 = vpack.c.b16 %v210, %v209
  %v245 = vpack.c.b16 %v212, %v211
  %v246 = vpack.c.b16 %v214, %v213
  %vm247 = vcmask 64512
  %v249 = vsel %vm247, %v215, 0
  %v252 = vsel %vm247, %v216, 0
  %v255 = vsel %vm247, %v217, 0
  %v258 = vsel %vm247, %v218, 0
  %v261 = vsel %vm247, %v219, 0
  %v264 = vsel %vm247, %v220, 0
  %v267 = vsel %vm247, %v221, 0
  %v270 = vsel %vm247, %v222, 0
  %v273 = vsel %vm247, %v223, 0
  %v276 = vsel %vm247, %v224, 0
  %v279 = vsel %vm247, %v225, 0
  %v282 = vsel %vm247, %v226, 0
  %v285 = vsel %vm247, %v227, 0
  %v288 = vsel %vm247, %v228, 0
  %v291 = vsel %vm247, %v229, 0
  %v294 = vsel %vm247, %v230, 0
  %v297 = vsel %vm247, %v231, 0
  %v300 = vsel %vm247, %v232, 0
  %v303 = vsel %vm247, %v233, 0
  %v306 = vsel %vm247, %v234, 0
  %v309 = vsel %vm247, %v235, 0
  %v312 = vsel %vm247, %v236, 0
  %v315 = vsel %vm247, %v237, 0
  %v318 = vsel %vm247, %v238, 0
  %v321 = vsel %vm247, %v239, 0
  %v324 = vsel %vm247, %v240, 0
  %v327 = vsel %vm247, %v241, 0
  %v330 = vsel %vm247, %v242, 0
  %v333 = vsel %vm247, %v243, 0
  %v336 = vsel %vm247, %v244, 0
  %v339 = vsel %vm247, %v245, 0
  %v342 = vsel %vm247, %v246, 0
  %vm344 = vcmask 1043456
  %v346 = vsel %vm344, %v79, 0
  %348 = vmatprep.subr.bf16.mxu0 0
  %349 = vmatpush1.bf16.msra.mxu0 0
  %350 = vmatprep.subr.bf16.mxu0 0
  %351 = vmatpush1.bf16.msra.mxu0 0
  %352 = vmatprep.subr.bf16.mxu0 0
  %353 = vmatpush1.bf16.msra.mxu0 0
  %354 = vmatprep.subr.bf16.mxu0 0
  %355 = vmatpush1.bf16.msra.mxu0 0
  %356 = vmatprep.subr.bf16.mxu0 0
  %357 = vmatpush1.bf16.msra.mxu0 0
  %358 = vmatprep.subr.bf16.mxu0 0
  %359 = vmatpush1.bf16.msra.mxu0 0
  %360 = vmatprep.subr.bf16.mxu0 0
  %361 = vmatpush1.bf16.msra.mxu0 0
  %362 = vmatprep.subr.bf16.mxu0 0
  %363 = vmatpush1.bf16.msra.mxu0 %v346
  %364 = vmatprep.subr.bf16.mxu0 0
  %365 = vmatpush2.bf16.msra.mxu0 0
  %366 = vmatprep.subr.bf16.mxu0 0
  %367 = vmatpush2.bf16.msra.mxu0 0
  %368 = vmatprep.subr.bf16.mxu0 0
  %369 = vmatpush2.bf16.msra.mxu0 0
  %370 = vmatprep.subr.bf16.mxu0 0
  %371 = vmatpush2.bf16.msra.mxu0 0
  %372 = vmatprep.subr.bf16.mxu0 0
  %373 = vmatpush2.bf16.msra.mxu0 0
  %374 = vmatprep.subr.bf16.mxu0 0
  %375 = vmatpush2.bf16.msra.mxu0 0
  %376 = vmatprep.subr.bf16.mxu0 0
  %377 = vmatpush2.bf16.msra.mxu0 0
  %378 = vmatprep.subr.bf16.mxu0 0
  %379 = vmatpush2.bf16.msra.mxu0 0
  %380 = vmatprep.mubr.bf16.mxu0 0
  %381 = vmatmul.mubr.bf16.gmra.mxu0 %v249
  %v382 = vpop.f32.mrf.mxu0
  %v383 = vadd.f32 %v85, %v382
  %v384 = vpop.f32.mrf.mxu0
  %v385 = vpop.f32.mrf.mxu0
  %v386 = vadd.f32 %v85, %v385
  %v387 = vpop.f32.mrf.mxu0
  %388 = vmatprep.mubr.bf16.mxu0 0
  %389 = vmatmul.mubr.bf16.gmra.mxu0 %v252
  %v390 = vpop.f32.mrf.mxu0
  %v391 = vadd.f32 %v85, %v390
  %v392 = vpop.f32.mrf.mxu0
  %v393 = vpop.f32.mrf.mxu0
  %v394 = vadd.f32 %v85, %v393
  %v395 = vpop.f32.mrf.mxu0
  %396 = vmatprep.mubr.bf16.mxu0 0
  %397 = vmatmul.mubr.bf16.gmra.mxu0 %v255
  %v398 = vpop.f32.mrf.mxu0
  %v399 = vadd.f32 %v85, %v398
  %v400 = vpop.f32.mrf.mxu0
  %v401 = vpop.f32.mrf.mxu0
  %v402 = vadd.f32 %v85, %v401
  %v403 = vpop.f32.mrf.mxu0
  %404 = vmatprep.mubr.bf16.mxu0 0
  %405 = vmatmul.mubr.bf16.gmra.mxu0 %v258
  %v406 = vpop.f32.mrf.mxu0
  %v407 = vadd.f32 %v85, %v406
  %v408 = vpop.f32.mrf.mxu0
  %v409 = vpop.f32.mrf.mxu0
  %v410 = vadd.f32 %v85, %v409
  %v411 = vpop.f32.mrf.mxu0
  %412 = vmatprep.mubr.bf16.mxu0 0
  %413 = vmatmul.mubr.bf16.gmra.mxu0 %v261
  %v414 = vpop.f32.mrf.mxu0
  %v415 = vadd.f32 %v85, %v414
  %v416 = vpop.f32.mrf.mxu0
  %v417 = vpop.f32.mrf.mxu0
  %v418 = vadd.f32 %v85, %v417
  %v419 = vpop.f32.mrf.mxu0
  %420 = vmatprep.mubr.bf16.mxu0 0
  %421 = vmatmul.mubr.bf16.gmra.mxu0 %v264
  %v422 = vpop.f32.mrf.mxu0
  %v423 = vadd.f32 %v85, %v422
  %v424 = vpop.f32.mrf.mxu0
  %v425 = vpop.f32.mrf.mxu0
  %v426 = vadd.f32 %v85, %v425
  %v427 = vpop.f32.mrf.mxu0
  %428 = vmatprep.mubr.bf16.mxu0 0
  %429 = vmatmul.mubr.bf16.gmra.mxu0 %v267
  %v430 = vpop.f32.mrf.mxu0
  %v431 = vadd.f32 %v85, %v430
  %v432 = vpop.f32.mrf.mxu0
  %v433 = vpop.f32.mrf.mxu0
  %v434 = vadd.f32 %v85, %v433
  %v435 = vpop.f32.mrf.mxu0
  %436 = vmatprep.mubr.bf16.mxu0 0
  %437 = vmatmul.mubr.bf16.gmra.mxu0 %v270
  %v438 = vpop.f32.mrf.mxu0
  %v439 = vadd.f32 %v85, %v438
  %v440 = vpop.f32.mrf.mxu0
  %v441 = vpop.f32.mrf.mxu0
  %v442 = vadd.f32 %v85, %v441
  %v443 = vpop.f32.mrf.mxu0
  %444 = vmatprep.mubr.bf16.mxu0 0
  %445 = vmatmul.mubr.bf16.gmra.mxu0 %v273
  %v446 = vpop.f32.mrf.mxu0
  %v447 = vadd.f32 %v85, %v446
  %v448 = vpop.f32.mrf.mxu0
  %v449 = vpop.f32.mrf.mxu0
  %v450 = vadd.f32 %v85, %v449
  %v451 = vpop.f32.mrf.mxu0
  %452 = vmatprep.mubr.bf16.mxu0 0
  %453 = vmatmul.mubr.bf16.gmra.mxu0 %v276
  %v454 = vpop.f32.mrf.mxu0
  %v455 = vadd.f32 %v85, %v454
  %v456 = vpop.f32.mrf.mxu0
  %v457 = vpop.f32.mrf.mxu0
  %v458 = vadd.f32 %v85, %v457
  %v459 = vpop.f32.mrf.mxu0
  %460 = vmatprep.mubr.bf16.mxu0 0
  %461 = vmatmul.mubr.bf16.gmra.mxu0 %v279
  %v462 = vpop.f32.mrf.mxu0
  %v463 = vadd.f32 %v85, %v462
  %v464 = vpop.f32.mrf.mxu0
  %v465 = vpop.f32.mrf.mxu0
  %v466 = vadd.f32 %v85, %v465
  %v467 = vpop.f32.mrf.mxu0
  %468 = vmatprep.mubr.bf16.mxu0 0
  %469 = vmatmul.mubr.bf16.gmra.mxu0 %v282
  %v470 = vpop.f32.mrf.mxu0
  %v471 = vadd.f32 %v85, %v470
  %v472 = vpop.f32.mrf.mxu0
  %v473 = vpop.f32.mrf.mxu0
  %v474 = vadd.f32 %v85, %v473
  %v475 = vpop.f32.mrf.mxu0
  %476 = vmatprep.mubr.bf16.mxu0 0
  %477 = vmatmul.mubr.bf16.gmra.mxu0 %v285
  %v478 = vpop.f32.mrf.mxu0
  %v479 = vadd.f32 %v85, %v478
  %v480 = vpop.f32.mrf.mxu0
  %v481 = vpop.f32.mrf.mxu0
  %v482 = vadd.f32 %v85, %v481
  %v483 = vpop.f32.mrf.mxu0
  %484 = vmatprep.mubr.bf16.mxu0 0
  %485 = vmatmul.mubr.bf16.gmra.mxu0 %v288
  %v486 = vpop.f32.mrf.mxu0
  %v487 = vadd.f32 %v85, %v486
  %v488 = vpop.f32.mrf.mxu0
  %v489 = vpop.f32.mrf.mxu0
  %v490 = vadd.f32 %v85, %v489
  %v491 = vpop.f32.mrf.mxu0
  %492 = vmatprep.mubr.bf16.mxu0 0
  %493 = vmatmul.mubr.bf16.gmra.mxu0 %v291
  %v494 = vpop.f32.mrf.mxu0
  %v495 = vadd.f32 %v85, %v494
  %v496 = vpop.f32.mrf.mxu0
  %v497 = vpop.f32.mrf.mxu0
  %v498 = vadd.f32 %v85, %v497
  %v499 = vpop.f32.mrf.mxu0
  %500 = vmatprep.mubr.bf16.mxu0 0
  %501 = vmatmul.mubr.bf16.gmra.mxu0 %v294
  %v502 = vpop.f32.mrf.mxu0
  %v503 = vadd.f32 %v85, %v502
  %v504 = vpop.f32.mrf.mxu0
  %v505 = vpop.f32.mrf.mxu0
  %v506 = vadd.f32 %v85, %v505
  %v507 = vpop.f32.mrf.mxu0
  %508 = vmatprep.mubr.bf16.mxu0 0
  %509 = vmatmul.mubr.bf16.gmra.mxu0 %v297
  %v510 = vpop.f32.mrf.mxu0
  %v511 = vadd.f32 %v85, %v510
  %v512 = vpop.f32.mrf.mxu0
  %v513 = vpop.f32.mrf.mxu0
  %v514 = vadd.f32 %v85, %v513
  %v515 = vpop.f32.mrf.mxu0
  %516 = vmatprep.mubr.bf16.mxu0 0
  %517 = vmatmul.mubr.bf16.gmra.mxu0 %v300
  %v518 = vpop.f32.mrf.mxu0
  %v519 = vadd.f32 %v85, %v518
  %v520 = vpop.f32.mrf.mxu0
  %v521 = vpop.f32.mrf.mxu0
  %v522 = vadd.f32 %v85, %v521
  %v523 = vpop.f32.mrf.mxu0
  %524 = vmatprep.mubr.bf16.mxu0 0
  %525 = vmatmul.mubr.bf16.gmra.mxu0 %v303
  %v526 = vpop.f32.mrf.mxu0
  %v527 = vadd.f32 %v85, %v526
  %v528 = vpop.f32.mrf.mxu0
  %v529 = vpop.f32.mrf.mxu0
  %v530 = vadd.f32 %v85, %v529
  %v531 = vpop.f32.mrf.mxu0
  %532 = vmatprep.mubr.bf16.mxu0 0
  %533 = vmatmul.mubr.bf16.gmra.mxu0 %v306
  %v534 = vpop.f32.mrf.mxu0
  %v535 = vadd.f32 %v85, %v534
  %v536 = vpop.f32.mrf.mxu0
  %v537 = vpop.f32.mrf.mxu0
  %v538 = vadd.f32 %v85, %v537
  %v539 = vpop.f32.mrf.mxu0
  %540 = vmatprep.mubr.bf16.mxu0 0
  %541 = vmatmul.mubr.bf16.gmra.mxu0 %v309
  %v542 = vpop.f32.mrf.mxu0
  %v543 = vadd.f32 %v85, %v542
  %v544 = vpop.f32.mrf.mxu0
  %v545 = vpop.f32.mrf.mxu0
  %v546 = vadd.f32 %v85, %v545
  %v547 = vpop.f32.mrf.mxu0
  %548 = vmatprep.mubr.bf16.mxu0 0
  %549 = vmatmul.mubr.bf16.gmra.mxu0 %v312
  %v550 = vpop.f32.mrf.mxu0
  %v551 = vadd.f32 %v85, %v550
  %v552 = vpop.f32.mrf.mxu0
  %v553 = vpop.f32.mrf.mxu0
  %v554 = vadd.f32 %v85, %v553
  %v555 = vpop.f32.mrf.mxu0
  %556 = vmatprep.mubr.bf16.mxu0 0
  %557 = vmatmul.mubr.bf16.gmra.mxu0 %v315
  %v558 = vpop.f32.mrf.mxu0
  %v559 = vadd.f32 %v85, %v558
  %v560 = vpop.f32.mrf.mxu0
  %v561 = vpop.f32.mrf.mxu0
  %v562 = vadd.f32 %v85, %v561
  %v563 = vpop.f32.mrf.mxu0
  %564 = vmatprep.mubr.bf16.mxu0 0
  %565 = vmatmul.mubr.bf16.gmra.mxu0 %v318
  %v566 = vpop.f32.mrf.mxu0
  %v567 = vadd.f32 %v85, %v566
  %v568 = vpop.f32.mrf.mxu0
  %v569 = vpop.f32.mrf.mxu0
  %v570 = vadd.f32 %v85, %v569
  %v571 = vpop.f32.mrf.mxu0
  %572 = vmatprep.mubr.bf16.mxu0 0
  %573 = vmatmul.mubr.bf16.gmra.mxu0 %v321
  %v574 = vpop.f32.mrf.mxu0
  %v575 = vadd.f32 %v85, %v574
  %v576 = vpop.f32.mrf.mxu0
  %v577 = vpop.f32.mrf.mxu0
  %v578 = vadd.f32 %v85, %v577
  %v579 = vpop.f32.mrf.mxu0
  %580 = vmatprep.mubr.bf16.mxu0 0
  %581 = vmatmul.mubr.bf16.gmra.mxu0 %v324
  %v582 = vpop.f32.mrf.mxu0
  %v583 = vadd.f32 %v85, %v582
  %v584 = vpop.f32.mrf.mxu0
  %v585 = vpop.f32.mrf.mxu0
  %v586 = vadd.f32 %v85, %v585
  %v587 = vpop.f32.mrf.mxu0
  %588 = vmatprep.mubr.bf16.mxu0 0
  %589 = vmatmul.mubr.bf16.gmra.mxu0 %v327
  %v590 = vpop.f32.mrf.mxu0
  %v591 = vadd.f32 %v85, %v590
  %v592 = vpop.f32.mrf.mxu0
  %v593 = vpop.f32.mrf.mxu0
  %v594 = vadd.f32 %v85, %v593
  %v595 = vpop.f32.mrf.mxu0
  %596 = vmatprep.mubr.bf16.mxu0 0
  %597 = vmatmul.mubr.bf16.gmra.mxu0 %v330
  %v598 = vpop.f32.mrf.mxu0
  %v599 = vadd.f32 %v85, %v598
  %v600 = vpop.f32.mrf.mxu0
  %v601 = vpop.f32.mrf.mxu0
  %v602 = vadd.f32 %v85, %v601
  %v603 = vpop.f32.mrf.mxu0
  %604 = vmatprep.mubr.bf16.mxu0 0
  %605 = vmatmul.mubr.bf16.gmra.mxu0 %v333
  %v606 = vpop.f32.mrf.mxu0
  %v607 = vadd.f32 %v85, %v606
  %v608 = vpop.f32.mrf.mxu0
  %v609 = vpop.f32.mrf.mxu0
  %v610 = vadd.f32 %v85, %v609
  %v611 = vpop.f32.mrf.mxu0
  %612 = vmatprep.mubr.bf16.mxu0 0
  %613 = vmatmul.mubr.bf16.gmra.mxu0 %v336
  %v614 = vpop.f32.mrf.mxu0
  %v615 = vadd.f32 %v85, %v614
  %v616 = vpop.f32.mrf.mxu0
  %v617 = vpop.f32.mrf.mxu0
  %v618 = vadd.f32 %v85, %v617
  %v619 = vpop.f32.mrf.mxu0
  %620 = vmatprep.mubr.bf16.mxu0 0
  %621 = vmatmul.mubr.bf16.gmra.mxu0 %v339
  %v622 = vpop.f32.mrf.mxu0
  %v623 = vadd.f32 %v85, %v622
  %v624 = vpop.f32.mrf.mxu0
  %v625 = vpop.f32.mrf.mxu0
  %v626 = vadd.f32 %v85, %v625
  %v627 = vpop.f32.mrf.mxu0
  %628 = vmatprep.mubr.bf16.mxu0 0
  %629 = vmatmul.mubr.bf16.gmra.mxu0 %v342
  %v630 = vpop.f32.mrf.mxu0
  %v631 = vadd.f32 %v85, %v630
  %v632 = vpop.f32.mrf.mxu0
  %v633 = vpop.f32.mrf.mxu0
  %v634 = vadd.f32 %v85, %v633
  %v635 = vpop.f32.mrf.mxu0
  %636 = vdwg.mxu0
  %637 = vst [vmem:[%s3] sm:$0xff] %v383
  %638 = vst [vmem:[%s3 + $0x8] sm:$0xff] %v386
  %639 = vst [vmem:[%s3 + $0x10] sm:$0xff] %v391
  %640 = vst [vmem:[%s3 + $0x18] sm:$0xff] %v394
  %641 = vst [vmem:[%s3 + $0x20] sm:$0xff] %v399
  %642 = vst [vmem:[%s3 + $0x28] sm:$0xff] %v402
  %643 = vst [vmem:[%s3 + $0x30] sm:$0xff] %v407
  %644 = vst [vmem:[%s3 + $0x38] sm:$0xff] %v410
  %645 = vst [vmem:[%s3 + $0x40] sm:$0xff] %v415
  %646 = vst [vmem:[%s3 + $0x48] sm:$0xff] %v418
  %647 = vst [vmem:[%s3 + $0x50] sm:$0xff] %v423
  %648 = vst [vmem:[%s3 + $0x58] sm:$0xff] %v426
  %649 = vst [vmem:[%s3 + $0x60] sm:$0xff] %v431
  %650 = vst [vmem:[%s3 + $0x68] sm:$0xff] %v434
  %651 = vst [vmem:[%s3 + $0x70] sm:$0xff] %v439
  %652 = vst [vmem:[%s3 + $0x78] sm:$0xff] %v442
  %653 = vst [vmem:[%s3 + $0x80] sm:$0xff] %v447
  %654 = vst [vmem:[%s3 + $0x88] sm:$0xff] %v450
  %655 = vst [vmem:[%s3 + $0x90] sm:$0xff] %v455
  %656 = vst [vmem:[%s3 + $0x98] sm:$0xff] %v458
  %657 = vst [vmem:[%s3 + $0xa0] sm:$0xff] %v463
  %658 = vst [vmem:[%s3 + $0xa8] sm:$0xff] %v466
  %659 = vst [vmem:[%s3 + $0xb0] sm:$0xff] %v471
  %660 = vst [vmem:[%s3 + $0xb8] sm:$0xff] %v474
  %661 = vst [vmem:[%s3 + $0xc0] sm:$0xff] %v479
  %662 = vst [vmem:[%s3 + $0xc8] sm:$0xff] %v482
  %663 = vst [vmem:[%s3 + $0xd0] sm:$0xff] %v487
  %664 = vst [vmem:[%s3 + $0xd8] sm:$0xff] %v490
  %665 = vst [vmem:[%s3 + $0xe0] sm:$0xff] %v495
  %666 = vst [vmem:[%s3 + $0xe8] sm:$0xff] %v498
  %667 = vst [vmem:[%s3 + $0xf0] sm:$0xff] %v503
  %668 = vst [vmem:[%s3 + $0xf8] sm:$0xff] %v506
  %669 = vst [vmem:[%s3 + $0x100] sm:$0xff] %v511
  %670 = vst [vmem:[%s3 + $0x108] sm:$0xff] %v514
  %671 = vst [vmem:[%s3 + $0x110] sm:$0xff] %v519
  %672 = vst [vmem:[%s3 + $0x118] sm:$0xff] %v522
  %673 = vst [vmem:[%s3 + $0x120] sm:$0xff] %v527
  %674 = vst [vmem:[%s3 + $0x128] sm:$0xff] %v530
  %675 = vst [vmem:[%s3 + $0x130] sm:$0xff] %v535
  %676 = vst [vmem:[%s3 + $0x138] sm:$0xff] %v538
  %677 = vst [vmem:[%s3 + $0x140] sm:$0xff] %v543
  %678 = vst [vmem:[%s3 + $0x148] sm:$0xff] %v546
  %679 = vst [vmem:[%s3 + $0x150] sm:$0xff] %v551
  %680 = vst [vmem:[%s3 + $0x158] sm:$0xff] %v554
  %681 = vst [vmem:[%s3 + $0x160] sm:$0xff] %v559
  %682 = vst [vmem:[%s3 + $0x168] sm:$0xff] %v562
  %683 = vst [vmem:[%s3 + $0x170] sm:$0xff] %v567
  %684 = vst [vmem:[%s3 + $0x178] sm:$0xff] %v570
  %685 = vst [vmem:[%s3 + $0x180] sm:$0xff] %v575
  %686 = vst [vmem:[%s3 + $0x188] sm:$0xff] %v578
  %687 = vst [vmem:[%s3 + $0x190] sm:$0xff] %v583
  %688 = vst [vmem:[%s3 + $0x198] sm:$0xff] %v586
  %689 = vst [vmem:[%s3 + $0x1a0] sm:$0xff] %v591
  %690 = vst [vmem:[%s3 + $0x1a8] sm:$0xff] %v594
  %691 = vst [vmem:[%s3 + $0x1b0] sm:$0xff] %v599
  %692 = vst [vmem:[%s3 + $0x1b8] sm:$0xff] %v602
  %693 = vst [vmem:[%s3 + $0x1c0] sm:$0xff] %v607
  %694 = vst [vmem:[%s3 + $0x1c8] sm:$0xff] %v610
  %695 = vst [vmem:[%s3 + $0x1d0] sm:$0xff] %v615
  %696 = vst [vmem:[%s3 + $0x1d8] sm:$0xff] %v618
  %697 = vst [vmem:[%s3 + $0x1e0] sm:$0xff] %v623
  %698 = vst [vmem:[%s3 + $0x1e8] sm:$0xff] %v626
  %699 = vst [vmem:[%s3 + $0x1f0] sm:$0xff] %v631
  %700 = vst [vmem:[%s3 + $0x1f8] sm:$0xff] %v634
  // Predicated region
  $region14: #{mcc_block_forward.11} parent=0 // pred_check
    _
  $region15: #{mcc_block_forward.11} parent=0 // pred_check_branch
    %702 = sbr.rel (0) target = $region17
  $region16: #{mcc_block_forward.11} parent=0 // pred_region
    _
  $region17: #{mcc_block_forward.11} parent=0 // pred_fallthru
    _
  // Predicated region
  $region18: #{mcc_block_forward.11} parent=0 // pred_check
    _
  $region19: #{mcc_block_forward.11} parent=0 // pred_check_branch
    %704 = sbr.rel (0) target = $region21
  $region20: #{mcc_block_forward.11} parent=0 // pred_region
    _
  $region21: #{mcc_block_forward.11} parent=0 // pred_fallthru
    _

// kernel: mcc_block_forward.12
$region0: #{mcc_block_forward.12}
  #allocation0 [shape = 'u32[]', space=smem, size = 0x4, offset = 0x4, fixed_abs, tag = 'smem constant byte address 0x4 - core index']
  #allocation1 [shape = 'u32[144,128]{1,0:T(1,128)}', space=vmem, size = 0x12000, scoped, tag = 'internal scratch']
  #allocation2 [shape = 'f32[16,8]{1,0:T(8,128)}', space=vmem, size = 0x2000, scoped, tag = 'scratch operand']
  #allocation3 [shape = 'f32[8,8]{1,0:T(8,128)}', space=vmem, size = 0x1000, scoped, tag = 'scratch operand']
  %s0 = inlined_call_operand.vmem [shape: bf16[2,256,8], index: 0, kind: input, shape index: {}]
  %s1 = inlined_call_operand.vmem [shape: f32[2,256,8], index: 1, kind: input, shape index: {}]
  %s2 = inlined_call_operand.vmem [shape: f32[2,256,16], index: 2, kind: input, shape index: {}]
  %s3 = inlined_call_operand.vmem [shape: f32[2,256,16], index: 3, kind: input, shape index: {}]
  %s4 = inlined_call_operand.vmem [shape: bf16[2,256,8], index: 4, kind: input, shape index: {}]
  %s5 = inlined_call_operand.vmem [shape: f32[16,8], index: 5, kind: input, shape index: {}]
  %s6 = inlined_call_operand.vmem [shape: f32[1,8], index: 6, kind: input, shape index: {}]
  %s7 = inlined_call_operand.vmem [shape: bf16[2,256,8], index: 7, kind: output, shape index: {}]
  %s8 = sld [smem:[#allocation0]]
  $region72: #{mcc_block_forward.12} parent=0
    _
  %s10 = ssub.s32 1, %s8
  %s11 = scalar_select 0, %s10, %s8
  loop: start=0, step=1, limit=4
  $region2: #{mcc_block_forward.12} parent=0 // loop_pre_header
    _
  $region3: #{mcc_block_forward.12} parent=0 // loop_header
    %s13 = sphi 0, %s17
    %p14 = scmp.ge.s32.totalorder %s13, 4
    %s20 = sphi 0, %s32
    %s21 = sphi 0, %s28
    %s22 = sphi 0, %s20
    %s23 = sphi 0, %s21
    %s24 = sphi 0, %s22
    %s25 = sphi 0, %s23
    %s37 = sphi 0, %s39
    %s40 = sphi 0, %s37
    %s41 = sphi 0, %s40
    %s57 = sphi 0, %s41
    %s65 = sphi 0, %s67
    %s68 = sphi 0, %s65
    %s69 = sphi 0, %s68
    %s85 = sphi 0, %s69
    %s93 = sphi 0, %s95
    %s96 = sphi 0, %s93
    %s97 = sphi 0, %s96
    %s113 = sphi 0, %s97
    %s121 = sphi 0, %s123
    %s124 = sphi 0, %s121
    %s125 = sphi 0, %s124
    %s141 = sphi 0, %s125
    %s149 = sphi 0, %s151
    %s152 = sphi 0, %s149
    %s153 = sphi 0, %s152
    %s169 = sphi 0, %s153
    %s173 = sphi 0, %s173
    %s175 = sphi 0, %s173
    %s176 = sphi 0, %s175
    %s190 = sphi 0, %s176
    %s194 = sphi 0, %s194
    %s196 = sphi 0, %s194
    %s197 = sphi 0, %s196
    %s211 = sphi 0, %s197
    %s219 = sphi 0, %s221
    %s222 = sphi 0, %s219
    %s223 = sphi 0, %s222
    %s239 = sphi 0, %s223
  $region4: #{mcc_block_forward.12} parent=0 // loop_header_branch
    %16 = sbr.rel (%p14) target = $region8
  $region5: #{mcc_block_forward.12} parent=0 // loop_body
    %s18 = ssub.s32 %s13, 1
    %s19 = ssub.s32 %s13, 2
    %s26 = sadd.s32 1, %s21
    %p27 = scmp.ge.s32.totalorder %s26, 1
    %s28 = scalar_select %p27, 0, %s26
    %s29 = sadd.s32 1, %s20
    %s30 = scalar_select %p27, %s29, %s20
    %p31 = scmp.ge.s32.totalorder %s30, 2
    %s32 = scalar_select %p31, 0, %s30
    %s33 = ssub.s32 %s20, %s32
    %s34 = ssub.s32 %s21, %s28
    %s35 = sor.u32 %s33, %s34
    %p36 = scmp.eq.s32.totalorder %s35, 0
    %s38 = sadd.s32 %s37, 1
    %s39 = scalar_select %p36, %s37, %s38
    %p42 = pneg %p36
    %p43 = scmp.eq.s32.totalorder %s13, 1
    %p44 = por %p42, %p43
    %p45 = scmp.ne.s32.totalorder %s37, %s40
    %p46 = scmp.eq.s32.totalorder %s13, 0
    %p47 = por %p45, %p46
    %p48 = scmp.ne.s32.totalorder %s37, %s40
    %p49 = scmp.eq.s32.totalorder %s18, 1
    %p50 = por %p48, %p49
    %p51 = scmp.ne.s32.totalorder %s40, %s41
    %p52 = scmp.eq.s32.totalorder %s18, 0
    %p53 = por %p51, %p52
    %p54 = scmp.ne.s32.totalorder %s40, %s41
    %p55 = scmp.eq.s32.totalorder %s19, 1
    %p56 = por %p54, %p55
    %p58 = scmp.ne.s32.totalorder %s41, %s57
    %p59 = scmp.eq.s32.totalorder %s19, 0
    %p60 = por %p58, %p59
    %s61 = ssub.s32 %s20, %s32
    %s62 = ssub.s32 %s21, %s28
    %s63 = sor.u32 %s61, %s62
    %p64 = scmp.eq.s32.totalorder %s63, 0
    %s66 = sadd.s32 %s65, 1
    %s67 = scalar_select %p64, %s65, %s66
    %p70 = pneg %p64
    %p71 = scmp.eq.s32.totalorder %s13, 1
    %p72 = por %p70, %p71
    %p73 = scmp.ne.s32.totalorder %s65, %s68
    %p74 = scmp.eq.s32.totalorder %s13, 0
    %p75 = por %p73, %p74
    %p76 = scmp.ne.s32.totalorder %s65, %s68
    %p77 = scmp.eq.s32.totalorder %s18, 1
    %p78 = por %p76, %p77
    %p79 = scmp.ne.s32.totalorder %s68, %s69
    %p80 = scmp.eq.s32.totalorder %s18, 0
    %p81 = por %p79, %p80
    %p82 = scmp.ne.s32.totalorder %s68, %s69
    %p83 = scmp.eq.s32.totalorder %s19, 1
    %p84 = por %p82, %p83
    %p86 = scmp.ne.s32.totalorder %s69, %s85
    %p87 = scmp.eq.s32.totalorder %s19, 0
    %p88 = por %p86, %p87
    %s89 = ssub.s32 %s20, %s32
    %s90 = ssub.s32 %s21, %s28
    %s91 = sor.u32 %s89, %s90
    %p92 = scmp.eq.s32.totalorder %s91, 0
    %s94 = sadd.s32 %s93, 1
    %s95 = scalar_select %p92, %s93, %s94
    %p98 = pneg %p92
    %p99 = scmp.eq.s32.totalorder %s13, 1
    %p100 = por %p98, %p99
    %p101 = scmp.ne.s32.totalorder %s93, %s96
    %p102 = scmp.eq.s32.totalorder %s13, 0
    %p103 = por %p101, %p102
    %p104 = scmp.ne.s32.totalorder %s93, %s96
    %p105 = scmp.eq.s32.totalorder %s18, 1
    %p106 = por %p104, %p105
    %p107 = scmp.ne.s32.totalorder %s96, %s97
    %p108 = scmp.eq.s32.totalorder %s18, 0
    %p109 = por %p107, %p108
    %p110 = scmp.ne.s32.totalorder %s96, %s97
    %p111 = scmp.eq.s32.totalorder %s19, 1
    %p112 = por %p110, %p111
    %p114 = scmp.ne.s32.totalorder %s97, %s113
    %p115 = scmp.eq.s32.totalorder %s19, 0
    %p116 = por %p114, %p115
    %s117 = ssub.s32 %s20, %s32
    %s118 = ssub.s32 %s21, %s28
    %s119 = sor.u32 %s117, %s118
    %p120 = scmp.eq.s32.totalorder %s119, 0
    %s122 = sadd.s32 %s121, 1
    %s123 = scalar_select %p120, %s121, %s122
    %p126 = pneg %p120
    %p127 = scmp.eq.s32.totalorder %s13, 1
    %p128 = por %p126, %p127
    %p129 = scmp.ne.s32.totalorder %s121, %s124
    %p130 = scmp.eq.s32.totalorder %s13, 0
    %p131 = por %p129, %p130
    %p132 = scmp.ne.s32.totalorder %s121, %s124
    %p133 = scmp.eq.s32.totalorder %s18, 1
    %p134 = por %p132, %p133
    %p135 = scmp.ne.s32.totalorder %s124, %s125
    %p136 = scmp.eq.s32.totalorder %s18, 0
    %p137 = por %p135, %p136
    %p138 = scmp.ne.s32.totalorder %s124, %s125
    %p139 = scmp.eq.s32.totalorder %s19, 1
    %p140 = por %p138, %p139
    %p142 = scmp.ne.s32.totalorder %s125, %s141
    %p143 = scmp.eq.s32.totalorder %s19, 0
    %p144 = por %p142, %p143
    %s145 = ssub.s32 %s20, %s32
    %s146 = ssub.s32 %s21, %s28
    %s147 = sor.u32 %s145, %s146
    %p148 = scmp.eq.s32.totalorder %s147, 0
    %s150 = sadd.s32 %s149, 1
    %s151 = scalar_select %p148, %s149, %s150
    %p154 = pneg %p148
    %p155 = scmp.eq.s32.totalorder %s13, 1
    %p156 = por %p154, %p155
    %p157 = scmp.ne.s32.totalorder %s149, %s152
    %p158 = scmp.eq.s32.totalorder %s13, 0
    %p159 = por %p157, %p158
    %p160 = scmp.ne.s32.totalorder %s149, %s152
    %p161 = scmp.eq.s32.totalorder %s18, 1
    %p162 = por %p160, %p161
    %p163 = scmp.ne.s32.totalorder %s152, %s153
    %p164 = scmp.eq.s32.totalorder %s18, 0
    %p165 = por %p163, %p164
    %p166 = scmp.ne.s32.totalorder %s152, %s153
    %p167 = scmp.eq.s32.totalorder %s19, 1
    %p168 = por %p166, %p167
    %p170 = scmp.ne.s32.totalorder %s153, %s169
    %p171 = scmp.eq.s32.totalorder %s19, 0
    %p172 = por %p170, %p171
    %s174 = sadd.s32 %s173, 1
    %p177 = scmp.eq.s32.totalorder %s13, 1
    %p178 = scmp.ne.s32.totalorder %s173, %s175
    %p179 = scmp.eq.s32.totalorder %s13, 0
    %p180 = por %p178, %p179
    %p181 = scmp.ne.s32.totalorder %s173, %s175
    %p182 = scmp.eq.s32.totalorder %s18, 1
    %p183 = por %p181, %p182
    %p184 = scmp.ne.s32.totalorder %s175, %s176
    %p185 = scmp.eq.s32.totalorder %s18, 0
    %p186 = por %p184, %p185
    %p187 = scmp.ne.s32.totalorder %s175, %s176
    %p188 = scmp.eq.s32.totalorder %s19, 1
    %p189 = por %p187, %p188
    %p191 = scmp.ne.s32.totalorder %s176, %s190
    %p192 = scmp.eq.s32.totalorder %s19, 0
    %p193 = por %p191, %p192
    %s195 = sadd.s32 %s194, 1
    %p198 = scmp.eq.s32.totalorder %s13, 1
    %p199 = scmp.ne.s32.totalorder %s194, %s196
    %p200 = scmp.eq.s32.totalorder %s13, 0
    %p201 = por %p199, %p200
    %p202 = scmp.ne.s32.totalorder %s194, %s196
    %p203 = scmp.eq.s32.totalorder %s18, 1
    %p204 = por %p202, %p203
    %p205 = scmp.ne.s32.totalorder %s196, %s197
    %p206 = scmp.eq.s32.totalorder %s18, 0
    %p207 = por %p205, %p206
    %p208 = scmp.ne.s32.totalorder %s196, %s197
    %p209 = scmp.eq.s32.totalorder %s19, 1
    %p210 = por %p208, %p209
    %p212 = scmp.ne.s32.totalorder %s197, %s211
    %p213 = scmp.eq.s32.totalorder %s19, 0
    %p214 = por %p212, %p213
    %s215 = ssub.s32 %s20, %s32
    %s216 = ssub.s32 %s21, %s28
    %s217 = sor.u32 %s215, %s216
    %p218 = scmp.eq.s32.totalorder %s217, 0
    %s220 = sadd.s32 %s219, 1
    %s221 = scalar_select %p218, %s219, %s220
    %p224 = pneg %p218
    %p225 = scmp.eq.s32.totalorder %s13, 1
    %p226 = por %p224, %p225
    %p227 = scmp.ne.s32.totalorder %s219, %s222
    %p228 = scmp.eq.s32.totalorder %s13, 0
    %p229 = por %p227, %p228
    %p230 = scmp.ne.s32.totalorder %s219, %s222
    %p231 = scmp.eq.s32.totalorder %s18, 1
    %p232 = por %p230, %p231
    %p233 = scmp.ne.s32.totalorder %s222, %s223
    %p234 = scmp.eq.s32.totalorder %s18, 0
    %p235 = por %p233, %p234
    %p236 = scmp.ne.s32.totalorder %s222, %s223
    %p237 = scmp.eq.s32.totalorder %s19, 1
    %p238 = por %p236, %p237
    %p240 = scmp.ne.s32.totalorder %s223, %s239
    %p241 = scmp.eq.s32.totalorder %s19, 0
    %p242 = por %p240, %p241
    %p243 = scmp.le.s32.totalorder 1, %s13
    %p244 = scmp.lt.s32.totalorder %s13, 3
    %p245 = pnand %p243, %p244
    %p246 = pneg %p245
    // Predicated region
    $region9: #{mcc_block_forward.12} parent=5 // pred_check
      _
    $region10: #{mcc_block_forward.12} parent=5 // pred_check_branch
      %248 = sbr.rel (%p245) target = $region12
    $region11: #{mcc_block_forward.12} parent=5 // pred_region
      %s249 = ssub.s32 %s13, 1
      // Predicated region
      $region13: #{mcc_block_forward.12} parent=11 // pred_check
        %p250 = pneg %p186
      $region14: #{mcc_block_forward.12} parent=11 // pred_check_branch
        %252 = sbr.rel (%p250) target = $region16
      $region15: #{mcc_block_forward.12} parent=11 // pred_region
        _
      $region16: #{mcc_block_forward.12} parent=11 // pred_fallthru
        _
      // Predicated region
      $region17: #{mcc_block_forward.12} parent=11 // pred_check
        %p253 = pneg %p207
      $region18: #{mcc_block_forward.12} parent=11 // pred_check_branch
        %255 = sbr.rel (%p253) target = $region20
      $region19: #{mcc_block_forward.12} parent=11 // pred_region
        _
      $region20: #{mcc_block_forward.12} parent=11 // pred_fallthru
        _
    $region12: #{mcc_block_forward.12} parent=5 // pred_fallthru
      _
    %p256 = scmp.lt.s32.totalorder %s13, 2
    // Predicated region
    $region21: #{mcc_block_forward.12} parent=5 // pred_check
      %p257 = pneg %p256
    $region22: #{mcc_block_forward.12} parent=5 // pred_check_branch
      %259 = sbr.rel (%p257) target = $region24
    $region23: #{mcc_block_forward.12} parent=5 // pred_region
      // Predicated region
      $region25: #{mcc_block_forward.12} parent=23 // pred_check
        %p260 = pneg %p47
      $region26: #{mcc_block_forward.12} parent=23 // pred_check_branch
        %262 = sbr.rel (%p260) target = $region28
      $region27: #{mcc_block_forward.12} parent=23 // pred_region
        %s263 = smul.u32 32, %s21
        %p264 = scmp.lt.s32.totalorder %s20, 1
        %s265 = scalar_select %p264, %s20, 1
        %p266 = scmp.lt.s32.totalorder %s263, 31
        %s267 = scalar_select %p266, %s263, 31
        %s268 = smul.addr %s265, 32
        %s269 = sadd.s32 %s267, %s268
        %s270 = smul.addr %s269, 4
        %s271 = scalar_lea.vmem %s0, %s270
        %s272 = smul.u32 32, %s21
      $region28: #{mcc_block_forward.12} parent=23 // pred_fallthru
        _
      // Predicated region
      $region29: #{mcc_block_forward.12} parent=23 // pred_check
        %p273 = pneg %p75
      $region30: #{mcc_block_forward.12} parent=23 // pred_check_branch
        %275 = sbr.rel (%p273) target = $region32
      $region31: #{mcc_block_forward.12} parent=23 // pred_region
        %s276 = smul.u32 32, %s21
        %p277 = scmp.lt.s32.totalorder %s20, 1
        %s278 = scalar_select %p277, %s20, 1
        %p279 = scmp.lt.s32.totalorder %s276, 31
        %s280 = scalar_select %p279, %s276, 31
        %s281 = smul.addr %s278, 32
        %s282 = sadd.s32 %s280, %s281
        %s283 = smul.addr %s282, 8
        %s284 = scalar_lea.vmem %s1, %s283
        %s285 = smul.u32 32, %s21
      $region32: #{mcc_block_forward.12} parent=23 // pred_fallthru
        _
      // Predicated region
      $region33: #{mcc_block_forward.12} parent=23 // pred_check
        %p286 = pneg %p103
      $region34: #{mcc_block_forward.12} parent=23 // pred_check_branch
        %288 = sbr.rel (%p286) target = $region36
      $region35: #{mcc_block_forward.12} parent=23 // pred_region
        %s289 = smul.u32 32, %s21
        %p290 = scmp.lt.s32.totalorder %s20, 1
        %s291 = scalar_select %p290, %s20, 1
        %p292 = scmp.lt.s32.totalorder %s289, 31
        %s293 = scalar_select %p292, %s289, 31
        %s294 = smul.addr %s291, 32
        %s295 = sadd.s32 %s293, %s294
        %s296 = smul.addr %s295, 8
        %s297 = scalar_lea.vmem %s2, %s296
        %s298 = smul.u32 32, %s21
      $region36: #{mcc_block_forward.12} parent=23 // pred_fallthru
        _
      // Predicated region
      $region37: #{mcc_block_forward.12} parent=23 // pred_check
        %p299 = pneg %p131
      $region38: #{mcc_block_forward.12} parent=23 // pred_check_branch
        %301 = sbr.rel (%p299) target = $region40
      $region39: #{mcc_block_forward.12} parent=23 // pred_region
        %s302 = smul.u32 32, %s21
        %p303 = scmp.lt.s32.totalorder %s20, 1
        %s304 = scalar_select %p303, %s20, 1
        %p305 = scmp.lt.s32.totalorder %s302, 31
        %s306 = scalar_select %p305, %s302, 31
        %s307 = smul.addr %s304, 32
        %s308 = sadd.s32 %s306, %s307
        %s309 = smul.addr %s308, 8
        %s310 = scalar_lea.vmem %s3, %s309
        %s311 = smul.u32 32, %s21
      $region40: #{mcc_block_forward.12} parent=23 // pred_fallthru
        _
      // Predicated region
      $region41: #{mcc_block_forward.12} parent=23 // pred_check
        %p312 = pneg %p159
      $region42: #{mcc_block_forward.12} parent=23 // pred_check_branch
        %314 = sbr.rel (%p312) target = $region44
      $region43: #{mcc_block_forward.12} parent=23 // pred_region
        %s315 = smul.u32 32, %s21
        %p316 = scmp.lt.s32.totalorder %s20, 1
        %s317 = scalar_select %p316, %s20, 1
        %p318 = scmp.lt.s32.totalorder %s315, 31
        %s319 = scalar_select %p318, %s315, 31
        %s320 = smul.addr %s317, 32
        %s321 = sadd.s32 %s319, %s320
        %s322 = smul.addr %s321, 4
        %s323 = scalar_lea.vmem %s4, %s322
        %s324 = smul.u32 32, %s21
      $region44: #{mcc_block_forward.12} parent=23 // pred_fallthru
        _
    $region24: #{mcc_block_forward.12} parent=5 // pred_fallthru
      _
    %p325 = scmp.le.s32.totalorder 1, %s13
    %p326 = scmp.lt.s32.totalorder %s13, 3
    %p327 = pnand %p325, %p326
    %p328 = pneg %p327
    // Predicated region
    $region45: #{mcc_block_forward.12} parent=5 // pred_check
      _
    $region46: #{mcc_block_forward.12} parent=5 // pred_check_branch
      %330 = sbr.rel (%p327) target = $region48
    $region47: #{mcc_block_forward.12} parent=5 // pred_region
      %s331 = ssub.s32 %s13, 1
      %s332 = smul.u32 32, %s23
      %p333 = scmp.lt.s32.totalorder %s22, 1
      %s334 = scalar_select %p333, %s22, 1
      %p335 = scmp.lt.s32.totalorder %s332, 31
      %s336 = scalar_select %p335, %s332, 31
      %s337 = smul.addr %s334, 32
      %s338 = sadd.s32 %s336, %s337
      %s339 = smul.addr %s338, 4
      %s340 = scalar_lea.vmem %s0, %s339
      %p341 = pneg %p53
      %p342 = pneg %p50
      %s343 = smul.u32 32, %s23
      %p344 = scmp.lt.s32.totalorder %s22, 1
      %s345 = scalar_select %p344, %s22, 1
      %p346 = scmp.lt.s32.totalorder %s343, 31
      %s347 = scalar_select %p346, %s343, 31
      %s348 = smul.addr %s345, 32
      %s349 = sadd.s32 %s347, %s348
      %s350 = smul.addr %s349, 8
      %s351 = scalar_lea.vmem %s1, %s350
      %p352 = pneg %p81
      %p353 = pneg %p78
      %s354 = smul.u32 32, %s23
      %p355 = scmp.lt.s32.totalorder %s22, 1
      %s356 = scalar_select %p355, %s22, 1
      %p357 = scmp.lt.s32.totalorder %s354, 31
      %s358 = scalar_select %p357, %s354, 31
      %s359 = smul.addr %s356, 32
      %s360 = sadd.s32 %s358, %s359
      %s361 = smul.addr %s360, 8
      %s362 = scalar_lea.vmem %s2, %s361
      %p363 = pneg %p109
      %p364 = pneg %p106
      %s365 = smul.u32 32, %s23
      %p366 = scmp.lt.s32.totalorder %s22, 1
      %s367 = scalar_select %p366, %s22, 1
      %p368 = scmp.lt.s32.totalorder %s365, 31
      %s369 = scalar_select %p368, %s365, 31
      %s370 = smul.addr %s367, 32
      %s371 = sadd.s32 %s369, %s370
      %s372 = smul.addr %s371, 8
      %s373 = scalar_lea.vmem %s3, %s372
      %p374 = pneg %p137
      %p375 = pneg %p134
      %s376 = smul.u32 32, %s23
      %p377 = scmp.lt.s32.totalorder %s22, 1
      %s378 = scalar_select %p377, %s22, 1
      %p379 = scmp.lt.s32.totalorder %s376, 31
      %s380 = scalar_select %p379, %s376, 31
      %s381 = smul.addr %s378, 32
      %s382 = sadd.s32 %s380, %s381
      %s383 = smul.addr %s382, 4
      %s384 = scalar_lea.vmem %s4, %s383
      %p385 = pneg %p165
      %p386 = pneg %p162
      %p387 = pneg %p186
      %p388 = pneg %p183
      %p389 = pneg %p207
      %p390 = pneg %p204
      %p391 = pneg %p235
      %p392 = pneg %p232
      %s393 = smul.u32 32, %s23
      %p394 = scmp.lt.s32.totalorder %s22, 1
      %s395 = scalar_select %p394, %s22, 1
      %p396 = scmp.lt.s32.totalorder %s393, 31
      %s397 = scalar_select %p396, %s393, 31
      %s398 = smul.addr %s395, 32
      %s399 = sadd.s32 %s397, %s398
      %s400 = smul.addr %s399, 4
      %s401 = scalar_lea.vmem %s7, %s400
      %s402 = smul.u32 32, %s23
      %p403 = scmp.lt.s32.totalorder %s22, 1
      %s404 = scalar_select %p403, %s22, 1
      %p405 = scmp.lt.s32.totalorder %s402, 31
      %s406 = scalar_select %p405, %s402, 31
      %s407 = smul.addr %s404, 32
      %s408 = sadd.s32 %s406, %s407
      %s409 = smul.addr %s408, 4
      %s410 = scalar_lea.vmem %s0, %s409
      %s411 = smul.u32 32, %s23
      %s412 = smul.u32 32, %s23
      %p413 = scmp.lt.s32.totalorder %s22, 1
      %s414 = scalar_select %p413, %s22, 1
      %p415 = scmp.lt.s32.totalorder %s412, 31
      %s416 = scalar_select %p415, %s412, 31
      %s417 = smul.addr %s414, 32
      %s418 = sadd.s32 %s416, %s417
      %s419 = smul.addr %s418, 8
      %s420 = scalar_lea.vmem %s1, %s419
      %s421 = smul.u32 32, %s23
      %s422 = smul.u32 32, %s23
      %p423 = scmp.lt.s32.totalorder %s22, 1
      %s424 = scalar_select %p423, %s22, 1
      %p425 = scmp.lt.s32.totalorder %s422, 31
      %s426 = scalar_select %p425, %s422, 31
      %s427 = smul.addr %s424, 32
      %s428 = sadd.s32 %s426, %s427
      %s429 = smul.addr %s428, 8
      %s430 = scalar_lea.vmem %s2, %s429
      %s431 = smul.u32 32, %s23
      %s432 = smul.u32 32, %s23
      %p433 = scmp.lt.s32.totalorder %s22, 1
      %s434 = scalar_select %p433, %s22, 1
      %p435 = scmp.lt.s32.totalorder %s432, 31
      %s436 = scalar_select %p435, %s432, 31
      %s437 = smul.addr %s434, 32
      %s438 = sadd.s32 %s436, %s437
      %s439 = smul.addr %s438, 8
      %s440 = scalar_lea.vmem %s3, %s439
      %s441 = smul.u32 32, %s23
      %s442 = smul.u32 32, %s23
      %p443 = scmp.lt.s32.totalorder %s22, 1
      %s444 = scalar_select %p443, %s22, 1
      %p445 = scmp.lt.s32.totalorder %s442, 31
      %s446 = scalar_select %p445, %s442, 31
      %s447 = smul.addr %s444, 32
      %s448 = sadd.s32 %s446, %s447
      %s449 = smul.addr %s448, 4
      %s450 = scalar_lea.vmem %s4, %s449
      %s451 = smul.u32 32, %s23
      %s452 = smul.u32 32, %s23
      %p453 = scmp.lt.s32.totalorder %s22, 1
      %s454 = scalar_select %p453, %s22, 1
      %p455 = scmp.lt.s32.totalorder %s452, 31
      %s456 = scalar_select %p455, %s452, 31
      %s457 = smul.addr %s454, 32
      %s458 = sadd.s32 %s456, %s457
      %s459 = smul.addr %s458, 4
      %s460 = scalar_lea.vmem %s7, %s459
      %s461 = smul.u32 32, %s23
      %p462 = scmp.eq.s32.totalorder %s23, 0
      // Predicated region
      $region49: #{mcc_block_forward.12} parent=47 // pred_check
        %p463 = pneg %p462
      $region50: #{mcc_block_forward.12} parent=47 // pred_check_branch
        %465 = sbr.rel (%p463) target = $region52
      $region51: #{mcc_block_forward.12} parent=47 // pred_region
        %vm466 = vcmask 64512
        %467 = vst.msk [vmem:[#allocation2] sm:$0xff] %vm466, 0.0
        %468 = vst.msk [vmem:[#allocation2 + $0x8] sm:$0xff] %vm466, 0.0
      $region52: #{mcc_block_forward.12} parent=47 // pred_fallthru
        _
      %v469 = vld [vmem:[%s5] sm:$0xff]
      %v470 = vld [vmem:[%s5 + $0x8] sm:$0xff]
      %v471 = vld [vmem:[%s6] sm:$0x1]
      loop: start=0, step=1, limit=32
      $region53: #{mcc_block_forward.12} parent=47 // loop_pre_header
        _
      $region54: #{mcc_block_forward.12} parent=47 // loop_header
        %s473 = sphi 0, %s477
        %p474 = scmp.ge.s32.totalorder %s473, 32
      $region55: #{mcc_block_forward.12} parent=47 // loop_header_branch
        %476 = sbr.rel (%p474) target = $region59
      $region56: #{mcc_block_forward.12} parent=47 // loop_body
        %s478 = smul.u32 %s473, 8
        %s479 = sshra.s32 %s478, 3
        %s480 = sand.u32 %s478, 7
        %s481 = smul.addr %s479, 4
        %s482 = scalar_lea.vmem %s410, %s481
        %v483 = vld [vmem:[%s482] sm:$0xf]
        %v484 = vunpack.c.l.bf16 %v483
        %s485 = scalar_lea.vmem %s420, %s478
        %v486 = vld [vmem:[%s485] sm:$0xff]
        %s487 = smul.addr %s479, 4
        %s488 = scalar_lea.vmem %s450, %s487
        %v489 = vld [vmem:[%s488] sm:$0xf]
        %v490 = vunpack.c.l.bf16 %v489
        %s491 = scalar_lea.vmem %s430, %s478
        %v492 = vld [vmem:[%s491] sm:$0xff]
        %s493 = scalar_lea.vmem %s440, %s478
        %v494 = vld [vmem:[%s493] sm:$0xff]
        %vm495 = vcmp.gt.f32.partialorder %v486, 20.0
        %v496 = vmin.f32 %v486, 20.0
        %v497 = vmul.f32 %v496, 1.442695
        %v498 = vpow.pop %v497
        %v499 = vadd.f32 %v498, 1.0
        %v500 = vlog2.pop %v499
        %v501 = vmul.f32 %v500, 0.6931472
        %v502 = vsel %vm495, %v486, %v501
        %v503 = vmul.f32 %v502, %v484
        %v504 = vsub.f32 0.0, %v490
        %v505 = vmul.f32 %v504, 1.442695
        %v506 = vpow.pop %v505
        %v507 = vadd.f32 %v506, 1.0
        %v508 = vrcp.pop %v507
        %v509 = vmul.f32 1.0, %v508
        %v510 = vmul.f32 %v490, %v509
        %v512 = vcombine.high %v502, %v502
        %v514 = vunpack.c.l.s4 1966171168
        %v515 = vunpack.c.0.s8 %v514
        %v516 = vlaneseq
        %v517 = vshrl.u32 %v516, 7
        %v518 = vsub.s32 %v515, %v517
        %v519 = vrot.slane %v502, %v518
        %v521 = vunpack.c.l.s4 1966171168
        %v522 = vunpack.c.0.s8 %v521
        %v523 = vlaneseq
        %v524 = vshrl.u32 %v523, 7
        %v525 = vsub.s32 %v522, %v524
        %v526 = vrot.slane %v512, %v525
        %v527 = vcombine.high %v519, %v519
        %v528 = vcombine.high %v526, %v526
        %v530 = vunpack.c.l.s4 1966171168
        %v531 = vunpack.c.0.s8 %v530
        %v532 = vlaneseq
        %v533 = vshrl.u32 %v532, 7
        %v534 = vsub.s32 %v531, %v533
        %v535 = vrot.slane %v519, %v534
        %v537 = vunpack.c.l.s4 1966171168
        %v538 = vunpack.c.0.s8 %v537
        %v539 = vlaneseq
        %v540 = vshrl.u32 %v539, 7
        %v541 = vsub.s32 %v538, %v540
        %v542 = vrot.slane %v526, %v541
        %v544 = vunpack.c.l.s4 1966171168
        %v545 = vunpack.c.0.s8 %v544
        %v546 = vlaneseq
        %v547 = vshrl.u32 %v546, 7
        %v548 = vsub.s32 %v545, %v547
        %v549 = vrot.slane %v527, %v548
        %v551 = vunpack.c.l.s4 1966171168
        %v552 = vunpack.c.0.s8 %v551
        %v553 = vlaneseq
        %v554 = vshrl.u32 %v553, 7
        %v555 = vsub.s32 %v552, %v554
        %v556 = vrot.slane %v528, %v555
        %v557 = vcombine.high %v535, %v535
        %v558 = vcombine.high %v542, %v542
        %v559 = vcombine.high %v549, %v549
        %v560 = vcombine.high %v556, %v556
        %v561 = vlaneseq
        %v562 = vshrl.u32 %v561, 7
        %v563 = vsub.s32 0, %v562
        %v564 = vrot.slane %v535, %v563
        %v565 = vlaneseq
        %v566 = vshrl.u32 %v565, 7
        %v567 = vsub.s32 0, %v566
        %v568 = vrot.slane %v549, %v567
        %v569 = vlaneseq
        %v570 = vshrl.u32 %v569, 7
        %v571 = vsub.s32 0, %v570
        %v572 = vrot.slane %v557, %v571
        %v573 = vlaneseq
        %v574 = vshrl.u32 %v573, 7
        %v575 = vsub.s32 0, %v574
        %v576 = vrot.slane %v559, %v575
        %v577 = vlaneseq
        %v578 = vshrl.u32 %v577, 7
        %v579 = vsub.s32 0, %v578
        %v580 = vrot.slane %v542, %v579
        %v581 = vlaneseq
        %v582 = vshrl.u32 %v581, 7
        %v583 = vsub.s32 0, %v582
        %v584 = vrot.slane %v556, %v583
        %v585 = vlaneseq
        %v586 = vshrl.u32 %v585, 7
        %v587 = vsub.s32 0, %v586
        %v588 = vrot.slane %v558, %v587
        %v589 = vlaneseq
        %v590 = vshrl.u32 %v589, 7
        %v591 = vsub.s32 0, %v590
        %v592 = vrot.slane %v560, %v591
        %v601 = vmul.f32 %v564, %v469
        %v602 = vmul.f32 %v564, %v470
        %v603 = vmul.f32 %v568, %v469
        %v604 = vmul.f32 %v568, %v470
        %v605 = vmul.f32 %v572, %v469
        %v606 = vmul.f32 %v572, %v470
        %v607 = vmul.f32 %v576, %v469
        %v608 = vmul.f32 %v576, %v470
        %v609 = vmul.f32 %v580, %v469
        %v610 = vmul.f32 %v580, %v470
        %v611 = vmul.f32 %v584, %v469
        %v612 = vmul.f32 %v584, %v470
        %v613 = vmul.f32 %v588, %v469
        %v614 = vmul.f32 %v588, %v470
        %v615 = vmul.f32 %v592, %v469
        %v616 = vmul.f32 %v592, %v470
        %v617 = vmul.f32 %v601, 1.442695
        %v618 = vpow.pop %v617
        %v619 = vmul.f32 %v602, 1.442695
        %v620 = vpow.pop %v619
        %v621 = vmul.f32 %v603, 1.442695
        %v622 = vpow.pop %v621
        %v623 = vmul.f32 %v604, 1.442695
        %v624 = vpow.pop %v623
        %v625 = vmul.f32 %v605, 1.442695
        %v626 = vpow.pop %v625
        %v627 = vmul.f32 %v606, 1.442695
        %v628 = vpow.pop %v627
        %v629 = vmul.f32 %v607, 1.442695
        %v630 = vpow.pop %v629
        %v631 = vmul.f32 %v608, 1.442695
        %v632 = vpow.pop %v631
        %v633 = vmul.f32 %v609, 1.442695
        %v634 = vpow.pop %v633
        %v635 = vmul.f32 %v610, 1.442695
        %v636 = vpow.pop %v635
        %v637 = vmul.f32 %v611, 1.442695
        %v638 = vpow.pop %v637
        %v639 = vmul.f32 %v612, 1.442695
        %v640 = vpow.pop %v639
        %v641 = vmul.f32 %v613, 1.442695
        %v642 = vpow.pop %v641
        %v643 = vmul.f32 %v614, 1.442695
        %v644 = vpow.pop %v643
        %v645 = vmul.f32 %v615, 1.442695
        %v646 = vpow.pop %v645
        %v647 = vmul.f32 %v616, 1.442695
        %v648 = vpow.pop %v647
        %649 = vxpose.xlu0.b32.start [1/16] %v492, 128
        %650 = vxpose.xlu0.b32.cont [2/16] 0.0, 128
        %651 = vxpose.xlu0.b32.cont [3/16] 0.0, 128
        %652 = vxpose.xlu0.b32.cont [4/16] 0.0, 128
        %653 = vxpose.xlu0.b32.cont [5/16] 0.0, 128
        %654 = vxpose.xlu0.b32.cont [6/16] 0.0, 128
        %655 = vxpose.xlu0.b32.cont [7/16] 0.0, 128
        %656 = vxpose.xlu0.b32.cont [8/16] 0.0, 128
        %657 = vxpose.xlu0.b32.cont [9/16] 0.0, 128
        %658 = vxpose.xlu0.b32.cont [10/16] 0.0, 128
        %659 = vxpose.xlu0.b32.cont [11/16] 0.0, 128
        %660 = vxpose.xlu0.b32.cont [12/16] 0.0, 128
        %661 = vxpose.xlu0.b32.cont [13/16] 0.0, 128
        %662 = vxpose.xlu0.b32.cont [14/16] 0.0, 128
        %663 = vxpose.xlu0.b32.cont [15/16] 0.0, 128
        %664 = vxpose.xlu0.b32.end [16/16] 0.0, 128
        %v665 = vpop.trf.xlu0
        %v666 = vpop.trf.xlu0
        %v667 = vpop.trf.xlu0
        %v668 = vpop.trf.xlu0
        %v669 = vpop.trf.xlu0
        %v670 = vpop.trf.xlu0
        %v671 = vpop.trf.xlu0
        %v672 = vpop.trf.xlu0
        %v673 = vpop.trf.xlu0
        %v674 = vpop.trf.xlu0
        %v675 = vpop.trf.xlu0
        %v676 = vpop.trf.xlu0
        %v677 = vpop.trf.xlu0
        %v678 = vpop.trf.xlu0
        %v679 = vpop.trf.xlu0
        %v680 = vpop.trf.xlu0
        %681 = vxpose.xlu0.b32.start [1/16] %v494, 128
        %682 = vxpose.xlu0.b32.cont [2/16] 0.0, 128
        %683 = vxpose.xlu0.b32.cont [3/16] 0.0, 128
        %684 = vxpose.xlu0.b32.cont [4/16] 0.0, 128
        %685 = vxpose.xlu0.b32.cont [5/16] 0.0, 128
        %686 = vxpose.xlu0.b32.cont [6/16] 0.0, 128
        %687 = vxpose.xlu0.b32.cont [7/16] 0.0, 128
        %688 = vxpose.xlu0.b32.cont [8/16] 0.0, 128
        %689 = vxpose.xlu0.b32.cont [9/16] 0.0, 128
        %690 = vxpose.xlu0.b32.cont [10/16] 0.0, 128
        %691 = vxpose.xlu0.b32.cont [11/16] 0.0, 128
        %692 = vxpose.xlu0.b32.cont [12/16] 0.0, 128
        %693 = vxpose.xlu0.b32.cont [13/16] 0.0, 128
        %694 = vxpose.xlu0.b32.cont [14/16] 0.0, 128
        %695 = vxpose.xlu0.b32.cont [15/16] 0.0, 128
        %696 = vxpose.xlu0.b32.end [16/16] 0.0, 128
        %v697 = vpop.trf.xlu0
        %v698 = vpop.trf.xlu0
        %v699 = vpop.trf.xlu0
        %v700 = vpop.trf.xlu0
        %v701 = vpop.trf.xlu0
        %v702 = vpop.trf.xlu0
        %v703 = vpop.trf.xlu0
        %v704 = vpop.trf.xlu0
        %v705 = vpop.trf.xlu0
        %v706 = vpop.trf.xlu0
        %v707 = vpop.trf.xlu0
        %v708 = vpop.trf.xlu0
        %v709 = vpop.trf.xlu0
        %v710 = vpop.trf.xlu0
        %v711 = vpop.trf.xlu0
        %v712 = vpop.trf.xlu0
        %v713 = vld [vmem:[#allocation2] sm:$0xff]
        %v714 = vld [vmem:[#allocation2 + $0x8] sm:$0xff]
        %v715 = vmul.f32 %v618, %v713
        %v716 = vmul.f32 %v620, %v714
        %718 = vset.pattern.permute.xlu0 0
        %719 = vperm.xlu0 %718, %v665
        %v720 = vpop.permute.xlu0 %719
        %723 = vset.pattern.permute.xlu0 0
        %724 = vperm.xlu0 %723, %v666
        %v725 = vpop.permute.xlu0 %724
        %v727 = vlaneseq
        %v728 = vshrl.u32 %v727, 7
        %v729 = vsub.s32 0, %v728
        %v730 = vrot.slane %v503, %v729
        %v731 = vmul.f32 %v720, %v730
        %v732 = vmul.f32 %v725, %v730
        %v733 = vadd.f32 %v715, %v731
        %v734 = vadd.f32 %v716, %v732
        %736 = vset.pattern.permute.xlu0 0
        %737 = vperm.xlu0 %736, %v697
        %v738 = vpop.permute.xlu0 %737
        %741 = vset.pattern.permute.xlu0 0
        %742 = vperm.xlu0 %741, %v698
        %v743 = vpop.permute.xlu0 %742
        %v745 = vmul.f32 %v733, %v738
        %v746 = vmul.f32 %v734, %v743
        %vm747 = vcmask 64512
        %v748 = vsel %vm747, %v745, 0.0
        %v749 = vsel %vm747, %v746, 0.0
        %v750 = vadd.f32 %v748, %v749
        %v751 = vrot.slane %v750, 4
        %v752 = vadd.f32 %v750, %v751
        %v753 = vrot.slane %v752, 2
        %v754 = vadd.f32 %v752, %v753
        %v755 = vrot.slane %v754, 1
        %v756 = vadd.f32 %v754, %v755
        %vm757 = vcmask 57344
        %758 = vst.msk [vmem:[#allocation3] sm:$0x1] %vm757, %v756
        %v759 = vmul.f32 %v622, %v733
        %v760 = vmul.f32 %v624, %v734
        %761 = vset.pattern.permute.xlu0 1
        %762 = vperm.xlu0 %761, %v665
        %v763 = vpop.permute.xlu0 %762
        %765 = vset.pattern.permute.xlu0 1
        %766 = vperm.xlu0 %765, %v666
        %v767 = vpop.permute.xlu0 %766
        %v769 = vlaneseq
        %v770 = vshrl.u32 %v769, 7
        %v771 = vsub.s32 1, %v770
        %v772 = vrot.slane %v503, %v771
        %v773 = vmul.f32 %v763, %v772
        %v774 = vmul.f32 %v767, %v772
        %v775 = vadd.f32 %v759, %v773
        %v776 = vadd.f32 %v760, %v774
        %777 = vset.pattern.permute.xlu0 1
        %778 = vperm.xlu0 %777, %v697
        %v779 = vpop.permute.xlu0 %778
        %781 = vset.pattern.permute.xlu0 1
        %782 = vperm.xlu0 %781, %v698
        %v783 = vpop.permute.xlu0 %782
        %v785 = vmul.f32 %v775, %v779
        %v786 = vmul.f32 %v776, %v783
        %v787 = vsel %vm747, %v785, 0.0
        %v788 = vsel %vm747, %v786, 0.0
        %v789 = vadd.f32 %v787, %v788
        %v790 = vrot.slane %v789, 4
        %v791 = vadd.f32 %v789, %v790
        %v792 = vrot.slane %v791, 2
        %v793 = vadd.f32 %v791, %v792
        %v794 = vrot.slane %v793, 1
        %v795 = vadd.f32 %v793, %v794
        %796 = vst.msk [vmem:[#allocation3 + $0x1] sm:$0x1] %vm757, %v795
        %v797 = vmul.f32 %v626, %v775
        %v798 = vmul.f32 %v628, %v776
        %799 = vset.pattern.permute.xlu0 2
        %800 = vperm.xlu0 %799, %v665
        %v801 = vpop.permute.xlu0 %800
        %803 = vset.pattern.permute.xlu0 2
        %804 = vperm.xlu0 %803, %v666
        %v805 = vpop.permute.xlu0 %804
        %v807 = vlaneseq
        %v808 = vshrl.u32 %v807, 7
        %v809 = vsub.s32 2, %v808
        %v810 = vrot.slane %v503, %v809
        %v811 = vmul.f32 %v801, %v810
        %v812 = vmul.f32 %v805, %v810
        %v813 = vadd.f32 %v797, %v811
        %v814 = vadd.f32 %v798, %v812
        %815 = vset.pattern.permute.xlu0 2
        %816 = vperm.xlu0 %815, %v697
        %v817 = vpop.permute.xlu0 %816
        %819 = vset.pattern.permute.xlu0 2
        %820 = vperm.xlu0 %819, %v698
        %v821 = vpop.permute.xlu0 %820
        %v823 = vmul.f32 %v813, %v817
        %v824 = vmul.f32 %v814, %v821
        %v825 = vsel %vm747, %v823, 0.0
        %v826 = vsel %vm747, %v824, 0.0
        %v827 = vadd.f32 %v825, %v826
        %v828 = vrot.slane %v827, 4
        %v829 = vadd.f32 %v827, %v828
        %v830 = vrot.slane %v829, 2
        %v831 = vadd.f32 %v829, %v830
        %v832 = vrot.slane %v831, 1
        %v833 = vadd.f32 %v831, %v832
        %834 = vst.msk [vmem:[#allocation3 + $0x2] sm:$0x1] %vm757, %v833
        %v835 = vmul.f32 %v630, %v813
        %v836 = vmul.f32 %v632, %v814
        %837 = vset.pattern.permute.xlu0 3
        %838 = vperm.xlu0 %837, %v665
        %v839 = vpop.permute.xlu0 %838
        %841 = vset.pattern.permute.xlu0 3
        %842 = vperm.xlu0 %841, %v666
        %v843 = vpop.permute.xlu0 %842
        %v845 = vlaneseq
        %v846 = vshrl.u32 %v845, 7
        %v847 = vsub.s32 3, %v846
        %v848 = vrot.slane %v503, %v847
        %v849 = vmul.f32 %v839, %v848
        %v850 = vmul.f32 %v843, %v848
        %v851 = vadd.f32 %v835, %v849
        %v852 = vadd.f32 %v836, %v850
        %853 = vset.pattern.permute.xlu0 3
        %854 = vperm.xlu0 %853, %v697
        %v855 = vpop.permute.xlu0 %854
        %857 = vset.pattern.permute.xlu0 3
        %858 = vperm.xlu0 %857, %v698
        %v859 = vpop.permute.xlu0 %858
        %v861 = vmul.f32 %v851, %v855
        %v862 = vmul.f32 %v852, %v859
        %v863 = vsel %vm747, %v861, 0.0
        %v864 = vsel %vm747, %v862, 0.0
        %v865 = vadd.f32 %v863, %v864
        %v866 = vrot.slane %v865, 4
        %v867 = vadd.f32 %v865, %v866
        %v868 = vrot.slane %v867, 2
        %v869 = vadd.f32 %v867, %v868
        %v870 = vrot.slane %v869, 1
        %v871 = vadd.f32 %v869, %v870
        %872 = vst.msk [vmem:[#allocation3 + $0x3] sm:$0x1] %vm757, %v871
        %v873 = vmul.f32 %v634, %v851
        %v874 = vmul.f32 %v636, %v852
        %875 = vset.pattern.permute.xlu0 4
        %876 = vperm.xlu0 %875, %v665
        %v877 = vpop.permute.xlu0 %876
        %879 = vset.pattern.permute.xlu0 4
        %880 = vperm.xlu0 %879, %v666
        %v881 = vpop.permute.xlu0 %880
        %v883 = vlaneseq
        %v884 = vshrl.u32 %v883, 7
        %v885 = vsub.s32 4, %v884
        %v886 = vrot.slane %v503, %v885
        %v887 = vmul.f32 %v877, %v886
        %v888 = vmul.f32 %v881, %v886
        %v889 = vadd.f32 %v873, %v887
        %v890 = vadd.f32 %v874, %v888
        %891 = vset.pattern.permute.xlu0 4
        %892 = vperm.xlu0 %891, %v697
        %v893 = vpop.permute.xlu0 %892
        %895 = vset.pattern.permute.xlu0 4
        %896 = vperm.xlu0 %895, %v698
        %v897 = vpop.permute.xlu0 %896
        %v899 = vmul.f32 %v889, %v893
        %v900 = vmul.f32 %v890, %v897
        %v901 = vsel %vm747, %v899, 0.0
        %v902 = vsel %vm747, %v900, 0.0
        %v903 = vadd.f32 %v901, %v902
        %v904 = vrot.slane %v903, 4
        %v905 = vadd.f32 %v903, %v904
        %v906 = vrot.slane %v905, 2
        %v907 = vadd.f32 %v905, %v906
        %v908 = vrot.slane %v907, 1
        %v909 = vadd.f32 %v907, %v908
        %910 = vst.msk [vmem:[#allocation3 + $0x4] sm:$0x1] %vm757, %v909
        %v911 = vmul.f32 %v638, %v889
        %v912 = vmul.f32 %v640, %v890
        %913 = vset.pattern.permute.xlu0 5
        %914 = vperm.xlu0 %913, %v665
        %v915 = vpop.permute.xlu0 %914
        %917 = vset.pattern.permute.xlu0 5
        %918 = vperm.xlu0 %917, %v666
        %v919 = vpop.permute.xlu0 %918
        %v921 = vlaneseq
        %v922 = vshrl.u32 %v921, 7
        %v923 = vsub.s32 5, %v922
        %v924 = vrot.slane %v503, %v923
        %v925 = vmul.f32 %v915, %v924
        %v926 = vmul.f32 %v919, %v924
        %v927 = vadd.f32 %v911, %v925
        %v928 = vadd.f32 %v912, %v926
        %929 = vset.pattern.permute.xlu0 5
        %930 = vperm.xlu0 %929, %v697
        %v931 = vpop.permute.xlu0 %930
        %933 = vset.pattern.permute.xlu0 5
        %934 = vperm.xlu0 %933, %v698
        %v935 = vpop.permute.xlu0 %934
        %v937 = vmul.f32 %v927, %v931
        %v938 = vmul.f32 %v928, %v935
        %v939 = vsel %vm747, %v937, 0.0
        %v940 = vsel %vm747, %v938, 0.0
        %v941 = vadd.f32 %v939, %v940
        %v942 = vrot.slane %v941, 4
        %v943 = vadd.f32 %v941, %v942
        %v944 = vrot.slane %v943, 2
        %v945 = vadd.f32 %v943, %v944
        %v946 = vrot.slane %v945, 1
        %v947 = vadd.f32 %v945, %v946
        %948 = vst.msk [vmem:[#allocation3 + $0x5] sm:$0x1] %vm757, %v947
        %v949 = vmul.f32 %v642, %v927
        %v950 = vmul.f32 %v644, %v928
        %951 = vset.pattern.permute.xlu0 6
        %952 = vperm.xlu0 %951, %v665
        %v953 = vpop.permute.xlu0 %952
        %955 = vset.pattern.permute.xlu0 6
        %956 = vperm.xlu0 %955, %v666
        %v957 = vpop.permute.xlu0 %956
        %v959 = vlaneseq
        %v960 = vshrl.u32 %v959, 7
        %v961 = vsub.s32 6, %v960
        %v962 = vrot.slane %v503, %v961
        %v963 = vmul.f32 %v953, %v962
        %v964 = vmul.f32 %v957, %v962
        %v965 = vadd.f32 %v949, %v963
        %v966 = vadd.f32 %v950, %v964
        %967 = vset.pattern.permute.xlu0 6
        %968 = vperm.xlu0 %967, %v697
        %v969 = vpop.permute.xlu0 %968
        %971 = vset.pattern.permute.xlu0 6
        %972 = vperm.xlu0 %971, %v698
        %v973 = vpop.permute.xlu0 %972
        %v975 = vmul.f32 %v965, %v969
        %v976 = vmul.f32 %v966, %v973
        %v977 = vsel %vm747, %v975, 0.0
        %v978 = vsel %vm747, %v976, 0.0
        %v979 = vadd.f32 %v977, %v978
        %v980 = vrot.slane %v979, 4
        %v981 = vadd.f32 %v979, %v980
        %v982 = vrot.slane %v981, 2
        %v983 = vadd.f32 %v981, %v982
        %v984 = vrot.slane %v983, 1
        %v985 = vadd.f32 %v983, %v984
        %986 = vst.msk [vmem:[#allocation3 + $0x6] sm:$0x1] %vm757, %v985
        %v987 = vmul.f32 %v646, %v965
        %v988 = vmul.f32 %v648, %v966
        %989 = vset.pattern.permute.xlu0 7
        %990 = vperm.xlu0 %989, %v665
        %v991 = vpop.permute.xlu0 %990
        %993 = vset.pattern.permute.xlu0 7
        %994 = vperm.xlu0 %993, %v666
        %v995 = vpop.permute.xlu0 %994
        %v997 = vlaneseq
        %v998 = vshrl.u32 %v997, 7
        %v999 = vsub.s32 7, %v998
        %v1000 = vrot.slane %v503, %v999
        %v1001 = vmul.f32 %v991, %v1000
        %v1002 = vmul.f32 %v995, %v1000
        %v1003 = vadd.f32 %v987, %v1001
        %v1004 = vadd.f32 %v988, %v1002
        %1005 = vset.pattern.permute.xlu0 7
        %1006 = vperm.xlu0 %1005, %v697
        %v1007 = vpop.permute.xlu0 %1006
        %1009 = vset.pattern.permute.xlu0 7
        %1010 = vperm.xlu0 %1009, %v698
        %v1011 = vpop.permute.xlu0 %1010
        %v1013 = vmul.f32 %v1003, %v1007
        %v1014 = vmul.f32 %v1004, %v1011
        %v1015 = vsel %vm747, %v1013, 0.0
        %v1016 = vsel %vm747, %v1014, 0.0
        %v1017 = vadd.f32 %v1015, %v1016
        %v1018 = vrot.slane %v1017, 4
        %v1019 = vadd.f32 %v1017, %v1018
        %v1020 = vrot.slane %v1019, 2
        %v1021 = vadd.f32 %v1019, %v1020
        %v1022 = vrot.slane %v1021, 1
        %v1023 = vadd.f32 %v1021, %v1022
        %1024 = vst.msk [vmem:[#allocation3 + $0x7] sm:$0x1] %vm757, %v1023
        %1025 = vst.msk [vmem:[#allocation2] sm:$0xff] %vm747, %v1003
        %1026 = vst.msk [vmem:[#allocation2 + $0x8] sm:$0xff] %vm747, %v1004
        %v1027 = vld [vmem:[#allocation3] sm:$0xff]
        %v1029 = vlaneseq
        %v1030 = vshrl.u32 %v1029, 7
        %v1031 = vsub.s32 0, %v1030
        %v1032 = vrot.slane %v471, %v1031
        %v1034 = vmul.f32 %v1032, %v484
        %v1035 = vadd.f32 %v1027, %v1034
        %v1036 = vmul.f32 %v1035, %v510
        %v1037 = vpack.c.bf16 %v1036, %v1036
        %s1038 = smul.addr %s479, 4
        %s1039 = scalar_lea.vmem %s460, %s1038
        %vm1040 = vcmask 60416
        %1041 = vst.msk [vmem:[%s1039] sm:$0xf] %vm1040, %v1037
      $region57: #{mcc_block_forward.12} parent=47 // loop_footer
        %s477 = sadd.s32 1, %s473
      $region58: #{mcc_block_forward.12} parent=47 // loop_footer_branch
        %472 = sbr.rel target = $region54
      $region59: #{mcc_block_forward.12} parent=47 // loop_exit
        _
      %s1042 = smul.u32 32, %s23
      %p1043 = scmp.lt.s32.totalorder %s22, 1
      %s1044 = scalar_select %p1043, %s22, 1
      %p1045 = scmp.lt.s32.totalorder %s1042, 31
      %s1046 = scalar_select %p1045, %s1042, 31
      %s1047 = smul.addr %s1044, 32
      %s1048 = sadd.s32 %s1046, %s1047
      %s1049 = smul.addr %s1048, 4
      %s1050 = scalar_lea.vmem %s7, %s1049
      // Predicated region
      $region60: #{mcc_block_forward.12} parent=47 // pred_check
        %p1051 = pneg %p232
      $region61: #{mcc_block_forward.12} parent=47 // pred_check_branch
        %1053 = sbr.rel (%p1051) target = $region63
      $region62: #{mcc_block_forward.12} parent=47 // pred_region
        %s1054 = smul.u32 32, %s23
      $region63: #{mcc_block_forward.12} parent=47 // pred_fallthru
        _
    $region48: #{mcc_block_forward.12} parent=5 // pred_fallthru
      _
    %p1055 = scmp.le.s32.totalorder 2, %s13
    // Predicated region
    $region64: #{mcc_block_forward.12} parent=5 // pred_check
      %p1056 = pneg %p1055
    $region65: #{mcc_block_forward.12} parent=5 // pred_check_branch
      %1058 = sbr.rel (%p1056) target = $region67
    $region66: #{mcc_block_forward.12} parent=5 // pred_region
      %s1059 = ssub.s32 %s13, 2
      // Predicated region
      $region68: #{mcc_block_forward.12} parent=66 // pred_check
        %p1060 = pneg %p238
      $region69: #{mcc_block_forward.12} parent=66 // pred_check_branch
        %1062 = sbr.rel (%p1060) target = $region71
      $region70: #{mcc_block_forward.12} parent=66 // pred_region
        %s1063 = smul.u32 32, %s25
        %p1064 = scmp.lt.s32.totalorder %s24, 1
        %s1065 = scalar_select %p1064, %s24, 1
        %p1066 = scmp.lt.s32.totalorder %s1063, 31
        %s1067 = scalar_select %p1066, %s1063, 31
        %s1068 = smul.addr %s1065, 32
        %s1069 = sadd.s32 %s1067, %s1068
        %s1070 = smul.addr %s1069, 4
        %s1071 = scalar_lea.vmem %s7, %s1070
      $region71: #{mcc_block_forward.12} parent=66 // pred_fallthru
        _
    $region67: #{mcc_block_forward.12} parent=5 // pred_fallthru
      _
  $region6: #{mcc_block_forward.12} parent=0 // loop_footer
    %s17 = sadd.s32 1, %s13
  $region7: #{mcc_block_forward.12} parent=0 // loop_footer_branch
    %12 = sbr.rel target = $region3
  $region8: #{mcc_block_forward.12} parent=0 // loop_exit
    _

// kernel: mcc_block_forward.13
$region0: #{mcc_block_forward.13}
  #allocation0 [shape = 'u32[]', space=smem, size = 0x4, offset = 0x4, fixed_abs, tag = 'smem constant byte address 0x4 - core index']
  #allocation1 [shape = 'u32[144,128]{1,0:T(1,128)}', space=vmem, size = 0x12000, scoped, tag = 'internal scratch']
  #allocation2 [shape = 'f32[1,1]{1,0:T(1,128)S(6)}', space=smem, size = 0x200, scoped, tag = 'scoped memory for mcc_block_forward.13']
  %s0 = inlined_call_operand.vmem [shape: bf16[512,8], index: 0, kind: input, shape index: {}]
  %s1 = inlined_call_operand.vmem [shape: bf16[8,128], index: 1, kind: input, shape index: {}]
  %s2 = inlined_call_operand.<no memory space> [shape: f32[1,1], index: 2, kind: input, shape index: {}]
  %s3 = inlined_call_operand.vmem [shape: bf16[512,128], index: 3, kind: output, shape index: {}]
  %s4 = sld [smem:[#allocation0]]
  $region22: #{mcc_block_forward.13} parent=0
    _
  %s6 = ssub.s32 1, %s4
  %s7 = scalar_select 0, %s6, %s4
  %8 = sst [smem:[#allocation2]] %s2
  // Predicated region
  $region2: #{mcc_block_forward.13} parent=0 // pred_check
    _
  $region3: #{mcc_block_forward.13} parent=0 // pred_check_branch
    %10 = sbr.rel (0) target = $region5
  $region4: #{mcc_block_forward.13} parent=0 // pred_region
    _
  $region5: #{mcc_block_forward.13} parent=0 // pred_fallthru
    _
  // Predicated region
  $region6: #{mcc_block_forward.13} parent=0 // pred_check
    _
  $region7: #{mcc_block_forward.13} parent=0 // pred_check_branch
    %12 = sbr.rel (0) target = $region9
  $region8: #{mcc_block_forward.13} parent=0 // pred_region
    _
  $region9: #{mcc_block_forward.13} parent=0 // pred_fallthru
    _
  // Predicated region
  $region10: #{mcc_block_forward.13} parent=0 // pred_check
    _
  $region11: #{mcc_block_forward.13} parent=0 // pred_check_branch
    %14 = sbr.rel (0) target = $region13
  $region12: #{mcc_block_forward.13} parent=0 // pred_region
    _
  $region13: #{mcc_block_forward.13} parent=0 // pred_fallthru
    _
  %v16 = vld [vmem:[%s0] sm:$0xf]
  %v17 = vld [vmem:[%s0 + $0x4] sm:$0xf]
  %v18 = vld [vmem:[%s0 + $0x8] sm:$0xf]
  %v19 = vld [vmem:[%s0 + $0xc] sm:$0xf]
  %v20 = vld [vmem:[%s0 + $0x10] sm:$0xf]
  %v21 = vld [vmem:[%s0 + $0x14] sm:$0xf]
  %v22 = vld [vmem:[%s0 + $0x18] sm:$0xf]
  %v23 = vld [vmem:[%s0 + $0x1c] sm:$0xf]
  %v24 = vld [vmem:[%s0 + $0x20] sm:$0xf]
  %v25 = vld [vmem:[%s0 + $0x24] sm:$0xf]
  %v26 = vld [vmem:[%s0 + $0x28] sm:$0xf]
  %v27 = vld [vmem:[%s0 + $0x2c] sm:$0xf]
  %v28 = vld [vmem:[%s0 + $0x30] sm:$0xf]
  %v29 = vld [vmem:[%s0 + $0x34] sm:$0xf]
  %v30 = vld [vmem:[%s0 + $0x38] sm:$0xf]
  %v31 = vld [vmem:[%s0 + $0x3c] sm:$0xf]
  %v32 = vld [vmem:[%s0 + $0x40] sm:$0xf]
  %v33 = vld [vmem:[%s0 + $0x44] sm:$0xf]
  %v34 = vld [vmem:[%s0 + $0x48] sm:$0xf]
  %v35 = vld [vmem:[%s0 + $0x4c] sm:$0xf]
  %v36 = vld [vmem:[%s0 + $0x50] sm:$0xf]
  %v37 = vld [vmem:[%s0 + $0x54] sm:$0xf]
  %v38 = vld [vmem:[%s0 + $0x58] sm:$0xf]
  %v39 = vld [vmem:[%s0 + $0x5c] sm:$0xf]
  %v40 = vld [vmem:[%s0 + $0x60] sm:$0xf]
  %v41 = vld [vmem:[%s0 + $0x64] sm:$0xf]
  %v42 = vld [vmem:[%s0 + $0x68] sm:$0xf]
  %v43 = vld [vmem:[%s0 + $0x6c] sm:$0xf]
  %v44 = vld [vmem:[%s0 + $0x70] sm:$0xf]
  %v45 = vld [vmem:[%s0 + $0x74] sm:$0xf]
  %v46 = vld [vmem:[%s0 + $0x78] sm:$0xf]
  %v47 = vld [vmem:[%s0 + $0x7c] sm:$0xf]
  %v48 = vld [vmem:[%s0 + $0x80] sm:$0xf]
  %v49 = vld [vmem:[%s0 + $0x84] sm:$0xf]
  %v50 = vld [vmem:[%s0 + $0x88] sm:$0xf]
  %v51 = vld [vmem:[%s0 + $0x8c] sm:$0xf]
  %v52 = vld [vmem:[%s0 + $0x90] sm:$0xf]
  %v53 = vld [vmem:[%s0 + $0x94] sm:$0xf]
  %v54 = vld [vmem:[%s0 + $0x98] sm:$0xf]
  %v55 = vld [vmem:[%s0 + $0x9c] sm:$0xf]
  %v56 = vld [vmem:[%s0 + $0xa0] sm:$0xf]
  %v57 = vld [vmem:[%s0 + $0xa4] sm:$0xf]
  %v58 = vld [vmem:[%s0 + $0xa8] sm:$0xf]
  %v59 = vld [vmem:[%s0 + $0xac] sm:$0xf]
  %v60 = vld [vmem:[%s0 + $0xb0] sm:$0xf]
  %v61 = vld [vmem:[%s0 + $0xb4] sm:$0xf]
  %v62 = vld [vmem:[%s0 + $0xb8] sm:$0xf]
  %v63 = vld [vmem:[%s0 + $0xbc] sm:$0xf]
  %v64 = vld [vmem:[%s0 + $0xc0] sm:$0xf]
  %v65 = vld [vmem:[%s0 + $0xc4] sm:$0xf]
  %v66 = vld [vmem:[%s0 + $0xc8] sm:$0xf]
  %v67 = vld [vmem:[%s0 + $0xcc] sm:$0xf]
  %v68 = vld [vmem:[%s0 + $0xd0] sm:$0xf]
  %v69 = vld [vmem:[%s0 + $0xd4] sm:$0xf]
  %v70 = vld [vmem:[%s0 + $0xd8] sm:$0xf]
  %v71 = vld [vmem:[%s0 + $0xdc] sm:$0xf]
  %v72 = vld [vmem:[%s0 + $0xe0] sm:$0xf]
  %v73 = vld [vmem:[%s0 + $0xe4] sm:$0xf]
  %v74 = vld [vmem:[%s0 + $0xe8] sm:$0xf]
  %v75 = vld [vmem:[%s0 + $0xec] sm:$0xf]
  %v76 = vld [vmem:[%s0 + $0xf0] sm:$0xf]
  %v77 = vld [vmem:[%s0 + $0xf4] sm:$0xf]
  %v78 = vld [vmem:[%s0 + $0xf8] sm:$0xf]
  %v79 = vld [vmem:[%s0 + $0xfc] sm:$0xf]
  %v80 = vld [vmem:[%s1] sm:$0xf]
  %v145 = vunpack.c.l.b16 %v16
  %v146 = vunpack.c.l.b16 %v17
  %v147 = vunpack.c.l.b16 %v18
  %v148 = vunpack.c.l.b16 %v19
  %v149 = vunpack.c.l.b16 %v20
  %v150 = vunpack.c.l.b16 %v21
  %v151 = vunpack.c.l.b16 %v22
  %v152 = vunpack.c.l.b16 %v23
  %v153 = vunpack.c.l.b16 %v24
  %v154 = vunpack.c.l.b16 %v25
  %v155 = vunpack.c.l.b16 %v26
  %v156 = vunpack.c.l.b16 %v27
  %v157 = vunpack.c.l.b16 %v28
  %v158 = vunpack.c.l.b16 %v29
  %v159 = vunpack.c.l.b16 %v30
  %v160 = vunpack.c.l.b16 %v31
  %v161 = vunpack.c.l.b16 %v32
  %v162 = vunpack.c.l.b16 %v33
  %v163 = vunpack.c.l.b16 %v34
  %v164 = vunpack.c.l.b16 %v35
  %v165 = vunpack.c.l.b16 %v36
  %v166 = vunpack.c.l.b16 %v37
  %v167 = vunpack.c.l.b16 %v38
  %v168 = vunpack.c.l.b16 %v39
  %v169 = vunpack.c.l.b16 %v40
  %v170 = vunpack.c.l.b16 %v41
  %v171 = vunpack.c.l.b16 %v42
  %v172 = vunpack.c.l.b16 %v43
  %v173 = vunpack.c.l.b16 %v44
  %v174 = vunpack.c.l.b16 %v45
  %v175 = vunpack.c.l.b16 %v46
  %v176 = vunpack.c.l.b16 %v47
  %v177 = vunpack.c.l.b16 %v48
  %v178 = vunpack.c.l.b16 %v49
  %v179 = vunpack.c.l.b16 %v50
  %v180 = vunpack.c.l.b16 %v51
  %v181 = vunpack.c.l.b16 %v52
  %v182 = vunpack.c.l.b16 %v53
  %v183 = vunpack.c.l.b16 %v54
  %v184 = vunpack.c.l.b16 %v55
  %v185 = vunpack.c.l.b16 %v56
  %v186 = vunpack.c.l.b16 %v57
  %v187 = vunpack.c.l.b16 %v58
  %v188 = vunpack.c.l.b16 %v59
  %v189 = vunpack.c.l.b16 %v60
  %v190 = vunpack.c.l.b16 %v61
  %v191 = vunpack.c.l.b16 %v62
  %v192 = vunpack.c.l.b16 %v63
  %v193 = vunpack.c.l.b16 %v64
  %v194 = vunpack.c.l.b16 %v65
  %v195 = vunpack.c.l.b16 %v66
  %v196 = vunpack.c.l.b16 %v67
  %v197 = vunpack.c.l.b16 %v68
  %v198 = vunpack.c.l.b16 %v69
  %v199 = vunpack.c.l.b16 %v70
  %v200 = vunpack.c.l.b16 %v71
  %v201 = vunpack.c.l.b16 %v72
  %v202 = vunpack.c.l.b16 %v73
  %v203 = vunpack.c.l.b16 %v74
  %v204 = vunpack.c.l.b16 %v75
  %v205 = vunpack.c.l.b16 %v76
  %v206 = vunpack.c.l.b16 %v77
  %v207 = vunpack.c.l.b16 %v78
  %v208 = vunpack.c.l.b16 %v79
  %v209 = vpack.c.b16 %v146, %v145
  %v210 = vpack.c.b16 %v148, %v147
  %v211 = vpack.c.b16 %v150, %v149
  %v212 = vpack.c.b16 %v152, %v151
  %v213 = vpack.c.b16 %v154, %v153
  %v214 = vpack.c.b16 %v156, %v155
  %v215 = vpack.c.b16 %v158, %v157
  %v216 = vpack.c.b16 %v160, %v159
  %v217 = vpack.c.b16 %v162, %v161
  %v218 = vpack.c.b16 %v164, %v163
  %v219 = vpack.c.b16 %v166, %v165
  %v220 = vpack.c.b16 %v168, %v167
  %v221 = vpack.c.b16 %v170, %v169
  %v222 = vpack.c.b16 %v172, %v171
  %v223 = vpack.c.b16 %v174, %v173
  %v224 = vpack.c.b16 %v176, %v175
  %v225 = vpack.c.b16 %v178, %v177
  %v226 = vpack.c.b16 %v180, %v179
  %v227 = vpack.c.b16 %v182, %v181
  %v228 = vpack.c.b16 %v184, %v183
  %v229 = vpack.c.b16 %v186, %v185
  %v230 = vpack.c.b16 %v188, %v187
  %v231 = vpack.c.b16 %v190, %v189
  %v232 = vpack.c.b16 %v192, %v191
  %v233 = vpack.c.b16 %v194, %v193
  %v234 = vpack.c.b16 %v196, %v195
  %v235 = vpack.c.b16 %v198, %v197
  %v236 = vpack.c.b16 %v200, %v199
  %v237 = vpack.c.b16 %v202, %v201
  %v238 = vpack.c.b16 %v204, %v203
  %v239 = vpack.c.b16 %v206, %v205
  %v240 = vpack.c.b16 %v208, %v207
  %vm241 = vcmask 64512
  %v243 = vsel %vm241, %v209, 0
  %v246 = vsel %vm241, %v210, 0
  %v249 = vsel %vm241, %v211, 0
  %v252 = vsel %vm241, %v212, 0
  %v255 = vsel %vm241, %v213, 0
  %v258 = vsel %vm241, %v214, 0
  %v261 = vsel %vm241, %v215, 0
  %v264 = vsel %vm241, %v216, 0
  %v267 = vsel %vm241, %v217, 0
  %v270 = vsel %vm241, %v218, 0
  %v273 = vsel %vm241, %v219, 0
  %v276 = vsel %vm241, %v220, 0
  %v279 = vsel %vm241, %v221, 0
  %v282 = vsel %vm241, %v222, 0
  %v285 = vsel %vm241, %v223, 0
  %v288 = vsel %vm241, %v224, 0
  %v291 = vsel %vm241, %v225, 0
  %v294 = vsel %vm241, %v226, 0
  %v297 = vsel %vm241, %v227, 0
  %v300 = vsel %vm241, %v228, 0
  %v303 = vsel %vm241, %v229, 0
  %v306 = vsel %vm241, %v230, 0
  %v309 = vsel %vm241, %v231, 0
  %v312 = vsel %vm241, %v232, 0
  %v315 = vsel %vm241, %v233, 0
  %v318 = vsel %vm241, %v234, 0
  %v321 = vsel %vm241, %v235, 0
  %v324 = vsel %vm241, %v236, 0
  %v327 = vsel %vm241, %v237, 0
  %v330 = vsel %vm241, %v238, 0
  %v333 = vsel %vm241, %v239, 0
  %v336 = vsel %vm241, %v240, 0
  %vm338 = vcmask 1043456
  %v340 = vsel %vm338, %v80, 0
  %342 = vmatprep.subr.bf16.mxu0 0
  %343 = vmatpush1.bf16.msra.mxu0 0
  %344 = vmatprep.subr.bf16.mxu0 0
  %345 = vmatpush1.bf16.msra.mxu0 0
  %346 = vmatprep.subr.bf16.mxu0 0
  %347 = vmatpush1.bf16.msra.mxu0 0
  %348 = vmatprep.subr.bf16.mxu0 0
  %349 = vmatpush1.bf16.msra.mxu0 0
  %350 = vmatprep.subr.bf16.mxu0 0
  %351 = vmatpush1.bf16.msra.mxu0 0
  %352 = vmatprep.subr.bf16.mxu0 0
  %353 = vmatpush1.bf16.msra.mxu0 0
  %354 = vmatprep.subr.bf16.mxu0 0
  %355 = vmatpush1.bf16.msra.mxu0 0
  %356 = vmatprep.subr.bf16.mxu0 0
  %357 = vmatpush1.bf16.msra.mxu0 %v340
  %358 = vmatprep.subr.bf16.mxu0 0
  %359 = vmatpush2.bf16.msra.mxu0 0
  %360 = vmatprep.subr.bf16.mxu0 0
  %361 = vmatpush2.bf16.msra.mxu0 0
  %362 = vmatprep.subr.bf16.mxu0 0
  %363 = vmatpush2.bf16.msra.mxu0 0
  %364 = vmatprep.subr.bf16.mxu0 0
  %365 = vmatpush2.bf16.msra.mxu0 0
  %366 = vmatprep.subr.bf16.mxu0 0
  %367 = vmatpush2.bf16.msra.mxu0 0
  %368 = vmatprep.subr.bf16.mxu0 0
  %369 = vmatpush2.bf16.msra.mxu0 0
  %370 = vmatprep.subr.bf16.mxu0 0
  %371 = vmatpush2.bf16.msra.mxu0 0
  %372 = vmatprep.subr.bf16.mxu0 0
  %373 = vmatpush2.bf16.msra.mxu0 0
  %374 = vmatprep.mubr.bf16.mxu0 0
  %375 = vmatmul.mubr.bf16.gmra.mxu0 %v243
  %v376 = vpop.f32.mrf.mxu0
  %v377 = vadd.f32 0.0, %v376
  %v378 = vpop.f32.mrf.mxu0
  %v379 = vpop.f32.mrf.mxu0
  %v380 = vadd.f32 0.0, %v379
  %v381 = vpop.f32.mrf.mxu0
  %382 = vmatprep.mubr.bf16.mxu0 0
  %383 = vmatmul.mubr.bf16.gmra.mxu0 %v246
  %v384 = vpop.f32.mrf.mxu0
  %v385 = vadd.f32 0.0, %v384
  %v386 = vpop.f32.mrf.mxu0
  %v387 = vpop.f32.mrf.mxu0
  %v388 = vadd.f32 0.0, %v387
  %v389 = vpop.f32.mrf.mxu0
  %390 = vmatprep.mubr.bf16.mxu0 0
  %391 = vmatmul.mubr.bf16.gmra.mxu0 %v249
  %v392 = vpop.f32.mrf.mxu0
  %v393 = vadd.f32 0.0, %v392
  %v394 = vpop.f32.mrf.mxu0
  %v395 = vpop.f32.mrf.mxu0
  %v396 = vadd.f32 0.0, %v395
  %v397 = vpop.f32.mrf.mxu0
  %398 = vmatprep.mubr.bf16.mxu0 0
  %399 = vmatmul.mubr.bf16.gmra.mxu0 %v252
  %v400 = vpop.f32.mrf.mxu0
  %v401 = vadd.f32 0.0, %v400
  %v402 = vpop.f32.mrf.mxu0
  %v403 = vpop.f32.mrf.mxu0
  %v404 = vadd.f32 0.0, %v403
  %v405 = vpop.f32.mrf.mxu0
  %406 = vmatprep.mubr.bf16.mxu0 0
  %407 = vmatmul.mubr.bf16.gmra.mxu0 %v255
  %v408 = vpop.f32.mrf.mxu0
  %v409 = vadd.f32 0.0, %v408
  %v410 = vpop.f32.mrf.mxu0
  %v411 = vpop.f32.mrf.mxu0
  %v412 = vadd.f32 0.0, %v411
  %v413 = vpop.f32.mrf.mxu0
  %414 = vmatprep.mubr.bf16.mxu0 0
  %415 = vmatmul.mubr.bf16.gmra.mxu0 %v258
  %v416 = vpop.f32.mrf.mxu0
  %v417 = vadd.f32 0.0, %v416
  %v418 = vpop.f32.mrf.mxu0
  %v419 = vpop.f32.mrf.mxu0
  %v420 = vadd.f32 0.0, %v419
  %v421 = vpop.f32.mrf.mxu0
  %422 = vmatprep.mubr.bf16.mxu0 0
  %423 = vmatmul.mubr.bf16.gmra.mxu0 %v261
  %v424 = vpop.f32.mrf.mxu0
  %v425 = vadd.f32 0.0, %v424
  %v426 = vpop.f32.mrf.mxu0
  %v427 = vpop.f32.mrf.mxu0
  %v428 = vadd.f32 0.0, %v427
  %v429 = vpop.f32.mrf.mxu0
  %430 = vmatprep.mubr.bf16.mxu0 0
  %431 = vmatmul.mubr.bf16.gmra.mxu0 %v264
  %v432 = vpop.f32.mrf.mxu0
  %v433 = vadd.f32 0.0, %v432
  %v434 = vpop.f32.mrf.mxu0
  %v435 = vpop.f32.mrf.mxu0
  %v436 = vadd.f32 0.0, %v435
  %v437 = vpop.f32.mrf.mxu0
  %438 = vmatprep.mubr.bf16.mxu0 0
  %439 = vmatmul.mubr.bf16.gmra.mxu0 %v267
  %v440 = vpop.f32.mrf.mxu0
  %v441 = vadd.f32 0.0, %v440
  %v442 = vpop.f32.mrf.mxu0
  %v443 = vpop.f32.mrf.mxu0
  %v444 = vadd.f32 0.0, %v443
  %v445 = vpop.f32.mrf.mxu0
  %446 = vmatprep.mubr.bf16.mxu0 0
  %447 = vmatmul.mubr.bf16.gmra.mxu0 %v270
  %v448 = vpop.f32.mrf.mxu0
  %v449 = vadd.f32 0.0, %v448
  %v450 = vpop.f32.mrf.mxu0
  %v451 = vpop.f32.mrf.mxu0
  %v452 = vadd.f32 0.0, %v451
  %v453 = vpop.f32.mrf.mxu0
  %454 = vmatprep.mubr.bf16.mxu0 0
  %455 = vmatmul.mubr.bf16.gmra.mxu0 %v273
  %v456 = vpop.f32.mrf.mxu0
  %v457 = vadd.f32 0.0, %v456
  %v458 = vpop.f32.mrf.mxu0
  %v459 = vpop.f32.mrf.mxu0
  %v460 = vadd.f32 0.0, %v459
  %v461 = vpop.f32.mrf.mxu0
  %462 = vmatprep.mubr.bf16.mxu0 0
  %463 = vmatmul.mubr.bf16.gmra.mxu0 %v276
  %v464 = vpop.f32.mrf.mxu0
  %v465 = vadd.f32 0.0, %v464
  %v466 = vpop.f32.mrf.mxu0
  %v467 = vpop.f32.mrf.mxu0
  %v468 = vadd.f32 0.0, %v467
  %v469 = vpop.f32.mrf.mxu0
  %470 = vmatprep.mubr.bf16.mxu0 0
  %471 = vmatmul.mubr.bf16.gmra.mxu0 %v279
  %v472 = vpop.f32.mrf.mxu0
  %v473 = vadd.f32 0.0, %v472
  %v474 = vpop.f32.mrf.mxu0
  %v475 = vpop.f32.mrf.mxu0
  %v476 = vadd.f32 0.0, %v475
  %v477 = vpop.f32.mrf.mxu0
  %478 = vmatprep.mubr.bf16.mxu0 0
  %479 = vmatmul.mubr.bf16.gmra.mxu0 %v282
  %v480 = vpop.f32.mrf.mxu0
  %v481 = vadd.f32 0.0, %v480
  %v482 = vpop.f32.mrf.mxu0
  %v483 = vpop.f32.mrf.mxu0
  %v484 = vadd.f32 0.0, %v483
  %v485 = vpop.f32.mrf.mxu0
  %486 = vmatprep.mubr.bf16.mxu0 0
  %487 = vmatmul.mubr.bf16.gmra.mxu0 %v285
  %v488 = vpop.f32.mrf.mxu0
  %v489 = vadd.f32 0.0, %v488
  %v490 = vpop.f32.mrf.mxu0
  %v491 = vpop.f32.mrf.mxu0
  %v492 = vadd.f32 0.0, %v491
  %v493 = vpop.f32.mrf.mxu0
  %494 = vmatprep.mubr.bf16.mxu0 0
  %495 = vmatmul.mubr.bf16.gmra.mxu0 %v288
  %v496 = vpop.f32.mrf.mxu0
  %v497 = vadd.f32 0.0, %v496
  %v498 = vpop.f32.mrf.mxu0
  %v499 = vpop.f32.mrf.mxu0
  %v500 = vadd.f32 0.0, %v499
  %v501 = vpop.f32.mrf.mxu0
  %502 = vmatprep.mubr.bf16.mxu0 0
  %503 = vmatmul.mubr.bf16.gmra.mxu0 %v291
  %v504 = vpop.f32.mrf.mxu0
  %v505 = vadd.f32 0.0, %v504
  %v506 = vpop.f32.mrf.mxu0
  %v507 = vpop.f32.mrf.mxu0
  %v508 = vadd.f32 0.0, %v507
  %v509 = vpop.f32.mrf.mxu0
  %510 = vmatprep.mubr.bf16.mxu0 0
  %511 = vmatmul.mubr.bf16.gmra.mxu0 %v294
  %v512 = vpop.f32.mrf.mxu0
  %v513 = vadd.f32 0.0, %v512
  %v514 = vpop.f32.mrf.mxu0
  %v515 = vpop.f32.mrf.mxu0
  %v516 = vadd.f32 0.0, %v515
  %v517 = vpop.f32.mrf.mxu0
  %518 = vmatprep.mubr.bf16.mxu0 0
  %519 = vmatmul.mubr.bf16.gmra.mxu0 %v297
  %v520 = vpop.f32.mrf.mxu0
  %v521 = vadd.f32 0.0, %v520
  %v522 = vpop.f32.mrf.mxu0
  %v523 = vpop.f32.mrf.mxu0
  %v524 = vadd.f32 0.0, %v523
  %v525 = vpop.f32.mrf.mxu0
  %526 = vmatprep.mubr.bf16.mxu0 0
  %527 = vmatmul.mubr.bf16.gmra.mxu0 %v300
  %v528 = vpop.f32.mrf.mxu0
  %v529 = vadd.f32 0.0, %v528
  %v530 = vpop.f32.mrf.mxu0
  %v531 = vpop.f32.mrf.mxu0
  %v532 = vadd.f32 0.0, %v531
  %v533 = vpop.f32.mrf.mxu0
  %534 = vmatprep.mubr.bf16.mxu0 0
  %535 = vmatmul.mubr.bf16.gmra.mxu0 %v303
  %v536 = vpop.f32.mrf.mxu0
  %v537 = vadd.f32 0.0, %v536
  %v538 = vpop.f32.mrf.mxu0
  %v539 = vpop.f32.mrf.mxu0
  %v540 = vadd.f32 0.0, %v539
  %v541 = vpop.f32.mrf.mxu0
  %542 = vmatprep.mubr.bf16.mxu0 0
  %543 = vmatmul.mubr.bf16.gmra.mxu0 %v306
  %v544 = vpop.f32.mrf.mxu0
  %v545 = vadd.f32 0.0, %v544
  %v546 = vpop.f32.mrf.mxu0
  %v547 = vpop.f32.mrf.mxu0
  %v548 = vadd.f32 0.0, %v547
  %v549 = vpop.f32.mrf.mxu0
  %550 = vmatprep.mubr.bf16.mxu0 0
  %551 = vmatmul.mubr.bf16.gmra.mxu0 %v309
  %v552 = vpop.f32.mrf.mxu0
  %v553 = vadd.f32 0.0, %v552
  %v554 = vpop.f32.mrf.mxu0
  %v555 = vpop.f32.mrf.mxu0
  %v556 = vadd.f32 0.0, %v555
  %v557 = vpop.f32.mrf.mxu0
  %558 = vmatprep.mubr.bf16.mxu0 0
  %559 = vmatmul.mubr.bf16.gmra.mxu0 %v312
  %v560 = vpop.f32.mrf.mxu0
  %v561 = vadd.f32 0.0, %v560
  %v562 = vpop.f32.mrf.mxu0
  %v563 = vpop.f32.mrf.mxu0
  %v564 = vadd.f32 0.0, %v563
  %v565 = vpop.f32.mrf.mxu0
  %566 = vmatprep.mubr.bf16.mxu0 0
  %567 = vmatmul.mubr.bf16.gmra.mxu0 %v315
  %v568 = vpop.f32.mrf.mxu0
  %v569 = vadd.f32 0.0, %v568
  %v570 = vpop.f32.mrf.mxu0
  %v571 = vpop.f32.mrf.mxu0
  %v572 = vadd.f32 0.0, %v571
  %v573 = vpop.f32.mrf.mxu0
  %574 = vmatprep.mubr.bf16.mxu0 0
  %575 = vmatmul.mubr.bf16.gmra.mxu0 %v318
  %v576 = vpop.f32.mrf.mxu0
  %v577 = vadd.f32 0.0, %v576
  %v578 = vpop.f32.mrf.mxu0
  %v579 = vpop.f32.mrf.mxu0
  %v580 = vadd.f32 0.0, %v579
  %v581 = vpop.f32.mrf.mxu0
  %582 = vmatprep.mubr.bf16.mxu0 0
  %583 = vmatmul.mubr.bf16.gmra.mxu0 %v321
  %v584 = vpop.f32.mrf.mxu0
  %v585 = vadd.f32 0.0, %v584
  %v586 = vpop.f32.mrf.mxu0
  %v587 = vpop.f32.mrf.mxu0
  %v588 = vadd.f32 0.0, %v587
  %v589 = vpop.f32.mrf.mxu0
  %590 = vmatprep.mubr.bf16.mxu0 0
  %591 = vmatmul.mubr.bf16.gmra.mxu0 %v324
  %v592 = vpop.f32.mrf.mxu0
  %v593 = vadd.f32 0.0, %v592
  %v594 = vpop.f32.mrf.mxu0
  %v595 = vpop.f32.mrf.mxu0
  %v596 = vadd.f32 0.0, %v595
  %v597 = vpop.f32.mrf.mxu0
  %598 = vmatprep.mubr.bf16.mxu0 0
  %599 = vmatmul.mubr.bf16.gmra.mxu0 %v327
  %v600 = vpop.f32.mrf.mxu0
  %v601 = vadd.f32 0.0, %v600
  %v602 = vpop.f32.mrf.mxu0
  %v603 = vpop.f32.mrf.mxu0
  %v604 = vadd.f32 0.0, %v603
  %v605 = vpop.f32.mrf.mxu0
  %606 = vmatprep.mubr.bf16.mxu0 0
  %607 = vmatmul.mubr.bf16.gmra.mxu0 %v330
  %v608 = vpop.f32.mrf.mxu0
  %v609 = vadd.f32 0.0, %v608
  %v610 = vpop.f32.mrf.mxu0
  %v611 = vpop.f32.mrf.mxu0
  %v612 = vadd.f32 0.0, %v611
  %v613 = vpop.f32.mrf.mxu0
  %614 = vmatprep.mubr.bf16.mxu0 0
  %615 = vmatmul.mubr.bf16.gmra.mxu0 %v333
  %v616 = vpop.f32.mrf.mxu0
  %v617 = vadd.f32 0.0, %v616
  %v618 = vpop.f32.mrf.mxu0
  %v619 = vpop.f32.mrf.mxu0
  %v620 = vadd.f32 0.0, %v619
  %v621 = vpop.f32.mrf.mxu0
  %622 = vmatprep.mubr.bf16.mxu0 0
  %623 = vmatmul.mubr.bf16.gmra.mxu0 %v336
  %v624 = vpop.f32.mrf.mxu0
  %v625 = vadd.f32 0.0, %v624
  %v626 = vpop.f32.mrf.mxu0
  %v627 = vpop.f32.mrf.mxu0
  %v628 = vadd.f32 0.0, %v627
  %v629 = vpop.f32.mrf.mxu0
  %630 = vdwg.mxu0
  %s631 = sld [smem:[#allocation2]]
  %vm632 = vcmp.ge.f32.partialorder %v377, 0.0
  %vm633 = vcmp.ge.f32.partialorder %v380, 0.0
  %vm634 = vcmp.ge.f32.partialorder %v385, 0.0
  %vm635 = vcmp.ge.f32.partialorder %v388, 0.0
  %vm636 = vcmp.ge.f32.partialorder %v393, 0.0
  %vm637 = vcmp.ge.f32.partialorder %v396, 0.0
  %vm638 = vcmp.ge.f32.partialorder %v401, 0.0
  %vm639 = vcmp.ge.f32.partialorder %v404, 0.0
  %vm640 = vcmp.ge.f32.partialorder %v409, 0.0
  %vm641 = vcmp.ge.f32.partialorder %v412, 0.0
  %vm642 = vcmp.ge.f32.partialorder %v417, 0.0
  %vm643 = vcmp.ge.f32.partialorder %v420, 0.0
  %vm644 = vcmp.ge.f32.partialorder %v425, 0.0
  %vm645 = vcmp.ge.f32.partialorder %v428, 0.0
  %vm646 = vcmp.ge.f32.partialorder %v433, 0.0
  %vm647 = vcmp.ge.f32.partialorder %v436, 0.0
  %vm648 = vcmp.ge.f32.partialorder %v441, 0.0
  %vm649 = vcmp.ge.f32.partialorder %v444, 0.0
  %vm650 = vcmp.ge.f32.partialorder %v449, 0.0
  %vm651 = vcmp.ge.f32.partialorder %v452, 0.0
  %vm652 = vcmp.ge.f32.partialorder %v457, 0.0
  %vm653 = vcmp.ge.f32.partialorder %v460, 0.0
  %vm654 = vcmp.ge.f32.partialorder %v465, 0.0
  %vm655 = vcmp.ge.f32.partialorder %v468, 0.0
  %vm656 = vcmp.ge.f32.partialorder %v473, 0.0
  %vm657 = vcmp.ge.f32.partialorder %v476, 0.0
  %vm658 = vcmp.ge.f32.partialorder %v481, 0.0
  %vm659 = vcmp.ge.f32.partialorder %v484, 0.0
  %vm660 = vcmp.ge.f32.partialorder %v489, 0.0
  %vm661 = vcmp.ge.f32.partialorder %v492, 0.0
  %vm662 = vcmp.ge.f32.partialorder %v497, 0.0
  %vm663 = vcmp.ge.f32.partialorder %v500, 0.0
  %vm664 = vcmp.ge.f32.partialorder %v505, 0.0
  %vm665 = vcmp.ge.f32.partialorder %v508, 0.0
  %vm666 = vcmp.ge.f32.partialorder %v513, 0.0
  %vm667 = vcmp.ge.f32.partialorder %v516, 0.0
  %vm668 = vcmp.ge.f32.partialorder %v521, 0.0
  %vm669 = vcmp.ge.f32.partialorder %v524, 0.0
  %vm670 = vcmp.ge.f32.partialorder %v529, 0.0
  %vm671 = vcmp.ge.f32.partialorder %v532, 0.0
  %vm672 = vcmp.ge.f32.partialorder %v537, 0.0
  %vm673 = vcmp.ge.f32.partialorder %v540, 0.0
  %vm674 = vcmp.ge.f32.partialorder %v545, 0.0
  %vm675 = vcmp.ge.f32.partialorder %v548, 0.0
  %vm676 = vcmp.ge.f32.partialorder %v553, 0.0
  %vm677 = vcmp.ge.f32.partialorder %v556, 0.0
  %vm678 = vcmp.ge.f32.partialorder %v561, 0.0
  %vm679 = vcmp.ge.f32.partialorder %v564, 0.0
  %vm680 = vcmp.ge.f32.partialorder %v569, 0.0
  %vm681 = vcmp.ge.f32.partialorder %v572, 0.0
  %vm682 = vcmp.ge.f32.partialorder %v577, 0.0
  %vm683 = vcmp.ge.f32.partialorder %v580, 0.0
  %vm684 = vcmp.ge.f32.partialorder %v585, 0.0
  %vm685 = vcmp.ge.f32.partialorder %v588, 0.0
  %vm686 = vcmp.ge.f32.partialorder %v593, 0.0
  %vm687 = vcmp.ge.f32.partialorder %v596, 0.0
  %vm688 = vcmp.ge.f32.partialorder %v601, 0.0
  %vm689 = vcmp.ge.f32.partialorder %v604, 0.0
  %vm690 = vcmp.ge.f32.partialorder %v609, 0.0
  %vm691 = vcmp.ge.f32.partialorder %v612, 0.0
  %vm692 = vcmp.ge.f32.partialorder %v617, 0.0
  %vm693 = vcmp.ge.f32.partialorder %v620, 0.0
  %vm694 = vcmp.ge.f32.partialorder %v625, 0.0
  %vm695 = vcmp.ge.f32.partialorder %v628, 0.0
  %v696 = vstv %s631
  %v697 = vmul.f32 %v696, %v377
  %v698 = vmul.f32 %v696, %v380
  %v699 = vmul.f32 %v696, %v385
  %v700 = vmul.f32 %v696, %v388
  %v701 = vmul.f32 %v696, %v393
  %v702 = vmul.f32 %v696, %v396
  %v703 = vmul.f32 %v696, %v401
  %v704 = vmul.f32 %v696, %v404
  %v705 = vmul.f32 %v696, %v409
  %v706 = vmul.f32 %v696, %v412
  %v707 = vmul.f32 %v696, %v417
  %v708 = vmul.f32 %v696, %v420
  %v709 = vmul.f32 %v696, %v425
  %v710 = vmul.f32 %v696, %v428
  %v711 = vmul.f32 %v696, %v433
  %v712 = vmul.f32 %v696, %v436
  %v713 = vmul.f32 %v696, %v441
  %v714 = vmul.f32 %v696, %v444
  %v715 = vmul.f32 %v696, %v449
  %v716 = vmul.f32 %v696, %v452
  %v717 = vmul.f32 %v696, %v457
  %v718 = vmul.f32 %v696, %v460
  %v719 = vmul.f32 %v696, %v465
  %v720 = vmul.f32 %v696, %v468
  %v721 = vmul.f32 %v696, %v473
  %v722 = vmul.f32 %v696, %v476
  %v723 = vmul.f32 %v696, %v481
  %v724 = vmul.f32 %v696, %v484
  %v725 = vmul.f32 %v696, %v489
  %v726 = vmul.f32 %v696, %v492
  %v727 = vmul.f32 %v696, %v497
  %v728 = vmul.f32 %v696, %v500
  %v729 = vmul.f32 %v696, %v505
  %v730 = vmul.f32 %v696, %v508
  %v731 = vmul.f32 %v696, %v513
  %v732 = vmul.f32 %v696, %v516
  %v733 = vmul.f32 %v696, %v521
  %v734 = vmul.f32 %v696, %v524
  %v735 = vmul.f32 %v696, %v529
  %v736 = vmul.f32 %v696, %v532
  %v737 = vmul.f32 %v696, %v537
  %v738 = vmul.f32 %v696, %v540
  %v739 = vmul.f32 %v696, %v545
  %v740 = vmul.f32 %v696, %v548
  %v741 = vmul.f32 %v696, %v553
  %v742 = vmul.f32 %v696, %v556
  %v743 = vmul.f32 %v696, %v561
  %v744 = vmul.f32 %v696, %v564
  %v745 = vmul.f32 %v696, %v569
  %v746 = vmul.f32 %v696, %v572
  %v747 = vmul.f32 %v696, %v577
  %v748 = vmul.f32 %v696, %v580
  %v749 = vmul.f32 %v696, %v585
  %v750 = vmul.f32 %v696, %v588
  %v751 = vmul.f32 %v696, %v593
  %v752 = vmul.f32 %v696, %v596
  %v753 = vmul.f32 %v696, %v601
  %v754 = vmul.f32 %v696, %v604
  %v755 = vmul.f32 %v696, %v609
  %v756 = vmul.f32 %v696, %v612
  %v757 = vmul.f32 %v696, %v617
  %v758 = vmul.f32 %v696, %v620
  %v759 = vmul.f32 %v696, %v625
  %v760 = vmul.f32 %v696, %v628
  %v761 = vsel %vm632, %v377, %v697
  %v762 = vsel %vm633, %v380, %v698
  %v763 = vsel %vm634, %v385, %v699
  %v764 = vsel %vm635, %v388, %v700
  %v765 = vsel %vm636, %v393, %v701
  %v766 = vsel %vm637, %v396, %v702
  %v767 = vsel %vm638, %v401, %v703
  %v768 = vsel %vm639, %v404, %v704
  %v769 = vsel %vm640, %v409, %v705
  %v770 = vsel %vm641, %v412, %v706
  %v771 = vsel %vm642, %v417, %v707
  %v772 = vsel %vm643, %v420, %v708
  %v773 = vsel %vm644, %v425, %v709
  %v774 = vsel %vm645, %v428, %v710
  %v775 = vsel %vm646, %v433, %v711
  %v776 = vsel %vm647, %v436, %v712
  %v777 = vsel %vm648, %v441, %v713
  %v778 = vsel %vm649, %v444, %v714
  %v779 = vsel %vm650, %v449, %v715
  %v780 = vsel %vm651, %v452, %v716
  %v781 = vsel %vm652, %v457, %v717
  %v782 = vsel %vm653, %v460, %v718
  %v783 = vsel %vm654, %v465, %v719
  %v784 = vsel %vm655, %v468, %v720
  %v785 = vsel %vm656, %v473, %v721
  %v786 = vsel %vm657, %v476, %v722
  %v787 = vsel %vm658, %v481, %v723
  %v788 = vsel %vm659, %v484, %v724
  %v789 = vsel %vm660, %v489, %v725
  %v790 = vsel %vm661, %v492, %v726
  %v791 = vsel %vm662, %v497, %v727
  %v792 = vsel %vm663, %v500, %v728
  %v793 = vsel %vm664, %v505, %v729
  %v794 = vsel %vm665, %v508, %v730
  %v795 = vsel %vm666, %v513, %v731
  %v796 = vsel %vm667, %v516, %v732
  %v797 = vsel %vm668, %v521, %v733
  %v798 = vsel %vm669, %v524, %v734
  %v799 = vsel %vm670, %v529, %v735
  %v800 = vsel %vm671, %v532, %v736
  %v801 = vsel %vm672, %v537, %v737
  %v802 = vsel %vm673, %v540, %v738
  %v803 = vsel %vm674, %v545, %v739
  %v804 = vsel %vm675, %v548, %v740
  %v805 = vsel %vm676, %v553, %v741
  %v806 = vsel %vm677, %v556, %v742
  %v807 = vsel %vm678, %v561, %v743
  %v808 = vsel %vm679, %v564, %v744
  %v809 = vsel %vm680, %v569, %v745
  %v810 = vsel %vm681, %v572, %v746
  %v811 = vsel %vm682, %v577, %v747
  %v812 = vsel %vm683, %v580, %v748
  %v813 = vsel %vm684, %v585, %v749
  %v814 = vsel %vm685, %v588, %v750
  %v815 = vsel %vm686, %v593, %v751
  %v816 = vsel %vm687, %v596, %v752
  %v817 = vsel %vm688, %v601, %v753
  %v818 = vsel %vm689, %v604, %v754
  %v819 = vsel %vm690, %v609, %v755
  %v820 = vsel %vm691, %v612, %v756
  %v821 = vsel %vm692, %v617, %v757
  %v822 = vsel %vm693, %v620, %v758
  %v823 = vsel %vm694, %v625, %v759
  %v824 = vsel %vm695, %v628, %v760
  %v825 = vpack.c.bf16 %v762, %v761
  %v826 = vpack.c.bf16 %v764, %v763
  %v827 = vpack.c.bf16 %v766, %v765
  %v828 = vpack.c.bf16 %v768, %v767
  %v829 = vpack.c.bf16 %v770, %v769
  %v830 = vpack.c.bf16 %v772, %v771
  %v831 = vpack.c.bf16 %v774, %v773
  %v832 = vpack.c.bf16 %v776, %v775
  %v833 = vpack.c.bf16 %v778, %v777
  %v834 = vpack.c.bf16 %v780, %v779
  %v835 = vpack.c.bf16 %v782, %v781
  %v836 = vpack.c.bf16 %v784, %v783
  %v837 = vpack.c.bf16 %v786, %v785
  %v838 = vpack.c.bf16 %v788, %v787
  %v839 = vpack.c.bf16 %v790, %v789
  %v840 = vpack.c.bf16 %v792, %v791
  %v841 = vpack.c.bf16 %v794, %v793
  %v842 = vpack.c.bf16 %v796, %v795
  %v843 = vpack.c.bf16 %v798, %v797
  %v844 = vpack.c.bf16 %v800, %v799
  %v845 = vpack.c.bf16 %v802, %v801
  %v846 = vpack.c.bf16 %v804, %v803
  %v847 = vpack.c.bf16 %v806, %v805
  %v848 = vpack.c.bf16 %v808, %v807
  %v849 = vpack.c.bf16 %v810, %v809
  %v850 = vpack.c.bf16 %v812, %v811
  %v851 = vpack.c.bf16 %v814, %v813
  %v852 = vpack.c.bf16 %v816, %v815
  %v853 = vpack.c.bf16 %v818, %v817
  %v854 = vpack.c.bf16 %v820, %v819
  %v855 = vpack.c.bf16 %v822, %v821
  %v856 = vpack.c.bf16 %v824, %v823
  %v889 = vunpack.c.l.b16 %v825
  %v890 = vunpack.c.h.b16 %v825
  %v891 = vunpack.c.l.b16 %v826
  %v892 = vunpack.c.h.b16 %v826
  %v893 = vunpack.c.l.b16 %v827
  %v894 = vunpack.c.h.b16 %v827
  %v895 = vunpack.c.l.b16 %v828
  %v896 = vunpack.c.h.b16 %v828
  %v897 = vunpack.c.l.b16 %v829
  %v898 = vunpack.c.h.b16 %v829
  %v899 = vunpack.c.l.b16 %v830
  %v900 = vunpack.c.h.b16 %v830
  %v901 = vunpack.c.l.b16 %v831
  %v902 = vunpack.c.h.b16 %v831
  %v903 = vunpack.c.l.b16 %v832
  %v904 = vunpack.c.h.b16 %v832
  %v905 = vunpack.c.l.b16 %v833
  %v906 = vunpack.c.h.b16 %v833
  %v907 = vunpack.c.l.b16 %v834
  %v908 = vunpack.c.h.b16 %v834
  %v909 = vunpack.c.l.b16 %v835
  %v910 = vunpack.c.h.b16 %v835
  %v911 = vunpack.c.l.b16 %v836
  %v912 = vunpack.c.h.b16 %v836
  %v913 = vunpack.c.l.b16 %v837
  %v914 = vunpack.c.h.b16 %v837
  %v915 = vunpack.c.l.b16 %v838
  %v916 = vunpack.c.h.b16 %v838
  %v917 = vunpack.c.l.b16 %v839
  %v918 = vunpack.c.h.b16 %v839
  %v919 = vunpack.c.l.b16 %v840
  %v920 = vunpack.c.h.b16 %v840
  %v921 = vunpack.c.l.b16 %v841
  %v922 = vunpack.c.h.b16 %v841
  %v923 = vunpack.c.l.b16 %v842
  %v924 = vunpack.c.h.b16 %v842
  %v925 = vunpack.c.l.b16 %v843
  %v926 = vunpack.c.h.b16 %v843
  %v927 = vunpack.c.l.b16 %v844
  %v928 = vunpack.c.h.b16 %v844
  %v929 = vunpack.c.l.b16 %v845
  %v930 = vunpack.c.h.b16 %v845
  %v931 = vunpack.c.l.b16 %v846
  %v932 = vunpack.c.h.b16 %v846
  %v933 = vunpack.c.l.b16 %v847
  %v934 = vunpack.c.h.b16 %v847
  %v935 = vunpack.c.l.b16 %v848
  %v936 = vunpack.c.h.b16 %v848
  %v937 = vunpack.c.l.b16 %v849
  %v938 = vunpack.c.h.b16 %v849
  %v939 = vunpack.c.l.b16 %v850
  %v940 = vunpack.c.h.b16 %v850
  %v941 = vunpack.c.l.b16 %v851
  %v942 = vunpack.c.h.b16 %v851
  %v943 = vunpack.c.l.b16 %v852
  %v944 = vunpack.c.h.b16 %v852
  %v945 = vunpack.c.l.b16 %v853
  %v946 = vunpack.c.h.b16 %v853
  %v947 = vunpack.c.l.b16 %v854
  %v948 = vunpack.c.h.b16 %v854
  %v949 = vunpack.c.l.b16 %v855
  %v950 = vunpack.c.h.b16 %v855
  %v951 = vunpack.c.l.b16 %v856
  %v952 = vunpack.c.h.b16 %v856
  %v953 = vpack.c.b16 %v889, %v889
  %v954 = vpack.c.b16 %v890, %v890
  %v955 = vpack.c.b16 %v891, %v891
  %v956 = vpack.c.b16 %v892, %v892
  %v957 = vpack.c.b16 %v893, %v893
  %v958 = vpack.c.b16 %v894, %v894
  %v959 = vpack.c.b16 %v895, %v895
  %v960 = vpack.c.b16 %v896, %v896
  %v961 = vpack.c.b16 %v897, %v897
  %v962 = vpack.c.b16 %v898, %v898
  %v963 = vpack.c.b16 %v899, %v899
  %v964 = vpack.c.b16 %v900, %v900
  %v965 = vpack.c.b16 %v901, %v901
  %v966 = vpack.c.b16 %v902, %v902
  %v967 = vpack.c.b16 %v903, %v903
  %v968 = vpack.c.b16 %v904, %v904
  %v969 = vpack.c.b16 %v905, %v905
  %v970 = vpack.c.b16 %v906, %v906
  %v971 = vpack.c.b16 %v907, %v907
  %v972 = vpack.c.b16 %v908, %v908
  %v973 = vpack.c.b16 %v909, %v909
  %v974 = vpack.c.b16 %v910, %v910
  %v975 = vpack.c.b16 %v911, %v911
  %v976 = vpack.c.b16 %v912, %v912
  %v977 = vpack.c.b16 %v913, %v913
  %v978 = vpack.c.b16 %v914, %v914
  %v979 = vpack.c.b16 %v915, %v915
  %v980 = vpack.c.b16 %v916, %v916
  %v981 = vpack.c.b16 %v917, %v917
  %v982 = vpack.c.b16 %v918, %v918
  %v983 = vpack.c.b16 %v919, %v919
  %v984 = vpack.c.b16 %v920, %v920
  %v985 = vpack.c.b16 %v921, %v921
  %v986 = vpack.c.b16 %v922, %v922
  %v987 = vpack.c.b16 %v923, %v923
  %v988 = vpack.c.b16 %v924, %v924
  %v989 = vpack.c.b16 %v925, %v925
  %v990 = vpack.c.b16 %v926, %v926
  %v991 = vpack.c.b16 %v927, %v927
  %v992 = vpack.c.b16 %v928, %v928
  %v993 = vpack.c.b16 %v929, %v929
  %v994 = vpack.c.b16 %v930, %v930
  %v995 = vpack.c.b16 %v931, %v931
  %v996 = vpack.c.b16 %v932, %v932
  %v997 = vpack.c.b16 %v933, %v933
  %v998 = vpack.c.b16 %v934, %v934
  %v999 = vpack.c.b16 %v935, %v935
  %v1000 = vpack.c.b16 %v936, %v936
  %v1001 = vpack.c.b16 %v937, %v937
  %v1002 = vpack.c.b16 %v938, %v938
  %v1003 = vpack.c.b16 %v939, %v939
  %v1004 = vpack.c.b16 %v940, %v940
  %v1005 = vpack.c.b16 %v941, %v941
  %v1006 = vpack.c.b16 %v942, %v942
  %v1007 = vpack.c.b16 %v943, %v943
  %v1008 = vpack.c.b16 %v944, %v944
  %v1009 = vpack.c.b16 %v945, %v945
  %v1010 = vpack.c.b16 %v946, %v946
  %v1011 = vpack.c.b16 %v947, %v947
  %v1012 = vpack.c.b16 %v948, %v948
  %v1013 = vpack.c.b16 %v949, %v949
  %v1014 = vpack.c.b16 %v950, %v950
  %v1015 = vpack.c.b16 %v951, %v951
  %v1016 = vpack.c.b16 %v952, %v952
  %1081 = vst [vmem:[%s3] sm:$0xf] %v953
  %1082 = vst [vmem:[%s3 + $0x4] sm:$0xf] %v954
  %1083 = vst [vmem:[%s3 + $0x8] sm:$0xf] %v955
  %1084 = vst [vmem:[%s3 + $0xc] sm:$0xf] %v956
  %1085 = vst [vmem:[%s3 + $0x10] sm:$0xf] %v957
  %1086 = vst [vmem:[%s3 + $0x14] sm:$0xf] %v958
  %1087 = vst [vmem:[%s3 + $0x18] sm:$0xf] %v959
  %1088 = vst [vmem:[%s3 + $0x1c] sm:$0xf] %v960
  %1089 = vst [vmem:[%s3 + $0x20] sm:$0xf] %v961
  %1090 = vst [vmem:[%s3 + $0x24] sm:$0xf] %v962
  %1091 = vst [vmem:[%s3 + $0x28] sm:$0xf] %v963
  %1092 = vst [vmem:[%s3 + $0x2c] sm:$0xf] %v964
  %1093 = vst [vmem:[%s3 + $0x30] sm:$0xf] %v965
  %1094 = vst [vmem:[%s3 + $0x34] sm:$0xf] %v966
  %1095 = vst [vmem:[%s3 + $0x38] sm:$0xf] %v967
  %1096 = vst [vmem:[%s3 + $0x3c] sm:$0xf] %v968
  %1097 = vst [vmem:[%s3 + $0x40] sm:$0xf] %v969
  %1098 = vst [vmem:[%s3 + $0x44] sm:$0xf] %v970
  %1099 = vst [vmem:[%s3 + $0x48] sm:$0xf] %v971
  %1100 = vst [vmem:[%s3 + $0x4c] sm:$0xf] %v972
  %1101 = vst [vmem:[%s3 + $0x50] sm:$0xf] %v973
  %1102 = vst [vmem:[%s3 + $0x54] sm:$0xf] %v974
  %1103 = vst [vmem:[%s3 + $0x58] sm:$0xf] %v975
  %1104 = vst [vmem:[%s3 + $0x5c] sm:$0xf] %v976
  %1105 = vst [vmem:[%s3 + $0x60] sm:$0xf] %v977
  %1106 = vst [vmem:[%s3 + $0x64] sm:$0xf] %v978
  %1107 = vst [vmem:[%s3 + $0x68] sm:$0xf] %v979
  %1108 = vst [vmem:[%s3 + $0x6c] sm:$0xf] %v980
  %1109 = vst [vmem:[%s3 + $0x70] sm:$0xf] %v981
  %1110 = vst [vmem:[%s3 + $0x74] sm:$0xf] %v982
  %1111 = vst [vmem:[%s3 + $0x78] sm:$0xf] %v983
  %1112 = vst [vmem:[%s3 + $0x7c] sm:$0xf] %v984
  %1113 = vst [vmem:[%s3 + $0x80] sm:$0xf] %v985
  %1114 = vst [vmem:[%s3 + $0x84] sm:$0xf] %v986
  %1115 = vst [vmem:[%s3 + $0x88] sm:$0xf] %v987
  %1116 = vst [vmem:[%s3 + $0x8c] sm:$0xf] %v988
  %1117 = vst [vmem:[%s3 + $0x90] sm:$0xf] %v989
  %1118 = vst [vmem:[%s3 + $0x94] sm:$0xf] %v990
  %1119 = vst [vmem:[%s3 + $0x98] sm:$0xf] %v991
  %1120 = vst [vmem:[%s3 + $0x9c] sm:$0xf] %v992
  %1121 = vst [vmem:[%s3 + $0xa0] sm:$0xf] %v993
  %1122 = vst [vmem:[%s3 + $0xa4] sm:$0xf] %v994
  %1123 = vst [vmem:[%s3 + $0xa8] sm:$0xf] %v995
  %1124 = vst [vmem:[%s3 + $0xac] sm:$0xf] %v996
  %1125 = vst [vmem:[%s3 + $0xb0] sm:$0xf] %v997
  %1126 = vst [vmem:[%s3 + $0xb4] sm:$0xf] %v998
  %1127 = vst [vmem:[%s3 + $0xb8] sm:$0xf] %v999
  %1128 = vst [vmem:[%s3 + $0xbc] sm:$0xf] %v1000
  %1129 = vst [vmem:[%s3 + $0xc0] sm:$0xf] %v1001
  %1130 = vst [vmem:[%s3 + $0xc4] sm:$0xf] %v1002
  %1131 = vst [vmem:[%s3 + $0xc8] sm:$0xf] %v1003
  %1132 = vst [vmem:[%s3 + $0xcc] sm:$0xf] %v1004
  %1133 = vst [vmem:[%s3 + $0xd0] sm:$0xf] %v1005
  %1134 = vst [vmem:[%s3 + $0xd4] sm:$0xf] %v1006
  %1135 = vst [vmem:[%s3 + $0xd8] sm:$0xf] %v1007
  %1136 = vst [vmem:[%s3 + $0xdc] sm:$0xf] %v1008
  %1137 = vst [vmem:[%s3 + $0xe0] sm:$0xf] %v1009
  %1138 = vst [vmem:[%s3 + $0xe4] sm:$0xf] %v1010
  %1139 = vst [vmem:[%s3 + $0xe8] sm:$0xf] %v1011
  %1140 = vst [vmem:[%s3 + $0xec] sm:$0xf] %v1012
  %1141 = vst [vmem:[%s3 + $0xf0] sm:$0xf] %v1013
  %1142 = vst [vmem:[%s3 + $0xf4] sm:$0xf] %v1014
  %1143 = vst [vmem:[%s3 + $0xf8] sm:$0xf] %v1015
  %1144 = vst [vmem:[%s3 + $0xfc] sm:$0xf] %v1016
  // Predicated region
  $region14: #{mcc_block_forward.13} parent=0 // pred_check
    _
  $region15: #{mcc_block_forward.13} parent=0 // pred_check_branch
    %1146 = sbr.rel (0) target = $region17
  $region16: #{mcc_block_forward.13} parent=0 // pred_region
    _
  $region17: #{mcc_block_forward.13} parent=0 // pred_fallthru
    _
  // Predicated region
  $region18: #{mcc_block_forward.13} parent=0 // pred_check
    _
  $region19: #{mcc_block_forward.13} parent=0 // pred_check_branch
    %1148 = sbr.rel (0) target = $region21
  $region20: #{mcc_block_forward.13} parent=0 // pred_region
    _
  $region21: #{mcc_block_forward.13} parent=0 // pred_fallthru
    _

// kernel: mcc_block_forward.8
$region0: #{mcc_block_forward.8}
  #allocation0 [shape = 'u32[]', space=smem, size = 0x4, offset = 0x4, fixed_abs, tag = 'smem constant byte address 0x4 - core index']
  #allocation1 [shape = 'u32[144,128]{1,0:T(1,128)}', space=vmem, size = 0x12000, scoped, tag = 'internal scratch']
  %s0 = inlined_call_operand.vmem [shape: bf16[512,4], index: 0, kind: input, shape index: {}]
  %s1 = inlined_call_operand.vmem [shape: bf16[4,128], index: 1, kind: input, shape index: {}]
  %s2 = inlined_call_operand.vmem [shape: f32[1,128], index: 2, kind: input, shape index: {}]
  %s3 = inlined_call_operand.vmem [shape: f32[1,128], index: 3, kind: input, shape index: {}]
  %s4 = inlined_call_operand.vmem [shape: f32[512,128], index: 4, kind: output, shape index: {}]
  %s5 = sld [smem:[#allocation0]]
  $region26: #{mcc_block_forward.8} parent=0
    _
  %s7 = ssub.s32 1, %s5
  %s8 = scalar_select 0, %s7, %s5
  // Predicated region
  $region2: #{mcc_block_forward.8} parent=0 // pred_check
    _
  $region3: #{mcc_block_forward.8} parent=0 // pred_check_branch
    %10 = sbr.rel (0) target = $region5
  $region4: #{mcc_block_forward.8} parent=0 // pred_region
    _
  $region5: #{mcc_block_forward.8} parent=0 // pred_fallthru
    _
  // Predicated region
  $region6: #{mcc_block_forward.8} parent=0 // pred_check
    _
  $region7: #{mcc_block_forward.8} parent=0 // pred_check_branch
    %12 = sbr.rel (0) target = $region9
  $region8: #{mcc_block_forward.8} parent=0 // pred_region
    _
  $region9: #{mcc_block_forward.8} parent=0 // pred_fallthru
    _
  // Predicated region
  $region10: #{mcc_block_forward.8} parent=0 // pred_check
    _
  $region11: #{mcc_block_forward.8} parent=0 // pred_check_branch
    %14 = sbr.rel (0) target = $region13
  $region12: #{mcc_block_forward.8} parent=0 // pred_region
    _
  $region13: #{mcc_block_forward.8} parent=0 // pred_fallthru
    _
  // Predicated region
  $region14: #{mcc_block_forward.8} parent=0 // pred_check
    _
  $region15: #{mcc_block_forward.8} parent=0 // pred_check_branch
    %16 = sbr.rel (0) target = $region17
  $region16: #{mcc_block_forward.8} parent=0 // pred_region
    _
  $region17: #{mcc_block_forward.8} parent=0 // pred_fallthru
    _
  %v18 = vld [vmem:[%s0] sm:$0xf]
  %v19 = vld [vmem:[%s0 + $0x4] sm:$0xf]
  %v20 = vld [vmem:[%s0 + $0x8] sm:$0xf]
  %v21 = vld [vmem:[%s0 + $0xc] sm:$0xf]
  %v22 = vld [vmem:[%s0 + $0x10] sm:$0xf]
  %v23 = vld [vmem:[%s0 + $0x14] sm:$0xf]
  %v24 = vld [vmem:[%s0 + $0x18] sm:$0xf]
  %v25 = vld [vmem:[%s0 + $0x1c] sm:$0xf]
  %v26 = vld [vmem:[%s0 + $0x20] sm:$0xf]
  %v27 = vld [vmem:[%s0 + $0x24] sm:$0xf]
  %v28 = vld [vmem:[%s0 + $0x28] sm:$0xf]
  %v29 = vld [vmem:[%s0 + $0x2c] sm:$0xf]
  %v30 = vld [vmem:[%s0 + $0x30] sm:$0xf]
  %v31 = vld [vmem:[%s0 + $0x34] sm:$0xf]
  %v32 = vld [vmem:[%s0 + $0x38] sm:$0xf]
  %v33 = vld [vmem:[%s0 + $0x3c] sm:$0xf]
  %v34 = vld [vmem:[%s0 + $0x40] sm:$0xf]
  %v35 = vld [vmem:[%s0 + $0x44] sm:$0xf]
  %v36 = vld [vmem:[%s0 + $0x48] sm:$0xf]
  %v37 = vld [vmem:[%s0 + $0x4c] sm:$0xf]
  %v38 = vld [vmem:[%s0 + $0x50] sm:$0xf]
  %v39 = vld [vmem:[%s0 + $0x54] sm:$0xf]
  %v40 = vld [vmem:[%s0 + $0x58] sm:$0xf]
  %v41 = vld [vmem:[%s0 + $0x5c] sm:$0xf]
  %v42 = vld [vmem:[%s0 + $0x60] sm:$0xf]
  %v43 = vld [vmem:[%s0 + $0x64] sm:$0xf]
  %v44 = vld [vmem:[%s0 + $0x68] sm:$0xf]
  %v45 = vld [vmem:[%s0 + $0x6c] sm:$0xf]
  %v46 = vld [vmem:[%s0 + $0x70] sm:$0xf]
  %v47 = vld [vmem:[%s0 + $0x74] sm:$0xf]
  %v48 = vld [vmem:[%s0 + $0x78] sm:$0xf]
  %v49 = vld [vmem:[%s0 + $0x7c] sm:$0xf]
  %v50 = vld [vmem:[%s0 + $0x80] sm:$0xf]
  %v51 = vld [vmem:[%s0 + $0x84] sm:$0xf]
  %v52 = vld [vmem:[%s0 + $0x88] sm:$0xf]
  %v53 = vld [vmem:[%s0 + $0x8c] sm:$0xf]
  %v54 = vld [vmem:[%s0 + $0x90] sm:$0xf]
  %v55 = vld [vmem:[%s0 + $0x94] sm:$0xf]
  %v56 = vld [vmem:[%s0 + $0x98] sm:$0xf]
  %v57 = vld [vmem:[%s0 + $0x9c] sm:$0xf]
  %v58 = vld [vmem:[%s0 + $0xa0] sm:$0xf]
  %v59 = vld [vmem:[%s0 + $0xa4] sm:$0xf]
  %v60 = vld [vmem:[%s0 + $0xa8] sm:$0xf]
  %v61 = vld [vmem:[%s0 + $0xac] sm:$0xf]
  %v62 = vld [vmem:[%s0 + $0xb0] sm:$0xf]
  %v63 = vld [vmem:[%s0 + $0xb4] sm:$0xf]
  %v64 = vld [vmem:[%s0 + $0xb8] sm:$0xf]
  %v65 = vld [vmem:[%s0 + $0xbc] sm:$0xf]
  %v66 = vld [vmem:[%s0 + $0xc0] sm:$0xf]
  %v67 = vld [vmem:[%s0 + $0xc4] sm:$0xf]
  %v68 = vld [vmem:[%s0 + $0xc8] sm:$0xf]
  %v69 = vld [vmem:[%s0 + $0xcc] sm:$0xf]
  %v70 = vld [vmem:[%s0 + $0xd0] sm:$0xf]
  %v71 = vld [vmem:[%s0 + $0xd4] sm:$0xf]
  %v72 = vld [vmem:[%s0 + $0xd8] sm:$0xf]
  %v73 = vld [vmem:[%s0 + $0xdc] sm:$0xf]
  %v74 = vld [vmem:[%s0 + $0xe0] sm:$0xf]
  %v75 = vld [vmem:[%s0 + $0xe4] sm:$0xf]
  %v76 = vld [vmem:[%s0 + $0xe8] sm:$0xf]
  %v77 = vld [vmem:[%s0 + $0xec] sm:$0xf]
  %v78 = vld [vmem:[%s0 + $0xf0] sm:$0xf]
  %v79 = vld [vmem:[%s0 + $0xf4] sm:$0xf]
  %v80 = vld [vmem:[%s0 + $0xf8] sm:$0xf]
  %v81 = vld [vmem:[%s0 + $0xfc] sm:$0xf]
  %v82 = vld [vmem:[%s1] sm:$0x3]
  %v147 = vunpack.c.l.b16 %v18
  %v148 = vunpack.c.l.b16 %v19
  %v149 = vunpack.c.l.b16 %v20
  %v150 = vunpack.c.l.b16 %v21
  %v151 = vunpack.c.l.b16 %v22
  %v152 = vunpack.c.l.b16 %v23
  %v153 = vunpack.c.l.b16 %v24
  %v154 = vunpack.c.l.b16 %v25
  %v155 = vunpack.c.l.b16 %v26
  %v156 = vunpack.c.l.b16 %v27
  %v157 = vunpack.c.l.b16 %v28
  %v158 = vunpack.c.l.b16 %v29
  %v159 = vunpack.c.l.b16 %v30
  %v160 = vunpack.c.l.b16 %v31
  %v161 = vunpack.c.l.b16 %v32
  %v162 = vunpack.c.l.b16 %v33
  %v163 = vunpack.c.l.b16 %v34
  %v164 = vunpack.c.l.b16 %v35
  %v165 = vunpack.c.l.b16 %v36
  %v166 = vunpack.c.l.b16 %v37
  %v167 = vunpack.c.l.b16 %v38
  %v168 = vunpack.c.l.b16 %v39
  %v169 = vunpack.c.l.b16 %v40
  %v170 = vunpack.c.l.b16 %v41
  %v171 = vunpack.c.l.b16 %v42
  %v172 = vunpack.c.l.b16 %v43
  %v173 = vunpack.c.l.b16 %v44
  %v174 = vunpack.c.l.b16 %v45
  %v175 = vunpack.c.l.b16 %v46
  %v176 = vunpack.c.l.b16 %v47
  %v177 = vunpack.c.l.b16 %v48
  %v178 = vunpack.c.l.b16 %v49
  %v179 = vunpack.c.l.b16 %v50
  %v180 = vunpack.c.l.b16 %v51
  %v181 = vunpack.c.l.b16 %v52
  %v182 = vunpack.c.l.b16 %v53
  %v183 = vunpack.c.l.b16 %v54
  %v184 = vunpack.c.l.b16 %v55
  %v185 = vunpack.c.l.b16 %v56
  %v186 = vunpack.c.l.b16 %v57
  %v187 = vunpack.c.l.b16 %v58
  %v188 = vunpack.c.l.b16 %v59
  %v189 = vunpack.c.l.b16 %v60
  %v190 = vunpack.c.l.b16 %v61
  %v191 = vunpack.c.l.b16 %v62
  %v192 = vunpack.c.l.b16 %v63
  %v193 = vunpack.c.l.b16 %v64
  %v194 = vunpack.c.l.b16 %v65
  %v195 = vunpack.c.l.b16 %v66
  %v196 = vunpack.c.l.b16 %v67
  %v197 = vunpack.c.l.b16 %v68
  %v198 = vunpack.c.l.b16 %v69
  %v199 = vunpack.c.l.b16 %v70
  %v200 = vunpack.c.l.b16 %v71
  %v201 = vunpack.c.l.b16 %v72
  %v202 = vunpack.c.l.b16 %v73
  %v203 = vunpack.c.l.b16 %v74
  %v204 = vunpack.c.l.b16 %v75
  %v205 = vunpack.c.l.b16 %v76
  %v206 = vunpack.c.l.b16 %v77
  %v207 = vunpack.c.l.b16 %v78
  %v208 = vunpack.c.l.b16 %v79
  %v209 = vunpack.c.l.b16 %v80
  %v210 = vunpack.c.l.b16 %v81
  %v211 = vpack.c.b16 %v148, %v147
  %v212 = vpack.c.b16 %v150, %v149
  %v213 = vpack.c.b16 %v152, %v151
  %v214 = vpack.c.b16 %v154, %v153
  %v215 = vpack.c.b16 %v156, %v155
  %v216 = vpack.c.b16 %v158, %v157
  %v217 = vpack.c.b16 %v160, %v159
  %v218 = vpack.c.b16 %v162, %v161
  %v219 = vpack.c.b16 %v164, %v163
  %v220 = vpack.c.b16 %v166, %v165
  %v221 = vpack.c.b16 %v168, %v167
  %v222 = vpack.c.b16 %v170, %v169
  %v223 = vpack.c.b16 %v172, %v171
  %v224 = vpack.c.b16 %v174, %v173
  %v225 = vpack.c.b16 %v176, %v175
  %v226 = vpack.c.b16 %v178, %v177
  %v227 = vpack.c.b16 %v180, %v179
  %v228 = vpack.c.b16 %v182, %v181
  %v229 = vpack.c.b16 %v184, %v183
  %v230 = vpack.c.b16 %v186, %v185
  %v231 = vpack.c.b16 %v188, %v187
  %v232 = vpack.c.b16 %v190, %v189
  %v233 = vpack.c.b16 %v192, %v191
  %v234 = vpack.c.b16 %v194, %v193
  %v235 = vpack.c.b16 %v196, %v195
  %v236 = vpack.c.b16 %v198, %v197
  %v237 = vpack.c.b16 %v200, %v199
  %v238 = vpack.c.b16 %v202, %v201
  %v239 = vpack.c.b16 %v204, %v203
  %v240 = vpack.c.b16 %v206, %v205
  %v241 = vpack.c.b16 %v208, %v207
  %v242 = vpack.c.b16 %v210, %v209
  %vm243 = vcmask 31744
  %v245 = vsel %vm243, %v211, 0
  %v248 = vsel %vm243, %v212, 0
  %v251 = vsel %vm243, %v213, 0
  %v254 = vsel %vm243, %v214, 0
  %v257 = vsel %vm243, %v215, 0
  %v260 = vsel %vm243, %v216, 0
  %v263 = vsel %vm243, %v217, 0
  %v266 = vsel %vm243, %v218, 0
  %v269 = vsel %vm243, %v219, 0
  %v272 = vsel %vm243, %v220, 0
  %v275 = vsel %vm243, %v221, 0
  %v278 = vsel %vm243, %v222, 0
  %v281 = vsel %vm243, %v223, 0
  %v284 = vsel %vm243, %v224, 0
  %v287 = vsel %vm243, %v225, 0
  %v290 = vsel %vm243, %v226, 0
  %v293 = vsel %vm243, %v227, 0
  %v296 = vsel %vm243, %v228, 0
  %v299 = vsel %vm243, %v229, 0
  %v302 = vsel %vm243, %v230, 0
  %v305 = vsel %vm243, %v231, 0
  %v308 = vsel %vm243, %v232, 0
  %v311 = vsel %vm243, %v233, 0
  %v314 = vsel %vm243, %v234, 0
  %v317 = vsel %vm243, %v235, 0
  %v320 = vsel %vm243, %v236, 0
  %v323 = vsel %vm243, %v237, 0
  %v326 = vsel %vm243, %v238, 0
  %v329 = vsel %vm243, %v239, 0
  %v332 = vsel %vm243, %v240, 0
  %v335 = vsel %vm243, %v241, 0
  %v338 = vsel %vm243, %v242, 0
  %vm340 = vcmask 1041408
  %v342 = vsel %vm340, %v82, 0
  %344 = vmatprep.subr.bf16.mxu0 0
  %345 = vmatpush1.bf16.msra.mxu0 0
  %346 = vmatprep.subr.bf16.mxu0 0
  %347 = vmatpush1.bf16.msra.mxu0 0
  %348 = vmatprep.subr.bf16.mxu0 0
  %349 = vmatpush1.bf16.msra.mxu0 0
  %350 = vmatprep.subr.bf16.mxu0 0
  %351 = vmatpush1.bf16.msra.mxu0 0
  %352 = vmatprep.subr.bf16.mxu0 0
  %353 = vmatpush1.bf16.msra.mxu0 0
  %354 = vmatprep.subr.bf16.mxu0 0
  %355 = vmatpush1.bf16.msra.mxu0 0
  %356 = vmatprep.subr.bf16.mxu0 0
  %357 = vmatpush1.bf16.msra.mxu0 0
  %358 = vmatprep.subr.bf16.mxu0 0
  %359 = vmatpush1.bf16.msra.mxu0 %v342
  %360 = vmatprep.subr.bf16.mxu0 0
  %361 = vmatpush2.bf16.msra.mxu0 0
  %362 = vmatprep.subr.bf16.mxu0 0
  %363 = vmatpush2.bf16.msra.mxu0 0
  %364 = vmatprep.subr.bf16.mxu0 0
  %365 = vmatpush2.bf16.msra.mxu0 0
  %366 = vmatprep.subr.bf16.mxu0 0
  %367 = vmatpush2.bf16.msra.mxu0 0
  %368 = vmatprep.subr.bf16.mxu0 0
  %369 = vmatpush2.bf16.msra.mxu0 0
  %370 = vmatprep.subr.bf16.mxu0 0
  %371 = vmatpush2.bf16.msra.mxu0 0
  %372 = vmatprep.subr.bf16.mxu0 0
  %373 = vmatpush2.bf16.msra.mxu0 0
  %374 = vmatprep.subr.bf16.mxu0 0
  %375 = vmatpush2.bf16.msra.mxu0 0
  %376 = vmatprep.mubr.bf16.mxu0 0
  %377 = vmatmul.mubr.bf16.gmra.mxu0 %v245
  %v378 = vpop.f32.mrf.mxu0
  %v379 = vadd.f32 0.0, %v378
  %v380 = vpop.f32.mrf.mxu0
  %v381 = vpop.f32.mrf.mxu0
  %v382 = vadd.f32 0.0, %v381
  %v383 = vpop.f32.mrf.mxu0
  %384 = vmatprep.mubr.bf16.mxu0 0
  %385 = vmatmul.mubr.bf16.gmra.mxu0 %v248
  %v386 = vpop.f32.mrf.mxu0
  %v387 = vadd.f32 0.0, %v386
  %v388 = vpop.f32.mrf.mxu0
  %v389 = vpop.f32.mrf.mxu0
  %v390 = vadd.f32 0.0, %v389
  %v391 = vpop.f32.mrf.mxu0
  %392 = vmatprep.mubr.bf16.mxu0 0
  %393 = vmatmul.mubr.bf16.gmra.mxu0 %v251
  %v394 = vpop.f32.mrf.mxu0
  %v395 = vadd.f32 0.0, %v394
  %v396 = vpop.f32.mrf.mxu0
  %v397 = vpop.f32.mrf.mxu0
  %v398 = vadd.f32 0.0, %v397
  %v399 = vpop.f32.mrf.mxu0
  %400 = vmatprep.mubr.bf16.mxu0 0
  %401 = vmatmul.mubr.bf16.gmra.mxu0 %v254
  %v402 = vpop.f32.mrf.mxu0
  %v403 = vadd.f32 0.0, %v402
  %v404 = vpop.f32.mrf.mxu0
  %v405 = vpop.f32.mrf.mxu0
  %v406 = vadd.f32 0.0, %v405
  %v407 = vpop.f32.mrf.mxu0
  %408 = vmatprep.mubr.bf16.mxu0 0
  %409 = vmatmul.mubr.bf16.gmra.mxu0 %v257
  %v410 = vpop.f32.mrf.mxu0
  %v411 = vadd.f32 0.0, %v410
  %v412 = vpop.f32.mrf.mxu0
  %v413 = vpop.f32.mrf.mxu0
  %v414 = vadd.f32 0.0, %v413
  %v415 = vpop.f32.mrf.mxu0
  %416 = vmatprep.mubr.bf16.mxu0 0
  %417 = vmatmul.mubr.bf16.gmra.mxu0 %v260
  %v418 = vpop.f32.mrf.mxu0
  %v419 = vadd.f32 0.0, %v418
  %v420 = vpop.f32.mrf.mxu0
  %v421 = vpop.f32.mrf.mxu0
  %v422 = vadd.f32 0.0, %v421
  %v423 = vpop.f32.mrf.mxu0
  %424 = vmatprep.mubr.bf16.mxu0 0
  %425 = vmatmul.mubr.bf16.gmra.mxu0 %v263
  %v426 = vpop.f32.mrf.mxu0
  %v427 = vadd.f32 0.0, %v426
  %v428 = vpop.f32.mrf.mxu0
  %v429 = vpop.f32.mrf.mxu0
  %v430 = vadd.f32 0.0, %v429
  %v431 = vpop.f32.mrf.mxu0
  %432 = vmatprep.mubr.bf16.mxu0 0
  %433 = vmatmul.mubr.bf16.gmra.mxu0 %v266
  %v434 = vpop.f32.mrf.mxu0
  %v435 = vadd.f32 0.0, %v434
  %v436 = vpop.f32.mrf.mxu0
  %v437 = vpop.f32.mrf.mxu0
  %v438 = vadd.f32 0.0, %v437
  %v439 = vpop.f32.mrf.mxu0
  %440 = vmatprep.mubr.bf16.mxu0 0
  %441 = vmatmul.mubr.bf16.gmra.mxu0 %v269
  %v442 = vpop.f32.mrf.mxu0
  %v443 = vadd.f32 0.0, %v442
  %v444 = vpop.f32.mrf.mxu0
  %v445 = vpop.f32.mrf.mxu0
  %v446 = vadd.f32 0.0, %v445
  %v447 = vpop.f32.mrf.mxu0
  %448 = vmatprep.mubr.bf16.mxu0 0
  %449 = vmatmul.mubr.bf16.gmra.mxu0 %v272
  %v450 = vpop.f32.mrf.mxu0
  %v451 = vadd.f32 0.0, %v450
  %v452 = vpop.f32.mrf.mxu0
  %v453 = vpop.f32.mrf.mxu0
  %v454 = vadd.f32 0.0, %v453
  %v455 = vpop.f32.mrf.mxu0
  %456 = vmatprep.mubr.bf16.mxu0 0
  %457 = vmatmul.mubr.bf16.gmra.mxu0 %v275
  %v458 = vpop.f32.mrf.mxu0
  %v459 = vadd.f32 0.0, %v458
  %v460 = vpop.f32.mrf.mxu0
  %v461 = vpop.f32.mrf.mxu0
  %v462 = vadd.f32 0.0, %v461
  %v463 = vpop.f32.mrf.mxu0
  %464 = vmatprep.mubr.bf16.mxu0 0
  %465 = vmatmul.mubr.bf16.gmra.mxu0 %v278
  %v466 = vpop.f32.mrf.mxu0
  %v467 = vadd.f32 0.0, %v466
  %v468 = vpop.f32.mrf.mxu0
  %v469 = vpop.f32.mrf.mxu0
  %v470 = vadd.f32 0.0, %v469
  %v471 = vpop.f32.mrf.mxu0
  %472 = vmatprep.mubr.bf16.mxu0 0
  %473 = vmatmul.mubr.bf16.gmra.mxu0 %v281
  %v474 = vpop.f32.mrf.mxu0
  %v475 = vadd.f32 0.0, %v474
  %v476 = vpop.f32.mrf.mxu0
  %v477 = vpop.f32.mrf.mxu0
  %v478 = vadd.f32 0.0, %v477
  %v479 = vpop.f32.mrf.mxu0
  %480 = vmatprep.mubr.bf16.mxu0 0
  %481 = vmatmul.mubr.bf16.gmra.mxu0 %v284
  %v482 = vpop.f32.mrf.mxu0
  %v483 = vadd.f32 0.0, %v482
  %v484 = vpop.f32.mrf.mxu0
  %v485 = vpop.f32.mrf.mxu0
  %v486 = vadd.f32 0.0, %v485
  %v487 = vpop.f32.mrf.mxu0
  %488 = vmatprep.mubr.bf16.mxu0 0
  %489 = vmatmul.mubr.bf16.gmra.mxu0 %v287
  %v490 = vpop.f32.mrf.mxu0
  %v491 = vadd.f32 0.0, %v490
  %v492 = vpop.f32.mrf.mxu0
  %v493 = vpop.f32.mrf.mxu0
  %v494 = vadd.f32 0.0, %v493
  %v495 = vpop.f32.mrf.mxu0
  %496 = vmatprep.mubr.bf16.mxu0 0
  %497 = vmatmul.mubr.bf16.gmra.mxu0 %v290
  %v498 = vpop.f32.mrf.mxu0
  %v499 = vadd.f32 0.0, %v498
  %v500 = vpop.f32.mrf.mxu0
  %v501 = vpop.f32.mrf.mxu0
  %v502 = vadd.f32 0.0, %v501
  %v503 = vpop.f32.mrf.mxu0
  %504 = vmatprep.mubr.bf16.mxu0 0
  %505 = vmatmul.mubr.bf16.gmra.mxu0 %v293
  %v506 = vpop.f32.mrf.mxu0
  %v507 = vadd.f32 0.0, %v506
  %v508 = vpop.f32.mrf.mxu0
  %v509 = vpop.f32.mrf.mxu0
  %v510 = vadd.f32 0.0, %v509
  %v511 = vpop.f32.mrf.mxu0
  %512 = vmatprep.mubr.bf16.mxu0 0
  %513 = vmatmul.mubr.bf16.gmra.mxu0 %v296
  %v514 = vpop.f32.mrf.mxu0
  %v515 = vadd.f32 0.0, %v514
  %v516 = vpop.f32.mrf.mxu0
  %v517 = vpop.f32.mrf.mxu0
  %v518 = vadd.f32 0.0, %v517
  %v519 = vpop.f32.mrf.mxu0
  %520 = vmatprep.mubr.bf16.mxu0 0
  %521 = vmatmul.mubr.bf16.gmra.mxu0 %v299
  %v522 = vpop.f32.mrf.mxu0
  %v523 = vadd.f32 0.0, %v522
  %v524 = vpop.f32.mrf.mxu0
  %v525 = vpop.f32.mrf.mxu0
  %v526 = vadd.f32 0.0, %v525
  %v527 = vpop.f32.mrf.mxu0
  %528 = vmatprep.mubr.bf16.mxu0 0
  %529 = vmatmul.mubr.bf16.gmra.mxu0 %v302
  %v530 = vpop.f32.mrf.mxu0
  %v531 = vadd.f32 0.0, %v530
  %v532 = vpop.f32.mrf.mxu0
  %v533 = vpop.f32.mrf.mxu0
  %v534 = vadd.f32 0.0, %v533
  %v535 = vpop.f32.mrf.mxu0
  %536 = vmatprep.mubr.bf16.mxu0 0
  %537 = vmatmul.mubr.bf16.gmra.mxu0 %v305
  %v538 = vpop.f32.mrf.mxu0
  %v539 = vadd.f32 0.0, %v538
  %v540 = vpop.f32.mrf.mxu0
  %v541 = vpop.f32.mrf.mxu0
  %v542 = vadd.f32 0.0, %v541
  %v543 = vpop.f32.mrf.mxu0
  %544 = vmatprep.mubr.bf16.mxu0 0
  %545 = vmatmul.mubr.bf16.gmra.mxu0 %v308
  %v546 = vpop.f32.mrf.mxu0
  %v547 = vadd.f32 0.0, %v546
  %v548 = vpop.f32.mrf.mxu0
  %v549 = vpop.f32.mrf.mxu0
  %v550 = vadd.f32 0.0, %v549
  %v551 = vpop.f32.mrf.mxu0
  %552 = vmatprep.mubr.bf16.mxu0 0
  %553 = vmatmul.mubr.bf16.gmra.mxu0 %v311
  %v554 = vpop.f32.mrf.mxu0
  %v555 = vadd.f32 0.0, %v554
  %v556 = vpop.f32.mrf.mxu0
  %v557 = vpop.f32.mrf.mxu0
  %v558 = vadd.f32 0.0, %v557
  %v559 = vpop.f32.mrf.mxu0
  %560 = vmatprep.mubr.bf16.mxu0 0
  %561 = vmatmul.mubr.bf16.gmra.mxu0 %v314
  %v562 = vpop.f32.mrf.mxu0
  %v563 = vadd.f32 0.0, %v562
  %v564 = vpop.f32.mrf.mxu0
  %v565 = vpop.f32.mrf.mxu0
  %v566 = vadd.f32 0.0, %v565
  %v567 = vpop.f32.mrf.mxu0
  %568 = vmatprep.mubr.bf16.mxu0 0
  %569 = vmatmul.mubr.bf16.gmra.mxu0 %v317
  %v570 = vpop.f32.mrf.mxu0
  %v571 = vadd.f32 0.0, %v570
  %v572 = vpop.f32.mrf.mxu0
  %v573 = vpop.f32.mrf.mxu0
  %v574 = vadd.f32 0.0, %v573
  %v575 = vpop.f32.mrf.mxu0
  %576 = vmatprep.mubr.bf16.mxu0 0
  %577 = vmatmul.mubr.bf16.gmra.mxu0 %v320
  %v578 = vpop.f32.mrf.mxu0
  %v579 = vadd.f32 0.0, %v578
  %v580 = vpop.f32.mrf.mxu0
  %v581 = vpop.f32.mrf.mxu0
  %v582 = vadd.f32 0.0, %v581
  %v583 = vpop.f32.mrf.mxu0
  %584 = vmatprep.mubr.bf16.mxu0 0
  %585 = vmatmul.mubr.bf16.gmra.mxu0 %v323
  %v586 = vpop.f32.mrf.mxu0
  %v587 = vadd.f32 0.0, %v586
  %v588 = vpop.f32.mrf.mxu0
  %v589 = vpop.f32.mrf.mxu0
  %v590 = vadd.f32 0.0, %v589
  %v591 = vpop.f32.mrf.mxu0
  %592 = vmatprep.mubr.bf16.mxu0 0
  %593 = vmatmul.mubr.bf16.gmra.mxu0 %v326
  %v594 = vpop.f32.mrf.mxu0
  %v595 = vadd.f32 0.0, %v594
  %v596 = vpop.f32.mrf.mxu0
  %v597 = vpop.f32.mrf.mxu0
  %v598 = vadd.f32 0.0, %v597
  %v599 = vpop.f32.mrf.mxu0
  %600 = vmatprep.mubr.bf16.mxu0 0
  %601 = vmatmul.mubr.bf16.gmra.mxu0 %v329
  %v602 = vpop.f32.mrf.mxu0
  %v603 = vadd.f32 0.0, %v602
  %v604 = vpop.f32.mrf.mxu0
  %v605 = vpop.f32.mrf.mxu0
  %v606 = vadd.f32 0.0, %v605
  %v607 = vpop.f32.mrf.mxu0
  %608 = vmatprep.mubr.bf16.mxu0 0
  %609 = vmatmul.mubr.bf16.gmra.mxu0 %v332
  %v610 = vpop.f32.mrf.mxu0
  %v611 = vadd.f32 0.0, %v610
  %v612 = vpop.f32.mrf.mxu0
  %v613 = vpop.f32.mrf.mxu0
  %v614 = vadd.f32 0.0, %v613
  %v615 = vpop.f32.mrf.mxu0
  %616 = vmatprep.mubr.bf16.mxu0 0
  %617 = vmatmul.mubr.bf16.gmra.mxu0 %v335
  %v618 = vpop.f32.mrf.mxu0
  %v619 = vadd.f32 0.0, %v618
  %v620 = vpop.f32.mrf.mxu0
  %v621 = vpop.f32.mrf.mxu0
  %v622 = vadd.f32 0.0, %v621
  %v623 = vpop.f32.mrf.mxu0
  %624 = vmatprep.mubr.bf16.mxu0 0
  %625 = vmatmul.mubr.bf16.gmra.mxu0 %v338
  %v626 = vpop.f32.mrf.mxu0
  %v627 = vadd.f32 0.0, %v626
  %v628 = vpop.f32.mrf.mxu0
  %v629 = vpop.f32.mrf.mxu0
  %v630 = vadd.f32 0.0, %v629
  %v631 = vpop.f32.mrf.mxu0
  %632 = vdwg.mxu0
  %v633 = vld [vmem:[%s2] sm:$0x1]
  %v635 = vlaneseq
  %v636 = vshrl.u32 %v635, 7
  %v637 = vsub.s32 0, %v636
  %v638 = vrot.slane %v633, %v637
  %v640 = vmul.f32 %v379, %v638
  %v641 = vmul.f32 %v382, %v638
  %v642 = vmul.f32 %v387, %v638
  %v643 = vmul.f32 %v390, %v638
  %v644 = vmul.f32 %v395, %v638
  %v645 = vmul.f32 %v398, %v638
  %v646 = vmul.f32 %v403, %v638
  %v647 = vmul.f32 %v406, %v638
  %v648 = vmul.f32 %v411, %v638
  %v649 = vmul.f32 %v414, %v638
  %v650 = vmul.f32 %v419, %v638
  %v651 = vmul.f32 %v422, %v638
  %v652 = vmul.f32 %v427, %v638
  %v653 = vmul.f32 %v430, %v638
  %v654 = vmul.f32 %v435, %v638
  %v655 = vmul.f32 %v438, %v638
  %v656 = vmul.f32 %v443, %v638
  %v657 = vmul.f32 %v446, %v638
  %v658 = vmul.f32 %v451, %v638
  %v659 = vmul.f32 %v454, %v638
  %v660 = vmul.f32 %v459, %v638
  %v661 = vmul.f32 %v462, %v638
  %v662 = vmul.f32 %v467, %v638
  %v663 = vmul.f32 %v470, %v638
  %v664 = vmul.f32 %v475, %v638
  %v665 = vmul.f32 %v478, %v638
  %v666 = vmul.f32 %v483, %v638
  %v667 = vmul.f32 %v486, %v638
  %v668 = vmul.f32 %v491, %v638
  %v669 = vmul.f32 %v494, %v638
  %v670 = vmul.f32 %v499, %v638
  %v671 = vmul.f32 %v502, %v638
  %v672 = vmul.f32 %v507, %v638
  %v673 = vmul.f32 %v510, %v638
  %v674 = vmul.f32 %v515, %v638
  %v675 = vmul.f32 %v518, %v638
  %v676 = vmul.f32 %v523, %v638
  %v677 = vmul.f32 %v526, %v638
  %v678 = vmul.f32 %v531, %v638
  %v679 = vmul.f32 %v534, %v638
  %v680 = vmul.f32 %v539, %v638
  %v681 = vmul.f32 %v542, %v638
  %v682 = vmul.f32 %v547, %v638
  %v683 = vmul.f32 %v550, %v638
  %v684 = vmul.f32 %v555, %v638
  %v685 = vmul.f32 %v558, %v638
  %v686 = vmul.f32 %v563, %v638
  %v687 = vmul.f32 %v566, %v638
  %v688 = vmul.f32 %v571, %v638
  %v689 = vmul.f32 %v574, %v638
  %v690 = vmul.f32 %v579, %v638
  %v691 = vmul.f32 %v582, %v638
  %v692 = vmul.f32 %v587, %v638
  %v693 = vmul.f32 %v590, %v638
  %v694 = vmul.f32 %v595, %v638
  %v695 = vmul.f32 %v598, %v638
  %v696 = vmul.f32 %v603, %v638
  %v697 = vmul.f32 %v606, %v638
  %v698 = vmul.f32 %v611, %v638
  %v699 = vmul.f32 %v614, %v638
  %v700 = vmul.f32 %v619, %v638
  %v701 = vmul.f32 %v622, %v638
  %v702 = vmul.f32 %v627, %v638
  %v703 = vmul.f32 %v630, %v638
  %v704 = vld [vmem:[%s3] sm:$0x1]
  %v706 = vlaneseq
  %v707 = vshrl.u32 %v706, 7
  %v708 = vsub.s32 0, %v707
  %v709 = vrot.slane %v704, %v708
  %v711 = vadd.f32 %v640, %v709
  %v712 = vadd.f32 %v641, %v709
  %v713 = vadd.f32 %v642, %v709
  %v714 = vadd.f32 %v643, %v709
  %v715 = vadd.f32 %v644, %v709
  %v716 = vadd.f32 %v645, %v709
  %v717 = vadd.f32 %v646, %v709
  %v718 = vadd.f32 %v647, %v709
  %v719 = vadd.f32 %v648, %v709
  %v720 = vadd.f32 %v649, %v709
  %v721 = vadd.f32 %v650, %v709
  %v722 = vadd.f32 %v651, %v709
  %v723 = vadd.f32 %v652, %v709
  %v724 = vadd.f32 %v653, %v709
  %v725 = vadd.f32 %v654, %v709
  %v726 = vadd.f32 %v655, %v709
  %v727 = vadd.f32 %v656, %v709
  %v728 = vadd.f32 %v657, %v709
  %v729 = vadd.f32 %v658, %v709
  %v730 = vadd.f32 %v659, %v709
  %v731 = vadd.f32 %v660, %v709
  %v732 = vadd.f32 %v661, %v709
  %v733 = vadd.f32 %v662, %v709
  %v734 = vadd.f32 %v663, %v709
  %v735 = vadd.f32 %v664, %v709
  %v736 = vadd.f32 %v665, %v709
  %v737 = vadd.f32 %v666, %v709
  %v738 = vadd.f32 %v667, %v709
  %v739 = vadd.f32 %v668, %v709
  %v740 = vadd.f32 %v669, %v709
  %v741 = vadd.f32 %v670, %v709
  %v742 = vadd.f32 %v671, %v709
  %v743 = vadd.f32 %v672, %v709
  %v744 = vadd.f32 %v673, %v709
  %v745 = vadd.f32 %v674, %v709
  %v746 = vadd.f32 %v675, %v709
  %v747 = vadd.f32 %v676, %v709
  %v748 = vadd.f32 %v677, %v709
  %v749 = vadd.f32 %v678, %v709
  %v750 = vadd.f32 %v679, %v709
  %v751 = vadd.f32 %v680, %v709
  %v752 = vadd.f32 %v681, %v709
  %v753 = vadd.f32 %v682, %v709
  %v754 = vadd.f32 %v683, %v709
  %v755 = vadd.f32 %v684, %v709
  %v756 = vadd.f32 %v685, %v709
  %v757 = vadd.f32 %v686, %v709
  %v758 = vadd.f32 %v687, %v709
  %v759 = vadd.f32 %v688, %v709
  %v760 = vadd.f32 %v689, %v709
  %v761 = vadd.f32 %v690, %v709
  %v762 = vadd.f32 %v691, %v709
  %v763 = vadd.f32 %v692, %v709
  %v764 = vadd.f32 %v693, %v709
  %v765 = vadd.f32 %v694, %v709
  %v766 = vadd.f32 %v695, %v709
  %v767 = vadd.f32 %v696, %v709
  %v768 = vadd.f32 %v697, %v709
  %v769 = vadd.f32 %v698, %v709
  %v770 = vadd.f32 %v699, %v709
  %v771 = vadd.f32 %v700, %v709
  %v772 = vadd.f32 %v701, %v709
  %v773 = vadd.f32 %v702, %v709
  %v774 = vadd.f32 %v703, %v709
  %775 = vst [vmem:[%s4] sm:$0xff] %v711
  %776 = vst [vmem:[%s4 + $0x8] sm:$0xff] %v712
  %777 = vst [vmem:[%s4 + $0x10] sm:$0xff] %v713
  %778 = vst [vmem:[%s4 + $0x18] sm:$0xff] %v714
  %779 = vst [vmem:[%s4 + $0x20] sm:$0xff] %v715
  %780 = vst [vmem:[%s4 + $0x28] sm:$0xff] %v716
  %781 = vst [vmem:[%s4 + $0x30] sm:$0xff] %v717
  %782 = vst [vmem:[%s4 + $0x38] sm:$0xff] %v718
  %783 = vst [vmem:[%s4 + $0x40] sm:$0xff] %v719
  %784 = vst [vmem:[%s4 + $0x48] sm:$0xff] %v720
  %785 = vst [vmem:[%s4 + $0x50] sm:$0xff] %v721
  %786 = vst [vmem:[%s4 + $0x58] sm:$0xff] %v722
  %787 = vst [vmem:[%s4 + $0x60] sm:$0xff] %v723
  %788 = vst [vmem:[%s4 + $0x68] sm:$0xff] %v724
  %789 = vst [vmem:[%s4 + $0x70] sm:$0xff] %v725
  %790 = vst [vmem:[%s4 + $0x78] sm:$0xff] %v726
  %791 = vst [vmem:[%s4 + $0x80] sm:$0xff] %v727
  %792 = vst [vmem:[%s4 + $0x88] sm:$0xff] %v728
  %793 = vst [vmem:[%s4 + $0x90] sm:$0xff] %v729
  %794 = vst [vmem:[%s4 + $0x98] sm:$0xff] %v730
  %795 = vst [vmem:[%s4 + $0xa0] sm:$0xff] %v731
  %796 = vst [vmem:[%s4 + $0xa8] sm:$0xff] %v732
  %797 = vst [vmem:[%s4 + $0xb0] sm:$0xff] %v733
  %798 = vst [vmem:[%s4 + $0xb8] sm:$0xff] %v734
  %799 = vst [vmem:[%s4 + $0xc0] sm:$0xff] %v735
  %800 = vst [vmem:[%s4 + $0xc8] sm:$0xff] %v736
  %801 = vst [vmem:[%s4 + $0xd0] sm:$0xff] %v737
  %802 = vst [vmem:[%s4 + $0xd8] sm:$0xff] %v738
  %803 = vst [vmem:[%s4 + $0xe0] sm:$0xff] %v739
  %804 = vst [vmem:[%s4 + $0xe8] sm:$0xff] %v740
  %805 = vst [vmem:[%s4 + $0xf0] sm:$0xff] %v741
  %806 = vst [vmem:[%s4 + $0xf8] sm:$0xff] %v742
  %807 = vst [vmem:[%s4 + $0x100] sm:$0xff] %v743
  %808 = vst [vmem:[%s4 + $0x108] sm:$0xff] %v744
  %809 = vst [vmem:[%s4 + $0x110] sm:$0xff] %v745
  %810 = vst [vmem:[%s4 + $0x118] sm:$0xff] %v746
  %811 = vst [vmem:[%s4 + $0x120] sm:$0xff] %v747
  %812 = vst [vmem:[%s4 + $0x128] sm:$0xff] %v748
  %813 = vst [vmem:[%s4 + $0x130] sm:$0xff] %v749
  %814 = vst [vmem:[%s4 + $0x138] sm:$0xff] %v750
  %815 = vst [vmem:[%s4 + $0x140] sm:$0xff] %v751
  %816 = vst [vmem:[%s4 + $0x148] sm:$0xff] %v752
  %817 = vst [vmem:[%s4 + $0x150] sm:$0xff] %v753
  %818 = vst [vmem:[%s4 + $0x158] sm:$0xff] %v754
  %819 = vst [vmem:[%s4 + $0x160] sm:$0xff] %v755
  %820 = vst [vmem:[%s4 + $0x168] sm:$0xff] %v756
  %821 = vst [vmem:[%s4 + $0x170] sm:$0xff] %v757
  %822 = vst [vmem:[%s4 + $0x178] sm:$0xff] %v758
  %823 = vst [vmem:[%s4 + $0x180] sm:$0xff] %v759
  %824 = vst [vmem:[%s4 + $0x188] sm:$0xff] %v760
  %825 = vst [vmem:[%s4 + $0x190] sm:$0xff] %v761
  %826 = vst [vmem:[%s4 + $0x198] sm:$0xff] %v762
  %827 = vst [vmem:[%s4 + $0x1a0] sm:$0xff] %v763
  %828 = vst [vmem:[%s4 + $0x1a8] sm:$0xff] %v764
  %829 = vst [vmem:[%s4 + $0x1b0] sm:$0xff] %v765
  %830 = vst [vmem:[%s4 + $0x1b8] sm:$0xff] %v766
  %831 = vst [vmem:[%s4 + $0x1c0] sm:$0xff] %v767
  %832 = vst [vmem:[%s4 + $0x1c8] sm:$0xff] %v768
  %833 = vst [vmem:[%s4 + $0x1d0] sm:$0xff] %v769
  %834 = vst [vmem:[%s4 + $0x1d8] sm:$0xff] %v770
  %835 = vst [vmem:[%s4 + $0x1e0] sm:$0xff] %v771
  %836 = vst [vmem:[%s4 + $0x1e8] sm:$0xff] %v772
  %837 = vst [vmem:[%s4 + $0x1f0] sm:$0xff] %v773
  %838 = vst [vmem:[%s4 + $0x1f8] sm:$0xff] %v774
  // Predicated region
  $region18: #{mcc_block_forward.8} parent=0 // pred_check
    _
  $region19: #{mcc_block_forward.8} parent=0 // pred_check_branch
    %840 = sbr.rel (0) target = $region21
  $region20: #{mcc_block_forward.8} parent=0 // pred_region
    _
  $region21: #{mcc_block_forward.8} parent=0 // pred_fallthru
    _
  // Predicated region
  $region22: #{mcc_block_forward.8} parent=0 // pred_check
    _
  $region23: #{mcc_block_forward.8} parent=0 // pred_check_branch
    %842 = sbr.rel (0) target = $region25
  $region24: #{mcc_block_forward.8} parent=0 // pred_region
    _
  $region25: #{mcc_block_forward.8} parent=0 // pred_fallthru
    _

// kernel: mcc_block_forward.14
$region0: #{mcc_block_forward.14}
  #allocation0 [shape = 'u32[]', space=smem, size = 0x4, offset = 0x4, fixed_abs, tag = 'smem constant byte address 0x4 - core index']
  #allocation1 [shape = 'u32[144,128]{1,0:T(1,128)}', space=vmem, size = 0x12000, scoped, tag = 'internal scratch']
  #allocation2 [shape = 'f32[1,1]{1,0:T(1,128)S(6)}', space=smem, size = 0x200, scoped, tag = 'scoped memory for mcc_block_forward.14']
  %s0 = inlined_call_operand.vmem [shape: bf16[2,18,18,8], index: 0, kind: input, shape index: {}]
  %s1 = inlined_call_operand.vmem [shape: bf16[72,128], index: 1, kind: input, shape index: {}]
  %s2 = inlined_call_operand.vmem [shape: f32[1,128], index: 2, kind: input, shape index: {}]
  %s3 = inlined_call_operand.vmem [shape: f32[1,128], index: 3, kind: input, shape index: {}]
  %s4 = inlined_call_operand.<no memory space> [shape: f32[1,1], index: 4, kind: input, shape index: {}]
  %s5 = inlined_call_operand.vmem [shape: bf16[2,16,16,128], index: 5, kind: output, shape index: {}]
  %s6 = sld [smem:[#allocation0]]
  $region53: #{mcc_block_forward.14} parent=0
    _
  %s8 = ssub.s32 1, %s6
  %s9 = scalar_select 0, %s8, %s6
  %10 = sst [smem:[#allocation2]] %s4
  loop: start=0, step=1, limit=4
  $region2: #{mcc_block_forward.14} parent=0 // loop_pre_header
    _
  $region3: #{mcc_block_forward.14} parent=0 // loop_header
    %s12 = sphi 0, %s16
    %p13 = scmp.ge.s32.totalorder %s12, 4
    %s19 = sphi 0, %s31
    %s20 = sphi 0, %s27
    %s21 = sphi 0, %s19
    %s22 = sphi 0, %s20
    %s23 = sphi 0, %s21
    %s24 = sphi 0, %s22
    %s34 = sphi 0, %s36
    %s37 = sphi 0, %s34
    %s38 = sphi 0, %s37
    %s54 = sphi 0, %s38
    %s58 = sphi 0, %s58
    %s60 = sphi 0, %s58
    %s61 = sphi 0, %s60
    %s75 = sphi 0, %s61
    %s79 = sphi 0, %s79
    %s81 = sphi 0, %s79
    %s82 = sphi 0, %s81
    %s96 = sphi 0, %s82
    %s100 = sphi 0, %s100
    %s102 = sphi 0, %s100
    %s103 = sphi 0, %s102
    %s117 = sphi 0, %s103
    %s121 = sphi 0, %s121
    %s123 = sphi 0, %s121
    %s124 = sphi 0, %s123
    %s138 = sphi 0, %s124
    %s146 = sphi 0, %s148
    %s149 = sphi 0, %s146
    %s150 = sphi 0, %s149
    %s166 = sphi 0, %s150
  $region4: #{mcc_block_forward.14} parent=0 // loop_header_branch
    %15 = sbr.rel (%p13) target = $region8
  $region5: #{mcc_block_forward.14} parent=0 // loop_body
    %s17 = ssub.s32 %s12, 1
    %s18 = ssub.s32 %s12, 2
    %s25 = sadd.s32 1, %s20
    %p26 = scmp.ge.s32.totalorder %s25, 1
    %s27 = scalar_select %p26, 0, %s25
    %s28 = sadd.s32 1, %s19
    %s29 = scalar_select %p26, %s28, %s19
    %p30 = scmp.ge.s32.totalorder %s29, 2
    %s31 = scalar_select %p30, 0, %s29
    %s32 = ssub.s32 %s19, %s31
    %p33 = scmp.eq.s32.totalorder %s32, 0
    %s35 = sadd.s32 %s34, 1
    %s36 = scalar_select %p33, %s34, %s35
    %p39 = pneg %p33
    %p40 = scmp.eq.s32.totalorder %s12, 1
    %p41 = por %p39, %p40
    %p42 = scmp.ne.s32.totalorder %s34, %s37
    %p43 = scmp.eq.s32.totalorder %s12, 0
    %p44 = por %p42, %p43
    %p45 = scmp.ne.s32.totalorder %s34, %s37
    %p46 = scmp.eq.s32.totalorder %s17, 1
    %p47 = por %p45, %p46
    %p48 = scmp.ne.s32.totalorder %s37, %s38
    %p49 = scmp.eq.s32.totalorder %s17, 0
    %p50 = por %p48, %p49
    %p51 = scmp.ne.s32.totalorder %s37, %s38
    %p52 = scmp.eq.s32.totalorder %s18, 1
    %p53 = por %p51, %p52
    %p55 = scmp.ne.s32.totalorder %s38, %s54
    %p56 = scmp.eq.s32.totalorder %s18, 0
    %p57 = por %p55, %p56
    %s59 = sadd.s32 %s58, 1
    %p62 = scmp.eq.s32.totalorder %s12, 1
    %p63 = scmp.ne.s32.totalorder %s58, %s60
    %p64 = scmp.eq.s32.totalorder %s12, 0
    %p65 = por %p63, %p64
    %p66 = scmp.ne.s32.totalorder %s58, %s60
    %p67 = scmp.eq.s32.totalorder %s17, 1
    %p68 = por %p66, %p67
    %p69 = scmp.ne.s32.totalorder %s60, %s61
    %p70 = scmp.eq.s32.totalorder %s17, 0
    %p71 = por %p69, %p70
    %p72 = scmp.ne.s32.totalorder %s60, %s61
    %p73 = scmp.eq.s32.totalorder %s18, 1
    %p74 = por %p72, %p73
    %p76 = scmp.ne.s32.totalorder %s61, %s75
    %p77 = scmp.eq.s32.totalorder %s18, 0
    %p78 = por %p76, %p77
    %s80 = sadd.s32 %s79, 1
    %p83 = scmp.eq.s32.totalorder %s12, 1
    %p84 = scmp.ne.s32.totalorder %s79, %s81
    %p85 = scmp.eq.s32.totalorder %s12, 0
    %p86 = por %p84, %p85
    %p87 = scmp.ne.s32.totalorder %s79, %s81
    %p88 = scmp.eq.s32.totalorder %s17, 1
    %p89 = por %p87, %p88
    %p90 = scmp.ne.s32.totalorder %s81, %s82
    %p91 = scmp.eq.s32.totalorder %s17, 0
    %p92 = por %p90, %p91
    %p93 = scmp.ne.s32.totalorder %s81, %s82
    %p94 = scmp.eq.s32.totalorder %s18, 1
    %p95 = por %p93, %p94
    %p97 = scmp.ne.s32.totalorder %s82, %s96
    %p98 = scmp.eq.s32.totalorder %s18, 0
    %p99 = por %p97, %p98
    %s101 = sadd.s32 %s100, 1
    %p104 = scmp.eq.s32.totalorder %s12, 1
    %p105 = scmp.ne.s32.totalorder %s100, %s102
    %p106 = scmp.eq.s32.totalorder %s12, 0
    %p107 = por %p105, %p106
    %p108 = scmp.ne.s32.totalorder %s100, %s102
    %p109 = scmp.eq.s32.totalorder %s17, 1
    %p110 = por %p108, %p109
    %p111 = scmp.ne.s32.totalorder %s102, %s103
    %p112 = scmp.eq.s32.totalorder %s17, 0
    %p113 = por %p111, %p112
    %p114 = scmp.ne.s32.totalorder %s102, %s103
    %p115 = scmp.eq.s32.totalorder %s18, 1
    %p116 = por %p114, %p115
    %p118 = scmp.ne.s32.totalorder %s103, %s117
    %p119 = scmp.eq.s32.totalorder %s18, 0
    %p120 = por %p118, %p119
    %s122 = sadd.s32 %s121, 1
    %p125 = scmp.eq.s32.totalorder %s12, 1
    %p126 = scmp.ne.s32.totalorder %s121, %s123
    %p127 = scmp.eq.s32.totalorder %s12, 0
    %p128 = por %p126, %p127
    %p129 = scmp.ne.s32.totalorder %s121, %s123
    %p130 = scmp.eq.s32.totalorder %s17, 1
    %p131 = por %p129, %p130
    %p132 = scmp.ne.s32.totalorder %s123, %s124
    %p133 = scmp.eq.s32.totalorder %s17, 0
    %p134 = por %p132, %p133
    %p135 = scmp.ne.s32.totalorder %s123, %s124
    %p136 = scmp.eq.s32.totalorder %s18, 1
    %p137 = por %p135, %p136
    %p139 = scmp.ne.s32.totalorder %s124, %s138
    %p140 = scmp.eq.s32.totalorder %s18, 0
    %p141 = por %p139, %p140
    %s142 = ssub.s32 %s19, %s31
    %s143 = ssub.s32 %s20, %s27
    %s144 = sor.u32 %s142, %s143
    %p145 = scmp.eq.s32.totalorder %s144, 0
    %s147 = sadd.s32 %s146, 1
    %s148 = scalar_select %p145, %s146, %s147
    %p151 = pneg %p145
    %p152 = scmp.eq.s32.totalorder %s12, 1
    %p153 = por %p151, %p152
    %p154 = scmp.ne.s32.totalorder %s146, %s149
    %p155 = scmp.eq.s32.totalorder %s12, 0
    %p156 = por %p154, %p155
    %p157 = scmp.ne.s32.totalorder %s146, %s149
    %p158 = scmp.eq.s32.totalorder %s17, 1
    %p159 = por %p157, %p158
    %p160 = scmp.ne.s32.totalorder %s149, %s150
    %p161 = scmp.eq.s32.totalorder %s17, 0
    %p162 = por %p160, %p161
    %p163 = scmp.ne.s32.totalorder %s149, %s150
    %p164 = scmp.eq.s32.totalorder %s18, 1
    %p165 = por %p163, %p164
    %p167 = scmp.ne.s32.totalorder %s150, %s166
    %p168 = scmp.eq.s32.totalorder %s18, 0
    %p169 = por %p167, %p168
    %p170 = scmp.le.s32.totalorder 1, %s12
    %p171 = scmp.lt.s32.totalorder %s12, 3
    %p172 = pnand %p170, %p171
    %p173 = pneg %p172
    // Predicated region
    $region9: #{mcc_block_forward.14} parent=5 // pred_check
      _
    $region10: #{mcc_block_forward.14} parent=5 // pred_check_branch
      %175 = sbr.rel (%p172) target = $region12
    $region11: #{mcc_block_forward.14} parent=5 // pred_region
      %s176 = ssub.s32 %s12, 1
      // Predicated region
      $region13: #{mcc_block_forward.14} parent=11 // pred_check
        %p177 = pneg %p71
      $region14: #{mcc_block_forward.14} parent=11 // pred_check_branch
        %179 = sbr.rel (%p177) target = $region16
      $region15: #{mcc_block_forward.14} parent=11 // pred_region
        _
      $region16: #{mcc_block_forward.14} parent=11 // pred_fallthru
        _
      // Predicated region
      $region17: #{mcc_block_forward.14} parent=11 // pred_check
        %p180 = pneg %p92
      $region18: #{mcc_block_forward.14} parent=11 // pred_check_branch
        %182 = sbr.rel (%p180) target = $region20
      $region19: #{mcc_block_forward.14} parent=11 // pred_region
        _
      $region20: #{mcc_block_forward.14} parent=11 // pred_fallthru
        _
      // Predicated region
      $region21: #{mcc_block_forward.14} parent=11 // pred_check
        %p183 = pneg %p113
      $region22: #{mcc_block_forward.14} parent=11 // pred_check_branch
        %185 = sbr.rel (%p183) target = $region24
      $region23: #{mcc_block_forward.14} parent=11 // pred_region
        _
      $region24: #{mcc_block_forward.14} parent=11 // pred_fallthru
        _
      // Predicated region
      $region25: #{mcc_block_forward.14} parent=11 // pred_check
        %p186 = pneg %p134
      $region26: #{mcc_block_forward.14} parent=11 // pred_check_branch
        %188 = sbr.rel (%p186) target = $region28
      $region27: #{mcc_block_forward.14} parent=11 // pred_region
        _
      $region28: #{mcc_block_forward.14} parent=11 // pred_fallthru
        _
    $region12: #{mcc_block_forward.14} parent=5 // pred_fallthru
      _
    %p189 = scmp.lt.s32.totalorder %s12, 2
    // Predicated region
    $region29: #{mcc_block_forward.14} parent=5 // pred_check
      %p190 = pneg %p189
    $region30: #{mcc_block_forward.14} parent=5 // pred_check_branch
      %192 = sbr.rel (%p190) target = $region32
    $region31: #{mcc_block_forward.14} parent=5 // pred_region
      // Predicated region
      $region33: #{mcc_block_forward.14} parent=31 // pred_check
        %p193 = pneg %p44
      $region34: #{mcc_block_forward.14} parent=31 // pred_check_branch
        %195 = sbr.rel (%p193) target = $region36
      $region35: #{mcc_block_forward.14} parent=31 // pred_region
        %p196 = scmp.lt.s32.totalorder %s19, 1
        %s197 = scalar_select %p196, %s19, 1
        %s198 = smul.addr %s197, 54
        %s199 = smul.addr %s198, 4
        %s200 = scalar_lea.vmem %s0, %s199
      $region36: #{mcc_block_forward.14} parent=31 // pred_fallthru
        _
    $region32: #{mcc_block_forward.14} parent=5 // pred_fallthru
      _
    %p201 = scmp.le.s32.totalorder 1, %s12
    %p202 = scmp.lt.s32.totalorder %s12, 3
    %p203 = pnand %p201, %p202
    %p204 = pneg %p203
    // Predicated region
    $region37: #{mcc_block_forward.14} parent=5 // pred_check
      _
    $region38: #{mcc_block_forward.14} parent=5 // pred_check_branch
      %206 = sbr.rel (%p203) target = $region40
    $region39: #{mcc_block_forward.14} parent=5 // pred_region
      %s207 = ssub.s32 %s12, 1
      %p208 = scmp.lt.s32.totalorder %s21, 1
      %s209 = scalar_select %p208, %s21, 1
      %s210 = smul.addr %s209, 54
      %s211 = smul.addr %s210, 4
      %s212 = scalar_lea.vmem %s0, %s211
      %p213 = pneg %p50
      %p214 = pneg %p47
      %p215 = pneg %p71
      %p216 = pneg %p68
      %p217 = pneg %p92
      %p218 = pneg %p89
      %p219 = pneg %p113
      %p220 = pneg %p110
      %p221 = pneg %p134
      %p222 = pneg %p131
      %p223 = pneg %p162
      %p224 = pneg %p159
      %s225 = smul.u32 16, %s22
      %p226 = scmp.lt.s32.totalorder %s21, 1
      %s227 = scalar_select %p226, %s21, 1
      %p228 = scmp.lt.s32.totalorder %s225, 15
      %s229 = scalar_select %p228, %s225, 15
      %s230 = smul.addr %s229, 2
      %s231 = smul.addr %s227, 32
      %s232 = sadd.s32 %s230, %s231
      %s233 = smul.addr %s232, 4
      %s234 = scalar_lea.vmem %s5, %s233
      %p235 = scmp.lt.s32.totalorder %s21, 1
      %s236 = scalar_select %p235, %s21, 1
      %s237 = smul.addr %s236, 54
      %s238 = smul.addr %s237, 4
      %s239 = scalar_lea.vmem %s0, %s238
      %s240 = smul.u32 16, %s22
      %p241 = scmp.lt.s32.totalorder %s21, 1
      %s242 = scalar_select %p241, %s21, 1
      %p243 = scmp.lt.s32.totalorder %s240, 15
      %s244 = scalar_select %p243, %s240, 15
      %s245 = smul.addr %s244, 2
      %s246 = smul.addr %s242, 32
      %s247 = sadd.s32 %s245, %s246
      %s248 = smul.addr %s247, 4
      %s249 = scalar_lea.vmem %s5, %s248
      %s250 = smul.u32 16, %s22
      %s252 = smul.u32 %s22, 16
      %s253 = smul.u32 %s252, 3
      %s254 = smul.addr %s253, 4
      %s255 = scalar_lea.vmem %s239, %s254
      %v256 = vld [vmem:[%s255] sm:$0xf]
      %v257 = vld [vmem:[%s255 + $0x4] sm:$0xf]
      %v258 = vld [vmem:[%s255 + $0xc] sm:$0xf]
      %v259 = vld [vmem:[%s255 + $0x10] sm:$0xf]
      %v260 = vld [vmem:[%s255 + $0x18] sm:$0xf]
      %v261 = vld [vmem:[%s255 + $0x1c] sm:$0xf]
      %v262 = vld [vmem:[%s255 + $0x24] sm:$0xf]
      %v263 = vld [vmem:[%s255 + $0x28] sm:$0xf]
      %v264 = vld [vmem:[%s255 + $0x30] sm:$0xf]
      %v265 = vld [vmem:[%s255 + $0x34] sm:$0xf]
      %v266 = vld [vmem:[%s255 + $0x3c] sm:$0xf]
      %v267 = vld [vmem:[%s255 + $0x40] sm:$0xf]
      %v268 = vld [vmem:[%s255 + $0x48] sm:$0xf]
      %v269 = vld [vmem:[%s255 + $0x4c] sm:$0xf]
      %v270 = vld [vmem:[%s255 + $0x54] sm:$0xf]
      %v271 = vld [vmem:[%s255 + $0x58] sm:$0xf]
      %v272 = vld [vmem:[%s255 + $0x60] sm:$0xf]
      %v273 = vld [vmem:[%s255 + $0x64] sm:$0xf]
      %v274 = vld [vmem:[%s255 + $0x6c] sm:$0xf]
      %v275 = vld [vmem:[%s255 + $0x70] sm:$0xf]
      %v276 = vld [vmem:[%s255 + $0x78] sm:$0xf]
      %v277 = vld [vmem:[%s255 + $0x7c] sm:$0xf]
      %v278 = vld [vmem:[%s255 + $0x84] sm:$0xf]
      %v279 = vld [vmem:[%s255 + $0x88] sm:$0xf]
      %v280 = vld [vmem:[%s255 + $0x90] sm:$0xf]
      %v281 = vld [vmem:[%s255 + $0x94] sm:$0xf]
      %v282 = vld [vmem:[%s255 + $0x9c] sm:$0xf]
      %v283 = vld [vmem:[%s255 + $0xa0] sm:$0xf]
      %v284 = vld [vmem:[%s255 + $0xa8] sm:$0xf]
      %v285 = vld [vmem:[%s255 + $0xac] sm:$0xf]
      %v286 = vld [vmem:[%s255 + $0xb4] sm:$0xf]
      %v287 = vld [vmem:[%s255 + $0xb8] sm:$0xf]
      %v288 = vld [vmem:[%s255 + $0x8] sm:$0x1]
      %v289 = vld [vmem:[%s255 + $0x14] sm:$0x1]
      %v290 = vld [vmem:[%s255 + $0x20] sm:$0x1]
      %v291 = vld [vmem:[%s255 + $0x2c] sm:$0x1]
      %v292 = vld [vmem:[%s255 + $0x38] sm:$0x1]
      %v293 = vld [vmem:[%s255 + $0x44] sm:$0x1]
      %v294 = vld [vmem:[%s255 + $0x50] sm:$0x1]
      %v295 = vld [vmem:[%s255 + $0x5c] sm:$0x1]
      %v296 = vld [vmem:[%s255 + $0x68] sm:$0x1]
      %v297 = vld [vmem:[%s255 + $0x74] sm:$0x1]
      %v298 = vld [vmem:[%s255 + $0x80] sm:$0x1]
      %v299 = vld [vmem:[%s255 + $0x8c] sm:$0x1]
      %v300 = vld [vmem:[%s255 + $0x98] sm:$0x1]
      %v301 = vld [vmem:[%s255 + $0xa4] sm:$0x1]
      %v302 = vld [vmem:[%s255 + $0xb0] sm:$0x1]
      %v303 = vld [vmem:[%s255 + $0xbc] sm:$0x1]
      %v304 = vld [vmem:[%s255] sm:$0xe]
      %v305 = vld [vmem:[%s255 + $0xc] sm:$0xe]
      %v306 = vld [vmem:[%s255 + $0x18] sm:$0xe]
      %v307 = vld [vmem:[%s255 + $0x24] sm:$0xe]
      %v308 = vld [vmem:[%s255 + $0x30] sm:$0xe]
      %v309 = vld [vmem:[%s255 + $0x3c] sm:$0xe]
      %v310 = vld [vmem:[%s255 + $0x48] sm:$0xe]
      %v311 = vld [vmem:[%s255 + $0x54] sm:$0xe]
      %v312 = vld [vmem:[%s255 + $0x60] sm:$0xe]
      %v313 = vld [vmem:[%s255 + $0x6c] sm:$0xe]
      %v314 = vld [vmem:[%s255 + $0x78] sm:$0xe]
      %v315 = vld [vmem:[%s255 + $0x84] sm:$0xe]
      %v316 = vld [vmem:[%s255 + $0x90] sm:$0xe]
      %v317 = vld [vmem:[%s255 + $0x9c] sm:$0xe]
      %v318 = vld [vmem:[%s255 + $0xa8] sm:$0xe]
      %v319 = vld [vmem:[%s255 + $0xb4] sm:$0xe]
      %s320 = sadd.s32 %s252, 1
      %s321 = smul.u32 %s320, 3
      %s322 = smul.addr %s321, 4
      %s323 = scalar_lea.vmem %s239, %s322
      %v324 = vld [vmem:[%s323] sm:$0xf]
      %v325 = vld [vmem:[%s323 + $0x4] sm:$0xf]
      %v326 = vld [vmem:[%s323 + $0xc] sm:$0xf]
      %v327 = vld [vmem:[%s323 + $0x10] sm:$0xf]
      %v328 = vld [vmem:[%s323 + $0x18] sm:$0xf]
      %v329 = vld [vmem:[%s323 + $0x1c] sm:$0xf]
      %v330 = vld [vmem:[%s323 + $0x24] sm:$0xf]
      %v331 = vld [vmem:[%s323 + $0x28] sm:$0xf]
      %v332 = vld [vmem:[%s323 + $0x30] sm:$0xf]
      %v333 = vld [vmem:[%s323 + $0x34] sm:$0xf]
      %v334 = vld [vmem:[%s323 + $0x3c] sm:$0xf]
      %v335 = vld [vmem:[%s323 + $0x40] sm:$0xf]
      %v336 = vld [vmem:[%s323 + $0x48] sm:$0xf]
      %v337 = vld [vmem:[%s323 + $0x4c] sm:$0xf]
      %v338 = vld [vmem:[%s323 + $0x54] sm:$0xf]
      %v339 = vld [vmem:[%s323 + $0x58] sm:$0xf]
      %v340 = vld [vmem:[%s323 + $0x60] sm:$0xf]
      %v341 = vld [vmem:[%s323 + $0x64] sm:$0xf]
      %v342 = vld [vmem:[%s323 + $0x6c] sm:$0xf]
      %v343 = vld [vmem:[%s323 + $0x70] sm:$0xf]
      %v344 = vld [vmem:[%s323 + $0x78] sm:$0xf]
      %v345 = vld [vmem:[%s323 + $0x7c] sm:$0xf]
      %v346 = vld [vmem:[%s323 + $0x84] sm:$0xf]
      %v347 = vld [vmem:[%s323 + $0x88] sm:$0xf]
      %v348 = vld [vmem:[%s323 + $0x90] sm:$0xf]
      %v349 = vld [vmem:[%s323 + $0x94] sm:$0xf]
      %v350 = vld [vmem:[%s323 + $0x9c] sm:$0xf]
      %v351 = vld [vmem:[%s323 + $0xa0] sm:$0xf]
      %v352 = vld [vmem:[%s323 + $0xa8] sm:$0xf]
      %v353 = vld [vmem:[%s323 + $0xac] sm:$0xf]
      %v354 = vld [vmem:[%s323 + $0xb4] sm:$0xf]
      %v355 = vld [vmem:[%s323 + $0xb8] sm:$0xf]
      %v356 = vld [vmem:[%s323 + $0x8] sm:$0x1]
      %v357 = vld [vmem:[%s323 + $0x14] sm:$0x1]
      %v358 = vld [vmem:[%s323 + $0x20] sm:$0x1]
      %v359 = vld [vmem:[%s323 + $0x2c] sm:$0x1]
      %v360 = vld [vmem:[%s323 + $0x38] sm:$0x1]
      %v361 = vld [vmem:[%s323 + $0x44] sm:$0x1]
      %v362 = vld [vmem:[%s323 + $0x50] sm:$0x1]
      %v363 = vld [vmem:[%s323 + $0x5c] sm:$0x1]
      %v364 = vld [vmem:[%s323 + $0x68] sm:$0x1]
      %v365 = vld [vmem:[%s323 + $0x74] sm:$0x1]
      %v366 = vld [vmem:[%s323 + $0x80] sm:$0x1]
      %v367 = vld [vmem:[%s323 + $0x8c] sm:$0x1]
      %v368 = vld [vmem:[%s323 + $0x98] sm:$0x1]
      %v369 = vld [vmem:[%s323 + $0xa4] sm:$0x1]
      %v370 = vld [vmem:[%s323 + $0xb0] sm:$0x1]
      %v371 = vld [vmem:[%s323 + $0xbc] sm:$0x1]
      %v372 = vld [vmem:[%s323] sm:$0xe]
      %v373 = vld [vmem:[%s323 + $0xc] sm:$0xe]
      %v374 = vld [vmem:[%s323 + $0x18] sm:$0xe]
      %v375 = vld [vmem:[%s323 + $0x24] sm:$0xe]
      %v376 = vld [vmem:[%s323 + $0x30] sm:$0xe]
      %v377 = vld [vmem:[%s323 + $0x3c] sm:$0xe]
      %v378 = vld [vmem:[%s323 + $0x48] sm:$0xe]
      %v379 = vld [vmem:[%s323 + $0x54] sm:$0xe]
      %v380 = vld [vmem:[%s323 + $0x60] sm:$0xe]
      %v381 = vld [vmem:[%s323 + $0x6c] sm:$0xe]
      %v382 = vld [vmem:[%s323 + $0x78] sm:$0xe]
      %v383 = vld [vmem:[%s323 + $0x84] sm:$0xe]
      %v384 = vld [vmem:[%s323 + $0x90] sm:$0xe]
      %v385 = vld [vmem:[%s323 + $0x9c] sm:$0xe]
      %v386 = vld [vmem:[%s323 + $0xa8] sm:$0xe]
      %v387 = vld [vmem:[%s323 + $0xb4] sm:$0xe]
      %s388 = sadd.s32 %s252, 2
      %s389 = smul.u32 %s388, 3
      %s390 = smul.addr %s389, 4
      %s391 = scalar_lea.vmem %s239, %s390
      %v392 = vld [vmem:[%s391] sm:$0xf]
      %v393 = vld [vmem:[%s391 + $0x4] sm:$0xf]
      %v394 = vld [vmem:[%s391 + $0xc] sm:$0xf]
      %v395 = vld [vmem:[%s391 + $0x10] sm:$0xf]
      %v396 = vld [vmem:[%s391 + $0x18] sm:$0xf]
      %v397 = vld [vmem:[%s391 + $0x1c] sm:$0xf]
      %v398 = vld [vmem:[%s391 + $0x24] sm:$0xf]
      %v399 = vld [vmem:[%s391 + $0x28] sm:$0xf]
      %v400 = vld [vmem:[%s391 + $0x30] sm:$0xf]
      %v401 = vld [vmem:[%s391 + $0x34] sm:$0xf]
      %v402 = vld [vmem:[%s391 + $0x3c] sm:$0xf]
      %v403 = vld [vmem:[%s391 + $0x40] sm:$0xf]
      %v404 = vld [vmem:[%s391 + $0x48] sm:$0xf]
      %v405 = vld [vmem:[%s391 + $0x4c] sm:$0xf]
      %v406 = vld [vmem:[%s391 + $0x54] sm:$0xf]
      %v407 = vld [vmem:[%s391 + $0x58] sm:$0xf]
      %v408 = vld [vmem:[%s391 + $0x60] sm:$0xf]
      %v409 = vld [vmem:[%s391 + $0x64] sm:$0xf]
      %v410 = vld [vmem:[%s391 + $0x6c] sm:$0xf]
      %v411 = vld [vmem:[%s391 + $0x70] sm:$0xf]
      %v412 = vld [vmem:[%s391 + $0x78] sm:$0xf]
      %v413 = vld [vmem:[%s391 + $0x7c] sm:$0xf]
      %v414 = vld [vmem:[%s391 + $0x84] sm:$0xf]
      %v415 = vld [vmem:[%s391 + $0x88] sm:$0xf]
      %v416 = vld [vmem:[%s391 + $0x90] sm:$0xf]
      %v417 = vld [vmem:[%s391 + $0x94] sm:$0xf]
      %v418 = vld [vmem:[%s391 + $0x9c] sm:$0xf]
      %v419 = vld [vmem:[%s391 + $0xa0] sm:$0xf]
      %v420 = vld [vmem:[%s391 + $0xa8] sm:$0xf]
      %v421 = vld [vmem:[%s391 + $0xac] sm:$0xf]
      %v422 = vld [vmem:[%s391 + $0xb4] sm:$0xf]
      %v423 = vld [vmem:[%s391 + $0xb8] sm:$0xf]
      %v424 = vld [vmem:[%s391 + $0x8] sm:$0x1]
      %v425 = vld [vmem:[%s391 + $0x14] sm:$0x1]
      %v426 = vld [vmem:[%s391 + $0x20] sm:$0x1]
      %v427 = vld [vmem:[%s391 + $0x2c] sm:$0x1]
      %v428 = vld [vmem:[%s391 + $0x38] sm:$0x1]
      %v429 = vld [vmem:[%s391 + $0x44] sm:$0x1]
      %v430 = vld [vmem:[%s391 + $0x50] sm:$0x1]
      %v431 = vld [vmem:[%s391 + $0x5c] sm:$0x1]
      %v432 = vld [vmem:[%s391 + $0x68] sm:$0x1]
      %v433 = vld [vmem:[%s391 + $0x74] sm:$0x1]
      %v434 = vld [vmem:[%s391 + $0x80] sm:$0x1]
      %v435 = vld [vmem:[%s391 + $0x8c] sm:$0x1]
      %v436 = vld [vmem:[%s391 + $0x98] sm:$0x1]
      %v437 = vld [vmem:[%s391 + $0xa4] sm:$0x1]
      %v438 = vld [vmem:[%s391 + $0xb0] sm:$0x1]
      %v439 = vld [vmem:[%s391 + $0xbc] sm:$0x1]
      %v440 = vld [vmem:[%s391] sm:$0xe]
      %v441 = vld [vmem:[%s391 + $0xc] sm:$0xe]
      %v442 = vld [vmem:[%s391 + $0x18] sm:$0xe]
      %v443 = vld [vmem:[%s391 + $0x24] sm:$0xe]
      %v444 = vld [vmem:[%s391 + $0x30] sm:$0xe]
      %v445 = vld [vmem:[%s391 + $0x3c] sm:$0xe]
      %v446 = vld [vmem:[%s391 + $0x48] sm:$0xe]
      %v447 = vld [vmem:[%s391 + $0x54] sm:$0xe]
      %v448 = vld [vmem:[%s391 + $0x60] sm:$0xe]
      %v449 = vld [vmem:[%s391 + $0x6c] sm:$0xe]
      %v450 = vld [vmem:[%s391 + $0x78] sm:$0xe]
      %v451 = vld [vmem:[%s391 + $0x84] sm:$0xe]
      %v452 = vld [vmem:[%s391 + $0x90] sm:$0xe]
      %v453 = vld [vmem:[%s391 + $0x9c] sm:$0xe]
      %v454 = vld [vmem:[%s391 + $0xa8] sm:$0xe]
      %v455 = vld [vmem:[%s391 + $0xb4] sm:$0xe]
      %v488 = vunpack.c.l.b16 %v256
      %v489 = vunpack.c.l.b16 %v257
      %v490 = vunpack.c.l.b16 %v258
      %v491 = vunpack.c.l.b16 %v259
      %v492 = vunpack.c.l.b16 %v260
      %v493 = vunpack.c.l.b16 %v261
      %v494 = vunpack.c.l.b16 %v262
      %v495 = vunpack.c.l.b16 %v263
      %v496 = vunpack.c.l.b16 %v264
      %v497 = vunpack.c.l.b16 %v265
      %v498 = vunpack.c.l.b16 %v266
      %v499 = vunpack.c.l.b16 %v267
      %v500 = vunpack.c.l.b16 %v268
      %v501 = vunpack.c.l.b16 %v269
      %v502 = vunpack.c.l.b16 %v270
      %v503 = vunpack.c.l.b16 %v271
      %v504 = vunpack.c.l.b16 %v272
      %v505 = vunpack.c.l.b16 %v273
      %v506 = vunpack.c.l.b16 %v274
      %v507 = vunpack.c.l.b16 %v275
      %v508 = vunpack.c.l.b16 %v276
      %v509 = vunpack.c.l.b16 %v277
      %v510 = vunpack.c.l.b16 %v278
      %v511 = vunpack.c.l.b16 %v279
      %v512 = vunpack.c.l.b16 %v280
      %v513 = vunpack.c.l.b16 %v281
      %v514 = vunpack.c.l.b16 %v282
      %v515 = vunpack.c.l.b16 %v283
      %v516 = vunpack.c.l.b16 %v284
      %v517 = vunpack.c.l.b16 %v285
      %v518 = vunpack.c.l.b16 %v286
      %v519 = vunpack.c.l.b16 %v287
      %v520 = vpack.c.b16 %v489, %v488
      %v521 = vpack.c.b16 %v491, %v490
      %v522 = vpack.c.b16 %v493, %v492
      %v523 = vpack.c.b16 %v495, %v494
      %v524 = vpack.c.b16 %v497, %v496
      %v525 = vpack.c.b16 %v499, %v498
      %v526 = vpack.c.b16 %v501, %v500
      %v527 = vpack.c.b16 %v503, %v502
      %v528 = vpack.c.b16 %v505, %v504
      %v529 = vpack.c.b16 %v507, %v506
      %v530 = vpack.c.b16 %v509, %v508
      %v531 = vpack.c.b16 %v511, %v510
      %v532 = vpack.c.b16 %v513, %v512
      %v533 = vpack.c.b16 %v515, %v514
      %v534 = vpack.c.b16 %v517, %v516
      %v535 = vpack.c.b16 %v519, %v518
      %v552 = vunpack.c.l.b16 %v288
      %v553 = vunpack.c.l.b16 %v289
      %v554 = vunpack.c.l.b16 %v290
      %v555 = vunpack.c.l.b16 %v291
      %v556 = vunpack.c.l.b16 %v292
      %v557 = vunpack.c.l.b16 %v293
      %v558 = vunpack.c.l.b16 %v294
      %v559 = vunpack.c.l.b16 %v295
      %v560 = vunpack.c.l.b16 %v296
      %v561 = vunpack.c.l.b16 %v297
      %v562 = vunpack.c.l.b16 %v298
      %v563 = vunpack.c.l.b16 %v299
      %v564 = vunpack.c.l.b16 %v300
      %v565 = vunpack.c.l.b16 %v301
      %v566 = vunpack.c.l.b16 %v302
      %v567 = vunpack.c.l.b16 %v303
      %v568 = vpack.c.b16 %v552, %v552
      %v569 = vpack.c.b16 %v553, %v553
      %v570 = vpack.c.b16 %v554, %v554
      %v571 = vpack.c.b16 %v555, %v555
      %v572 = vpack.c.b16 %v556, %v556
      %v573 = vpack.c.b16 %v557, %v557
      %v574 = vpack.c.b16 %v558, %v558
      %v575 = vpack.c.b16 %v559, %v559
      %v576 = vpack.c.b16 %v560, %v560
      %v577 = vpack.c.b16 %v561, %v561
      %v578 = vpack.c.b16 %v562, %v562
      %v579 = vpack.c.b16 %v563, %v563
      %v580 = vpack.c.b16 %v564, %v564
      %v581 = vpack.c.b16 %v565, %v565
      %v582 = vpack.c.b16 %v566, %v566
      %v583 = vpack.c.b16 %v567, %v567
      %vm584 = vsmask.f32 7424
      %v586 = vshrl.u32 %v520, 16
      %v588 = vshll.u32 %v520, 16
      %v590 = vrot.slane %v588, 1
      %v591 = vor.u32 %v586, %v590
      %v593 = vshll.u32 %v568, 16
      %v595 = vrot.slane %v593, 1
      %v596 = vsel %vm584, %v591, %v595
      %v598 = vshrl.u32 %v521, 16
      %v600 = vshll.u32 %v521, 16
      %v602 = vrot.slane %v600, 1
      %v603 = vor.u32 %v598, %v602
      %v605 = vshll.u32 %v569, 16
      %v607 = vrot.slane %v605, 1
      %v608 = vsel %vm584, %v603, %v607
      %v610 = vshrl.u32 %v522, 16
      %v612 = vshll.u32 %v522, 16
      %v614 = vrot.slane %v612, 1
      %v615 = vor.u32 %v610, %v614
      %v617 = vshll.u32 %v570, 16
      %v619 = vrot.slane %v617, 1
      %v620 = vsel %vm584, %v615, %v619
      %v622 = vshrl.u32 %v523, 16
      %v624 = vshll.u32 %v523, 16
      %v626 = vrot.slane %v624, 1
      %v627 = vor.u32 %v622, %v626
      %v629 = vshll.u32 %v571, 16
      %v631 = vrot.slane %v629, 1
      %v632 = vsel %vm584, %v627, %v631
      %v634 = vshrl.u32 %v524, 16
      %v636 = vshll.u32 %v524, 16
      %v638 = vrot.slane %v636, 1
      %v639 = vor.u32 %v634, %v638
      %v641 = vshll.u32 %v572, 16
      %v643 = vrot.slane %v641, 1
      %v644 = vsel %vm584, %v639, %v643
      %v646 = vshrl.u32 %v525, 16
      %v648 = vshll.u32 %v525, 16
      %v650 = vrot.slane %v648, 1
      %v651 = vor.u32 %v646, %v650
      %v653 = vshll.u32 %v573, 16
      %v655 = vrot.slane %v653, 1
      %v656 = vsel %vm584, %v651, %v655
      %v658 = vshrl.u32 %v526, 16
      %v660 = vshll.u32 %v526, 16
      %v662 = vrot.slane %v660, 1
      %v663 = vor.u32 %v658, %v662
      %v665 = vshll.u32 %v574, 16
      %v667 = vrot.slane %v665, 1
      %v668 = vsel %vm584, %v663, %v667
      %v670 = vshrl.u32 %v527, 16
      %v672 = vshll.u32 %v527, 16
      %v674 = vrot.slane %v672, 1
      %v675 = vor.u32 %v670, %v674
      %v677 = vshll.u32 %v575, 16
      %v679 = vrot.slane %v677, 1
      %v680 = vsel %vm584, %v675, %v679
      %v682 = vshrl.u32 %v528, 16
      %v684 = vshll.u32 %v528, 16
      %v686 = vrot.slane %v684, 1
      %v687 = vor.u32 %v682, %v686
      %v689 = vshll.u32 %v576, 16
      %v691 = vrot.slane %v689, 1
      %v692 = vsel %vm584, %v687, %v691
      %v694 = vshrl.u32 %v529, 16
      %v696 = vshll.u32 %v529, 16
      %v698 = vrot.slane %v696, 1
      %v699 = vor.u32 %v694, %v698
      %v701 = vshll.u32 %v577, 16
      %v703 = vrot.slane %v701, 1
      %v704 = vsel %vm584, %v699, %v703
      %v706 = vshrl.u32 %v530, 16
      %v708 = vshll.u32 %v530, 16
      %v710 = vrot.slane %v708, 1
      %v711 = vor.u32 %v706, %v710
      %v713 = vshll.u32 %v578, 16
      %v715 = vrot.slane %v713, 1
      %v716 = vsel %vm584, %v711, %v715
      %v718 = vshrl.u32 %v531, 16
      %v720 = vshll.u32 %v531, 16
      %v722 = vrot.slane %v720, 1
      %v723 = vor.u32 %v718, %v722
      %v725 = vshll.u32 %v579, 16
      %v727 = vrot.slane %v725, 1
      %v728 = vsel %vm584, %v723, %v727
      %v730 = vshrl.u32 %v532, 16
      %v732 = vshll.u32 %v532, 16
      %v734 = vrot.slane %v732, 1
      %v735 = vor.u32 %v730, %v734
      %v737 = vshll.u32 %v580, 16
      %v739 = vrot.slane %v737, 1
      %v740 = vsel %vm584, %v735, %v739
      %v742 = vshrl.u32 %v533, 16
      %v744 = vshll.u32 %v533, 16
      %v746 = vrot.slane %v744, 1
      %v747 = vor.u32 %v742, %v746
      %v749 = vshll.u32 %v581, 16
      %v751 = vrot.slane %v749, 1
      %v752 = vsel %vm584, %v747, %v751
      %v754 = vshrl.u32 %v534, 16
      %v756 = vshll.u32 %v534, 16
      %v758 = vrot.slane %v756, 1
      %v759 = vor.u32 %v754, %v758
      %v761 = vshll.u32 %v582, 16
      %v763 = vrot.slane %v761, 1
      %v764 = vsel %vm584, %v759, %v763
      %v766 = vshrl.u32 %v535, 16
      %v768 = vshll.u32 %v535, 16
      %v770 = vrot.slane %v768, 1
      %v771 = vor.u32 %v766, %v770
      %v773 = vshll.u32 %v583, 16
      %v775 = vrot.slane %v773, 1
      %v776 = vsel %vm584, %v771, %v775
      %777 = vrot.lane.b32.xlu0 %v596, 8
      %v778 = vpop.permute.xlu0 %777
      %779 = vrot.lane.b32.xlu0 %v608, 8
      %v780 = vpop.permute.xlu0 %779
      %781 = vrot.lane.b32.xlu0 %v620, 8
      %v782 = vpop.permute.xlu0 %781
      %783 = vrot.lane.b32.xlu0 %v632, 8
      %v784 = vpop.permute.xlu0 %783
      %785 = vrot.lane.b32.xlu0 %v644, 8
      %v786 = vpop.permute.xlu0 %785
      %787 = vrot.lane.b32.xlu0 %v656, 8
      %v788 = vpop.permute.xlu0 %787
      %789 = vrot.lane.b32.xlu0 %v668, 8
      %v790 = vpop.permute.xlu0 %789
      %791 = vrot.lane.b32.xlu0 %v680, 8
      %v792 = vpop.permute.xlu0 %791
      %793 = vrot.lane.b32.xlu0 %v692, 8
      %v794 = vpop.permute.xlu0 %793
      %795 = vrot.lane.b32.xlu0 %v704, 8
      %v796 = vpop.permute.xlu0 %795
      %797 = vrot.lane.b32.xlu0 %v716, 8
      %v798 = vpop.permute.xlu0 %797
      %799 = vrot.lane.b32.xlu0 %v728, 8
      %v800 = vpop.permute.xlu0 %799
      %801 = vrot.lane.b32.xlu0 %v740, 8
      %v802 = vpop.permute.xlu0 %801
      %803 = vrot.lane.b32.xlu0 %v752, 8
      %v804 = vpop.permute.xlu0 %803
      %805 = vrot.lane.b32.xlu0 %v764, 8
      %v806 = vpop.permute.xlu0 %805
      %807 = vrot.lane.b32.xlu0 %v776, 8
      %v808 = vpop.permute.xlu0 %807
      %v825 = vunpack.c.l.b16 %v304
      %v826 = vunpack.c.l.b16 %v305
      %v827 = vunpack.c.l.b16 %v306
      %v828 = vunpack.c.l.b16 %v307
      %v829 = vunpack.c.l.b16 %v308
      %v830 = vunpack.c.l.b16 %v309
      %v831 = vunpack.c.l.b16 %v310
      %v832 = vunpack.c.l.b16 %v311
      %v833 = vunpack.c.l.b16 %v312
      %v834 = vunpack.c.l.b16 %v313
      %v835 = vunpack.c.l.b16 %v314
      %v836 = vunpack.c.l.b16 %v315
      %v837 = vunpack.c.l.b16 %v316
      %v838 = vunpack.c.l.b16 %v317
      %v839 = vunpack.c.l.b16 %v318
      %v840 = vunpack.c.l.b16 %v319
      %v841 = vpack.c.b16 %v489, %v825
      %v842 = vpack.c.b16 %v491, %v826
      %v843 = vpack.c.b16 %v493, %v827
      %v844 = vpack.c.b16 %v495, %v828
      %v845 = vpack.c.b16 %v497, %v829
      %v846 = vpack.c.b16 %v499, %v830
      %v847 = vpack.c.b16 %v501, %v831
      %v848 = vpack.c.b16 %v503, %v832
      %v849 = vpack.c.b16 %v505, %v833
      %v850 = vpack.c.b16 %v507, %v834
      %v851 = vpack.c.b16 %v509, %v835
      %v852 = vpack.c.b16 %v511, %v836
      %v853 = vpack.c.b16 %v513, %v837
      %v854 = vpack.c.b16 %v515, %v838
      %v855 = vpack.c.b16 %v517, %v839
      %v856 = vpack.c.b16 %v519, %v840
      %vm857 = vcmask 1046528
      %v858 = vrot.slane %v841, 1
      %v859 = vrot.slane %v568, 1
      %v860 = vsel %vm857, %v858, %v859
      %v861 = vrot.slane %v842, 1
      %v862 = vrot.slane %v569, 1
      %v863 = vsel %vm857, %v861, %v862
      %v864 = vrot.slane %v843, 1
      %v865 = vrot.slane %v570, 1
      %v866 = vsel %vm857, %v864, %v865
      %v867 = vrot.slane %v844, 1
      %v868 = vrot.slane %v571, 1
      %v869 = vsel %vm857, %v867, %v868
      %v870 = vrot.slane %v845, 1
      %v871 = vrot.slane %v572, 1
      %v872 = vsel %vm857, %v870, %v871
      %v873 = vrot.slane %v846, 1
      %v874 = vrot.slane %v573, 1
      %v875 = vsel %vm857, %v873, %v874
      %v876 = vrot.slane %v847, 1
      %v877 = vrot.slane %v574, 1
      %v878 = vsel %vm857, %v876, %v877
      %v879 = vrot.slane %v848, 1
      %v880 = vrot.slane %v575, 1
      %v881 = vsel %vm857, %v879, %v880
      %v882 = vrot.slane %v849, 1
      %v883 = vrot.slane %v576, 1
      %v884 = vsel %vm857, %v882, %v883
      %v885 = vrot.slane %v850, 1
      %v886 = vrot.slane %v577, 1
      %v887 = vsel %vm857, %v885, %v886
      %v888 = vrot.slane %v851, 1
      %v889 = vrot.slane %v578, 1
      %v890 = vsel %vm857, %v888, %v889
      %v891 = vrot.slane %v852, 1
      %v892 = vrot.slane %v579, 1
      %v893 = vsel %vm857, %v891, %v892
      %v894 = vrot.slane %v853, 1
      %v895 = vrot.slane %v580, 1
      %v896 = vsel %vm857, %v894, %v895
      %v897 = vrot.slane %v854, 1
      %v898 = vrot.slane %v581, 1
      %v899 = vsel %vm857, %v897, %v898
      %v900 = vrot.slane %v855, 1
      %v901 = vrot.slane %v582, 1
      %v902 = vsel %vm857, %v900, %v901
      %v903 = vrot.slane %v856, 1
      %v904 = vrot.slane %v583, 1
      %v905 = vsel %vm857, %v903, %v904
      %906 = vrot.lane.b32.xlu0 %v860, 16
      %v907 = vpop.permute.xlu0 %906
      %908 = vrot.lane.b32.xlu0 %v863, 16
      %v909 = vpop.permute.xlu0 %908
      %910 = vrot.lane.b32.xlu0 %v866, 16
      %v911 = vpop.permute.xlu0 %910
      %912 = vrot.lane.b32.xlu0 %v869, 16
      %v913 = vpop.permute.xlu0 %912
      %914 = vrot.lane.b32.xlu0 %v872, 16
      %v915 = vpop.permute.xlu0 %914
      %916 = vrot.lane.b32.xlu0 %v875, 16
      %v917 = vpop.permute.xlu0 %916
      %918 = vrot.lane.b32.xlu0 %v878, 16
      %v919 = vpop.permute.xlu0 %918
      %920 = vrot.lane.b32.xlu0 %v881, 16
      %v921 = vpop.permute.xlu0 %920
      %922 = vrot.lane.b32.xlu0 %v884, 16
      %v923 = vpop.permute.xlu0 %922
      %924 = vrot.lane.b32.xlu0 %v887, 16
      %v925 = vpop.permute.xlu0 %924
      %926 = vrot.lane.b32.xlu0 %v890, 16
      %v927 = vpop.permute.xlu0 %926
      %928 = vrot.lane.b32.xlu0 %v893, 16
      %v929 = vpop.permute.xlu0 %928
      %930 = vrot.lane.b32.xlu0 %v896, 16
      %v931 = vpop.permute.xlu0 %930
      %932 = vrot.lane.b32.xlu0 %v899, 16
      %v933 = vpop.permute.xlu0 %932
      %934 = vrot.lane.b32.xlu0 %v902, 16
      %v935 = vpop.permute.xlu0 %934
      %936 = vrot.lane.b32.xlu0 %v905, 16
      %v937 = vpop.permute.xlu0 %936
      %v970 = vunpack.c.l.b16 %v324
      %v971 = vunpack.c.l.b16 %v325
      %v972 = vunpack.c.l.b16 %v326
      %v973 = vunpack.c.l.b16 %v327
      %v974 = vunpack.c.l.b16 %v328
      %v975 = vunpack.c.l.b16 %v329
      %v976 = vunpack.c.l.b16 %v330
      %v977 = vunpack.c.l.b16 %v331
      %v978 = vunpack.c.l.b16 %v332
      %v979 = vunpack.c.l.b16 %v333
      %v980 = vunpack.c.l.b16 %v334
      %v981 = vunpack.c.l.b16 %v335
      %v982 = vunpack.c.l.b16 %v336
      %v983 = vunpack.c.l.b16 %v337
      %v984 = vunpack.c.l.b16 %v338
      %v985 = vunpack.c.l.b16 %v339
      %v986 = vunpack.c.l.b16 %v340
      %v987 = vunpack.c.l.b16 %v341
      %v988 = vunpack.c.l.b16 %v342
      %v989 = vunpack.c.l.b16 %v343
      %v990 = vunpack.c.l.b16 %v344
      %v991 = vunpack.c.l.b16 %v345
      %v992 = vunpack.c.l.b16 %v346
      %v993 = vunpack.c.l.b16 %v347
      %v994 = vunpack.c.l.b16 %v348
      %v995 = vunpack.c.l.b16 %v349
      %v996 = vunpack.c.l.b16 %v350
      %v997 = vunpack.c.l.b16 %v351
      %v998 = vunpack.c.l.b16 %v352
      %v999 = vunpack.c.l.b16 %v353
      %v1000 = vunpack.c.l.b16 %v354
      %v1001 = vunpack.c.l.b16 %v355
      %v1002 = vpack.c.b16 %v971, %v970
      %v1003 = vpack.c.b16 %v973, %v972
      %v1004 = vpack.c.b16 %v975, %v974
      %v1005 = vpack.c.b16 %v977, %v976
      %v1006 = vpack.c.b16 %v979, %v978
      %v1007 = vpack.c.b16 %v981, %v980
      %v1008 = vpack.c.b16 %v983, %v982
      %v1009 = vpack.c.b16 %v985, %v984
      %v1010 = vpack.c.b16 %v987, %v986
      %v1011 = vpack.c.b16 %v989, %v988
      %v1012 = vpack.c.b16 %v991, %v990
      %v1013 = vpack.c.b16 %v993, %v992
      %v1014 = vpack.c.b16 %v995, %v994
      %v1015 = vpack.c.b16 %v997, %v996
      %v1016 = vpack.c.b16 %v999, %v998
      %v1017 = vpack.c.b16 %v1001, %v1000
      %1018 = vrot.lane.b32.xlu0 %v1002, 24
      %v1019 = vpop.permute.xlu0 %1018
      %1020 = vrot.lane.b32.xlu0 %v1003, 24
      %v1021 = vpop.permute.xlu0 %1020
      %1022 = vrot.lane.b32.xlu0 %v1004, 24
      %v1023 = vpop.permute.xlu0 %1022
      %1024 = vrot.lane.b32.xlu0 %v1005, 24
      %v1025 = vpop.permute.xlu0 %1024
      %1026 = vrot.lane.b32.xlu0 %v1006, 24
      %v1027 = vpop.permute.xlu0 %1026
      %1028 = vrot.lane.b32.xlu0 %v1007, 24
      %v1029 = vpop.permute.xlu0 %1028
      %1030 = vrot.lane.b32.xlu0 %v1008, 24
      %v1031 = vpop.permute.xlu0 %1030
      %1032 = vrot.lane.b32.xlu0 %v1009, 24
      %v1033 = vpop.permute.xlu0 %1032
      %1034 = vrot.lane.b32.xlu0 %v1010, 24
      %v1035 = vpop.permute.xlu0 %1034
      %1036 = vrot.lane.b32.xlu0 %v1011, 24
      %v1037 = vpop.permute.xlu0 %1036
      %1038 = vrot.lane.b32.xlu0 %v1012, 24
      %v1039 = vpop.permute.xlu0 %1038
      %1040 = vrot.lane.b32.xlu0 %v1013, 24
      %v1041 = vpop.permute.xlu0 %1040
      %1042 = vrot.lane.b32.xlu0 %v1014, 24
      %v1043 = vpop.permute.xlu0 %1042
      %1044 = vrot.lane.b32.xlu0 %v1015, 24
      %v1045 = vpop.permute.xlu0 %1044
      %1046 = vrot.lane.b32.xlu0 %v1016, 24
      %v1047 = vpop.permute.xlu0 %1046
      %1048 = vrot.lane.b32.xlu0 %v1017, 24
      %v1049 = vpop.permute.xlu0 %1048
      %v1066 = vunpack.c.l.b16 %v356
      %v1067 = vunpack.c.l.b16 %v357
      %v1068 = vunpack.c.l.b16 %v358
      %v1069 = vunpack.c.l.b16 %v359
      %v1070 = vunpack.c.l.b16 %v360
      %v1071 = vunpack.c.l.b16 %v361
      %v1072 = vunpack.c.l.b16 %v362
      %v1073 = vunpack.c.l.b16 %v363
      %v1074 = vunpack.c.l.b16 %v364
      %v1075 = vunpack.c.l.b16 %v365
      %v1076 = vunpack.c.l.b16 %v366
      %v1077 = vunpack.c.l.b16 %v367
      %v1078 = vunpack.c.l.b16 %v368
      %v1079 = vunpack.c.l.b16 %v369
      %v1080 = vunpack.c.l.b16 %v370
      %v1081 = vunpack.c.l.b16 %v371
      %v1082 = vpack.c.b16 %v1066, %v1066
      %v1083 = vpack.c.b16 %v1067, %v1067
      %v1084 = vpack.c.b16 %v1068, %v1068
      %v1085 = vpack.c.b16 %v1069, %v1069
      %v1086 = vpack.c.b16 %v1070, %v1070
      %v1087 = vpack.c.b16 %v1071, %v1071
      %v1088 = vpack.c.b16 %v1072, %v1072
      %v1089 = vpack.c.b16 %v1073, %v1073
      %v1090 = vpack.c.b16 %v1074, %v1074
      %v1091 = vpack.c.b16 %v1075, %v1075
      %v1092 = vpack.c.b16 %v1076, %v1076
      %v1093 = vpack.c.b16 %v1077, %v1077
      %v1094 = vpack.c.b16 %v1078, %v1078
      %v1095 = vpack.c.b16 %v1079, %v1079
      %v1096 = vpack.c.b16 %v1080, %v1080
      %v1097 = vpack.c.b16 %v1081, %v1081
      %v1099 = vshrl.u32 %v1002, 16
      %v1101 = vshll.u32 %v1002, 16
      %v1103 = vrot.slane %v1101, 1
      %v1104 = vor.u32 %v1099, %v1103
      %v1106 = vshll.u32 %v1082, 16
      %v1108 = vrot.slane %v1106, 1
      %v1109 = vsel %vm584, %v1104, %v1108
      %v1111 = vshrl.u32 %v1003, 16
      %v1113 = vshll.u32 %v1003, 16
      %v1115 = vrot.slane %v1113, 1
      %v1116 = vor.u32 %v1111, %v1115
      %v1118 = vshll.u32 %v1083, 16
      %v1120 = vrot.slane %v1118, 1
      %v1121 = vsel %vm584, %v1116, %v1120
      %v1123 = vshrl.u32 %v1004, 16
      %v1125 = vshll.u32 %v1004, 16
      %v1127 = vrot.slane %v1125, 1
      %v1128 = vor.u32 %v1123, %v1127
      %v1130 = vshll.u32 %v1084, 16
      %v1132 = vrot.slane %v1130, 1
      %v1133 = vsel %vm584, %v1128, %v1132
      %v1135 = vshrl.u32 %v1005, 16
      %v1137 = vshll.u32 %v1005, 16
      %v1139 = vrot.slane %v1137, 1
      %v1140 = vor.u32 %v1135, %v1139
      %v1142 = vshll.u32 %v1085, 16
      %v1144 = vrot.slane %v1142, 1
      %v1145 = vsel %vm584, %v1140, %v1144
      %v1147 = vshrl.u32 %v1006, 16
      %v1149 = vshll.u32 %v1006, 16
      %v1151 = vrot.slane %v1149, 1
      %v1152 = vor.u32 %v1147, %v1151
      %v1154 = vshll.u32 %v1086, 16
      %v1156 = vrot.slane %v1154, 1
      %v1157 = vsel %vm584, %v1152, %v1156
      %v1159 = vshrl.u32 %v1007, 16
      %v1161 = vshll.u32 %v1007, 16
      %v1163 = vrot.slane %v1161, 1
      %v1164 = vor.u32 %v1159, %v1163
      %v1166 = vshll.u32 %v1087, 16
      %v1168 = vrot.slane %v1166, 1
      %v1169 = vsel %vm584, %v1164, %v1168
      %v1171 = vshrl.u32 %v1008, 16
      %v1173 = vshll.u32 %v1008, 16
      %v1175 = vrot.slane %v1173, 1
      %v1176 = vor.u32 %v1171, %v1175
      %v1178 = vshll.u32 %v1088, 16
      %v1180 = vrot.slane %v1178, 1
      %v1181 = vsel %vm584, %v1176, %v1180
      %v1183 = vshrl.u32 %v1009, 16
      %v1185 = vshll.u32 %v1009, 16
      %v1187 = vrot.slane %v1185, 1
      %v1188 = vor.u32 %v1183, %v1187
      %v1190 = vshll.u32 %v1089, 16
      %v1192 = vrot.slane %v1190, 1
      %v1193 = vsel %vm584, %v1188, %v1192
      %v1195 = vshrl.u32 %v1010, 16
      %v1197 = vshll.u32 %v1010, 16
      %v1199 = vrot.slane %v1197, 1
      %v1200 = vor.u32 %v1195, %v1199
      %v1202 = vshll.u32 %v1090, 16
      %v1204 = vrot.slane %v1202, 1
      %v1205 = vsel %vm584, %v1200, %v1204
      %v1207 = vshrl.u32 %v1011, 16
      %v1209 = vshll.u32 %v1011, 16
      %v1211 = vrot.slane %v1209, 1
      %v1212 = vor.u32 %v1207, %v1211
      %v1214 = vshll.u32 %v1091, 16
      %v1216 = vrot.slane %v1214, 1
      %v1217 = vsel %vm584, %v1212, %v1216
      %v1219 = vshrl.u32 %v1012, 16
      %v1221 = vshll.u32 %v1012, 16
      %v1223 = vrot.slane %v1221, 1
      %v1224 = vor.u32 %v1219, %v1223
      %v1226 = vshll.u32 %v1092, 16
      %v1228 = vrot.slane %v1226, 1
      %v1229 = vsel %vm584, %v1224, %v1228
      %v1231 = vshrl.u32 %v1013, 16
      %v1233 = vshll.u32 %v1013, 16
      %v1235 = vrot.slane %v1233, 1
      %v1236 = vor.u32 %v1231, %v1235
      %v1238 = vshll.u32 %v1093, 16
      %v1240 = vrot.slane %v1238, 1
      %v1241 = vsel %vm584, %v1236, %v1240
      %v1243 = vshrl.u32 %v1014, 16
      %v1245 = vshll.u32 %v1014, 16
      %v1247 = vrot.slane %v1245, 1
      %v1248 = vor.u32 %v1243, %v1247
      %v1250 = vshll.u32 %v1094, 16
      %v1252 = vrot.slane %v1250, 1
      %v1253 = vsel %vm584, %v1248, %v1252
      %v1255 = vshrl.u32 %v1015, 16
      %v1257 = vshll.u32 %v1015, 16
      %v1259 = vrot.slane %v1257, 1
      %v1260 = vor.u32 %v1255, %v1259
      %v1262 = vshll.u32 %v1095, 16
      %v1264 = vrot.slane %v1262, 1
      %v1265 = vsel %vm584, %v1260, %v1264
      %v1267 = vshrl.u32 %v1016, 16
      %v1269 = vshll.u32 %v1016, 16
      %v1271 = vrot.slane %v1269, 1
      %v1272 = vor.u32 %v1267, %v1271
      %v1274 = vshll.u32 %v1096, 16
      %v1276 = vrot.slane %v1274, 1
      %v1277 = vsel %vm584, %v1272, %v1276
      %v1279 = vshrl.u32 %v1017, 16
      %v1281 = vshll.u32 %v1017, 16
      %v1283 = vrot.slane %v1281, 1
      %v1284 = vor.u32 %v1279, %v1283
      %v1286 = vshll.u32 %v1097, 16
      %v1288 = vrot.slane %v1286, 1
      %v1289 = vsel %vm584, %v1284, %v1288
      %1290 = vrot.lane.b32.xlu0 %v1109, 32
      %v1291 = vpop.permute.xlu0 %1290
      %1292 = vrot.lane.b32.xlu0 %v1121, 32
      %v1293 = vpop.permute.xlu0 %1292
      %1294 = vrot.lane.b32.xlu0 %v1133, 32
      %v1295 = vpop.permute.xlu0 %1294
      %1296 = vrot.lane.b32.xlu0 %v1145, 32
      %v1297 = vpop.permute.xlu0 %1296
      %1298 = vrot.lane.b32.xlu0 %v1157, 32
      %v1299 = vpop.permute.xlu0 %1298
      %1300 = vrot.lane.b32.xlu0 %v1169, 32
      %v1301 = vpop.permute.xlu0 %1300
      %1302 = vrot.lane.b32.xlu0 %v1181, 32
      %v1303 = vpop.permute.xlu0 %1302
      %1304 = vrot.lane.b32.xlu0 %v1193, 32
      %v1305 = vpop.permute.xlu0 %1304
      %1306 = vrot.lane.b32.xlu0 %v1205, 32
      %v1307 = vpop.permute.xlu0 %1306
      %1308 = vrot.lane.b32.xlu0 %v1217, 32
      %v1309 = vpop.permute.xlu0 %1308
      %1310 = vrot.lane.b32.xlu0 %v1229, 32
      %v1311 = vpop.permute.xlu0 %1310
      %1312 = vrot.lane.b32.xlu0 %v1241, 32
      %v1313 = vpop.permute.xlu0 %1312
      %1314 = vrot.lane.b32.xlu0 %v1253, 32
      %v1315 = vpop.permute.xlu0 %1314
      %1316 = vrot.lane.b32.xlu0 %v1265, 32
      %v1317 = vpop.permute.xlu0 %1316
      %1318 = vrot.lane.b32.xlu0 %v1277, 32
      %v1319 = vpop.permute.xlu0 %1318
      %1320 = vrot.lane.b32.xlu0 %v1289, 32
      %v1321 = vpop.permute.xlu0 %1320
      %v1338 = vunpack.c.l.b16 %v372
      %v1339 = vunpack.c.l.b16 %v373
      %v1340 = vunpack.c.l.b16 %v374
      %v1341 = vunpack.c.l.b16 %v375
      %v1342 = vunpack.c.l.b16 %v376
      %v1343 = vunpack.c.l.b16 %v377
      %v1344 = vunpack.c.l.b16 %v378
      %v1345 = vunpack.c.l.b16 %v379
      %v1346 = vunpack.c.l.b16 %v380
      %v1347 = vunpack.c.l.b16 %v381
      %v1348 = vunpack.c.l.b16 %v382
      %v1349 = vunpack.c.l.b16 %v383
      %v1350 = vunpack.c.l.b16 %v384
      %v1351 = vunpack.c.l.b16 %v385
      %v1352 = vunpack.c.l.b16 %v386
      %v1353 = vunpack.c.l.b16 %v387
      %v1354 = vpack.c.b16 %v971, %v1338
      %v1355 = vpack.c.b16 %v973, %v1339
      %v1356 = vpack.c.b16 %v975, %v1340
      %v1357 = vpack.c.b16 %v977, %v1341
      %v1358 = vpack.c.b16 %v979, %v1342
      %v1359 = vpack.c.b16 %v981, %v1343
      %v1360 = vpack.c.b16 %v983, %v1344
      %v1361 = vpack.c.b16 %v985, %v1345
      %v1362 = vpack.c.b16 %v987, %v1346
      %v1363 = vpack.c.b16 %v989, %v1347
      %v1364 = vpack.c.b16 %v991, %v1348
      %v1365 = vpack.c.b16 %v993, %v1349
      %v1366 = vpack.c.b16 %v995, %v1350
      %v1367 = vpack.c.b16 %v997, %v1351
      %v1368 = vpack.c.b16 %v999, %v1352
      %v1369 = vpack.c.b16 %v1001, %v1353
      %v1370 = vrot.slane %v1354, 1
      %v1371 = vrot.slane %v1082, 1
      %v1372 = vsel %vm857, %v1370, %v1371
      %v1373 = vrot.slane %v1355, 1
      %v1374 = vrot.slane %v1083, 1
      %v1375 = vsel %vm857, %v1373, %v1374
      %v1376 = vrot.slane %v1356, 1
      %v1377 = vrot.slane %v1084, 1
      %v1378 = vsel %vm857, %v1376, %v1377
      %v1379 = vrot.slane %v1357, 1
      %v1380 = vrot.slane %v1085, 1
      %v1381 = vsel %vm857, %v1379, %v1380
      %v1382 = vrot.slane %v1358, 1
      %v1383 = vrot.slane %v1086, 1
      %v1384 = vsel %vm857, %v1382, %v1383
      %v1385 = vrot.slane %v1359, 1
      %v1386 = vrot.slane %v1087, 1
      %v1387 = vsel %vm857, %v1385, %v1386
      %v1388 = vrot.slane %v1360, 1
      %v1389 = vrot.slane %v1088, 1
      %v1390 = vsel %vm857, %v1388, %v1389
      %v1391 = vrot.slane %v1361, 1
      %v1392 = vrot.slane %v1089, 1
      %v1393 = vsel %vm857, %v1391, %v1392
      %v1394 = vrot.slane %v1362, 1
      %v1395 = vrot.slane %v1090, 1
      %v1396 = vsel %vm857, %v1394, %v1395
      %v1397 = vrot.slane %v1363, 1
      %v1398 = vrot.slane %v1091, 1
      %v1399 = vsel %vm857, %v1397, %v1398
      %v1400 = vrot.slane %v1364, 1
      %v1401 = vrot.slane %v1092, 1
      %v1402 = vsel %vm857, %v1400, %v1401
      %v1403 = vrot.slane %v1365, 1
      %v1404 = vrot.slane %v1093, 1
      %v1405 = vsel %vm857, %v1403, %v1404
      %v1406 = vrot.slane %v1366, 1
      %v1407 = vrot.slane %v1094, 1
      %v1408 = vsel %vm857, %v1406, %v1407
      %v1409 = vrot.slane %v1367, 1
      %v1410 = vrot.slane %v1095, 1
      %v1411 = vsel %vm857, %v1409, %v1410
      %v1412 = vrot.slane %v1368, 1
      %v1413 = vrot.slane %v1096, 1
      %v1414 = vsel %vm857, %v1412, %v1413
      %v1415 = vrot.slane %v1369, 1
      %v1416 = vrot.slane %v1097, 1
      %v1417 = vsel %vm857, %v1415, %v1416
      %1418 = vrot.lane.b32.xlu0 %v1372, 40
      %v1419 = vpop.permute.xlu0 %1418
      %1420 = vrot.lane.b32.xlu0 %v1375, 40
      %v1421 = vpop.permute.xlu0 %1420
      %1422 = vrot.lane.b32.xlu0 %v1378, 40
      %v1423 = vpop.permute.xlu0 %1422
      %1424 = vrot.lane.b32.xlu0 %v1381, 40
      %v1425 = vpop.permute.xlu0 %1424
      %1426 = vrot.lane.b32.xlu0 %v1384, 40
      %v1427 = vpop.permute.xlu0 %1426
      %1428 = vrot.lane.b32.xlu0 %v1387, 40
      %v1429 = vpop.permute.xlu0 %1428
      %1430 = vrot.lane.b32.xlu0 %v1390, 40
      %v1431 = vpop.permute.xlu0 %1430
      %1432 = vrot.lane.b32.xlu0 %v1393, 40
      %v1433 = vpop.permute.xlu0 %1432
      %1434 = vrot.lane.b32.xlu0 %v1396, 40
      %v1435 = vpop.permute.xlu0 %1434
      %1436 = vrot.lane.b32.xlu0 %v1399, 40
      %v1437 = vpop.permute.xlu0 %1436
      %1438 = vrot.lane.b32.xlu0 %v1402, 40
      %v1439 = vpop.permute.xlu0 %1438
      %1440 = vrot.lane.b32.xlu0 %v1405, 40
      %v1441 = vpop.permute.xlu0 %1440
      %1442 = vrot.lane.b32.xlu0 %v1408, 40
      %v1443 = vpop.permute.xlu0 %1442
      %1444 = vrot.lane.b32.xlu0 %v1411, 40
      %v1445 = vpop.permute.xlu0 %1444
      %1446 = vrot.lane.b32.xlu0 %v1414, 40
      %v1447 = vpop.permute.xlu0 %1446
      %1448 = vrot.lane.b32.xlu0 %v1417, 40
      %v1449 = vpop.permute.xlu0 %1448
      %v1482 = vunpack.c.l.b16 %v392
      %v1483 = vunpack.c.l.b16 %v393
      %v1484 = vunpack.c.l.b16 %v394
      %v1485 = vunpack.c.l.b16 %v395
      %v1486 = vunpack.c.l.b16 %v396
      %v1487 = vunpack.c.l.b16 %v397
      %v1488 = vunpack.c.l.b16 %v398
      %v1489 = vunpack.c.l.b16 %v399
      %v1490 = vunpack.c.l.b16 %v400
      %v1491 = vunpack.c.l.b16 %v401
      %v1492 = vunpack.c.l.b16 %v402
      %v1493 = vunpack.c.l.b16 %v403
      %v1494 = vunpack.c.l.b16 %v404
      %v1495 = vunpack.c.l.b16 %v405
      %v1496 = vunpack.c.l.b16 %v406
      %v1497 = vunpack.c.l.b16 %v407
      %v1498 = vunpack.c.l.b16 %v408
      %v1499 = vunpack.c.l.b16 %v409
      %v1500 = vunpack.c.l.b16 %v410
      %v1501 = vunpack.c.l.b16 %v411
      %v1502 = vunpack.c.l.b16 %v412
      %v1503 = vunpack.c.l.b16 %v413
      %v1504 = vunpack.c.l.b16 %v414
      %v1505 = vunpack.c.l.b16 %v415
      %v1506 = vunpack.c.l.b16 %v416
      %v1507 = vunpack.c.l.b16 %v417
      %v1508 = vunpack.c.l.b16 %v418
      %v1509 = vunpack.c.l.b16 %v419
      %v1510 = vunpack.c.l.b16 %v420
      %v1511 = vunpack.c.l.b16 %v421
      %v1512 = vunpack.c.l.b16 %v422
      %v1513 = vunpack.c.l.b16 %v423
      %v1514 = vpack.c.b16 %v1483, %v1482
      %v1515 = vpack.c.b16 %v1485, %v1484
      %v1516 = vpack.c.b16 %v1487, %v1486
      %v1517 = vpack.c.b16 %v1489, %v1488
      %v1518 = vpack.c.b16 %v1491, %v1490
      %v1519 = vpack.c.b16 %v1493, %v1492
      %v1520 = vpack.c.b16 %v1495, %v1494
      %v1521 = vpack.c.b16 %v1497, %v1496
      %v1522 = vpack.c.b16 %v1499, %v1498
      %v1523 = vpack.c.b16 %v1501, %v1500
      %v1524 = vpack.c.b16 %v1503, %v1502
      %v1525 = vpack.c.b16 %v1505, %v1504
      %v1526 = vpack.c.b16 %v1507, %v1506
      %v1527 = vpack.c.b16 %v1509, %v1508
      %v1528 = vpack.c.b16 %v1511, %v1510
      %v1529 = vpack.c.b16 %v1513, %v1512
      %1530 = vrot.lane.b32.xlu0 %v1514, 48
      %v1531 = vpop.permute.xlu0 %1530
      %1532 = vrot.lane.b32.xlu0 %v1515, 48
      %v1533 = vpop.permute.xlu0 %1532
      %1534 = vrot.lane.b32.xlu0 %v1516, 48
      %v1535 = vpop.permute.xlu0 %1534
      %1536 = vrot.lane.b32.xlu0 %v1517, 48
      %v1537 = vpop.permute.xlu0 %1536
      %1538 = vrot.lane.b32.xlu0 %v1518, 48
      %v1539 = vpop.permute.xlu0 %1538
      %1540 = vrot.lane.b32.xlu0 %v1519, 48
      %v1541 = vpop.permute.xlu0 %1540
      %1542 = vrot.lane.b32.xlu0 %v1520, 48
      %v1543 = vpop.permute.xlu0 %1542
      %1544 = vrot.lane.b32.xlu0 %v1521, 48
      %v1545 = vpop.permute.xlu0 %1544
      %1546 = vrot.lane.b32.xlu0 %v1522, 48
      %v1547 = vpop.permute.xlu0 %1546
      %1548 = vrot.lane.b32.xlu0 %v1523, 48
      %v1549 = vpop.permute.xlu0 %1548
      %1550 = vrot.lane.b32.xlu0 %v1524, 48
      %v1551 = vpop.permute.xlu0 %1550
      %1552 = vrot.lane.b32.xlu0 %v1525, 48
      %v1553 = vpop.permute.xlu0 %1552
      %1554 = vrot.lane.b32.xlu0 %v1526, 48
      %v1555 = vpop.permute.xlu0 %1554
      %1556 = vrot.lane.b32.xlu0 %v1527, 48
      %v1557 = vpop.permute.xlu0 %1556
      %1558 = vrot.lane.b32.xlu0 %v1528, 48
      %v1559 = vpop.permute.xlu0 %1558
      %1560 = vrot.lane.b32.xlu0 %v1529, 48
      %v1561 = vpop.permute.xlu0 %1560
      %v1578 = vunpack.c.l.b16 %v424
      %v1579 = vunpack.c.l.b16 %v425
      %v1580 = vunpack.c.l.b16 %v426
      %v1581 = vunpack.c.l.b16 %v427
      %v1582 = vunpack.c.l.b16 %v428
      %v1583 = vunpack.c.l.b16 %v429
      %v1584 = vunpack.c.l.b16 %v430
      %v1585 = vunpack.c.l.b16 %v431
      %v1586 = vunpack.c.l.b16 %v432
      %v1587 = vunpack.c.l.b16 %v433
      %v1588 = vunpack.c.l.b16 %v434
      %v1589 = vunpack.c.l.b16 %v435
      %v1590 = vunpack.c.l.b16 %v436
      %v1591 = vunpack.c.l.b16 %v437
      %v1592 = vunpack.c.l.b16 %v438
      %v1593 = vunpack.c.l.b16 %v439
      %v1594 = vpack.c.b16 %v1578, %v1578
      %v1595 = vpack.c.b16 %v1579, %v1579
      %v1596 = vpack.c.b16 %v1580, %v1580
      %v1597 = vpack.c.b16 %v1581, %v1581
      %v1598 = vpack.c.b16 %v1582, %v1582
      %v1599 = vpack.c.b16 %v1583, %v1583
      %v1600 = vpack.c.b16 %v1584, %v1584
      %v1601 = vpack.c.b16 %v1585, %v1585
      %v1602 = vpack.c.b16 %v1586, %v1586
      %v1603 = vpack.c.b16 %v1587, %v1587
      %v1604 = vpack.c.b16 %v1588, %v1588
      %v1605 = vpack.c.b16 %v1589, %v1589
      %v1606 = vpack.c.b16 %v1590, %v1590
      %v1607 = vpack.c.b16 %v1591, %v1591
      %v1608 = vpack.c.b16 %v1592, %v1592
      %v1609 = vpack.c.b16 %v1593, %v1593
      %v1611 = vshrl.u32 %v1514, 16
      %v1613 = vshll.u32 %v1514, 16
      %v1615 = vrot.slane %v1613, 1
      %v1616 = vor.u32 %v1611, %v1615
      %v1618 = vshll.u32 %v1594, 16
      %v1620 = vrot.slane %v1618, 1
      %v1621 = vsel %vm584, %v1616, %v1620
      %v1623 = vshrl.u32 %v1515, 16
      %v1625 = vshll.u32 %v1515, 16
      %v1627 = vrot.slane %v1625, 1
      %v1628 = vor.u32 %v1623, %v1627
      %v1630 = vshll.u32 %v1595, 16
      %v1632 = vrot.slane %v1630, 1
      %v1633 = vsel %vm584, %v1628, %v1632
      %v1635 = vshrl.u32 %v1516, 16
      %v1637 = vshll.u32 %v1516, 16
      %v1639 = vrot.slane %v1637, 1
      %v1640 = vor.u32 %v1635, %v1639
      %v1642 = vshll.u32 %v1596, 16
      %v1644 = vrot.slane %v1642, 1
      %v1645 = vsel %vm584, %v1640, %v1644
      %v1647 = vshrl.u32 %v1517, 16
      %v1649 = vshll.u32 %v1517, 16
      %v1651 = vrot.slane %v1649, 1
      %v1652 = vor.u32 %v1647, %v1651
      %v1654 = vshll.u32 %v1597, 16
      %v1656 = vrot.slane %v1654, 1
      %v1657 = vsel %vm584, %v1652, %v1656
      %v1659 = vshrl.u32 %v1518, 16
      %v1661 = vshll.u32 %v1518, 16
      %v1663 = vrot.slane %v1661, 1
      %v1664 = vor.u32 %v1659, %v1663
      %v1666 = vshll.u32 %v1598, 16
      %v1668 = vrot.slane %v1666, 1
      %v1669 = vsel %vm584, %v1664, %v1668
      %v1671 = vshrl.u32 %v1519, 16
      %v1673 = vshll.u32 %v1519, 16
      %v1675 = vrot.slane %v1673, 1
      %v1676 = vor.u32 %v1671, %v1675
      %v1678 = vshll.u32 %v1599, 16
      %v1680 = vrot.slane %v1678, 1
      %v1681 = vsel %vm584, %v1676, %v1680
      %v1683 = vshrl.u32 %v1520, 16
      %v1685 = vshll.u32 %v1520, 16
      %v1687 = vrot.slane %v1685, 1
      %v1688 = vor.u32 %v1683, %v1687
      %v1690 = vshll.u32 %v1600, 16
      %v1692 = vrot.slane %v1690, 1
      %v1693 = vsel %vm584, %v1688, %v1692
      %v1695 = vshrl.u32 %v1521, 16
      %v1697 = vshll.u32 %v1521, 16
      %v1699 = vrot.slane %v1697, 1
      %v1700 = vor.u32 %v1695, %v1699
      %v1702 = vshll.u32 %v1601, 16
      %v1704 = vrot.slane %v1702, 1
      %v1705 = vsel %vm584, %v1700, %v1704
      %v1707 = vshrl.u32 %v1522, 16
      %v1709 = vshll.u32 %v1522, 16
      %v1711 = vrot.slane %v1709, 1
      %v1712 = vor.u32 %v1707, %v1711
      %v1714 = vshll.u32 %v1602, 16
      %v1716 = vrot.slane %v1714, 1
      %v1717 = vsel %vm584, %v1712, %v1716
      %v1719 = vshrl.u32 %v1523, 16
      %v1721 = vshll.u32 %v1523, 16
      %v1723 = vrot.slane %v1721, 1
      %v1724 = vor.u32 %v1719, %v1723
      %v1726 = vshll.u32 %v1603, 16
      %v1728 = vrot.slane %v1726, 1
      %v1729 = vsel %vm584, %v1724, %v1728
      %v1731 = vshrl.u32 %v1524, 16
      %v1733 = vshll.u32 %v1524, 16
      %v1735 = vrot.slane %v1733, 1
      %v1736 = vor.u32 %v1731, %v1735
      %v1738 = vshll.u32 %v1604, 16
      %v1740 = vrot.slane %v1738, 1
      %v1741 = vsel %vm584, %v1736, %v1740
      %v1743 = vshrl.u32 %v1525, 16
      %v1745 = vshll.u32 %v1525, 16
      %v1747 = vrot.slane %v1745, 1
      %v1748 = vor.u32 %v1743, %v1747
      %v1750 = vshll.u32 %v1605, 16
      %v1752 = vrot.slane %v1750, 1
      %v1753 = vsel %vm584, %v1748, %v1752
      %v1755 = vshrl.u32 %v1526, 16
      %v1757 = vshll.u32 %v1526, 16
      %v1759 = vrot.slane %v1757, 1
      %v1760 = vor.u32 %v1755, %v1759
      %v1762 = vshll.u32 %v1606, 16
      %v1764 = vrot.slane %v1762, 1
      %v1765 = vsel %vm584, %v1760, %v1764
      %v1767 = vshrl.u32 %v1527, 16
      %v1769 = vshll.u32 %v1527, 16
      %v1771 = vrot.slane %v1769, 1
      %v1772 = vor.u32 %v1767, %v1771
      %v1774 = vshll.u32 %v1607, 16
      %v1776 = vrot.slane %v1774, 1
      %v1777 = vsel %vm584, %v1772, %v1776
      %v1779 = vshrl.u32 %v1528, 16
      %v1781 = vshll.u32 %v1528, 16
      %v1783 = vrot.slane %v1781, 1
      %v1784 = vor.u32 %v1779, %v1783
      %v1786 = vshll.u32 %v1608, 16
      %v1788 = vrot.slane %v1786, 1
      %v1789 = vsel %vm584, %v1784, %v1788
      %v1791 = vshrl.u32 %v1529, 16
      %v1793 = vshll.u32 %v1529, 16
      %v1795 = vrot.slane %v1793, 1
      %v1796 = vor.u32 %v1791, %v1795
      %v1798 = vshll.u32 %v1609, 16
      %v1800 = vrot.slane %v1798, 1
      %v1801 = vsel %vm584, %v1796, %v1800
      %1802 = vrot.lane.b32.xlu0 %v1621, 56
      %v1803 = vpop.permute.xlu0 %1802
      %1804 = vrot.lane.b32.xlu0 %v1633, 56
      %v1805 = vpop.permute.xlu0 %1804
      %1806 = vrot.lane.b32.xlu0 %v1645, 56
      %v1807 = vpop.permute.xlu0 %1806
      %1808 = vrot.lane.b32.xlu0 %v1657, 56
      %v1809 = vpop.permute.xlu0 %1808
      %1810 = vrot.lane.b32.xlu0 %v1669, 56
      %v1811 = vpop.permute.xlu0 %1810
      %1812 = vrot.lane.b32.xlu0 %v1681, 56
      %v1813 = vpop.permute.xlu0 %1812
      %1814 = vrot.lane.b32.xlu0 %v1693, 56
      %v1815 = vpop.permute.xlu0 %1814
      %1816 = vrot.lane.b32.xlu0 %v1705, 56
      %v1817 = vpop.permute.xlu0 %1816
      %1818 = vrot.lane.b32.xlu0 %v1717, 56
      %v1819 = vpop.permute.xlu0 %1818
      %1820 = vrot.lane.b32.xlu0 %v1729, 56
      %v1821 = vpop.permute.xlu0 %1820
      %1822 = vrot.lane.b32.xlu0 %v1741, 56
      %v1823 = vpop.permute.xlu0 %1822
      %1824 = vrot.lane.b32.xlu0 %v1753, 56
      %v1825 = vpop.permute.xlu0 %1824
      %1826 = vrot.lane.b32.xlu0 %v1765, 56
      %v1827 = vpop.permute.xlu0 %1826
      %1828 = vrot.lane.b32.xlu0 %v1777, 56
      %v1829 = vpop.permute.xlu0 %1828
      %1830 = vrot.lane.b32.xlu0 %v1789, 56
      %v1831 = vpop.permute.xlu0 %1830
      %1832 = vrot.lane.b32.xlu0 %v1801, 56
      %v1833 = vpop.permute.xlu0 %1832
      %v1850 = vunpack.c.l.b16 %v440
      %v1851 = vunpack.c.l.b16 %v441
      %v1852 = vunpack.c.l.b16 %v442
      %v1853 = vunpack.c.l.b16 %v443
      %v1854 = vunpack.c.l.b16 %v444
      %v1855 = vunpack.c.l.b16 %v445
      %v1856 = vunpack.c.l.b16 %v446
      %v1857 = vunpack.c.l.b16 %v447
      %v1858 = vunpack.c.l.b16 %v448
      %v1859 = vunpack.c.l.b16 %v449
      %v1860 = vunpack.c.l.b16 %v450
      %v1861 = vunpack.c.l.b16 %v451
      %v1862 = vunpack.c.l.b16 %v452
      %v1863 = vunpack.c.l.b16 %v453
      %v1864 = vunpack.c.l.b16 %v454
      %v1865 = vunpack.c.l.b16 %v455
      %v1866 = vpack.c.b16 %v1483, %v1850
      %v1867 = vpack.c.b16 %v1485, %v1851
      %v1868 = vpack.c.b16 %v1487, %v1852
      %v1869 = vpack.c.b16 %v1489, %v1853
      %v1870 = vpack.c.b16 %v1491, %v1854
      %v1871 = vpack.c.b16 %v1493, %v1855
      %v1872 = vpack.c.b16 %v1495, %v1856
      %v1873 = vpack.c.b16 %v1497, %v1857
      %v1874 = vpack.c.b16 %v1499, %v1858
      %v1875 = vpack.c.b16 %v1501, %v1859
      %v1876 = vpack.c.b16 %v1503, %v1860
      %v1877 = vpack.c.b16 %v1505, %v1861
      %v1878 = vpack.c.b16 %v1507, %v1862
      %v1879 = vpack.c.b16 %v1509, %v1863
      %v1880 = vpack.c.b16 %v1511, %v1864
      %v1881 = vpack.c.b16 %v1513, %v1865
      %v1882 = vrot.slane %v1866, 1
      %v1883 = vrot.slane %v1594, 1
      %v1884 = vsel %vm857, %v1882, %v1883
      %v1885 = vrot.slane %v1867, 1
      %v1886 = vrot.slane %v1595, 1
      %v1887 = vsel %vm857, %v1885, %v1886
      %v1888 = vrot.slane %v1868, 1
      %v1889 = vrot.slane %v1596, 1
      %v1890 = vsel %vm857, %v1888, %v1889
      %v1891 = vrot.slane %v1869, 1
      %v1892 = vrot.slane %v1597, 1
      %v1893 = vsel %vm857, %v1891, %v1892
      %v1894 = vrot.slane %v1870, 1
      %v1895 = vrot.slane %v1598, 1
      %v1896 = vsel %vm857, %v1894, %v1895
      %v1897 = vrot.slane %v1871, 1
      %v1898 = vrot.slane %v1599, 1
      %v1899 = vsel %vm857, %v1897, %v1898
      %v1900 = vrot.slane %v1872, 1
      %v1901 = vrot.slane %v1600, 1
      %v1902 = vsel %vm857, %v1900, %v1901
      %v1903 = vrot.slane %v1873, 1
      %v1904 = vrot.slane %v1601, 1
      %v1905 = vsel %vm857, %v1903, %v1904
      %v1906 = vrot.slane %v1874, 1
      %v1907 = vrot.slane %v1602, 1
      %v1908 = vsel %vm857, %v1906, %v1907
      %v1909 = vrot.slane %v1875, 1
      %v1910 = vrot.slane %v1603, 1
      %v1911 = vsel %vm857, %v1909, %v1910
      %v1912 = vrot.slane %v1876, 1
      %v1913 = vrot.slane %v1604, 1
      %v1914 = vsel %vm857, %v1912, %v1913
      %v1915 = vrot.slane %v1877, 1
      %v1916 = vrot.slane %v1605, 1
      %v1917 = vsel %vm857, %v1915, %v1916
      %v1918 = vrot.slane %v1878, 1
      %v1919 = vrot.slane %v1606, 1
      %v1920 = vsel %vm857, %v1918, %v1919
      %v1921 = vrot.slane %v1879, 1
      %v1922 = vrot.slane %v1607, 1
      %v1923 = vsel %vm857, %v1921, %v1922
      %v1924 = vrot.slane %v1880, 1
      %v1925 = vrot.slane %v1608, 1
      %v1926 = vsel %vm857, %v1924, %v1925
      %v1927 = vrot.slane %v1881, 1
      %v1928 = vrot.slane %v1609, 1
      %v1929 = vsel %vm857, %v1927, %v1928
      %1930 = vrot.lane.b32.xlu0 %v1884, 64
      %v1931 = vpop.permute.xlu0 %1930
      %1932 = vrot.lane.b32.xlu0 %v1887, 64
      %v1933 = vpop.permute.xlu0 %1932
      %1934 = vrot.lane.b32.xlu0 %v1890, 64
      %v1935 = vpop.permute.xlu0 %1934
      %1936 = vrot.lane.b32.xlu0 %v1893, 64
      %v1937 = vpop.permute.xlu0 %1936
      %1938 = vrot.lane.b32.xlu0 %v1896, 64
      %v1939 = vpop.permute.xlu0 %1938
      %1940 = vrot.lane.b32.xlu0 %v1899, 64
      %v1941 = vpop.permute.xlu0 %1940
      %1942 = vrot.lane.b32.xlu0 %v1902, 64
      %v1943 = vpop.permute.xlu0 %1942
      %1944 = vrot.lane.b32.xlu0 %v1905, 64
      %v1945 = vpop.permute.xlu0 %1944
      %1946 = vrot.lane.b32.xlu0 %v1908, 64
      %v1947 = vpop.permute.xlu0 %1946
      %1948 = vrot.lane.b32.xlu0 %v1911, 64
      %v1949 = vpop.permute.xlu0 %1948
      %1950 = vrot.lane.b32.xlu0 %v1914, 64
      %v1951 = vpop.permute.xlu0 %1950
      %1952 = vrot.lane.b32.xlu0 %v1917, 64
      %v1953 = vpop.permute.xlu0 %1952
      %1954 = vrot.lane.b32.xlu0 %v1920, 64
      %v1955 = vpop.permute.xlu0 %1954
      %1956 = vrot.lane.b32.xlu0 %v1923, 64
      %v1957 = vpop.permute.xlu0 %1956
      %1958 = vrot.lane.b32.xlu0 %v1926, 64
      %v1959 = vpop.permute.xlu0 %1958
      %1960 = vrot.lane.b32.xlu0 %v1929, 64
      %v1961 = vpop.permute.xlu0 %1960
      %vm1962 = vcmask 64512
      %v1964 = vsel %vm1962, %v520, %v778
      %v1966 = vsel %vm1962, %v521, %v780
      %v1968 = vsel %vm1962, %v522, %v782
      %v1970 = vsel %vm1962, %v523, %v784
      %v1972 = vsel %vm1962, %v524, %v786
      %v1974 = vsel %vm1962, %v525, %v788
      %v1976 = vsel %vm1962, %v526, %v790
      %v1978 = vsel %vm1962, %v527, %v792
      %v1980 = vsel %vm1962, %v528, %v794
      %v1982 = vsel %vm1962, %v529, %v796
      %v1984 = vsel %vm1962, %v530, %v798
      %v1986 = vsel %vm1962, %v531, %v800
      %v1988 = vsel %vm1962, %v532, %v802
      %v1990 = vsel %vm1962, %v533, %v804
      %v1992 = vsel %vm1962, %v534, %v806
      %v1994 = vsel %vm1962, %v535, %v808
      %vm1995 = vcmask 130048
      %v1997 = vsel %vm1995, %v1964, %v907
      %v1999 = vsel %vm1995, %v1966, %v909
      %v2001 = vsel %vm1995, %v1968, %v911
      %v2003 = vsel %vm1995, %v1970, %v913
      %v2005 = vsel %vm1995, %v1972, %v915
      %v2007 = vsel %vm1995, %v1974, %v917
      %v2009 = vsel %vm1995, %v1976, %v919
      %v2011 = vsel %vm1995, %v1978, %v921
      %v2013 = vsel %vm1995, %v1980, %v923
      %v2015 = vsel %vm1995, %v1982, %v925
      %v2017 = vsel %vm1995, %v1984, %v927
      %v2019 = vsel %vm1995, %v1986, %v929
      %v2021 = vsel %vm1995, %v1988, %v931
      %v2023 = vsel %vm1995, %v1990, %v933
      %v2025 = vsel %vm1995, %v1992, %v935
      %v2027 = vsel %vm1995, %v1994, %v937
      %vm2028 = vcmask 195584
      %v2030 = vsel %vm2028, %v1997, %v1019
      %v2032 = vsel %vm2028, %v1999, %v1021
      %v2034 = vsel %vm2028, %v2001, %v1023
      %v2036 = vsel %vm2028, %v2003, %v1025
      %v2038 = vsel %vm2028, %v2005, %v1027
      %v2040 = vsel %vm2028, %v2007, %v1029
      %v2042 = vsel %vm2028, %v2009, %v1031
      %v2044 = vsel %vm2028, %v2011, %v1033
      %v2046 = vsel %vm2028, %v2013, %v1035
      %v2048 = vsel %vm2028, %v2015, %v1037
      %v2050 = vsel %vm2028, %v2017, %v1039
      %v2052 = vsel %vm2028, %v2019, %v1041
      %v2054 = vsel %vm2028, %v2021, %v1043
      %v2056 = vsel %vm2028, %v2023, %v1045
      %v2058 = vsel %vm2028, %v2025, %v1047
      %v2060 = vsel %vm2028, %v2027, %v1049
      %vm2061 = vcmask 261120
      %v2063 = vsel %vm2061, %v2030, %v1291
      %v2065 = vsel %vm2061, %v2032, %v1293
      %v2067 = vsel %vm2061, %v2034, %v1295
      %v2069 = vsel %vm2061, %v2036, %v1297
      %v2071 = vsel %vm2061, %v2038, %v1299
      %v2073 = vsel %vm2061, %v2040, %v1301
      %v2075 = vsel %vm2061, %v2042, %v1303
      %v2077 = vsel %vm2061, %v2044, %v1305
      %v2079 = vsel %vm2061, %v2046, %v1307
      %v2081 = vsel %vm2061, %v2048, %v1309
      %v2083 = vsel %vm2061, %v2050, %v1311
      %v2085 = vsel %vm2061, %v2052, %v1313
      %v2087 = vsel %vm2061, %v2054, %v1315
      %v2089 = vsel %vm2061, %v2056, %v1317
      %v2091 = vsel %vm2061, %v2058, %v1319
      %v2093 = vsel %vm2061, %v2060, %v1321
      %vm2094 = vcmask 326656
      %v2096 = vsel %vm2094, %v2063, %v1419
      %v2098 = vsel %vm2094, %v2065, %v1421
      %v2100 = vsel %vm2094, %v2067, %v1423
      %v2102 = vsel %vm2094, %v2069, %v1425
      %v2104 = vsel %vm2094, %v2071, %v1427
      %v2106 = vsel %vm2094, %v2073, %v1429
      %v2108 = vsel %vm2094, %v2075, %v1431
      %v2110 = vsel %vm2094, %v2077, %v1433
      %v2112 = vsel %vm2094, %v2079, %v1435
      %v2114 = vsel %vm2094, %v2081, %v1437
      %v2116 = vsel %vm2094, %v2083, %v1439
      %v2118 = vsel %vm2094, %v2085, %v1441
      %v2120 = vsel %vm2094, %v2087, %v1443
      %v2122 = vsel %vm2094, %v2089, %v1445
      %v2124 = vsel %vm2094, %v2091, %v1447
      %v2126 = vsel %vm2094, %v2093, %v1449
      %vm2127 = vcmask 392192
      %v2129 = vsel %vm2127, %v2096, %v1531
      %v2131 = vsel %vm2127, %v2098, %v1533
      %v2133 = vsel %vm2127, %v2100, %v1535
      %v2135 = vsel %vm2127, %v2102, %v1537
      %v2137 = vsel %vm2127, %v2104, %v1539
      %v2139 = vsel %vm2127, %v2106, %v1541
      %v2141 = vsel %vm2127, %v2108, %v1543
      %v2143 = vsel %vm2127, %v2110, %v1545
      %v2145 = vsel %vm2127, %v2112, %v1547
      %v2147 = vsel %vm2127, %v2114, %v1549
      %v2149 = vsel %vm2127, %v2116, %v1551
      %v2151 = vsel %vm2127, %v2118, %v1553
      %v2153 = vsel %vm2127, %v2120, %v1555
      %v2155 = vsel %vm2127, %v2122, %v1557
      %v2157 = vsel %vm2127, %v2124, %v1559
      %v2159 = vsel %vm2127, %v2126, %v1561
      %vm2160 = vcmask 457728
      %v2162 = vsel %vm2160, %v2129, %v1803
      %v2164 = vsel %vm2160, %v2131, %v1805
      %v2166 = vsel %vm2160, %v2133, %v1807
      %v2168 = vsel %vm2160, %v2135, %v1809
      %v2170 = vsel %vm2160, %v2137, %v1811
      %v2172 = vsel %vm2160, %v2139, %v1813
      %v2174 = vsel %vm2160, %v2141, %v1815
      %v2176 = vsel %vm2160, %v2143, %v1817
      %v2178 = vsel %vm2160, %v2145, %v1819
      %v2180 = vsel %vm2160, %v2147, %v1821
      %v2182 = vsel %vm2160, %v2149, %v1823
      %v2184 = vsel %vm2160, %v2151, %v1825
      %v2186 = vsel %vm2160, %v2153, %v1827
      %v2188 = vsel %vm2160, %v2155, %v1829
      %v2190 = vsel %vm2160, %v2157, %v1831
      %v2192 = vsel %vm2160, %v2159, %v1833
      %vm2193 = vcmask 523264
      %v2195 = vsel %vm2193, %v2162, %v1931
      %v2197 = vsel %vm2193, %v2164, %v1933
      %v2199 = vsel %vm2193, %v2166, %v1935
      %v2201 = vsel %vm2193, %v2168, %v1937
      %v2203 = vsel %vm2193, %v2170, %v1939
      %v2205 = vsel %vm2193, %v2172, %v1941
      %v2207 = vsel %vm2193, %v2174, %v1943
      %v2209 = vsel %vm2193, %v2176, %v1945
      %v2211 = vsel %vm2193, %v2178, %v1947
      %v2213 = vsel %vm2193, %v2180, %v1949
      %v2215 = vsel %vm2193, %v2182, %v1951
      %v2217 = vsel %vm2193, %v2184, %v1953
      %v2219 = vsel %vm2193, %v2186, %v1955
      %v2221 = vsel %vm2193, %v2188, %v1957
      %v2223 = vsel %vm2193, %v2190, %v1959
      %v2225 = vsel %vm2193, %v2192, %v1961
      %v2226 = vld [vmem:[%s1] sm:$0xf]
      %v2227 = vld [vmem:[%s1 + $0x4] sm:$0xf]
      %v2228 = vld [vmem:[%s1 + $0x8] sm:$0xf]
      %v2229 = vld [vmem:[%s1 + $0xc] sm:$0xf]
      %v2230 = vld [vmem:[%s1 + $0x10] sm:$0xf]
      %v2231 = vld [vmem:[%s1 + $0x14] sm:$0xf]
      %v2232 = vld [vmem:[%s1 + $0x18] sm:$0xf]
      %v2233 = vld [vmem:[%s1 + $0x1c] sm:$0xf]
      %v2234 = vld [vmem:[%s1 + $0x20] sm:$0xf]
      %v2244 = vunpack.c.l.b16 %v2226
      %v2245 = vunpack.c.l.b16 %v2227
      %v2246 = vunpack.c.l.b16 %v2228
      %v2247 = vunpack.c.l.b16 %v2229
      %v2248 = vunpack.c.l.b16 %v2230
      %v2249 = vunpack.c.l.b16 %v2231
      %v2250 = vunpack.c.l.b16 %v2232
      %v2251 = vunpack.c.l.b16 %v2233
      %v2252 = vunpack.c.l.b16 %v2234
      %v2253 = vpack.c.b16 %v2245, %v2244
      %v2254 = vpack.c.b16 %v2247, %v2246
      %v2255 = vpack.c.b16 %v2249, %v2248
      %v2256 = vpack.c.b16 %v2251, %v2250
      %v2257 = vpack.c.b16 %v2252, %v2252
      %vm2262 = vcmask 588800
      %v2263 = vsel %vm2262, %v2195, 0
      %v2265 = vsel %vm2262, %v2197, 0
      %v2267 = vsel %vm2262, %v2199, 0
      %v2269 = vsel %vm2262, %v2201, 0
      %v2271 = vsel %vm2262, %v2203, 0
      %v2273 = vsel %vm2262, %v2205, 0
      %v2275 = vsel %vm2262, %v2207, 0
      %v2277 = vsel %vm2262, %v2209, 0
      %v2279 = vsel %vm2262, %v2211, 0
      %v2281 = vsel %vm2262, %v2213, 0
      %v2283 = vsel %vm2262, %v2215, 0
      %v2285 = vsel %vm2262, %v2217, 0
      %v2287 = vsel %vm2262, %v2219, 0
      %v2289 = vsel %vm2262, %v2221, 0
      %v2291 = vsel %vm2262, %v2223, 0
      %v2293 = vsel %vm2262, %v2225, 0
      %vm2295 = vcmask 1043456
      %v2297 = vsel %vm2295, %v2257, 0
      %2299 = vmatprep.subr.bf16.mxu0 0
      %2300 = vmatpush1.bf16.msra.mxu0 0
      %2301 = vmatprep.subr.bf16.mxu0 0
      %2302 = vmatpush1.bf16.msra.mxu0 0
      %2303 = vmatprep.subr.bf16.mxu0 0
      %2304 = vmatpush1.bf16.msra.mxu0 0
      %2305 = vmatprep.subr.bf16.mxu0 0
      %2306 = vmatpush1.bf16.msra.mxu0 %v2297
      %2307 = vmatprep.subr.bf16.mxu0 0
      %2308 = vmatpush1.bf16.msra.mxu0 %v2256
      %2309 = vmatprep.subr.bf16.mxu0 0
      %2310 = vmatpush1.bf16.msra.mxu0 %v2255
      %2311 = vmatprep.subr.bf16.mxu0 0
      %2312 = vmatpush1.bf16.msra.mxu0 %v2254
      %2313 = vmatprep.subr.bf16.mxu0 0
      %2314 = vmatpush1.bf16.msra.mxu0 %v2253
      %2315 = vmatprep.subr.bf16.mxu0 0
      %2316 = vmatpush2.bf16.msra.mxu0 0
      %2317 = vmatprep.subr.bf16.mxu0 0
      %2318 = vmatpush2.bf16.msra.mxu0 0
      %2319 = vmatprep.subr.bf16.mxu0 0
      %2320 = vmatpush2.bf16.msra.mxu0 0
      %2321 = vmatprep.subr.bf16.mxu0 0
      %2322 = vmatpush2.bf16.msra.mxu0 0
      %2323 = vmatprep.subr.bf16.mxu0 0
      %2324 = vmatpush2.bf16.msra.mxu0 0
      %2325 = vmatprep.subr.bf16.mxu0 0
      %2326 = vmatpush2.bf16.msra.mxu0 0
      %2327 = vmatprep.subr.bf16.mxu0 0
      %2328 = vmatpush2.bf16.msra.mxu0 0
      %2329 = vmatprep.subr.bf16.mxu0 0
      %2330 = vmatpush2.bf16.msra.mxu0 0
      %2331 = vmatprep.mubr.bf16.mxu0 0
      %2332 = vmatmul.mubr.bf16.gmra.mxu0 %v2263
      %v2333 = vpop.f32.mrf.mxu0
      %v2334 = vadd.f32 0.0, %v2333
      %v2335 = vpop.f32.mrf.mxu0
      %v2336 = vpop.f32.mrf.mxu0
      %v2337 = vadd.f32 0.0, %v2336
      %v2338 = vpop.f32.mrf.mxu0
      %2339 = vmatprep.mubr.bf16.mxu0 0
      %2340 = vmatmul.mubr.bf16.gmra.mxu0 %v2265
      %v2341 = vpop.f32.mrf.mxu0
      %v2342 = vadd.f32 0.0, %v2341
      %v2343 = vpop.f32.mrf.mxu0
      %v2344 = vpop.f32.mrf.mxu0
      %v2345 = vadd.f32 0.0, %v2344
      %v2346 = vpop.f32.mrf.mxu0
      %2347 = vmatprep.mubr.bf16.mxu0 0
      %2348 = vmatmul.mubr.bf16.gmra.mxu0 %v2267
      %v2349 = vpop.f32.mrf.mxu0
      %v2350 = vadd.f32 0.0, %v2349
      %v2351 = vpop.f32.mrf.mxu0
      %v2352 = vpop.f32.mrf.mxu0
      %v2353 = vadd.f32 0.0, %v2352
      %v2354 = vpop.f32.mrf.mxu0
      %2355 = vmatprep.mubr.bf16.mxu0 0
      %2356 = vmatmul.mubr.bf16.gmra.mxu0 %v2269
      %v2357 = vpop.f32.mrf.mxu0
      %v2358 = vadd.f32 0.0, %v2357
      %v2359 = vpop.f32.mrf.mxu0
      %v2360 = vpop.f32.mrf.mxu0
      %v2361 = vadd.f32 0.0, %v2360
      %v2362 = vpop.f32.mrf.mxu0
      %2363 = vmatprep.mubr.bf16.mxu0 0
      %2364 = vmatmul.mubr.bf16.gmra.mxu0 %v2271
      %v2365 = vpop.f32.mrf.mxu0
      %v2366 = vadd.f32 0.0, %v2365
      %v2367 = vpop.f32.mrf.mxu0
      %v2368 = vpop.f32.mrf.mxu0
      %v2369 = vadd.f32 0.0, %v2368
      %v2370 = vpop.f32.mrf.mxu0
      %2371 = vmatprep.mubr.bf16.mxu0 0
      %2372 = vmatmul.mubr.bf16.gmra.mxu0 %v2273
      %v2373 = vpop.f32.mrf.mxu0
      %v2374 = vadd.f32 0.0, %v2373
      %v2375 = vpop.f32.mrf.mxu0
      %v2376 = vpop.f32.mrf.mxu0
      %v2377 = vadd.f32 0.0, %v2376
      %v2378 = vpop.f32.mrf.mxu0
      %2379 = vmatprep.mubr.bf16.mxu0 0
      %2380 = vmatmul.mubr.bf16.gmra.mxu0 %v2275
      %v2381 = vpop.f32.mrf.mxu0
      %v2382 = vadd.f32 0.0, %v2381
      %v2383 = vpop.f32.mrf.mxu0
      %v2384 = vpop.f32.mrf.mxu0
      %v2385 = vadd.f32 0.0, %v2384
      %v2386 = vpop.f32.mrf.mxu0
      %2387 = vmatprep.mubr.bf16.mxu0 0
      %2388 = vmatmul.mubr.bf16.gmra.mxu0 %v2277
      %v2389 = vpop.f32.mrf.mxu0
      %v2390 = vadd.f32 0.0, %v2389
      %v2391 = vpop.f32.mrf.mxu0
      %v2392 = vpop.f32.mrf.mxu0
      %v2393 = vadd.f32 0.0, %v2392
      %v2394 = vpop.f32.mrf.mxu0
      %2395 = vmatprep.mubr.bf16.mxu0 0
      %2396 = vmatmul.mubr.bf16.gmra.mxu0 %v2279
      %v2397 = vpop.f32.mrf.mxu0
      %v2398 = vadd.f32 0.0, %v2397
      %v2399 = vpop.f32.mrf.mxu0
      %v2400 = vpop.f32.mrf.mxu0
      %v2401 = vadd.f32 0.0, %v2400
      %v2402 = vpop.f32.mrf.mxu0
      %2403 = vmatprep.mubr.bf16.mxu0 0
      %2404 = vmatmul.mubr.bf16.gmra.mxu0 %v2281
      %v2405 = vpop.f32.mrf.mxu0
      %v2406 = vadd.f32 0.0, %v2405
      %v2407 = vpop.f32.mrf.mxu0
      %v2408 = vpop.f32.mrf.mxu0
      %v2409 = vadd.f32 0.0, %v2408
      %v2410 = vpop.f32.mrf.mxu0
      %2411 = vmatprep.mubr.bf16.mxu0 0
      %2412 = vmatmul.mubr.bf16.gmra.mxu0 %v2283
      %v2413 = vpop.f32.mrf.mxu0
      %v2414 = vadd.f32 0.0, %v2413
      %v2415 = vpop.f32.mrf.mxu0
      %v2416 = vpop.f32.mrf.mxu0
      %v2417 = vadd.f32 0.0, %v2416
      %v2418 = vpop.f32.mrf.mxu0
      %2419 = vmatprep.mubr.bf16.mxu0 0
      %2420 = vmatmul.mubr.bf16.gmra.mxu0 %v2285
      %v2421 = vpop.f32.mrf.mxu0
      %v2422 = vadd.f32 0.0, %v2421
      %v2423 = vpop.f32.mrf.mxu0
      %v2424 = vpop.f32.mrf.mxu0
      %v2425 = vadd.f32 0.0, %v2424
      %v2426 = vpop.f32.mrf.mxu0
      %2427 = vmatprep.mubr.bf16.mxu0 0
      %2428 = vmatmul.mubr.bf16.gmra.mxu0 %v2287
      %v2429 = vpop.f32.mrf.mxu0
      %v2430 = vadd.f32 0.0, %v2429
      %v2431 = vpop.f32.mrf.mxu0
      %v2432 = vpop.f32.mrf.mxu0
      %v2433 = vadd.f32 0.0, %v2432
      %v2434 = vpop.f32.mrf.mxu0
      %2435 = vmatprep.mubr.bf16.mxu0 0
      %2436 = vmatmul.mubr.bf16.gmra.mxu0 %v2289
      %v2437 = vpop.f32.mrf.mxu0
      %v2438 = vadd.f32 0.0, %v2437
      %v2439 = vpop.f32.mrf.mxu0
      %v2440 = vpop.f32.mrf.mxu0
      %v2441 = vadd.f32 0.0, %v2440
      %v2442 = vpop.f32.mrf.mxu0
      %2443 = vmatprep.mubr.bf16.mxu0 0
      %2444 = vmatmul.mubr.bf16.gmra.mxu0 %v2291
      %v2445 = vpop.f32.mrf.mxu0
      %v2446 = vadd.f32 0.0, %v2445
      %v2447 = vpop.f32.mrf.mxu0
      %v2448 = vpop.f32.mrf.mxu0
      %v2449 = vadd.f32 0.0, %v2448
      %v2450 = vpop.f32.mrf.mxu0
      %2451 = vmatprep.mubr.bf16.mxu0 0
      %2452 = vmatmul.mubr.bf16.gmra.mxu0 %v2293
      %v2453 = vpop.f32.mrf.mxu0
      %v2454 = vadd.f32 0.0, %v2453
      %v2455 = vpop.f32.mrf.mxu0
      %v2456 = vpop.f32.mrf.mxu0
      %v2457 = vadd.f32 0.0, %v2456
      %v2458 = vpop.f32.mrf.mxu0
      %2459 = vdwg.mxu0
      %v2460 = vld [vmem:[%s2] sm:$0x1]
      %v2462 = vlaneseq
      %v2463 = vshrl.u32 %v2462, 7
      %v2464 = vsub.s32 0, %v2463
      %v2465 = vrot.slane %v2460, %v2464
      %v2467 = vmul.f32 %v2334, %v2465
      %v2468 = vmul.f32 %v2337, %v2465
      %v2469 = vmul.f32 %v2342, %v2465
      %v2470 = vmul.f32 %v2345, %v2465
      %v2471 = vmul.f32 %v2350, %v2465
      %v2472 = vmul.f32 %v2353, %v2465
      %v2473 = vmul.f32 %v2358, %v2465
      %v2474 = vmul.f32 %v2361, %v2465
      %v2475 = vmul.f32 %v2366, %v2465
      %v2476 = vmul.f32 %v2369, %v2465
      %v2477 = vmul.f32 %v2374, %v2465
      %v2478 = vmul.f32 %v2377, %v2465
      %v2479 = vmul.f32 %v2382, %v2465
      %v2480 = vmul.f32 %v2385, %v2465
      %v2481 = vmul.f32 %v2390, %v2465
      %v2482 = vmul.f32 %v2393, %v2465
      %v2483 = vmul.f32 %v2398, %v2465
      %v2484 = vmul.f32 %v2401, %v2465
      %v2485 = vmul.f32 %v2406, %v2465
      %v2486 = vmul.f32 %v2409, %v2465
      %v2487 = vmul.f32 %v2414, %v2465
      %v2488 = vmul.f32 %v2417, %v2465
      %v2489 = vmul.f32 %v2422, %v2465
      %v2490 = vmul.f32 %v2425, %v2465
      %v2491 = vmul.f32 %v2430, %v2465
      %v2492 = vmul.f32 %v2433, %v2465
      %v2493 = vmul.f32 %v2438, %v2465
      %v2494 = vmul.f32 %v2441, %v2465
      %v2495 = vmul.f32 %v2446, %v2465
      %v2496 = vmul.f32 %v2449, %v2465
      %v2497 = vmul.f32 %v2454, %v2465
      %v2498 = vmul.f32 %v2457, %v2465
      %v2499 = vld [vmem:[%s3] sm:$0x1]
      %v2501 = vlaneseq
      %v2502 = vshrl.u32 %v2501, 7
      %v2503 = vsub.s32 0, %v2502
      %v2504 = vrot.slane %v2499, %v2503
      %v2506 = vadd.f32 %v2467, %v2504
      %v2507 = vadd.f32 %v2468, %v2504
      %v2508 = vadd.f32 %v2469, %v2504
      %v2509 = vadd.f32 %v2470, %v2504
      %v2510 = vadd.f32 %v2471, %v2504
      %v2511 = vadd.f32 %v2472, %v2504
      %v2512 = vadd.f32 %v2473, %v2504
      %v2513 = vadd.f32 %v2474, %v2504
      %v2514 = vadd.f32 %v2475, %v2504
      %v2515 = vadd.f32 %v2476, %v2504
      %v2516 = vadd.f32 %v2477, %v2504
      %v2517 = vadd.f32 %v2478, %v2504
      %v2518 = vadd.f32 %v2479, %v2504
      %v2519 = vadd.f32 %v2480, %v2504
      %v2520 = vadd.f32 %v2481, %v2504
      %v2521 = vadd.f32 %v2482, %v2504
      %v2522 = vadd.f32 %v2483, %v2504
      %v2523 = vadd.f32 %v2484, %v2504
      %v2524 = vadd.f32 %v2485, %v2504
      %v2525 = vadd.f32 %v2486, %v2504
      %v2526 = vadd.f32 %v2487, %v2504
      %v2527 = vadd.f32 %v2488, %v2504
      %v2528 = vadd.f32 %v2489, %v2504
      %v2529 = vadd.f32 %v2490, %v2504
      %v2530 = vadd.f32 %v2491, %v2504
      %v2531 = vadd.f32 %v2492, %v2504
      %v2532 = vadd.f32 %v2493, %v2504
      %v2533 = vadd.f32 %v2494, %v2504
      %v2534 = vadd.f32 %v2495, %v2504
      %v2535 = vadd.f32 %v2496, %v2504
      %v2536 = vadd.f32 %v2497, %v2504
      %v2537 = vadd.f32 %v2498, %v2504
      %s2538 = sld [smem:[#allocation2]]
      %vm2539 = vcmp.ge.f32.partialorder %v2506, 0.0
      %vm2540 = vcmp.ge.f32.partialorder %v2507, 0.0
      %vm2541 = vcmp.ge.f32.partialorder %v2508, 0.0
      %vm2542 = vcmp.ge.f32.partialorder %v2509, 0.0
      %vm2543 = vcmp.ge.f32.partialorder %v2510, 0.0
      %vm2544 = vcmp.ge.f32.partialorder %v2511, 0.0
      %vm2545 = vcmp.ge.f32.partialorder %v2512, 0.0
      %vm2546 = vcmp.ge.f32.partialorder %v2513, 0.0
      %vm2547 = vcmp.ge.f32.partialorder %v2514, 0.0
      %vm2548 = vcmp.ge.f32.partialorder %v2515, 0.0
      %vm2549 = vcmp.ge.f32.partialorder %v2516, 0.0
      %vm2550 = vcmp.ge.f32.partialorder %v2517, 0.0
      %vm2551 = vcmp.ge.f32.partialorder %v2518, 0.0
      %vm2552 = vcmp.ge.f32.partialorder %v2519, 0.0
      %vm2553 = vcmp.ge.f32.partialorder %v2520, 0.0
      %vm2554 = vcmp.ge.f32.partialorder %v2521, 0.0
      %vm2555 = vcmp.ge.f32.partialorder %v2522, 0.0
      %vm2556 = vcmp.ge.f32.partialorder %v2523, 0.0
      %vm2557 = vcmp.ge.f32.partialorder %v2524, 0.0
      %vm2558 = vcmp.ge.f32.partialorder %v2525, 0.0
      %vm2559 = vcmp.ge.f32.partialorder %v2526, 0.0
      %vm2560 = vcmp.ge.f32.partialorder %v2527, 0.0
      %vm2561 = vcmp.ge.f32.partialorder %v2528, 0.0
      %vm2562 = vcmp.ge.f32.partialorder %v2529, 0.0
      %vm2563 = vcmp.ge.f32.partialorder %v2530, 0.0
      %vm2564 = vcmp.ge.f32.partialorder %v2531, 0.0
      %vm2565 = vcmp.ge.f32.partialorder %v2532, 0.0
      %vm2566 = vcmp.ge.f32.partialorder %v2533, 0.0
      %vm2567 = vcmp.ge.f32.partialorder %v2534, 0.0
      %vm2568 = vcmp.ge.f32.partialorder %v2535, 0.0
      %vm2569 = vcmp.ge.f32.partialorder %v2536, 0.0
      %vm2570 = vcmp.ge.f32.partialorder %v2537, 0.0
      %v2571 = vstv %s2538
      %v2572 = vmul.f32 %v2571, %v2506
      %v2573 = vmul.f32 %v2571, %v2507
      %v2574 = vmul.f32 %v2571, %v2508
      %v2575 = vmul.f32 %v2571, %v2509
      %v2576 = vmul.f32 %v2571, %v2510
      %v2577 = vmul.f32 %v2571, %v2511
      %v2578 = vmul.f32 %v2571, %v2512
      %v2579 = vmul.f32 %v2571, %v2513
      %v2580 = vmul.f32 %v2571, %v2514
      %v2581 = vmul.f32 %v2571, %v2515
      %v2582 = vmul.f32 %v2571, %v2516
      %v2583 = vmul.f32 %v2571, %v2517
      %v2584 = vmul.f32 %v2571, %v2518
      %v2585 = vmul.f32 %v2571, %v2519
      %v2586 = vmul.f32 %v2571, %v2520
      %v2587 = vmul.f32 %v2571, %v2521
      %v2588 = vmul.f32 %v2571, %v2522
      %v2589 = vmul.f32 %v2571, %v2523
      %v2590 = vmul.f32 %v2571, %v2524
      %v2591 = vmul.f32 %v2571, %v2525
      %v2592 = vmul.f32 %v2571, %v2526
      %v2593 = vmul.f32 %v2571, %v2527
      %v2594 = vmul.f32 %v2571, %v2528
      %v2595 = vmul.f32 %v2571, %v2529
      %v2596 = vmul.f32 %v2571, %v2530
      %v2597 = vmul.f32 %v2571, %v2531
      %v2598 = vmul.f32 %v2571, %v2532
      %v2599 = vmul.f32 %v2571, %v2533
      %v2600 = vmul.f32 %v2571, %v2534
      %v2601 = vmul.f32 %v2571, %v2535
      %v2602 = vmul.f32 %v2571, %v2536
      %v2603 = vmul.f32 %v2571, %v2537
      %v2604 = vsel %vm2539, %v2506, %v2572
      %v2605 = vsel %vm2540, %v2507, %v2573
      %v2606 = vsel %vm2541, %v2508, %v2574
      %v2607 = vsel %vm2542, %v2509, %v2575
      %v2608 = vsel %vm2543, %v2510, %v2576
      %v2609 = vsel %vm2544, %v2511, %v2577
      %v2610 = vsel %vm2545, %v2512, %v2578
      %v2611 = vsel %vm2546, %v2513, %v2579
      %v2612 = vsel %vm2547, %v2514, %v2580
      %v2613 = vsel %vm2548, %v2515, %v2581
      %v2614 = vsel %vm2549, %v2516, %v2582
      %v2615 = vsel %vm2550, %v2517, %v2583
      %v2616 = vsel %vm2551, %v2518, %v2584
      %v2617 = vsel %vm2552, %v2519, %v2585
      %v2618 = vsel %vm2553, %v2520, %v2586
      %v2619 = vsel %vm2554, %v2521, %v2587
      %v2620 = vsel %vm2555, %v2522, %v2588
      %v2621 = vsel %vm2556, %v2523, %v2589
      %v2622 = vsel %vm2557, %v2524, %v2590
      %v2623 = vsel %vm2558, %v2525, %v2591
      %v2624 = vsel %vm2559, %v2526, %v2592
      %v2625 = vsel %vm2560, %v2527, %v2593
      %v2626 = vsel %vm2561, %v2528, %v2594
      %v2627 = vsel %vm2562, %v2529, %v2595
      %v2628 = vsel %vm2563, %v2530, %v2596
      %v2629 = vsel %vm2564, %v2531, %v2597
      %v2630 = vsel %vm2565, %v2532, %v2598
      %v2631 = vsel %vm2566, %v2533, %v2599
      %v2632 = vsel %vm2567, %v2534, %v2600
      %v2633 = vsel %vm2568, %v2535, %v2601
      %v2634 = vsel %vm2569, %v2536, %v2602
      %v2635 = vsel %vm2570, %v2537, %v2603
      %v2636 = vpack.c.bf16 %v2605, %v2604
      %v2637 = vpack.c.bf16 %v2607, %v2606
      %v2638 = vpack.c.bf16 %v2609, %v2608
      %v2639 = vpack.c.bf16 %v2611, %v2610
      %v2640 = vpack.c.bf16 %v2613, %v2612
      %v2641 = vpack.c.bf16 %v2615, %v2614
      %v2642 = vpack.c.bf16 %v2617, %v2616
      %v2643 = vpack.c.bf16 %v2619, %v2618
      %v2644 = vpack.c.bf16 %v2621, %v2620
      %v2645 = vpack.c.bf16 %v2623, %v2622
      %v2646 = vpack.c.bf16 %v2625, %v2624
      %v2647 = vpack.c.bf16 %v2627, %v2626
      %v2648 = vpack.c.bf16 %v2629, %v2628
      %v2649 = vpack.c.bf16 %v2631, %v2630
      %v2650 = vpack.c.bf16 %v2633, %v2632
      %v2651 = vpack.c.bf16 %v2635, %v2634
      %v2668 = vunpack.c.l.b16 %v2636
      %v2669 = vunpack.c.h.b16 %v2636
      %v2670 = vunpack.c.l.b16 %v2637
      %v2671 = vunpack.c.h.b16 %v2637
      %v2672 = vunpack.c.l.b16 %v2638
      %v2673 = vunpack.c.h.b16 %v2638
      %v2674 = vunpack.c.l.b16 %v2639
      %v2675 = vunpack.c.h.b16 %v2639
      %v2676 = vunpack.c.l.b16 %v2640
      %v2677 = vunpack.c.h.b16 %v2640
      %v2678 = vunpack.c.l.b16 %v2641
      %v2679 = vunpack.c.h.b16 %v2641
      %v2680 = vunpack.c.l.b16 %v2642
      %v2681 = vunpack.c.h.b16 %v2642
      %v2682 = vunpack.c.l.b16 %v2643
      %v2683 = vunpack.c.h.b16 %v2643
      %v2684 = vunpack.c.l.b16 %v2644
      %v2685 = vunpack.c.h.b16 %v2644
      %v2686 = vunpack.c.l.b16 %v2645
      %v2687 = vunpack.c.h.b16 %v2645
      %v2688 = vunpack.c.l.b16 %v2646
      %v2689 = vunpack.c.h.b16 %v2646
      %v2690 = vunpack.c.l.b16 %v2647
      %v2691 = vunpack.c.h.b16 %v2647
      %v2692 = vunpack.c.l.b16 %v2648
      %v2693 = vunpack.c.h.b16 %v2648
      %v2694 = vunpack.c.l.b16 %v2649
      %v2695 = vunpack.c.h.b16 %v2649
      %v2696 = vunpack.c.l.b16 %v2650
      %v2697 = vunpack.c.h.b16 %v2650
      %v2698 = vunpack.c.l.b16 %v2651
      %v2699 = vunpack.c.h.b16 %v2651
      %v2700 = vpack.c.b16 %v2668, %v2668
      %v2701 = vpack.c.b16 %v2669, %v2669
      %v2702 = vpack.c.b16 %v2670, %v2670
      %v2703 = vpack.c.b16 %v2671, %v2671
      %v2704 = vpack.c.b16 %v2672, %v2672
      %v2705 = vpack.c.b16 %v2673, %v2673
      %v2706 = vpack.c.b16 %v2674, %v2674
      %v2707 = vpack.c.b16 %v2675, %v2675
      %v2708 = vpack.c.b16 %v2676, %v2676
      %v2709 = vpack.c.b16 %v2677, %v2677
      %v2710 = vpack.c.b16 %v2678, %v2678
      %v2711 = vpack.c.b16 %v2679, %v2679
      %v2712 = vpack.c.b16 %v2680, %v2680
      %v2713 = vpack.c.b16 %v2681, %v2681
      %v2714 = vpack.c.b16 %v2682, %v2682
      %v2715 = vpack.c.b16 %v2683, %v2683
      %v2716 = vpack.c.b16 %v2684, %v2684
      %v2717 = vpack.c.b16 %v2685, %v2685
      %v2718 = vpack.c.b16 %v2686, %v2686
      %v2719 = vpack.c.b16 %v2687, %v2687
      %v2720 = vpack.c.b16 %v2688, %v2688
      %v2721 = vpack.c.b16 %v2689, %v2689
      %v2722 = vpack.c.b16 %v2690, %v2690
      %v2723 = vpack.c.b16 %v2691, %v2691
      %v2724 = vpack.c.b16 %v2692, %v2692
      %v2725 = vpack.c.b16 %v2693, %v2693
      %v2726 = vpack.c.b16 %v2694, %v2694
      %v2727 = vpack.c.b16 %v2695, %v2695
      %v2728 = vpack.c.b16 %v2696, %v2696
      %v2729 = vpack.c.b16 %v2697, %v2697
      %v2730 = vpack.c.b16 %v2698, %v2698
      %v2731 = vpack.c.b16 %v2699, %v2699
      %2764 = vst [vmem:[%s249] sm:$0xf] %v2700
      %2765 = vst [vmem:[%s249 + $0x4] sm:$0xf] %v2701
      %2766 = vst [vmem:[%s249 + $0x8] sm:$0xf] %v2702
      %2767 = vst [vmem:[%s249 + $0xc] sm:$0xf] %v2703
      %2768 = vst [vmem:[%s249 + $0x10] sm:$0xf] %v2704
      %2769 = vst [vmem:[%s249 + $0x14] sm:$0xf] %v2705
      %2770 = vst [vmem:[%s249 + $0x18] sm:$0xf] %v2706
      %2771 = vst [vmem:[%s249 + $0x1c] sm:$0xf] %v2707
      %2772 = vst [vmem:[%s249 + $0x20] sm:$0xf] %v2708
      %2773 = vst [vmem:[%s249 + $0x24] sm:$0xf] %v2709
      %2774 = vst [vmem:[%s249 + $0x28] sm:$0xf] %v2710
      %2775 = vst [vmem:[%s249 + $0x2c] sm:$0xf] %v2711
      %2776 = vst [vmem:[%s249 + $0x30] sm:$0xf] %v2712
      %2777 = vst [vmem:[%s249 + $0x34] sm:$0xf] %v2713
      %2778 = vst [vmem:[%s249 + $0x38] sm:$0xf] %v2714
      %2779 = vst [vmem:[%s249 + $0x3c] sm:$0xf] %v2715
      %2780 = vst [vmem:[%s249 + $0x40] sm:$0xf] %v2716
      %2781 = vst [vmem:[%s249 + $0x44] sm:$0xf] %v2717
      %2782 = vst [vmem:[%s249 + $0x48] sm:$0xf] %v2718
      %2783 = vst [vmem:[%s249 + $0x4c] sm:$0xf] %v2719
      %2784 = vst [vmem:[%s249 + $0x50] sm:$0xf] %v2720
      %2785 = vst [vmem:[%s249 + $0x54] sm:$0xf] %v2721
      %2786 = vst [vmem:[%s249 + $0x58] sm:$0xf] %v2722
      %2787 = vst [vmem:[%s249 + $0x5c] sm:$0xf] %v2723
      %2788 = vst [vmem:[%s249 + $0x60] sm:$0xf] %v2724
      %2789 = vst [vmem:[%s249 + $0x64] sm:$0xf] %v2725
      %2790 = vst [vmem:[%s249 + $0x68] sm:$0xf] %v2726
      %2791 = vst [vmem:[%s249 + $0x6c] sm:$0xf] %v2727
      %2792 = vst [vmem:[%s249 + $0x70] sm:$0xf] %v2728
      %2793 = vst [vmem:[%s249 + $0x74] sm:$0xf] %v2729
      %2794 = vst [vmem:[%s249 + $0x78] sm:$0xf] %v2730
      %2795 = vst [vmem:[%s249 + $0x7c] sm:$0xf] %v2731
      %s2796 = smul.u32 16, %s22
      %p2797 = scmp.lt.s32.totalorder %s21, 1
      %s2798 = scalar_select %p2797, %s21, 1
      %p2799 = scmp.lt.s32.totalorder %s2796, 15
      %s2800 = scalar_select %p2799, %s2796, 15
      %s2801 = smul.addr %s2800, 2
      %s2802 = smul.addr %s2798, 32
      %s2803 = sadd.s32 %s2801, %s2802
      %s2804 = smul.addr %s2803, 4
      %s2805 = scalar_lea.vmem %s5, %s2804
      // Predicated region
      $region41: #{mcc_block_forward.14} parent=39 // pred_check
        %p2806 = pneg %p159
      $region42: #{mcc_block_forward.14} parent=39 // pred_check_branch
        %2808 = sbr.rel (%p2806) target = $region44
      $region43: #{mcc_block_forward.14} parent=39 // pred_region
        %s2809 = smul.u32 16, %s22
      $region44: #{mcc_block_forward.14} parent=39 // pred_fallthru
        _
    $region40: #{mcc_block_forward.14} parent=5 // pred_fallthru
      _
    %p2810 = scmp.le.s32.totalorder 2, %s12
    // Predicated region
    $region45: #{mcc_block_forward.14} parent=5 // pred_check
      %p2811 = pneg %p2810
    $region46: #{mcc_block_forward.14} parent=5 // pred_check_branch
      %2813 = sbr.rel (%p2811) target = $region48
    $region47: #{mcc_block_forward.14} parent=5 // pred_region
      %s2814 = ssub.s32 %s12, 2
      // Predicated region
      $region49: #{mcc_block_forward.14} parent=47 // pred_check
        %p2815 = pneg %p165
      $region50: #{mcc_block_forward.14} parent=47 // pred_check_branch
        %2817 = sbr.rel (%p2815) target = $region52
      $region51: #{mcc_block_forward.14} parent=47 // pred_region
        %s2818 = smul.u32 16, %s24
        %p2819 = scmp.lt.s32.totalorder %s23, 1
        %s2820 = scalar_select %p2819, %s23, 1
        %p2821 = scmp.lt.s32.totalorder %s2818, 15
        %s2822 = scalar_select %p2821, %s2818, 15
        %s2823 = smul.addr %s2822, 2
        %s2824 = smul.addr %s2820, 32
        %s2825 = sadd.s32 %s2823, %s2824
        %s2826 = smul.addr %s2825, 4
        %s2827 = scalar_lea.vmem %s5, %s2826
      $region52: #{mcc_block_forward.14} parent=47 // pred_fallthru
        _
    $region48: #{mcc_block_forward.14} parent=5 // pred_fallthru
      _
  $region6: #{mcc_block_forward.14} parent=0 // loop_footer
    %s16 = sadd.s32 1, %s12
  $region7: #{mcc_block_forward.14} parent=0 // loop_footer_branch
    %11 = sbr.rel target = $region3
  $region8: #{mcc_block_forward.14} parent=0 // loop_exit
    _

// kernel: mcc_block_forward.15
$region0: #{mcc_block_forward.15}
  #allocation0 [shape = 'u32[]', space=smem, size = 0x4, offset = 0x4, fixed_abs, tag = 'smem constant byte address 0x4 - core index']
  #allocation1 [shape = 'u32[144,128]{1,0:T(1,128)}', space=vmem, size = 0x12000, scoped, tag = 'internal scratch']
  #allocation2 [shape = 'f32[1,1]{1,0:T(1,128)S(6)}', space=smem, size = 0x200, scoped, tag = 'scoped memory for mcc_block_forward.15']
  %s0 = inlined_call_operand.vmem [shape: bf16[2,18,18,128], index: 0, kind: input, shape index: {}]
  %s1 = inlined_call_operand.vmem [shape: bf16[72,128], index: 1, kind: input, shape index: {}]
  %s2 = inlined_call_operand.vmem [shape: f32[1,128], index: 2, kind: input, shape index: {}]
  %s3 = inlined_call_operand.vmem [shape: f32[1,128], index: 3, kind: input, shape index: {}]
  %s4 = inlined_call_operand.<no memory space> [shape: f32[1,1], index: 4, kind: input, shape index: {}]
  %s5 = inlined_call_operand.vmem [shape: f32[2,16,16,128], index: 5, kind: input, shape index: {}]
  %s6 = inlined_call_operand.vmem [shape: f32[2,16,16,128], index: 6, kind: output, shape index: {}]
  %s7 = sld [smem:[#allocation0]]
  $region57: #{mcc_block_forward.15} parent=0
    _
  %s9 = ssub.s32 1, %s7
  %s10 = scalar_select 0, %s9, %s7
  %11 = sst [smem:[#allocation2]] %s4
  loop: start=0, step=1, limit=4
  $region2: #{mcc_block_forward.15} parent=0 // loop_pre_header
    _
  $region3: #{mcc_block_forward.15} parent=0 // loop_header
    %s13 = sphi 0, %s17
    %p14 = scmp.ge.s32.totalorder %s13, 4
    %s20 = sphi 0, %s32
    %s21 = sphi 0, %s28
    %s22 = sphi 0, %s20
    %s23 = sphi 0, %s21
    %s24 = sphi 0, %s22
    %s25 = sphi 0, %s23
    %s35 = sphi 0, %s37
    %s38 = sphi 0, %s35
    %s39 = sphi 0, %s38
    %s55 = sphi 0, %s39
    %s59 = sphi 0, %s59
    %s61 = sphi 0, %s59
    %s62 = sphi 0, %s61
    %s76 = sphi 0, %s62
    %s80 = sphi 0, %s80
    %s82 = sphi 0, %s80
    %s83 = sphi 0, %s82
    %s97 = sphi 0, %s83
    %s101 = sphi 0, %s101
    %s103 = sphi 0, %s101
    %s104 = sphi 0, %s103
    %s118 = sphi 0, %s104
    %s122 = sphi 0, %s122
    %s124 = sphi 0, %s122
    %s125 = sphi 0, %s124
    %s139 = sphi 0, %s125
    %s147 = sphi 0, %s149
    %s150 = sphi 0, %s147
    %s151 = sphi 0, %s150
    %s167 = sphi 0, %s151
    %s175 = sphi 0, %s177
    %s178 = sphi 0, %s175
    %s179 = sphi 0, %s178
    %s195 = sphi 0, %s179
  $region4: #{mcc_block_forward.15} parent=0 // loop_header_branch
    %16 = sbr.rel (%p14) target = $region8
  $region5: #{mcc_block_forward.15} parent=0 // loop_body
    %s18 = ssub.s32 %s13, 1
    %s19 = ssub.s32 %s13, 2
    %s26 = sadd.s32 1, %s21
    %p27 = scmp.ge.s32.totalorder %s26, 1
    %s28 = scalar_select %p27, 0, %s26
    %s29 = sadd.s32 1, %s20
    %s30 = scalar_select %p27, %s29, %s20
    %p31 = scmp.ge.s32.totalorder %s30, 2
    %s32 = scalar_select %p31, 0, %s30
    %s33 = ssub.s32 %s20, %s32
    %p34 = scmp.eq.s32.totalorder %s33, 0
    %s36 = sadd.s32 %s35, 1
    %s37 = scalar_select %p34, %s35, %s36
    %p40 = pneg %p34
    %p41 = scmp.eq.s32.totalorder %s13, 1
    %p42 = por %p40, %p41
    %p43 = scmp.ne.s32.totalorder %s35, %s38
    %p44 = scmp.eq.s32.totalorder %s13, 0
    %p45 = por %p43, %p44
    %p46 = scmp.ne.s32.totalorder %s35, %s38
    %p47 = scmp.eq.s32.totalorder %s18, 1
    %p48 = por %p46, %p47
    %p49 = scmp.ne.s32.totalorder %s38, %s39
    %p50 = scmp.eq.s32.totalorder %s18, 0
    %p51 = por %p49, %p50
    %p52 = scmp.ne.s32.totalorder %s38, %s39
    %p53 = scmp.eq.s32.totalorder %s19, 1
    %p54 = por %p52, %p53
    %p56 = scmp.ne.s32.totalorder %s39, %s55
    %p57 = scmp.eq.s32.totalorder %s19, 0
    %p58 = por %p56, %p57
    %s60 = sadd.s32 %s59, 1
    %p63 = scmp.eq.s32.totalorder %s13, 1
    %p64 = scmp.ne.s32.totalorder %s59, %s61
    %p65 = scmp.eq.s32.totalorder %s13, 0
    %p66 = por %p64, %p65
    %p67 = scmp.ne.s32.totalorder %s59, %s61
    %p68 = scmp.eq.s32.totalorder %s18, 1
    %p69 = por %p67, %p68
    %p70 = scmp.ne.s32.totalorder %s61, %s62
    %p71 = scmp.eq.s32.totalorder %s18, 0
    %p72 = por %p70, %p71
    %p73 = scmp.ne.s32.totalorder %s61, %s62
    %p74 = scmp.eq.s32.totalorder %s19, 1
    %p75 = por %p73, %p74
    %p77 = scmp.ne.s32.totalorder %s62, %s76
    %p78 = scmp.eq.s32.totalorder %s19, 0
    %p79 = por %p77, %p78
    %s81 = sadd.s32 %s80, 1
    %p84 = scmp.eq.s32.totalorder %s13, 1
    %p85 = scmp.ne.s32.totalorder %s80, %s82
    %p86 = scmp.eq.s32.totalorder %s13, 0
    %p87 = por %p85, %p86
    %p88 = scmp.ne.s32.totalorder %s80, %s82
    %p89 = scmp.eq.s32.totalorder %s18, 1
    %p90 = por %p88, %p89
    %p91 = scmp.ne.s32.totalorder %s82, %s83
    %p92 = scmp.eq.s32.totalorder %s18, 0
    %p93 = por %p91, %p92
    %p94 = scmp.ne.s32.totalorder %s82, %s83
    %p95 = scmp.eq.s32.totalorder %s19, 1
    %p96 = por %p94, %p95
    %p98 = scmp.ne.s32.totalorder %s83, %s97
    %p99 = scmp.eq.s32.totalorder %s19, 0
    %p100 = por %p98, %p99
    %s102 = sadd.s32 %s101, 1
    %p105 = scmp.eq.s32.totalorder %s13, 1
    %p106 = scmp.ne.s32.totalorder %s101, %s103
    %p107 = scmp.eq.s32.totalorder %s13, 0
    %p108 = por %p106, %p107
    %p109 = scmp.ne.s32.totalorder %s101, %s103
    %p110 = scmp.eq.s32.totalorder %s18, 1
    %p111 = por %p109, %p110
    %p112 = scmp.ne.s32.totalorder %s103, %s104
    %p113 = scmp.eq.s32.totalorder %s18, 0
    %p114 = por %p112, %p113
    %p115 = scmp.ne.s32.totalorder %s103, %s104
    %p116 = scmp.eq.s32.totalorder %s19, 1
    %p117 = por %p115, %p116
    %p119 = scmp.ne.s32.totalorder %s104, %s118
    %p120 = scmp.eq.s32.totalorder %s19, 0
    %p121 = por %p119, %p120
    %s123 = sadd.s32 %s122, 1
    %p126 = scmp.eq.s32.totalorder %s13, 1
    %p127 = scmp.ne.s32.totalorder %s122, %s124
    %p128 = scmp.eq.s32.totalorder %s13, 0
    %p129 = por %p127, %p128
    %p130 = scmp.ne.s32.totalorder %s122, %s124
    %p131 = scmp.eq.s32.totalorder %s18, 1
    %p132 = por %p130, %p131
    %p133 = scmp.ne.s32.totalorder %s124, %s125
    %p134 = scmp.eq.s32.totalorder %s18, 0
    %p135 = por %p133, %p134
    %p136 = scmp.ne.s32.totalorder %s124, %s125
    %p137 = scmp.eq.s32.totalorder %s19, 1
    %p138 = por %p136, %p137
    %p140 = scmp.ne.s32.totalorder %s125, %s139
    %p141 = scmp.eq.s32.totalorder %s19, 0
    %p142 = por %p140, %p141
    %s143 = ssub.s32 %s20, %s32
    %s144 = ssub.s32 %s21, %s28
    %s145 = sor.u32 %s143, %s144
    %p146 = scmp.eq.s32.totalorder %s145, 0
    %s148 = sadd.s32 %s147, 1
    %s149 = scalar_select %p146, %s147, %s148
    %p152 = pneg %p146
    %p153 = scmp.eq.s32.totalorder %s13, 1
    %p154 = por %p152, %p153
    %p155 = scmp.ne.s32.totalorder %s147, %s150
    %p156 = scmp.eq.s32.totalorder %s13, 0
    %p157 = por %p155, %p156
    %p158 = scmp.ne.s32.totalorder %s147, %s150
    %p159 = scmp.eq.s32.totalorder %s18, 1
    %p160 = por %p158, %p159
    %p161 = scmp.ne.s32.totalorder %s150, %s151
    %p162 = scmp.eq.s32.totalorder %s18, 0
    %p163 = por %p161, %p162
    %p164 = scmp.ne.s32.totalorder %s150, %s151
    %p165 = scmp.eq.s32.totalorder %s19, 1
    %p166 = por %p164, %p165
    %p168 = scmp.ne.s32.totalorder %s151, %s167
    %p169 = scmp.eq.s32.totalorder %s19, 0
    %p170 = por %p168, %p169
    %s171 = ssub.s32 %s20, %s32
    %s172 = ssub.s32 %s21, %s28
    %s173 = sor.u32 %s171, %s172
    %p174 = scmp.eq.s32.totalorder %s173, 0
    %s176 = sadd.s32 %s175, 1
    %s177 = scalar_select %p174, %s175, %s176
    %p180 = pneg %p174
    %p181 = scmp.eq.s32.totalorder %s13, 1
    %p182 = por %p180, %p181
    %p183 = scmp.ne.s32.totalorder %s175, %s178
    %p184 = scmp.eq.s32.totalorder %s13, 0
    %p185 = por %p183, %p184
    %p186 = scmp.ne.s32.totalorder %s175, %s178
    %p187 = scmp.eq.s32.totalorder %s18, 1
    %p188 = por %p186, %p187
    %p189 = scmp.ne.s32.totalorder %s178, %s179
    %p190 = scmp.eq.s32.totalorder %s18, 0
    %p191 = por %p189, %p190
    %p192 = scmp.ne.s32.totalorder %s178, %s179
    %p193 = scmp.eq.s32.totalorder %s19, 1
    %p194 = por %p192, %p193
    %p196 = scmp.ne.s32.totalorder %s179, %s195
    %p197 = scmp.eq.s32.totalorder %s19, 0
    %p198 = por %p196, %p197
    %p199 = scmp.le.s32.totalorder 1, %s13
    %p200 = scmp.lt.s32.totalorder %s13, 3
    %p201 = pnand %p199, %p200
    %p202 = pneg %p201
    // Predicated region
    $region9: #{mcc_block_forward.15} parent=5 // pred_check
      _
    $region10: #{mcc_block_forward.15} parent=5 // pred_check_branch
      %204 = sbr.rel (%p201) target = $region12
    $region11: #{mcc_block_forward.15} parent=5 // pred_region
      %s205 = ssub.s32 %s13, 1
      // Predicated region
      $region13: #{mcc_block_forward.15} parent=11 // pred_check
        %p206 = pneg %p72
      $region14: #{mcc_block_forward.15} parent=11 // pred_check_branch
        %208 = sbr.rel (%p206) target = $region16
      $region15: #{mcc_block_forward.15} parent=11 // pred_region
        _
      $region16: #{mcc_block_forward.15} parent=11 // pred_fallthru
        _
      // Predicated region
      $region17: #{mcc_block_forward.15} parent=11 // pred_check
        %p209 = pneg %p93
      $region18: #{mcc_block_forward.15} parent=11 // pred_check_branch
        %211 = sbr.rel (%p209) target = $region20
      $region19: #{mcc_block_forward.15} parent=11 // pred_region
        _
      $region20: #{mcc_block_forward.15} parent=11 // pred_fallthru
        _
      // Predicated region
      $region21: #{mcc_block_forward.15} parent=11 // pred_check
        %p212 = pneg %p114
      $region22: #{mcc_block_forward.15} parent=11 // pred_check_branch
        %214 = sbr.rel (%p212) target = $region24
      $region23: #{mcc_block_forward.15} parent=11 // pred_region
        _
      $region24: #{mcc_block_forward.15} parent=11 // pred_fallthru
        _
      // Predicated region
      $region25: #{mcc_block_forward.15} parent=11 // pred_check
        %p215 = pneg %p135
      $region26: #{mcc_block_forward.15} parent=11 // pred_check_branch
        %217 = sbr.rel (%p215) target = $region28
      $region27: #{mcc_block_forward.15} parent=11 // pred_region
        _
      $region28: #{mcc_block_forward.15} parent=11 // pred_fallthru
        _
    $region12: #{mcc_block_forward.15} parent=5 // pred_fallthru
      _
    %p218 = scmp.lt.s32.totalorder %s13, 2
    // Predicated region
    $region29: #{mcc_block_forward.15} parent=5 // pred_check
      %p219 = pneg %p218
    $region30: #{mcc_block_forward.15} parent=5 // pred_check_branch
      %221 = sbr.rel (%p219) target = $region32
    $region31: #{mcc_block_forward.15} parent=5 // pred_region
      // Predicated region
      $region33: #{mcc_block_forward.15} parent=31 // pred_check
        %p222 = pneg %p45
      $region34: #{mcc_block_forward.15} parent=31 // pred_check_branch
        %224 = sbr.rel (%p222) target = $region36
      $region35: #{mcc_block_forward.15} parent=31 // pred_region
        %p225 = scmp.lt.s32.totalorder %s20, 1
        %s226 = scalar_select %p225, %s20, 1
        %s227 = smul.addr %s226, 54
        %s228 = smul.addr %s227, 4
        %s229 = scalar_lea.vmem %s0, %s228
      $region36: #{mcc_block_forward.15} parent=31 // pred_fallthru
        _
      // Predicated region
      $region37: #{mcc_block_forward.15} parent=31 // pred_check
        %p230 = pneg %p157
      $region38: #{mcc_block_forward.15} parent=31 // pred_check_branch
        %232 = sbr.rel (%p230) target = $region40
      $region39: #{mcc_block_forward.15} parent=31 // pred_region
        %s233 = smul.u32 16, %s21
        %p234 = scmp.lt.s32.totalorder %s20, 1
        %s235 = scalar_select %p234, %s20, 1
        %p236 = scmp.lt.s32.totalorder %s233, 15
        %s237 = scalar_select %p236, %s233, 15
        %s238 = smul.addr %s237, 2
        %s239 = smul.addr %s235, 32
        %s240 = sadd.s32 %s238, %s239
        %s241 = smul.addr %s240, 8
        %s242 = scalar_lea.vmem %s5, %s241
        %s243 = smul.u32 16, %s21
      $region40: #{mcc_block_forward.15} parent=31 // pred_fallthru
        _
    $region32: #{mcc_block_forward.15} parent=5 // pred_fallthru
      _
    %p244 = scmp.le.s32.totalorder 1, %s13
    %p245 = scmp.lt.s32.totalorder %s13, 3
    %p246 = pnand %p244, %p245
    %p247 = pneg %p246
    // Predicated region
    $region41: #{mcc_block_forward.15} parent=5 // pred_check
      _
    $region42: #{mcc_block_forward.15} parent=5 // pred_check_branch
      %249 = sbr.rel (%p246) target = $region44
    $region43: #{mcc_block_forward.15} parent=5 // pred_region
      %s250 = ssub.s32 %s13, 1
      %p251 = scmp.lt.s32.totalorder %s22, 1
      %s252 = scalar_select %p251, %s22, 1
      %s253 = smul.addr %s252, 54
      %s254 = smul.addr %s253, 4
      %s255 = scalar_lea.vmem %s0, %s254
      %p256 = pneg %p51
      %p257 = pneg %p48
      %p258 = pneg %p72
      %p259 = pneg %p69
      %p260 = pneg %p93
      %p261 = pneg %p90
      %p262 = pneg %p114
      %p263 = pneg %p111
      %p264 = pneg %p135
      %p265 = pneg %p132
      %s266 = smul.u32 16, %s23
      %p267 = scmp.lt.s32.totalorder %s22, 1
      %s268 = scalar_select %p267, %s22, 1
      %p269 = scmp.lt.s32.totalorder %s266, 15
      %s270 = scalar_select %p269, %s266, 15
      %s271 = smul.addr %s270, 2
      %s272 = smul.addr %s268, 32
      %s273 = sadd.s32 %s271, %s272
      %s274 = smul.addr %s273, 8
      %s275 = scalar_lea.vmem %s5, %s274
      %p276 = pneg %p163
      %p277 = pneg %p160
      %p278 = pneg %p191
      %p279 = pneg %p188
      %s280 = smul.u32 16, %s23
      %p281 = scmp.lt.s32.totalorder %s22, 1
      %s282 = scalar_select %p281, %s22, 1
      %p283 = scmp.lt.s32.totalorder %s280, 15
      %s284 = scalar_select %p283, %s280, 15
      %s285 = smul.addr %s284, 2
      %s286 = smul.addr %s282, 32
      %s287 = sadd.s32 %s285, %s286
      %s288 = smul.addr %s287, 8
      %s289 = scalar_lea.vmem %s6, %s288
      %p290 = scmp.lt.s32.totalorder %s22, 1
      %s291 = scalar_select %p290, %s22, 1
      %s292 = smul.addr %s291, 54
      %s293 = smul.addr %s292, 4
      %s294 = scalar_lea.vmem %s0, %s293
      %s295 = smul.u32 16, %s23
      %p296 = scmp.lt.s32.totalorder %s22, 1
      %s297 = scalar_select %p296, %s22, 1
      %p298 = scmp.lt.s32.totalorder %s295, 15
      %s299 = scalar_select %p298, %s295, 15
      %s300 = smul.addr %s299, 2
      %s301 = smul.addr %s297, 32
      %s302 = sadd.s32 %s300, %s301
      %s303 = smul.addr %s302, 8
      %s304 = scalar_lea.vmem %s5, %s303
      %s305 = smul.u32 16, %s23
      %s306 = smul.u32 16, %s23
      %p307 = scmp.lt.s32.totalorder %s22, 1
      %s308 = scalar_select %p307, %s22, 1
      %p309 = scmp.lt.s32.totalorder %s306, 15
      %s310 = scalar_select %p309, %s306, 15
      %s311 = smul.addr %s310, 2
      %s312 = smul.addr %s308, 32
      %s313 = sadd.s32 %s311, %s312
      %s314 = smul.addr %s313, 8
      %s315 = scalar_lea.vmem %s6, %s314
      %s316 = smul.u32 16, %s23
      %s318 = smul.u32 %s23, 16
      %s319 = smul.u32 %s318, 3
      %s320 = smul.addr %s319, 4
      %s321 = scalar_lea.vmem %s294, %s320
      %v322 = vld [vmem:[%s321] sm:$0xf]
      %v323 = vld [vmem:[%s321 + $0x4] sm:$0xf]
      %v324 = vld [vmem:[%s321 + $0xc] sm:$0xf]
      %v325 = vld [vmem:[%s321 + $0x10] sm:$0xf]
      %v326 = vld [vmem:[%s321 + $0x18] sm:$0xf]
      %v327 = vld [vmem:[%s321 + $0x1c] sm:$0xf]
      %v328 = vld [vmem:[%s321 + $0x24] sm:$0xf]
      %v329 = vld [vmem:[%s321 + $0x28] sm:$0xf]
      %v330 = vld [vmem:[%s321 + $0x30] sm:$0xf]
      %v331 = vld [vmem:[%s321 + $0x34] sm:$0xf]
      %v332 = vld [vmem:[%s321 + $0x3c] sm:$0xf]
      %v333 = vld [vmem:[%s321 + $0x40] sm:$0xf]
      %v334 = vld [vmem:[%s321 + $0x48] sm:$0xf]
      %v335 = vld [vmem:[%s321 + $0x4c] sm:$0xf]
      %v336 = vld [vmem:[%s321 + $0x54] sm:$0xf]
      %v337 = vld [vmem:[%s321 + $0x58] sm:$0xf]
      %v338 = vld [vmem:[%s321 + $0x60] sm:$0xf]
      %v339 = vld [vmem:[%s321 + $0x64] sm:$0xf]
      %v340 = vld [vmem:[%s321 + $0x6c] sm:$0xf]
      %v341 = vld [vmem:[%s321 + $0x70] sm:$0xf]
      %v342 = vld [vmem:[%s321 + $0x78] sm:$0xf]
      %v343 = vld [vmem:[%s321 + $0x7c] sm:$0xf]
      %v344 = vld [vmem:[%s321 + $0x84] sm:$0xf]
      %v345 = vld [vmem:[%s321 + $0x88] sm:$0xf]
      %v346 = vld [vmem:[%s321 + $0x90] sm:$0xf]
      %v347 = vld [vmem:[%s321 + $0x94] sm:$0xf]
      %v348 = vld [vmem:[%s321 + $0x9c] sm:$0xf]
      %v349 = vld [vmem:[%s321 + $0xa0] sm:$0xf]
      %v350 = vld [vmem:[%s321 + $0xa8] sm:$0xf]
      %v351 = vld [vmem:[%s321 + $0xac] sm:$0xf]
      %v352 = vld [vmem:[%s321 + $0xb4] sm:$0xf]
      %v353 = vld [vmem:[%s321 + $0xb8] sm:$0xf]
      %v354 = vld [vmem:[%s321 + $0x8] sm:$0x1]
      %v355 = vld [vmem:[%s321 + $0x14] sm:$0x1]
      %v356 = vld [vmem:[%s321 + $0x20] sm:$0x1]
      %v357 = vld [vmem:[%s321 + $0x2c] sm:$0x1]
      %v358 = vld [vmem:[%s321 + $0x38] sm:$0x1]
      %v359 = vld [vmem:[%s321 + $0x44] sm:$0x1]
      %v360 = vld [vmem:[%s321 + $0x50] sm:$0x1]
      %v361 = vld [vmem:[%s321 + $0x5c] sm:$0x1]
      %v362 = vld [vmem:[%s321 + $0x68] sm:$0x1]
      %v363 = vld [vmem:[%s321 + $0x74] sm:$0x1]
      %v364 = vld [vmem:[%s321 + $0x80] sm:$0x1]
      %v365 = vld [vmem:[%s321 + $0x8c] sm:$0x1]
      %v366 = vld [vmem:[%s321 + $0x98] sm:$0x1]
      %v367 = vld [vmem:[%s321 + $0xa4] sm:$0x1]
      %v368 = vld [vmem:[%s321 + $0xb0] sm:$0x1]
      %v369 = vld [vmem:[%s321 + $0xbc] sm:$0x1]
      %v370 = vld [vmem:[%s321] sm:$0xe]
      %v371 = vld [vmem:[%s321 + $0xc] sm:$0xe]
      %v372 = vld [vmem:[%s321 + $0x18] sm:$0xe]
      %v373 = vld [vmem:[%s321 + $0x24] sm:$0xe]
      %v374 = vld [vmem:[%s321 + $0x30] sm:$0xe]
      %v375 = vld [vmem:[%s321 + $0x3c] sm:$0xe]
      %v376 = vld [vmem:[%s321 + $0x48] sm:$0xe]
      %v377 = vld [vmem:[%s321 + $0x54] sm:$0xe]
      %v378 = vld [vmem:[%s321 + $0x60] sm:$0xe]
      %v379 = vld [vmem:[%s321 + $0x6c] sm:$0xe]
      %v380 = vld [vmem:[%s321 + $0x78] sm:$0xe]
      %v381 = vld [vmem:[%s321 + $0x84] sm:$0xe]
      %v382 = vld [vmem:[%s321 + $0x90] sm:$0xe]
      %v383 = vld [vmem:[%s321 + $0x9c] sm:$0xe]
      %v384 = vld [vmem:[%s321 + $0xa8] sm:$0xe]
      %v385 = vld [vmem:[%s321 + $0xb4] sm:$0xe]
      %s386 = sadd.s32 %s318, 1
      %s387 = smul.u32 %s386, 3
      %s388 = smul.addr %s387, 4
      %s389 = scalar_lea.vmem %s294, %s388
      %v390 = vld [vmem:[%s389] sm:$0xf]
      %v391 = vld [vmem:[%s389 + $0x4] sm:$0xf]
      %v392 = vld [vmem:[%s389 + $0xc] sm:$0xf]
      %v393 = vld [vmem:[%s389 + $0x10] sm:$0xf]
      %v394 = vld [vmem:[%s389 + $0x18] sm:$0xf]
      %v395 = vld [vmem:[%s389 + $0x1c] sm:$0xf]
      %v396 = vld [vmem:[%s389 + $0x24] sm:$0xf]
      %v397 = vld [vmem:[%s389 + $0x28] sm:$0xf]
      %v398 = vld [vmem:[%s389 + $0x30] sm:$0xf]
      %v399 = vld [vmem:[%s389 + $0x34] sm:$0xf]
      %v400 = vld [vmem:[%s389 + $0x3c] sm:$0xf]
      %v401 = vld [vmem:[%s389 + $0x40] sm:$0xf]
      %v402 = vld [vmem:[%s389 + $0x48] sm:$0xf]
      %v403 = vld [vmem:[%s389 + $0x4c] sm:$0xf]
      %v404 = vld [vmem:[%s389 + $0x54] sm:$0xf]
      %v405 = vld [vmem:[%s389 + $0x58] sm:$0xf]
      %v406 = vld [vmem:[%s389 + $0x60] sm:$0xf]
      %v407 = vld [vmem:[%s389 + $0x64] sm:$0xf]
      %v408 = vld [vmem:[%s389 + $0x6c] sm:$0xf]
      %v409 = vld [vmem:[%s389 + $0x70] sm:$0xf]
      %v410 = vld [vmem:[%s389 + $0x78] sm:$0xf]
      %v411 = vld [vmem:[%s389 + $0x7c] sm:$0xf]
      %v412 = vld [vmem:[%s389 + $0x84] sm:$0xf]
      %v413 = vld [vmem:[%s389 + $0x88] sm:$0xf]
      %v414 = vld [vmem:[%s389 + $0x90] sm:$0xf]
      %v415 = vld [vmem:[%s389 + $0x94] sm:$0xf]
      %v416 = vld [vmem:[%s389 + $0x9c] sm:$0xf]
      %v417 = vld [vmem:[%s389 + $0xa0] sm:$0xf]
      %v418 = vld [vmem:[%s389 + $0xa8] sm:$0xf]
      %v419 = vld [vmem:[%s389 + $0xac] sm:$0xf]
      %v420 = vld [vmem:[%s389 + $0xb4] sm:$0xf]
      %v421 = vld [vmem:[%s389 + $0xb8] sm:$0xf]
      %v422 = vld [vmem:[%s389 + $0x8] sm:$0x1]
      %v423 = vld [vmem:[%s389 + $0x14] sm:$0x1]
      %v424 = vld [vmem:[%s389 + $0x20] sm:$0x1]
      %v425 = vld [vmem:[%s389 + $0x2c] sm:$0x1]
      %v426 = vld [vmem:[%s389 + $0x38] sm:$0x1]
      %v427 = vld [vmem:[%s389 + $0x44] sm:$0x1]
      %v428 = vld [vmem:[%s389 + $0x50] sm:$0x1]
      %v429 = vld [vmem:[%s389 + $0x5c] sm:$0x1]
      %v430 = vld [vmem:[%s389 + $0x68] sm:$0x1]
      %v431 = vld [vmem:[%s389 + $0x74] sm:$0x1]
      %v432 = vld [vmem:[%s389 + $0x80] sm:$0x1]
      %v433 = vld [vmem:[%s389 + $0x8c] sm:$0x1]
      %v434 = vld [vmem:[%s389 + $0x98] sm:$0x1]
      %v435 = vld [vmem:[%s389 + $0xa4] sm:$0x1]
      %v436 = vld [vmem:[%s389 + $0xb0] sm:$0x1]
      %v437 = vld [vmem:[%s389 + $0xbc] sm:$0x1]
      %v438 = vld [vmem:[%s389] sm:$0xe]
      %v439 = vld [vmem:[%s389 + $0xc] sm:$0xe]
      %v440 = vld [vmem:[%s389 + $0x18] sm:$0xe]
      %v441 = vld [vmem:[%s389 + $0x24] sm:$0xe]
      %v442 = vld [vmem:[%s389 + $0x30] sm:$0xe]
      %v443 = vld [vmem:[%s389 + $0x3c] sm:$0xe]
      %v444 = vld [vmem:[%s389 + $0x48] sm:$0xe]
      %v445 = vld [vmem:[%s389 + $0x54] sm:$0xe]
      %v446 = vld [vmem:[%s389 + $0x60] sm:$0xe]
      %v447 = vld [vmem:[%s389 + $0x6c] sm:$0xe]
      %v448 = vld [vmem:[%s389 + $0x78] sm:$0xe]
      %v449 = vld [vmem:[%s389 + $0x84] sm:$0xe]
      %v450 = vld [vmem:[%s389 + $0x90] sm:$0xe]
      %v451 = vld [vmem:[%s389 + $0x9c] sm:$0xe]
      %v452 = vld [vmem:[%s389 + $0xa8] sm:$0xe]
      %v453 = vld [vmem:[%s389 + $0xb4] sm:$0xe]
      %s454 = sadd.s32 %s318, 2
      %s455 = smul.u32 %s454, 3
      %s456 = smul.addr %s455, 4
      %s457 = scalar_lea.vmem %s294, %s456
      %v458 = vld [vmem:[%s457] sm:$0xf]
      %v459 = vld [vmem:[%s457 + $0x4] sm:$0xf]
      %v460 = vld [vmem:[%s457 + $0xc] sm:$0xf]
      %v461 = vld [vmem:[%s457 + $0x10] sm:$0xf]
      %v462 = vld [vmem:[%s457 + $0x18] sm:$0xf]
      %v463 = vld [vmem:[%s457 + $0x1c] sm:$0xf]
      %v464 = vld [vmem:[%s457 + $0x24] sm:$0xf]
      %v465 = vld [vmem:[%s457 + $0x28] sm:$0xf]
      %v466 = vld [vmem:[%s457 + $0x30] sm:$0xf]
      %v467 = vld [vmem:[%s457 + $0x34] sm:$0xf]
      %v468 = vld [vmem:[%s457 + $0x3c] sm:$0xf]
      %v469 = vld [vmem:[%s457 + $0x40] sm:$0xf]
      %v470 = vld [vmem:[%s457 + $0x48] sm:$0xf]
      %v471 = vld [vmem:[%s457 + $0x4c] sm:$0xf]
      %v472 = vld [vmem:[%s457 + $0x54] sm:$0xf]
      %v473 = vld [vmem:[%s457 + $0x58] sm:$0xf]
      %v474 = vld [vmem:[%s457 + $0x60] sm:$0xf]
      %v475 = vld [vmem:[%s457 + $0x64] sm:$0xf]
      %v476 = vld [vmem:[%s457 + $0x6c] sm:$0xf]
      %v477 = vld [vmem:[%s457 + $0x70] sm:$0xf]
      %v478 = vld [vmem:[%s457 + $0x78] sm:$0xf]
      %v479 = vld [vmem:[%s457 + $0x7c] sm:$0xf]
      %v480 = vld [vmem:[%s457 + $0x84] sm:$0xf]
      %v481 = vld [vmem:[%s457 + $0x88] sm:$0xf]
      %v482 = vld [vmem:[%s457 + $0x90] sm:$0xf]
      %v483 = vld [vmem:[%s457 + $0x94] sm:$0xf]
      %v484 = vld [vmem:[%s457 + $0x9c] sm:$0xf]
      %v485 = vld [vmem:[%s457 + $0xa0] sm:$0xf]
      %v486 = vld [vmem:[%s457 + $0xa8] sm:$0xf]
      %v487 = vld [vmem:[%s457 + $0xac] sm:$0xf]
      %v488 = vld [vmem:[%s457 + $0xb4] sm:$0xf]
      %v489 = vld [vmem:[%s457 + $0xb8] sm:$0xf]
      %v490 = vld [vmem:[%s457 + $0x8] sm:$0x1]
      %v491 = vld [vmem:[%s457 + $0x14] sm:$0x1]
      %v492 = vld [vmem:[%s457 + $0x20] sm:$0x1]
      %v493 = vld [vmem:[%s457 + $0x2c] sm:$0x1]
      %v494 = vld [vmem:[%s457 + $0x38] sm:$0x1]
      %v495 = vld [vmem:[%s457 + $0x44] sm:$0x1]
      %v496 = vld [vmem:[%s457 + $0x50] sm:$0x1]
      %v497 = vld [vmem:[%s457 + $0x5c] sm:$0x1]
      %v498 = vld [vmem:[%s457 + $0x68] sm:$0x1]
      %v499 = vld [vmem:[%s457 + $0x74] sm:$0x1]
      %v500 = vld [vmem:[%s457 + $0x80] sm:$0x1]
      %v501 = vld [vmem:[%s457 + $0x8c] sm:$0x1]
      %v502 = vld [vmem:[%s457 + $0x98] sm:$0x1]
      %v503 = vld [vmem:[%s457 + $0xa4] sm:$0x1]
      %v504 = vld [vmem:[%s457 + $0xb0] sm:$0x1]
      %v505 = vld [vmem:[%s457 + $0xbc] sm:$0x1]
      %v506 = vld [vmem:[%s457] sm:$0xe]
      %v507 = vld [vmem:[%s457 + $0xc] sm:$0xe]
      %v508 = vld [vmem:[%s457 + $0x18] sm:$0xe]
      %v509 = vld [vmem:[%s457 + $0x24] sm:$0xe]
      %v510 = vld [vmem:[%s457 + $0x30] sm:$0xe]
      %v511 = vld [vmem:[%s457 + $0x3c] sm:$0xe]
      %v512 = vld [vmem:[%s457 + $0x48] sm:$0xe]
      %v513 = vld [vmem:[%s457 + $0x54] sm:$0xe]
      %v514 = vld [vmem:[%s457 + $0x60] sm:$0xe]
      %v515 = vld [vmem:[%s457 + $0x6c] sm:$0xe]
      %v516 = vld [vmem:[%s457 + $0x78] sm:$0xe]
      %v517 = vld [vmem:[%s457 + $0x84] sm:$0xe]
      %v518 = vld [vmem:[%s457 + $0x90] sm:$0xe]
      %v519 = vld [vmem:[%s457 + $0x9c] sm:$0xe]
      %v520 = vld [vmem:[%s457 + $0xa8] sm:$0xe]
      %v521 = vld [vmem:[%s457 + $0xb4] sm:$0xe]
      %v554 = vunpack.c.l.b16 %v322
      %v555 = vunpack.c.l.b16 %v323
      %v556 = vunpack.c.l.b16 %v324
      %v557 = vunpack.c.l.b16 %v325
      %v558 = vunpack.c.l.b16 %v326
      %v559 = vunpack.c.l.b16 %v327
      %v560 = vunpack.c.l.b16 %v328
      %v561 = vunpack.c.l.b16 %v329
      %v562 = vunpack.c.l.b16 %v330
      %v563 = vunpack.c.l.b16 %v331
      %v564 = vunpack.c.l.b16 %v332
      %v565 = vunpack.c.l.b16 %v333
      %v566 = vunpack.c.l.b16 %v334
      %v567 = vunpack.c.l.b16 %v335
      %v568 = vunpack.c.l.b16 %v336
      %v569 = vunpack.c.l.b16 %v337
      %v570 = vunpack.c.l.b16 %v338
      %v571 = vunpack.c.l.b16 %v339
      %v572 = vunpack.c.l.b16 %v340
      %v573 = vunpack.c.l.b16 %v341
      %v574 = vunpack.c.l.b16 %v342
      %v575 = vunpack.c.l.b16 %v343
      %v576 = vunpack.c.l.b16 %v344
      %v577 = vunpack.c.l.b16 %v345
      %v578 = vunpack.c.l.b16 %v346
      %v579 = vunpack.c.l.b16 %v347
      %v580 = vunpack.c.l.b16 %v348
      %v581 = vunpack.c.l.b16 %v349
      %v582 = vunpack.c.l.b16 %v350
      %v583 = vunpack.c.l.b16 %v351
      %v584 = vunpack.c.l.b16 %v352
      %v585 = vunpack.c.l.b16 %v353
      %v586 = vpack.c.b16 %v555, %v554
      %v587 = vpack.c.b16 %v557, %v556
      %v588 = vpack.c.b16 %v559, %v558
      %v589 = vpack.c.b16 %v561, %v560
      %v590 = vpack.c.b16 %v563, %v562
      %v591 = vpack.c.b16 %v565, %v564
      %v592 = vpack.c.b16 %v567, %v566
      %v593 = vpack.c.b16 %v569, %v568
      %v594 = vpack.c.b16 %v571, %v570
      %v595 = vpack.c.b16 %v573, %v572
      %v596 = vpack.c.b16 %v575, %v574
      %v597 = vpack.c.b16 %v577, %v576
      %v598 = vpack.c.b16 %v579, %v578
      %v599 = vpack.c.b16 %v581, %v580
      %v600 = vpack.c.b16 %v583, %v582
      %v601 = vpack.c.b16 %v585, %v584
      %v618 = vunpack.c.l.b16 %v354
      %v619 = vunpack.c.l.b16 %v355
      %v620 = vunpack.c.l.b16 %v356
      %v621 = vunpack.c.l.b16 %v357
      %v622 = vunpack.c.l.b16 %v358
      %v623 = vunpack.c.l.b16 %v359
      %v624 = vunpack.c.l.b16 %v360
      %v625 = vunpack.c.l.b16 %v361
      %v626 = vunpack.c.l.b16 %v362
      %v627 = vunpack.c.l.b16 %v363
      %v628 = vunpack.c.l.b16 %v364
      %v629 = vunpack.c.l.b16 %v365
      %v630 = vunpack.c.l.b16 %v366
      %v631 = vunpack.c.l.b16 %v367
      %v632 = vunpack.c.l.b16 %v368
      %v633 = vunpack.c.l.b16 %v369
      %v634 = vpack.c.b16 %v618, %v618
      %v635 = vpack.c.b16 %v619, %v619
      %v636 = vpack.c.b16 %v620, %v620
      %v637 = vpack.c.b16 %v621, %v621
      %v638 = vpack.c.b16 %v622, %v622
      %v639 = vpack.c.b16 %v623, %v623
      %v640 = vpack.c.b16 %v624, %v624
      %v641 = vpack.c.b16 %v625, %v625
      %v642 = vpack.c.b16 %v626, %v626
      %v643 = vpack.c.b16 %v627, %v627
      %v644 = vpack.c.b16 %v628, %v628
      %v645 = vpack.c.b16 %v629, %v629
      %v646 = vpack.c.b16 %v630, %v630
      %v647 = vpack.c.b16 %v631, %v631
      %v648 = vpack.c.b16 %v632, %v632
      %v649 = vpack.c.b16 %v633, %v633
      %vm650 = vsmask.f32 7424
      %v652 = vshrl.u32 %v586, 16
      %v654 = vshll.u32 %v586, 16
      %v656 = vrot.slane %v654, 1
      %v657 = vor.u32 %v652, %v656
      %v659 = vshll.u32 %v634, 16
      %v661 = vrot.slane %v659, 1
      %v662 = vsel %vm650, %v657, %v661
      %v664 = vshrl.u32 %v587, 16
      %v666 = vshll.u32 %v587, 16
      %v668 = vrot.slane %v666, 1
      %v669 = vor.u32 %v664, %v668
      %v671 = vshll.u32 %v635, 16
      %v673 = vrot.slane %v671, 1
      %v674 = vsel %vm650, %v669, %v673
      %v676 = vshrl.u32 %v588, 16
      %v678 = vshll.u32 %v588, 16
      %v680 = vrot.slane %v678, 1
      %v681 = vor.u32 %v676, %v680
      %v683 = vshll.u32 %v636, 16
      %v685 = vrot.slane %v683, 1
      %v686 = vsel %vm650, %v681, %v685
      %v688 = vshrl.u32 %v589, 16
      %v690 = vshll.u32 %v589, 16
      %v692 = vrot.slane %v690, 1
      %v693 = vor.u32 %v688, %v692
      %v695 = vshll.u32 %v637, 16
      %v697 = vrot.slane %v695, 1
      %v698 = vsel %vm650, %v693, %v697
      %v700 = vshrl.u32 %v590, 16
      %v702 = vshll.u32 %v590, 16
      %v704 = vrot.slane %v702, 1
      %v705 = vor.u32 %v700, %v704
      %v707 = vshll.u32 %v638, 16
      %v709 = vrot.slane %v707, 1
      %v710 = vsel %vm650, %v705, %v709
      %v712 = vshrl.u32 %v591, 16
      %v714 = vshll.u32 %v591, 16
      %v716 = vrot.slane %v714, 1
      %v717 = vor.u32 %v712, %v716
      %v719 = vshll.u32 %v639, 16
      %v721 = vrot.slane %v719, 1
      %v722 = vsel %vm650, %v717, %v721
      %v724 = vshrl.u32 %v592, 16
      %v726 = vshll.u32 %v592, 16
      %v728 = vrot.slane %v726, 1
      %v729 = vor.u32 %v724, %v728
      %v731 = vshll.u32 %v640, 16
      %v733 = vrot.slane %v731, 1
      %v734 = vsel %vm650, %v729, %v733
      %v736 = vshrl.u32 %v593, 16
      %v738 = vshll.u32 %v593, 16
      %v740 = vrot.slane %v738, 1
      %v741 = vor.u32 %v736, %v740
      %v743 = vshll.u32 %v641, 16
      %v745 = vrot.slane %v743, 1
      %v746 = vsel %vm650, %v741, %v745
      %v748 = vshrl.u32 %v594, 16
      %v750 = vshll.u32 %v594, 16
      %v752 = vrot.slane %v750, 1
      %v753 = vor.u32 %v748, %v752
      %v755 = vshll.u32 %v642, 16
      %v757 = vrot.slane %v755, 1
      %v758 = vsel %vm650, %v753, %v757
      %v760 = vshrl.u32 %v595, 16
      %v762 = vshll.u32 %v595, 16
      %v764 = vrot.slane %v762, 1
      %v765 = vor.u32 %v760, %v764
      %v767 = vshll.u32 %v643, 16
      %v769 = vrot.slane %v767, 1
      %v770 = vsel %vm650, %v765, %v769
      %v772 = vshrl.u32 %v596, 16
      %v774 = vshll.u32 %v596, 16
      %v776 = vrot.slane %v774, 1
      %v777 = vor.u32 %v772, %v776
      %v779 = vshll.u32 %v644, 16
      %v781 = vrot.slane %v779, 1
      %v782 = vsel %vm650, %v777, %v781
      %v784 = vshrl.u32 %v597, 16
      %v786 = vshll.u32 %v597, 16
      %v788 = vrot.slane %v786, 1
      %v789 = vor.u32 %v784, %v788
      %v791 = vshll.u32 %v645, 16
      %v793 = vrot.slane %v791, 1
      %v794 = vsel %vm650, %v789, %v793
      %v796 = vshrl.u32 %v598, 16
      %v798 = vshll.u32 %v598, 16
      %v800 = vrot.slane %v798, 1
      %v801 = vor.u32 %v796, %v800
      %v803 = vshll.u32 %v646, 16
      %v805 = vrot.slane %v803, 1
      %v806 = vsel %vm650, %v801, %v805
      %v808 = vshrl.u32 %v599, 16
      %v810 = vshll.u32 %v599, 16
      %v812 = vrot.slane %v810, 1
      %v813 = vor.u32 %v808, %v812
      %v815 = vshll.u32 %v647, 16
      %v817 = vrot.slane %v815, 1
      %v818 = vsel %vm650, %v813, %v817
      %v820 = vshrl.u32 %v600, 16
      %v822 = vshll.u32 %v600, 16
      %v824 = vrot.slane %v822, 1
      %v825 = vor.u32 %v820, %v824
      %v827 = vshll.u32 %v648, 16
      %v829 = vrot.slane %v827, 1
      %v830 = vsel %vm650, %v825, %v829
      %v832 = vshrl.u32 %v601, 16
      %v834 = vshll.u32 %v601, 16
      %v836 = vrot.slane %v834, 1
      %v837 = vor.u32 %v832, %v836
      %v839 = vshll.u32 %v649, 16
      %v841 = vrot.slane %v839, 1
      %v842 = vsel %vm650, %v837, %v841
      %843 = vrot.lane.b32.xlu0 %v662, 8
      %v844 = vpop.permute.xlu0 %843
      %845 = vrot.lane.b32.xlu0 %v674, 8
      %v846 = vpop.permute.xlu0 %845
      %847 = vrot.lane.b32.xlu0 %v686, 8
      %v848 = vpop.permute.xlu0 %847
      %849 = vrot.lane.b32.xlu0 %v698, 8
      %v850 = vpop.permute.xlu0 %849
      %851 = vrot.lane.b32.xlu0 %v710, 8
      %v852 = vpop.permute.xlu0 %851
      %853 = vrot.lane.b32.xlu0 %v722, 8
      %v854 = vpop.permute.xlu0 %853
      %855 = vrot.lane.b32.xlu0 %v734, 8
      %v856 = vpop.permute.xlu0 %855
      %857 = vrot.lane.b32.xlu0 %v746, 8
      %v858 = vpop.permute.xlu0 %857
      %859 = vrot.lane.b32.xlu0 %v758, 8
      %v860 = vpop.permute.xlu0 %859
      %861 = vrot.lane.b32.xlu0 %v770, 8
      %v862 = vpop.permute.xlu0 %861
      %863 = vrot.lane.b32.xlu0 %v782, 8
      %v864 = vpop.permute.xlu0 %863
      %865 = vrot.lane.b32.xlu0 %v794, 8
      %v866 = vpop.permute.xlu0 %865
      %867 = vrot.lane.b32.xlu0 %v806, 8
      %v868 = vpop.permute.xlu0 %867
      %869 = vrot.lane.b32.xlu0 %v818, 8
      %v870 = vpop.permute.xlu0 %869
      %871 = vrot.lane.b32.xlu0 %v830, 8
      %v872 = vpop.permute.xlu0 %871
      %873 = vrot.lane.b32.xlu0 %v842, 8
      %v874 = vpop.permute.xlu0 %873
      %v891 = vunpack.c.l.b16 %v370
      %v892 = vunpack.c.l.b16 %v371
      %v893 = vunpack.c.l.b16 %v372
      %v894 = vunpack.c.l.b16 %v373
      %v895 = vunpack.c.l.b16 %v374
      %v896 = vunpack.c.l.b16 %v375
      %v897 = vunpack.c.l.b16 %v376
      %v898 = vunpack.c.l.b16 %v377
      %v899 = vunpack.c.l.b16 %v378
      %v900 = vunpack.c.l.b16 %v379
      %v901 = vunpack.c.l.b16 %v380
      %v902 = vunpack.c.l.b16 %v381
      %v903 = vunpack.c.l.b16 %v382
      %v904 = vunpack.c.l.b16 %v383
      %v905 = vunpack.c.l.b16 %v384
      %v906 = vunpack.c.l.b16 %v385
      %v907 = vpack.c.b16 %v555, %v891
      %v908 = vpack.c.b16 %v557, %v892
      %v909 = vpack.c.b16 %v559, %v893
      %v910 = vpack.c.b16 %v561, %v894
      %v911 = vpack.c.b16 %v563, %v895
      %v912 = vpack.c.b16 %v565, %v896
      %v913 = vpack.c.b16 %v567, %v897
      %v914 = vpack.c.b16 %v569, %v898
      %v915 = vpack.c.b16 %v571, %v899
      %v916 = vpack.c.b16 %v573, %v900
      %v917 = vpack.c.b16 %v575, %v901
      %v918 = vpack.c.b16 %v577, %v902
      %v919 = vpack.c.b16 %v579, %v903
      %v920 = vpack.c.b16 %v581, %v904
      %v921 = vpack.c.b16 %v583, %v905
      %v922 = vpack.c.b16 %v585, %v906
      %vm923 = vcmask 1046528
      %v924 = vrot.slane %v907, 1
      %v925 = vrot.slane %v634, 1
      %v926 = vsel %vm923, %v924, %v925
      %v927 = vrot.slane %v908, 1
      %v928 = vrot.slane %v635, 1
      %v929 = vsel %vm923, %v927, %v928
      %v930 = vrot.slane %v909, 1
      %v931 = vrot.slane %v636, 1
      %v932 = vsel %vm923, %v930, %v931
      %v933 = vrot.slane %v910, 1
      %v934 = vrot.slane %v637, 1
      %v935 = vsel %vm923, %v933, %v934
      %v936 = vrot.slane %v911, 1
      %v937 = vrot.slane %v638, 1
      %v938 = vsel %vm923, %v936, %v937
      %v939 = vrot.slane %v912, 1
      %v940 = vrot.slane %v639, 1
      %v941 = vsel %vm923, %v939, %v940
      %v942 = vrot.slane %v913, 1
      %v943 = vrot.slane %v640, 1
      %v944 = vsel %vm923, %v942, %v943
      %v945 = vrot.slane %v914, 1
      %v946 = vrot.slane %v641, 1
      %v947 = vsel %vm923, %v945, %v946
      %v948 = vrot.slane %v915, 1
      %v949 = vrot.slane %v642, 1
      %v950 = vsel %vm923, %v948, %v949
      %v951 = vrot.slane %v916, 1
      %v952 = vrot.slane %v643, 1
      %v953 = vsel %vm923, %v951, %v952
      %v954 = vrot.slane %v917, 1
      %v955 = vrot.slane %v644, 1
      %v956 = vsel %vm923, %v954, %v955
      %v957 = vrot.slane %v918, 1
      %v958 = vrot.slane %v645, 1
      %v959 = vsel %vm923, %v957, %v958
      %v960 = vrot.slane %v919, 1
      %v961 = vrot.slane %v646, 1
      %v962 = vsel %vm923, %v960, %v961
      %v963 = vrot.slane %v920, 1
      %v964 = vrot.slane %v647, 1
      %v965 = vsel %vm923, %v963, %v964
      %v966 = vrot.slane %v921, 1
      %v967 = vrot.slane %v648, 1
      %v968 = vsel %vm923, %v966, %v967
      %v969 = vrot.slane %v922, 1
      %v970 = vrot.slane %v649, 1
      %v971 = vsel %vm923, %v969, %v970
      %972 = vrot.lane.b32.xlu0 %v926, 16
      %v973 = vpop.permute.xlu0 %972
      %974 = vrot.lane.b32.xlu0 %v929, 16
      %v975 = vpop.permute.xlu0 %974
      %976 = vrot.lane.b32.xlu0 %v932, 16
      %v977 = vpop.permute.xlu0 %976
      %978 = vrot.lane.b32.xlu0 %v935, 16
      %v979 = vpop.permute.xlu0 %978
      %980 = vrot.lane.b32.xlu0 %v938, 16
      %v981 = vpop.permute.xlu0 %980
      %982 = vrot.lane.b32.xlu0 %v941, 16
      %v983 = vpop.permute.xlu0 %982
      %984 = vrot.lane.b32.xlu0 %v944, 16
      %v985 = vpop.permute.xlu0 %984
      %986 = vrot.lane.b32.xlu0 %v947, 16
      %v987 = vpop.permute.xlu0 %986
      %988 = vrot.lane.b32.xlu0 %v950, 16
      %v989 = vpop.permute.xlu0 %988
      %990 = vrot.lane.b32.xlu0 %v953, 16
      %v991 = vpop.permute.xlu0 %990
      %992 = vrot.lane.b32.xlu0 %v956, 16
      %v993 = vpop.permute.xlu0 %992
      %994 = vrot.lane.b32.xlu0 %v959, 16
      %v995 = vpop.permute.xlu0 %994
      %996 = vrot.lane.b32.xlu0 %v962, 16
      %v997 = vpop.permute.xlu0 %996
      %998 = vrot.lane.b32.xlu0 %v965, 16
      %v999 = vpop.permute.xlu0 %998
      %1000 = vrot.lane.b32.xlu0 %v968, 16
      %v1001 = vpop.permute.xlu0 %1000
      %1002 = vrot.lane.b32.xlu0 %v971, 16
      %v1003 = vpop.permute.xlu0 %1002
      %v1036 = vunpack.c.l.b16 %v390
      %v1037 = vunpack.c.l.b16 %v391
      %v1038 = vunpack.c.l.b16 %v392
      %v1039 = vunpack.c.l.b16 %v393
      %v1040 = vunpack.c.l.b16 %v394
      %v1041 = vunpack.c.l.b16 %v395
      %v1042 = vunpack.c.l.b16 %v396
      %v1043 = vunpack.c.l.b16 %v397
      %v1044 = vunpack.c.l.b16 %v398
      %v1045 = vunpack.c.l.b16 %v399
      %v1046 = vunpack.c.l.b16 %v400
      %v1047 = vunpack.c.l.b16 %v401
      %v1048 = vunpack.c.l.b16 %v402
      %v1049 = vunpack.c.l.b16 %v403
      %v1050 = vunpack.c.l.b16 %v404
      %v1051 = vunpack.c.l.b16 %v405
      %v1052 = vunpack.c.l.b16 %v406
      %v1053 = vunpack.c.l.b16 %v407
      %v1054 = vunpack.c.l.b16 %v408
      %v1055 = vunpack.c.l.b16 %v409
      %v1056 = vunpack.c.l.b16 %v410
      %v1057 = vunpack.c.l.b16 %v411
      %v1058 = vunpack.c.l.b16 %v412
      %v1059 = vunpack.c.l.b16 %v413
      %v1060 = vunpack.c.l.b16 %v414
      %v1061 = vunpack.c.l.b16 %v415
      %v1062 = vunpack.c.l.b16 %v416
      %v1063 = vunpack.c.l.b16 %v417
      %v1064 = vunpack.c.l.b16 %v418
      %v1065 = vunpack.c.l.b16 %v419
      %v1066 = vunpack.c.l.b16 %v420
      %v1067 = vunpack.c.l.b16 %v421
      %v1068 = vpack.c.b16 %v1037, %v1036
      %v1069 = vpack.c.b16 %v1039, %v1038
      %v1070 = vpack.c.b16 %v1041, %v1040
      %v1071 = vpack.c.b16 %v1043, %v1042
      %v1072 = vpack.c.b16 %v1045, %v1044
      %v1073 = vpack.c.b16 %v1047, %v1046
      %v1074 = vpack.c.b16 %v1049, %v1048
      %v1075 = vpack.c.b16 %v1051, %v1050
      %v1076 = vpack.c.b16 %v1053, %v1052
      %v1077 = vpack.c.b16 %v1055, %v1054
      %v1078 = vpack.c.b16 %v1057, %v1056
      %v1079 = vpack.c.b16 %v1059, %v1058
      %v1080 = vpack.c.b16 %v1061, %v1060
      %v1081 = vpack.c.b16 %v1063, %v1062
      %v1082 = vpack.c.b16 %v1065, %v1064
      %v1083 = vpack.c.b16 %v1067, %v1066
      %1084 = vrot.lane.b32.xlu0 %v1068, 24
      %v1085 = vpop.permute.xlu0 %1084
      %1086 = vrot.lane.b32.xlu0 %v1069, 24
      %v1087 = vpop.permute.xlu0 %1086
      %1088 = vrot.lane.b32.xlu0 %v1070, 24
      %v1089 = vpop.permute.xlu0 %1088
      %1090 = vrot.lane.b32.xlu0 %v1071, 24
      %v1091 = vpop.permute.xlu0 %1090
      %1092 = vrot.lane.b32.xlu0 %v1072, 24
      %v1093 = vpop.permute.xlu0 %1092
      %1094 = vrot.lane.b32.xlu0 %v1073, 24
      %v1095 = vpop.permute.xlu0 %1094
      %1096 = vrot.lane.b32.xlu0 %v1074, 24
      %v1097 = vpop.permute.xlu0 %1096
      %1098 = vrot.lane.b32.xlu0 %v1075, 24
      %v1099 = vpop.permute.xlu0 %1098
      %1100 = vrot.lane.b32.xlu0 %v1076, 24
      %v1101 = vpop.permute.xlu0 %1100
      %1102 = vrot.lane.b32.xlu0 %v1077, 24
      %v1103 = vpop.permute.xlu0 %1102
      %1104 = vrot.lane.b32.xlu0 %v1078, 24
      %v1105 = vpop.permute.xlu0 %1104
      %1106 = vrot.lane.b32.xlu0 %v1079, 24
      %v1107 = vpop.permute.xlu0 %1106
      %1108 = vrot.lane.b32.xlu0 %v1080, 24
      %v1109 = vpop.permute.xlu0 %1108
      %1110 = vrot.lane.b32.xlu0 %v1081, 24
      %v1111 = vpop.permute.xlu0 %1110
      %1112 = vrot.lane.b32.xlu0 %v1082, 24
      %v1113 = vpop.permute.xlu0 %1112
      %1114 = vrot.lane.b32.xlu0 %v1083, 24
      %v1115 = vpop.permute.xlu0 %1114
      %v1132 = vunpack.c.l.b16 %v422
      %v1133 = vunpack.c.l.b16 %v423
      %v1134 = vunpack.c.l.b16 %v424
      %v1135 = vunpack.c.l.b16 %v425
      %v1136 = vunpack.c.l.b16 %v426
      %v1137 = vunpack.c.l.b16 %v427
      %v1138 = vunpack.c.l.b16 %v428
      %v1139 = vunpack.c.l.b16 %v429
      %v1140 = vunpack.c.l.b16 %v430
      %v1141 = vunpack.c.l.b16 %v431
      %v1142 = vunpack.c.l.b16 %v432
      %v1143 = vunpack.c.l.b16 %v433
      %v1144 = vunpack.c.l.b16 %v434
      %v1145 = vunpack.c.l.b16 %v435
      %v1146 = vunpack.c.l.b16 %v436
      %v1147 = vunpack.c.l.b16 %v437
      %v1148 = vpack.c.b16 %v1132, %v1132
      %v1149 = vpack.c.b16 %v1133, %v1133
      %v1150 = vpack.c.b16 %v1134, %v1134
      %v1151 = vpack.c.b16 %v1135, %v1135
      %v1152 = vpack.c.b16 %v1136, %v1136
      %v1153 = vpack.c.b16 %v1137, %v1137
      %v1154 = vpack.c.b16 %v1138, %v1138
      %v1155 = vpack.c.b16 %v1139, %v1139
      %v1156 = vpack.c.b16 %v1140, %v1140
      %v1157 = vpack.c.b16 %v1141, %v1141
      %v1158 = vpack.c.b16 %v1142, %v1142
      %v1159 = vpack.c.b16 %v1143, %v1143
      %v1160 = vpack.c.b16 %v1144, %v1144
      %v1161 = vpack.c.b16 %v1145, %v1145
      %v1162 = vpack.c.b16 %v1146, %v1146
      %v1163 = vpack.c.b16 %v1147, %v1147
      %v1165 = vshrl.u32 %v1068, 16
      %v1167 = vshll.u32 %v1068, 16
      %v1169 = vrot.slane %v1167, 1
      %v1170 = vor.u32 %v1165, %v1169
      %v1172 = vshll.u32 %v1148, 16
      %v1174 = vrot.slane %v1172, 1
      %v1175 = vsel %vm650, %v1170, %v1174
      %v1177 = vshrl.u32 %v1069, 16
      %v1179 = vshll.u32 %v1069, 16
      %v1181 = vrot.slane %v1179, 1
      %v1182 = vor.u32 %v1177, %v1181
      %v1184 = vshll.u32 %v1149, 16
      %v1186 = vrot.slane %v1184, 1
      %v1187 = vsel %vm650, %v1182, %v1186
      %v1189 = vshrl.u32 %v1070, 16
      %v1191 = vshll.u32 %v1070, 16
      %v1193 = vrot.slane %v1191, 1
      %v1194 = vor.u32 %v1189, %v1193
      %v1196 = vshll.u32 %v1150, 16
      %v1198 = vrot.slane %v1196, 1
      %v1199 = vsel %vm650, %v1194, %v1198
      %v1201 = vshrl.u32 %v1071, 16
      %v1203 = vshll.u32 %v1071, 16
      %v1205 = vrot.slane %v1203, 1
      %v1206 = vor.u32 %v1201, %v1205
      %v1208 = vshll.u32 %v1151, 16
      %v1210 = vrot.slane %v1208, 1
      %v1211 = vsel %vm650, %v1206, %v1210
      %v1213 = vshrl.u32 %v1072, 16
      %v1215 = vshll.u32 %v1072, 16
      %v1217 = vrot.slane %v1215, 1
      %v1218 = vor.u32 %v1213, %v1217
      %v1220 = vshll.u32 %v1152, 16
      %v1222 = vrot.slane %v1220, 1
      %v1223 = vsel %vm650, %v1218, %v1222
      %v1225 = vshrl.u32 %v1073, 16
      %v1227 = vshll.u32 %v1073, 16
      %v1229 = vrot.slane %v1227, 1
      %v1230 = vor.u32 %v1225, %v1229
      %v1232 = vshll.u32 %v1153, 16
      %v1234 = vrot.slane %v1232, 1
      %v1235 = vsel %vm650, %v1230, %v1234
      %v1237 = vshrl.u32 %v1074, 16
      %v1239 = vshll.u32 %v1074, 16
      %v1241 = vrot.slane %v1239, 1
      %v1242 = vor.u32 %v1237, %v1241
      %v1244 = vshll.u32 %v1154, 16
      %v1246 = vrot.slane %v1244, 1
      %v1247 = vsel %vm650, %v1242, %v1246
      %v1249 = vshrl.u32 %v1075, 16
      %v1251 = vshll.u32 %v1075, 16
      %v1253 = vrot.slane %v1251, 1
      %v1254 = vor.u32 %v1249, %v1253
      %v1256 = vshll.u32 %v1155, 16
      %v1258 = vrot.slane %v1256, 1
      %v1259 = vsel %vm650, %v1254, %v1258
      %v1261 = vshrl.u32 %v1076, 16
      %v1263 = vshll.u32 %v1076, 16
      %v1265 = vrot.slane %v1263, 1
      %v1266 = vor.u32 %v1261, %v1265
      %v1268 = vshll.u32 %v1156, 16
      %v1270 = vrot.slane %v1268, 1
      %v1271 = vsel %vm650, %v1266, %v1270
      %v1273 = vshrl.u32 %v1077, 16
      %v1275 = vshll.u32 %v1077, 16
      %v1277 = vrot.slane %v1275, 1
      %v1278 = vor.u32 %v1273, %v1277
      %v1280 = vshll.u32 %v1157, 16
      %v1282 = vrot.slane %v1280, 1
      %v1283 = vsel %vm650, %v1278, %v1282
      %v1285 = vshrl.u32 %v1078, 16
      %v1287 = vshll.u32 %v1078, 16
      %v1289 = vrot.slane %v1287, 1
      %v1290 = vor.u32 %v1285, %v1289
      %v1292 = vshll.u32 %v1158, 16
      %v1294 = vrot.slane %v1292, 1
      %v1295 = vsel %vm650, %v1290, %v1294
      %v1297 = vshrl.u32 %v1079, 16
      %v1299 = vshll.u32 %v1079, 16
      %v1301 = vrot.slane %v1299, 1
      %v1302 = vor.u32 %v1297, %v1301
      %v1304 = vshll.u32 %v1159, 16
      %v1306 = vrot.slane %v1304, 1
      %v1307 = vsel %vm650, %v1302, %v1306
      %v1309 = vshrl.u32 %v1080, 16
      %v1311 = vshll.u32 %v1080, 16
      %v1313 = vrot.slane %v1311, 1
      %v1314 = vor.u32 %v1309, %v1313
      %v1316 = vshll.u32 %v1160, 16
      %v1318 = vrot.slane %v1316, 1
      %v1319 = vsel %vm650, %v1314, %v1318
      %v1321 = vshrl.u32 %v1081, 16
      %v1323 = vshll.u32 %v1081, 16
      %v1325 = vrot.slane %v1323, 1
      %v1326 = vor.u32 %v1321, %v1325
      %v1328 = vshll.u32 %v1161, 16
      %v1330 = vrot.slane %v1328, 1
      %v1331 = vsel %vm650, %v1326, %v1330
      %v1333 = vshrl.u32 %v1082, 16
      %v1335 = vshll.u32 %v1082, 16
      %v1337 = vrot.slane %v1335, 1
      %v1338 = vor.u32 %v1333, %v1337
      %v1340 = vshll.u32 %v1162, 16
      %v1342 = vrot.slane %v1340, 1
      %v1343 = vsel %vm650, %v1338, %v1342
      %v1345 = vshrl.u32 %v1083, 16
      %v1347 = vshll.u32 %v1083, 16
      %v1349 = vrot.slane %v1347, 1
      %v1350 = vor.u32 %v1345, %v1349
      %v1352 = vshll.u32 %v1163, 16
      %v1354 = vrot.slane %v1352, 1
      %v1355 = vsel %vm650, %v1350, %v1354
      %1356 = vrot.lane.b32.xlu0 %v1175, 32
      %v1357 = vpop.permute.xlu0 %1356
      %1358 = vrot.lane.b32.xlu0 %v1187, 32
      %v1359 = vpop.permute.xlu0 %1358
      %1360 = vrot.lane.b32.xlu0 %v1199, 32
      %v1361 = vpop.permute.xlu0 %1360
      %1362 = vrot.lane.b32.xlu0 %v1211, 32
      %v1363 = vpop.permute.xlu0 %1362
      %1364 = vrot.lane.b32.xlu0 %v1223, 32
      %v1365 = vpop.permute.xlu0 %1364
      %1366 = vrot.lane.b32.xlu0 %v1235, 32
      %v1367 = vpop.permute.xlu0 %1366
      %1368 = vrot.lane.b32.xlu0 %v1247, 32
      %v1369 = vpop.permute.xlu0 %1368
      %1370 = vrot.lane.b32.xlu0 %v1259, 32
      %v1371 = vpop.permute.xlu0 %1370
      %1372 = vrot.lane.b32.xlu0 %v1271, 32
      %v1373 = vpop.permute.xlu0 %1372
      %1374 = vrot.lane.b32.xlu0 %v1283, 32
      %v1375 = vpop.permute.xlu0 %1374
      %1376 = vrot.lane.b32.xlu0 %v1295, 32
      %v1377 = vpop.permute.xlu0 %1376
      %1378 = vrot.lane.b32.xlu0 %v1307, 32
      %v1379 = vpop.permute.xlu0 %1378
      %1380 = vrot.lane.b32.xlu0 %v1319, 32
      %v1381 = vpop.permute.xlu0 %1380
      %1382 = vrot.lane.b32.xlu0 %v1331, 32
      %v1383 = vpop.permute.xlu0 %1382
      %1384 = vrot.lane.b32.xlu0 %v1343, 32
      %v1385 = vpop.permute.xlu0 %1384
      %1386 = vrot.lane.b32.xlu0 %v1355, 32
      %v1387 = vpop.permute.xlu0 %1386
      %v1404 = vunpack.c.l.b16 %v438
      %v1405 = vunpack.c.l.b16 %v439
      %v1406 = vunpack.c.l.b16 %v440
      %v1407 = vunpack.c.l.b16 %v441
      %v1408 = vunpack.c.l.b16 %v442
      %v1409 = vunpack.c.l.b16 %v443
      %v1410 = vunpack.c.l.b16 %v444
      %v1411 = vunpack.c.l.b16 %v445
      %v1412 = vunpack.c.l.b16 %v446
      %v1413 = vunpack.c.l.b16 %v447
      %v1414 = vunpack.c.l.b16 %v448
      %v1415 = vunpack.c.l.b16 %v449
      %v1416 = vunpack.c.l.b16 %v450
      %v1417 = vunpack.c.l.b16 %v451
      %v1418 = vunpack.c.l.b16 %v452
      %v1419 = vunpack.c.l.b16 %v453
      %v1420 = vpack.c.b16 %v1037, %v1404
      %v1421 = vpack.c.b16 %v1039, %v1405
      %v1422 = vpack.c.b16 %v1041, %v1406
      %v1423 = vpack.c.b16 %v1043, %v1407
      %v1424 = vpack.c.b16 %v1045, %v1408
      %v1425 = vpack.c.b16 %v1047, %v1409
      %v1426 = vpack.c.b16 %v1049, %v1410
      %v1427 = vpack.c.b16 %v1051, %v1411
      %v1428 = vpack.c.b16 %v1053, %v1412
      %v1429 = vpack.c.b16 %v1055, %v1413
      %v1430 = vpack.c.b16 %v1057, %v1414
      %v1431 = vpack.c.b16 %v1059, %v1415
      %v1432 = vpack.c.b16 %v1061, %v1416
      %v1433 = vpack.c.b16 %v1063, %v1417
      %v1434 = vpack.c.b16 %v1065, %v1418
      %v1435 = vpack.c.b16 %v1067, %v1419
      %v1436 = vrot.slane %v1420, 1
      %v1437 = vrot.slane %v1148, 1
      %v1438 = vsel %vm923, %v1436, %v1437
      %v1439 = vrot.slane %v1421, 1
      %v1440 = vrot.slane %v1149, 1
      %v1441 = vsel %vm923, %v1439, %v1440
      %v1442 = vrot.slane %v1422, 1
      %v1443 = vrot.slane %v1150, 1
      %v1444 = vsel %vm923, %v1442, %v1443
      %v1445 = vrot.slane %v1423, 1
      %v1446 = vrot.slane %v1151, 1
      %v1447 = vsel %vm923, %v1445, %v1446
      %v1448 = vrot.slane %v1424, 1
      %v1449 = vrot.slane %v1152, 1
      %v1450 = vsel %vm923, %v1448, %v1449
      %v1451 = vrot.slane %v1425, 1
      %v1452 = vrot.slane %v1153, 1
      %v1453 = vsel %vm923, %v1451, %v1452
      %v1454 = vrot.slane %v1426, 1
      %v1455 = vrot.slane %v1154, 1
      %v1456 = vsel %vm923, %v1454, %v1455
      %v1457 = vrot.slane %v1427, 1
      %v1458 = vrot.slane %v1155, 1
      %v1459 = vsel %vm923, %v1457, %v1458
      %v1460 = vrot.slane %v1428, 1
      %v1461 = vrot.slane %v1156, 1
      %v1462 = vsel %vm923, %v1460, %v1461
      %v1463 = vrot.slane %v1429, 1
      %v1464 = vrot.slane %v1157, 1
      %v1465 = vsel %vm923, %v1463, %v1464
      %v1466 = vrot.slane %v1430, 1
      %v1467 = vrot.slane %v1158, 1
      %v1468 = vsel %vm923, %v1466, %v1467
      %v1469 = vrot.slane %v1431, 1
      %v1470 = vrot.slane %v1159, 1
      %v1471 = vsel %vm923, %v1469, %v1470
      %v1472 = vrot.slane %v1432, 1
      %v1473 = vrot.slane %v1160, 1
      %v1474 = vsel %vm923, %v1472, %v1473
      %v1475 = vrot.slane %v1433, 1
      %v1476 = vrot.slane %v1161, 1
      %v1477 = vsel %vm923, %v1475, %v1476
      %v1478 = vrot.slane %v1434, 1
      %v1479 = vrot.slane %v1162, 1
      %v1480 = vsel %vm923, %v1478, %v1479
      %v1481 = vrot.slane %v1435, 1
      %v1482 = vrot.slane %v1163, 1
      %v1483 = vsel %vm923, %v1481, %v1482
      %1484 = vrot.lane.b32.xlu0 %v1438, 40
      %v1485 = vpop.permute.xlu0 %1484
      %1486 = vrot.lane.b32.xlu0 %v1441, 40
      %v1487 = vpop.permute.xlu0 %1486
      %1488 = vrot.lane.b32.xlu0 %v1444, 40
      %v1489 = vpop.permute.xlu0 %1488
      %1490 = vrot.lane.b32.xlu0 %v1447, 40
      %v1491 = vpop.permute.xlu0 %1490
      %1492 = vrot.lane.b32.xlu0 %v1450, 40
      %v1493 = vpop.permute.xlu0 %1492
      %1494 = vrot.lane.b32.xlu0 %v1453, 40
      %v1495 = vpop.permute.xlu0 %1494
      %1496 = vrot.lane.b32.xlu0 %v1456, 40
      %v1497 = vpop.permute.xlu0 %1496
      %1498 = vrot.lane.b32.xlu0 %v1459, 40
      %v1499 = vpop.permute.xlu0 %1498
      %1500 = vrot.lane.b32.xlu0 %v1462, 40
      %v1501 = vpop.permute.xlu0 %1500
      %1502 = vrot.lane.b32.xlu0 %v1465, 40
      %v1503 = vpop.permute.xlu0 %1502
      %1504 = vrot.lane.b32.xlu0 %v1468, 40
      %v1505 = vpop.permute.xlu0 %1504
      %1506 = vrot.lane.b32.xlu0 %v1471, 40
      %v1507 = vpop.permute.xlu0 %1506
      %1508 = vrot.lane.b32.xlu0 %v1474, 40
      %v1509 = vpop.permute.xlu0 %1508
      %1510 = vrot.lane.b32.xlu0 %v1477, 40
      %v1511 = vpop.permute.xlu0 %1510
      %1512 = vrot.lane.b32.xlu0 %v1480, 40
      %v1513 = vpop.permute.xlu0 %1512
      %1514 = vrot.lane.b32.xlu0 %v1483, 40
      %v1515 = vpop.permute.xlu0 %1514
      %v1548 = vunpack.c.l.b16 %v458
      %v1549 = vunpack.c.l.b16 %v459
      %v1550 = vunpack.c.l.b16 %v460
      %v1551 = vunpack.c.l.b16 %v461
      %v1552 = vunpack.c.l.b16 %v462
      %v1553 = vunpack.c.l.b16 %v463
      %v1554 = vunpack.c.l.b16 %v464
      %v1555 = vunpack.c.l.b16 %v465
      %v1556 = vunpack.c.l.b16 %v466
      %v1557 = vunpack.c.l.b16 %v467
      %v1558 = vunpack.c.l.b16 %v468
      %v1559 = vunpack.c.l.b16 %v469
      %v1560 = vunpack.c.l.b16 %v470
      %v1561 = vunpack.c.l.b16 %v471
      %v1562 = vunpack.c.l.b16 %v472
      %v1563 = vunpack.c.l.b16 %v473
      %v1564 = vunpack.c.l.b16 %v474
      %v1565 = vunpack.c.l.b16 %v475
      %v1566 = vunpack.c.l.b16 %v476
      %v1567 = vunpack.c.l.b16 %v477
      %v1568 = vunpack.c.l.b16 %v478
      %v1569 = vunpack.c.l.b16 %v479
      %v1570 = vunpack.c.l.b16 %v480
      %v1571 = vunpack.c.l.b16 %v481
      %v1572 = vunpack.c.l.b16 %v482
      %v1573 = vunpack.c.l.b16 %v483
      %v1574 = vunpack.c.l.b16 %v484
      %v1575 = vunpack.c.l.b16 %v485
      %v1576 = vunpack.c.l.b16 %v486
      %v1577 = vunpack.c.l.b16 %v487
      %v1578 = vunpack.c.l.b16 %v488
      %v1579 = vunpack.c.l.b16 %v489
      %v1580 = vpack.c.b16 %v1549, %v1548
      %v1581 = vpack.c.b16 %v1551, %v1550
      %v1582 = vpack.c.b16 %v1553, %v1552
      %v1583 = vpack.c.b16 %v1555, %v1554
      %v1584 = vpack.c.b16 %v1557, %v1556
      %v1585 = vpack.c.b16 %v1559, %v1558
      %v1586 = vpack.c.b16 %v1561, %v1560
      %v1587 = vpack.c.b16 %v1563, %v1562
      %v1588 = vpack.c.b16 %v1565, %v1564
      %v1589 = vpack.c.b16 %v1567, %v1566
      %v1590 = vpack.c.b16 %v1569, %v1568
      %v1591 = vpack.c.b16 %v1571, %v1570
      %v1592 = vpack.c.b16 %v1573, %v1572
      %v1593 = vpack.c.b16 %v1575, %v1574
      %v1594 = vpack.c.b16 %v1577, %v1576
      %v1595 = vpack.c.b16 %v1579, %v1578
      %1596 = vrot.lane.b32.xlu0 %v1580, 48
      %v1597 = vpop.permute.xlu0 %1596
      %1598 = vrot.lane.b32.xlu0 %v1581, 48
      %v1599 = vpop.permute.xlu0 %1598
      %1600 = vrot.lane.b32.xlu0 %v1582, 48
      %v1601 = vpop.permute.xlu0 %1600
      %1602 = vrot.lane.b32.xlu0 %v1583, 48
      %v1603 = vpop.permute.xlu0 %1602
      %1604 = vrot.lane.b32.xlu0 %v1584, 48
      %v1605 = vpop.permute.xlu0 %1604
      %1606 = vrot.lane.b32.xlu0 %v1585, 48
      %v1607 = vpop.permute.xlu0 %1606
      %1608 = vrot.lane.b32.xlu0 %v1586, 48
      %v1609 = vpop.permute.xlu0 %1608
      %1610 = vrot.lane.b32.xlu0 %v1587, 48
      %v1611 = vpop.permute.xlu0 %1610
      %1612 = vrot.lane.b32.xlu0 %v1588, 48
      %v1613 = vpop.permute.xlu0 %1612
      %1614 = vrot.lane.b32.xlu0 %v1589, 48
      %v1615 = vpop.permute.xlu0 %1614
      %1616 = vrot.lane.b32.xlu0 %v1590, 48
      %v1617 = vpop.permute.xlu0 %1616
      %1618 = vrot.lane.b32.xlu0 %v1591, 48
      %v1619 = vpop.permute.xlu0 %1618
      %1620 = vrot.lane.b32.xlu0 %v1592, 48
      %v1621 = vpop.permute.xlu0 %1620
      %1622 = vrot.lane.b32.xlu0 %v1593, 48
      %v1623 = vpop.permute.xlu0 %1622
      %1624 = vrot.lane.b32.xlu0 %v1594, 48
      %v1625 = vpop.permute.xlu0 %1624
      %1626 = vrot.lane.b32.xlu0 %v1595, 48
      %v1627 = vpop.permute.xlu0 %1626
      %v1644 = vunpack.c.l.b16 %v490
      %v1645 = vunpack.c.l.b16 %v491
      %v1646 = vunpack.c.l.b16 %v492
      %v1647 = vunpack.c.l.b16 %v493
      %v1648 = vunpack.c.l.b16 %v494
      %v1649 = vunpack.c.l.b16 %v495
      %v1650 = vunpack.c.l.b16 %v496
      %v1651 = vunpack.c.l.b16 %v497
      %v1652 = vunpack.c.l.b16 %v498
      %v1653 = vunpack.c.l.b16 %v499
      %v1654 = vunpack.c.l.b16 %v500
      %v1655 = vunpack.c.l.b16 %v501
      %v1656 = vunpack.c.l.b16 %v502
      %v1657 = vunpack.c.l.b16 %v503
      %v1658 = vunpack.c.l.b16 %v504
      %v1659 = vunpack.c.l.b16 %v505
      %v1660 = vpack.c.b16 %v1644, %v1644
      %v1661 = vpack.c.b16 %v1645, %v1645
      %v1662 = vpack.c.b16 %v1646, %v1646
      %v1663 = vpack.c.b16 %v1647, %v1647
      %v1664 = vpack.c.b16 %v1648, %v1648
      %v1665 = vpack.c.b16 %v1649, %v1649
      %v1666 = vpack.c.b16 %v1650, %v1650
      %v1667 = vpack.c.b16 %v1651, %v1651
      %v1668 = vpack.c.b16 %v1652, %v1652
      %v1669 = vpack.c.b16 %v1653, %v1653
      %v1670 = vpack.c.b16 %v1654, %v1654
      %v1671 = vpack.c.b16 %v1655, %v1655
      %v1672 = vpack.c.b16 %v1656, %v1656
      %v1673 = vpack.c.b16 %v1657, %v1657
      %v1674 = vpack.c.b16 %v1658, %v1658
      %v1675 = vpack.c.b16 %v1659, %v1659
      %v1677 = vshrl.u32 %v1580, 16
      %v1679 = vshll.u32 %v1580, 16
      %v1681 = vrot.slane %v1679, 1
      %v1682 = vor.u32 %v1677, %v1681
      %v1684 = vshll.u32 %v1660, 16
      %v1686 = vrot.slane %v1684, 1
      %v1687 = vsel %vm650, %v1682, %v1686
      %v1689 = vshrl.u32 %v1581, 16
      %v1691 = vshll.u32 %v1581, 16
      %v1693 = vrot.slane %v1691, 1
      %v1694 = vor.u32 %v1689, %v1693
      %v1696 = vshll.u32 %v1661, 16
      %v1698 = vrot.slane %v1696, 1
      %v1699 = vsel %vm650, %v1694, %v1698
      %v1701 = vshrl.u32 %v1582, 16
      %v1703 = vshll.u32 %v1582, 16
      %v1705 = vrot.slane %v1703, 1
      %v1706 = vor.u32 %v1701, %v1705
      %v1708 = vshll.u32 %v1662, 16
      %v1710 = vrot.slane %v1708, 1
      %v1711 = vsel %vm650, %v1706, %v1710
      %v1713 = vshrl.u32 %v1583, 16
      %v1715 = vshll.u32 %v1583, 16
      %v1717 = vrot.slane %v1715, 1
      %v1718 = vor.u32 %v1713, %v1717
      %v1720 = vshll.u32 %v1663, 16
      %v1722 = vrot.slane %v1720, 1
      %v1723 = vsel %vm650, %v1718, %v1722
      %v1725 = vshrl.u32 %v1584, 16
      %v1727 = vshll.u32 %v1584, 16
      %v1729 = vrot.slane %v1727, 1
      %v1730 = vor.u32 %v1725, %v1729
      %v1732 = vshll.u32 %v1664, 16
      %v1734 = vrot.slane %v1732, 1
      %v1735 = vsel %vm650, %v1730, %v1734
      %v1737 = vshrl.u32 %v1585, 16
      %v1739 = vshll.u32 %v1585, 16
      %v1741 = vrot.slane %v1739, 1
      %v1742 = vor.u32 %v1737, %v1741
      %v1744 = vshll.u32 %v1665, 16
      %v1746 = vrot.slane %v1744, 1
      %v1747 = vsel %vm650, %v1742, %v1746
      %v1749 = vshrl.u32 %v1586, 16
      %v1751 = vshll.u32 %v1586, 16
      %v1753 = vrot.slane %v1751, 1
      %v1754 = vor.u32 %v1749, %v1753
      %v1756 = vshll.u32 %v1666, 16
      %v1758 = vrot.slane %v1756, 1
      %v1759 = vsel %vm650, %v1754, %v1758
      %v1761 = vshrl.u32 %v1587, 16
      %v1763 = vshll.u32 %v1587, 16
      %v1765 = vrot.slane %v1763, 1
      %v1766 = vor.u32 %v1761, %v1765
      %v1768 = vshll.u32 %v1667, 16
      %v1770 = vrot.slane %v1768, 1
      %v1771 = vsel %vm650, %v1766, %v1770
      %v1773 = vshrl.u32 %v1588, 16
      %v1775 = vshll.u32 %v1588, 16
      %v1777 = vrot.slane %v1775, 1
      %v1778 = vor.u32 %v1773, %v1777
      %v1780 = vshll.u32 %v1668, 16
      %v1782 = vrot.slane %v1780, 1
      %v1783 = vsel %vm650, %v1778, %v1782
      %v1785 = vshrl.u32 %v1589, 16
      %v1787 = vshll.u32 %v1589, 16
      %v1789 = vrot.slane %v1787, 1
      %v1790 = vor.u32 %v1785, %v1789
      %v1792 = vshll.u32 %v1669, 16
      %v1794 = vrot.slane %v1792, 1
      %v1795 = vsel %vm650, %v1790, %v1794
      %v1797 = vshrl.u32 %v1590, 16
      %v1799 = vshll.u32 %v1590, 16
      %v1801 = vrot.slane %v1799, 1
      %v1802 = vor.u32 %v1797, %v1801
      %v1804 = vshll.u32 %v1670, 16
      %v1806 = vrot.slane %v1804, 1
      %v1807 = vsel %vm650, %v1802, %v1806
      %v1809 = vshrl.u32 %v1591, 16
      %v1811 = vshll.u32 %v1591, 16
      %v1813 = vrot.slane %v1811, 1
      %v1814 = vor.u32 %v1809, %v1813
      %v1816 = vshll.u32 %v1671, 16
      %v1818 = vrot.slane %v1816, 1
      %v1819 = vsel %vm650, %v1814, %v1818
      %v1821 = vshrl.u32 %v1592, 16
      %v1823 = vshll.u32 %v1592, 16
      %v1825 = vrot.slane %v1823, 1
      %v1826 = vor.u32 %v1821, %v1825
      %v1828 = vshll.u32 %v1672, 16
      %v1830 = vrot.slane %v1828, 1
      %v1831 = vsel %vm650, %v1826, %v1830
      %v1833 = vshrl.u32 %v1593, 16
      %v1835 = vshll.u32 %v1593, 16
      %v1837 = vrot.slane %v1835, 1
      %v1838 = vor.u32 %v1833, %v1837
      %v1840 = vshll.u32 %v1673, 16
      %v1842 = vrot.slane %v1840, 1
      %v1843 = vsel %vm650, %v1838, %v1842
      %v1845 = vshrl.u32 %v1594, 16
      %v1847 = vshll.u32 %v1594, 16
      %v1849 = vrot.slane %v1847, 1
      %v1850 = vor.u32 %v1845, %v1849
      %v1852 = vshll.u32 %v1674, 16
      %v1854 = vrot.slane %v1852, 1
      %v1855 = vsel %vm650, %v1850, %v1854
      %v1857 = vshrl.u32 %v1595, 16
      %v1859 = vshll.u32 %v1595, 16
      %v1861 = vrot.slane %v1859, 1
      %v1862 = vor.u32 %v1857, %v1861
      %v1864 = vshll.u32 %v1675, 16
      %v1866 = vrot.slane %v1864, 1
      %v1867 = vsel %vm650, %v1862, %v1866
      %1868 = vrot.lane.b32.xlu0 %v1687, 56
      %v1869 = vpop.permute.xlu0 %1868
      %1870 = vrot.lane.b32.xlu0 %v1699, 56
      %v1871 = vpop.permute.xlu0 %1870
      %1872 = vrot.lane.b32.xlu0 %v1711, 56
      %v1873 = vpop.permute.xlu0 %1872
      %1874 = vrot.lane.b32.xlu0 %v1723, 56
      %v1875 = vpop.permute.xlu0 %1874
      %1876 = vrot.lane.b32.xlu0 %v1735, 56
      %v1877 = vpop.permute.xlu0 %1876
      %1878 = vrot.lane.b32.xlu0 %v1747, 56
      %v1879 = vpop.permute.xlu0 %1878
      %1880 = vrot.lane.b32.xlu0 %v1759, 56
      %v1881 = vpop.permute.xlu0 %1880
      %1882 = vrot.lane.b32.xlu0 %v1771, 56
      %v1883 = vpop.permute.xlu0 %1882
      %1884 = vrot.lane.b32.xlu0 %v1783, 56
      %v1885 = vpop.permute.xlu0 %1884
      %1886 = vrot.lane.b32.xlu0 %v1795, 56
      %v1887 = vpop.permute.xlu0 %1886
      %1888 = vrot.lane.b32.xlu0 %v1807, 56
      %v1889 = vpop.permute.xlu0 %1888
      %1890 = vrot.lane.b32.xlu0 %v1819, 56
      %v1891 = vpop.permute.xlu0 %1890
      %1892 = vrot.lane.b32.xlu0 %v1831, 56
      %v1893 = vpop.permute.xlu0 %1892
      %1894 = vrot.lane.b32.xlu0 %v1843, 56
      %v1895 = vpop.permute.xlu0 %1894
      %1896 = vrot.lane.b32.xlu0 %v1855, 56
      %v1897 = vpop.permute.xlu0 %1896
      %1898 = vrot.lane.b32.xlu0 %v1867, 56
      %v1899 = vpop.permute.xlu0 %1898
      %v1916 = vunpack.c.l.b16 %v506
      %v1917 = vunpack.c.l.b16 %v507
      %v1918 = vunpack.c.l.b16 %v508
      %v1919 = vunpack.c.l.b16 %v509
      %v1920 = vunpack.c.l.b16 %v510
      %v1921 = vunpack.c.l.b16 %v511
      %v1922 = vunpack.c.l.b16 %v512
      %v1923 = vunpack.c.l.b16 %v513
      %v1924 = vunpack.c.l.b16 %v514
      %v1925 = vunpack.c.l.b16 %v515
      %v1926 = vunpack.c.l.b16 %v516
      %v1927 = vunpack.c.l.b16 %v517
      %v1928 = vunpack.c.l.b16 %v518
      %v1929 = vunpack.c.l.b16 %v519
      %v1930 = vunpack.c.l.b16 %v520
      %v1931 = vunpack.c.l.b16 %v521
      %v1932 = vpack.c.b16 %v1549, %v1916
      %v1933 = vpack.c.b16 %v1551, %v1917
      %v1934 = vpack.c.b16 %v1553, %v1918
      %v1935 = vpack.c.b16 %v1555, %v1919
      %v1936 = vpack.c.b16 %v1557, %v1920
      %v1937 = vpack.c.b16 %v1559, %v1921
      %v1938 = vpack.c.b16 %v1561, %v1922
      %v1939 = vpack.c.b16 %v1563, %v1923
      %v1940 = vpack.c.b16 %v1565, %v1924
      %v1941 = vpack.c.b16 %v1567, %v1925
      %v1942 = vpack.c.b16 %v1569, %v1926
      %v1943 = vpack.c.b16 %v1571, %v1927
      %v1944 = vpack.c.b16 %v1573, %v1928
      %v1945 = vpack.c.b16 %v1575, %v1929
      %v1946 = vpack.c.b16 %v1577, %v1930
      %v1947 = vpack.c.b16 %v1579, %v1931
      %v1948 = vrot.slane %v1932, 1
      %v1949 = vrot.slane %v1660, 1
      %v1950 = vsel %vm923, %v1948, %v1949
      %v1951 = vrot.slane %v1933, 1
      %v1952 = vrot.slane %v1661, 1
      %v1953 = vsel %vm923, %v1951, %v1952
      %v1954 = vrot.slane %v1934, 1
      %v1955 = vrot.slane %v1662, 1
      %v1956 = vsel %vm923, %v1954, %v1955
      %v1957 = vrot.slane %v1935, 1
      %v1958 = vrot.slane %v1663, 1
      %v1959 = vsel %vm923, %v1957, %v1958
      %v1960 = vrot.slane %v1936, 1
      %v1961 = vrot.slane %v1664, 1
      %v1962 = vsel %vm923, %v1960, %v1961
      %v1963 = vrot.slane %v1937, 1
      %v1964 = vrot.slane %v1665, 1
      %v1965 = vsel %vm923, %v1963, %v1964
      %v1966 = vrot.slane %v1938, 1
      %v1967 = vrot.slane %v1666, 1
      %v1968 = vsel %vm923, %v1966, %v1967
      %v1969 = vrot.slane %v1939, 1
      %v1970 = vrot.slane %v1667, 1
      %v1971 = vsel %vm923, %v1969, %v1970
      %v1972 = vrot.slane %v1940, 1
      %v1973 = vrot.slane %v1668, 1
      %v1974 = vsel %vm923, %v1972, %v1973
      %v1975 = vrot.slane %v1941, 1
      %v1976 = vrot.slane %v1669, 1
      %v1977 = vsel %vm923, %v1975, %v1976
      %v1978 = vrot.slane %v1942, 1
      %v1979 = vrot.slane %v1670, 1
      %v1980 = vsel %vm923, %v1978, %v1979
      %v1981 = vrot.slane %v1943, 1
      %v1982 = vrot.slane %v1671, 1
      %v1983 = vsel %vm923, %v1981, %v1982
      %v1984 = vrot.slane %v1944, 1
      %v1985 = vrot.slane %v1672, 1
      %v1986 = vsel %vm923, %v1984, %v1985
      %v1987 = vrot.slane %v1945, 1
      %v1988 = vrot.slane %v1673, 1
      %v1989 = vsel %vm923, %v1987, %v1988
      %v1990 = vrot.slane %v1946, 1
      %v1991 = vrot.slane %v1674, 1
      %v1992 = vsel %vm923, %v1990, %v1991
      %v1993 = vrot.slane %v1947, 1
      %v1994 = vrot.slane %v1675, 1
      %v1995 = vsel %vm923, %v1993, %v1994
      %1996 = vrot.lane.b32.xlu0 %v1950, 64
      %v1997 = vpop.permute.xlu0 %1996
      %1998 = vrot.lane.b32.xlu0 %v1953, 64
      %v1999 = vpop.permute.xlu0 %1998
      %2000 = vrot.lane.b32.xlu0 %v1956, 64
      %v2001 = vpop.permute.xlu0 %2000
      %2002 = vrot.lane.b32.xlu0 %v1959, 64
      %v2003 = vpop.permute.xlu0 %2002
      %2004 = vrot.lane.b32.xlu0 %v1962, 64
      %v2005 = vpop.permute.xlu0 %2004
      %2006 = vrot.lane.b32.xlu0 %v1965, 64
      %v2007 = vpop.permute.xlu0 %2006
      %2008 = vrot.lane.b32.xlu0 %v1968, 64
      %v2009 = vpop.permute.xlu0 %2008
      %2010 = vrot.lane.b32.xlu0 %v1971, 64
      %v2011 = vpop.permute.xlu0 %2010
      %2012 = vrot.lane.b32.xlu0 %v1974, 64
      %v2013 = vpop.permute.xlu0 %2012
      %2014 = vrot.lane.b32.xlu0 %v1977, 64
      %v2015 = vpop.permute.xlu0 %2014
      %2016 = vrot.lane.b32.xlu0 %v1980, 64
      %v2017 = vpop.permute.xlu0 %2016
      %2018 = vrot.lane.b32.xlu0 %v1983, 64
      %v2019 = vpop.permute.xlu0 %2018
      %2020 = vrot.lane.b32.xlu0 %v1986, 64
      %v2021 = vpop.permute.xlu0 %2020
      %2022 = vrot.lane.b32.xlu0 %v1989, 64
      %v2023 = vpop.permute.xlu0 %2022
      %2024 = vrot.lane.b32.xlu0 %v1992, 64
      %v2025 = vpop.permute.xlu0 %2024
      %2026 = vrot.lane.b32.xlu0 %v1995, 64
      %v2027 = vpop.permute.xlu0 %2026
      %vm2028 = vcmask 64512
      %v2030 = vsel %vm2028, %v586, %v844
      %v2032 = vsel %vm2028, %v587, %v846
      %v2034 = vsel %vm2028, %v588, %v848
      %v2036 = vsel %vm2028, %v589, %v850
      %v2038 = vsel %vm2028, %v590, %v852
      %v2040 = vsel %vm2028, %v591, %v854
      %v2042 = vsel %vm2028, %v592, %v856
      %v2044 = vsel %vm2028, %v593, %v858
      %v2046 = vsel %vm2028, %v594, %v860
      %v2048 = vsel %vm2028, %v595, %v862
      %v2050 = vsel %vm2028, %v596, %v864
      %v2052 = vsel %vm2028, %v597, %v866
      %v2054 = vsel %vm2028, %v598, %v868
      %v2056 = vsel %vm2028, %v599, %v870
      %v2058 = vsel %vm2028, %v600, %v872
      %v2060 = vsel %vm2028, %v601, %v874
      %vm2061 = vcmask 130048
      %v2063 = vsel %vm2061, %v2030, %v973
      %v2065 = vsel %vm2061, %v2032, %v975
      %v2067 = vsel %vm2061, %v2034, %v977
      %v2069 = vsel %vm2061, %v2036, %v979
      %v2071 = vsel %vm2061, %v2038, %v981
      %v2073 = vsel %vm2061, %v2040, %v983
      %v2075 = vsel %vm2061, %v2042, %v985
      %v2077 = vsel %vm2061, %v2044, %v987
      %v2079 = vsel %vm2061, %v2046, %v989
      %v2081 = vsel %vm2061, %v2048, %v991
      %v2083 = vsel %vm2061, %v2050, %v993
      %v2085 = vsel %vm2061, %v2052, %v995
      %v2087 = vsel %vm2061, %v2054, %v997
      %v2089 = vsel %vm2061, %v2056, %v999
      %v2091 = vsel %vm2061, %v2058, %v1001
      %v2093 = vsel %vm2061, %v2060, %v1003
      %vm2094 = vcmask 195584
      %v2096 = vsel %vm2094, %v2063, %v1085
      %v2098 = vsel %vm2094, %v2065, %v1087
      %v2100 = vsel %vm2094, %v2067, %v1089
      %v2102 = vsel %vm2094, %v2069, %v1091
      %v2104 = vsel %vm2094, %v2071, %v1093
      %v2106 = vsel %vm2094, %v2073, %v1095
      %v2108 = vsel %vm2094, %v2075, %v1097
      %v2110 = vsel %vm2094, %v2077, %v1099
      %v2112 = vsel %vm2094, %v2079, %v1101
      %v2114 = vsel %vm2094, %v2081, %v1103
      %v2116 = vsel %vm2094, %v2083, %v1105
      %v2118 = vsel %vm2094, %v2085, %v1107
      %v2120 = vsel %vm2094, %v2087, %v1109
      %v2122 = vsel %vm2094, %v2089, %v1111
      %v2124 = vsel %vm2094, %v2091, %v1113
      %v2126 = vsel %vm2094, %v2093, %v1115
      %vm2127 = vcmask 261120
      %v2129 = vsel %vm2127, %v2096, %v1357
      %v2131 = vsel %vm2127, %v2098, %v1359
      %v2133 = vsel %vm2127, %v2100, %v1361
      %v2135 = vsel %vm2127, %v2102, %v1363
      %v2137 = vsel %vm2127, %v2104, %v1365
      %v2139 = vsel %vm2127, %v2106, %v1367
      %v2141 = vsel %vm2127, %v2108, %v1369
      %v2143 = vsel %vm2127, %v2110, %v1371
      %v2145 = vsel %vm2127, %v2112, %v1373
      %v2147 = vsel %vm2127, %v2114, %v1375
      %v2149 = vsel %vm2127, %v2116, %v1377
      %v2151 = vsel %vm2127, %v2118, %v1379
      %v2153 = vsel %vm2127, %v2120, %v1381
      %v2155 = vsel %vm2127, %v2122, %v1383
      %v2157 = vsel %vm2127, %v2124, %v1385
      %v2159 = vsel %vm2127, %v2126, %v1387
      %vm2160 = vcmask 326656
      %v2162 = vsel %vm2160, %v2129, %v1485
      %v2164 = vsel %vm2160, %v2131, %v1487
      %v2166 = vsel %vm2160, %v2133, %v1489
      %v2168 = vsel %vm2160, %v2135, %v1491
      %v2170 = vsel %vm2160, %v2137, %v1493
      %v2172 = vsel %vm2160, %v2139, %v1495
      %v2174 = vsel %vm2160, %v2141, %v1497
      %v2176 = vsel %vm2160, %v2143, %v1499
      %v2178 = vsel %vm2160, %v2145, %v1501
      %v2180 = vsel %vm2160, %v2147, %v1503
      %v2182 = vsel %vm2160, %v2149, %v1505
      %v2184 = vsel %vm2160, %v2151, %v1507
      %v2186 = vsel %vm2160, %v2153, %v1509
      %v2188 = vsel %vm2160, %v2155, %v1511
      %v2190 = vsel %vm2160, %v2157, %v1513
      %v2192 = vsel %vm2160, %v2159, %v1515
      %vm2193 = vcmask 392192
      %v2195 = vsel %vm2193, %v2162, %v1597
      %v2197 = vsel %vm2193, %v2164, %v1599
      %v2199 = vsel %vm2193, %v2166, %v1601
      %v2201 = vsel %vm2193, %v2168, %v1603
      %v2203 = vsel %vm2193, %v2170, %v1605
      %v2205 = vsel %vm2193, %v2172, %v1607
      %v2207 = vsel %vm2193, %v2174, %v1609
      %v2209 = vsel %vm2193, %v2176, %v1611
      %v2211 = vsel %vm2193, %v2178, %v1613
      %v2213 = vsel %vm2193, %v2180, %v1615
      %v2215 = vsel %vm2193, %v2182, %v1617
      %v2217 = vsel %vm2193, %v2184, %v1619
      %v2219 = vsel %vm2193, %v2186, %v1621
      %v2221 = vsel %vm2193, %v2188, %v1623
      %v2223 = vsel %vm2193, %v2190, %v1625
      %v2225 = vsel %vm2193, %v2192, %v1627
      %vm2226 = vcmask 457728
      %v2228 = vsel %vm2226, %v2195, %v1869
      %v2230 = vsel %vm2226, %v2197, %v1871
      %v2232 = vsel %vm2226, %v2199, %v1873
      %v2234 = vsel %vm2226, %v2201, %v1875
      %v2236 = vsel %vm2226, %v2203, %v1877
      %v2238 = vsel %vm2226, %v2205, %v1879
      %v2240 = vsel %vm2226, %v2207, %v1881
      %v2242 = vsel %vm2226, %v2209, %v1883
      %v2244 = vsel %vm2226, %v2211, %v1885
      %v2246 = vsel %vm2226, %v2213, %v1887
      %v2248 = vsel %vm2226, %v2215, %v1889
      %v2250 = vsel %vm2226, %v2217, %v1891
      %v2252 = vsel %vm2226, %v2219, %v1893
      %v2254 = vsel %vm2226, %v2221, %v1895
      %v2256 = vsel %vm2226, %v2223, %v1897
      %v2258 = vsel %vm2226, %v2225, %v1899
      %vm2259 = vcmask 523264
      %v2261 = vsel %vm2259, %v2228, %v1997
      %v2263 = vsel %vm2259, %v2230, %v1999
      %v2265 = vsel %vm2259, %v2232, %v2001
      %v2267 = vsel %vm2259, %v2234, %v2003
      %v2269 = vsel %vm2259, %v2236, %v2005
      %v2271 = vsel %vm2259, %v2238, %v2007
      %v2273 = vsel %vm2259, %v2240, %v2009
      %v2275 = vsel %vm2259, %v2242, %v2011
      %v2277 = vsel %vm2259, %v2244, %v2013
      %v2279 = vsel %vm2259, %v2246, %v2015
      %v2281 = vsel %vm2259, %v2248, %v2017
      %v2283 = vsel %vm2259, %v2250, %v2019
      %v2285 = vsel %vm2259, %v2252, %v2021
      %v2287 = vsel %vm2259, %v2254, %v2023
      %v2289 = vsel %vm2259, %v2256, %v2025
      %v2291 = vsel %vm2259, %v2258, %v2027
      %v2292 = vld [vmem:[%s1] sm:$0xf]
      %v2293 = vld [vmem:[%s1 + $0x4] sm:$0xf]
      %v2294 = vld [vmem:[%s1 + $0x8] sm:$0xf]
      %v2295 = vld [vmem:[%s1 + $0xc] sm:$0xf]
      %v2296 = vld [vmem:[%s1 + $0x10] sm:$0xf]
      %v2297 = vld [vmem:[%s1 + $0x14] sm:$0xf]
      %v2298 = vld [vmem:[%s1 + $0x18] sm:$0xf]
      %v2299 = vld [vmem:[%s1 + $0x1c] sm:$0xf]
      %v2300 = vld [vmem:[%s1 + $0x20] sm:$0xf]
      %v2310 = vunpack.c.l.b16 %v2292
      %v2311 = vunpack.c.l.b16 %v2293
      %v2312 = vunpack.c.l.b16 %v2294
      %v2313 = vunpack.c.l.b16 %v2295
      %v2314 = vunpack.c.l.b16 %v2296
      %v2315 = vunpack.c.l.b16 %v2297
      %v2316 = vunpack.c.l.b16 %v2298
      %v2317 = vunpack.c.l.b16 %v2299
      %v2318 = vunpack.c.l.b16 %v2300
      %v2319 = vpack.c.b16 %v2311, %v2310
      %v2320 = vpack.c.b16 %v2313, %v2312
      %v2321 = vpack.c.b16 %v2315, %v2314
      %v2322 = vpack.c.b16 %v2317, %v2316
      %v2323 = vpack.c.b16 %v2318, %v2318
      %vm2328 = vcmask 588800
      %v2329 = vsel %vm2328, %v2261, 0
      %v2331 = vsel %vm2328, %v2263, 0
      %v2333 = vsel %vm2328, %v2265, 0
      %v2335 = vsel %vm2328, %v2267, 0
      %v2337 = vsel %vm2328, %v2269, 0
      %v2339 = vsel %vm2328, %v2271, 0
      %v2341 = vsel %vm2328, %v2273, 0
      %v2343 = vsel %vm2328, %v2275, 0
      %v2345 = vsel %vm2328, %v2277, 0
      %v2347 = vsel %vm2328, %v2279, 0
      %v2349 = vsel %vm2328, %v2281, 0
      %v2351 = vsel %vm2328, %v2283, 0
      %v2353 = vsel %vm2328, %v2285, 0
      %v2355 = vsel %vm2328, %v2287, 0
      %v2357 = vsel %vm2328, %v2289, 0
      %v2359 = vsel %vm2328, %v2291, 0
      %vm2361 = vcmask 1043456
      %v2363 = vsel %vm2361, %v2323, 0
      %2365 = vmatprep.subr.bf16.mxu0 0
      %2366 = vmatpush1.bf16.msra.mxu0 0
      %2367 = vmatprep.subr.bf16.mxu0 0
      %2368 = vmatpush1.bf16.msra.mxu0 0
      %2369 = vmatprep.subr.bf16.mxu0 0
      %2370 = vmatpush1.bf16.msra.mxu0 0
      %2371 = vmatprep.subr.bf16.mxu0 0
      %2372 = vmatpush1.bf16.msra.mxu0 %v2363
      %2373 = vmatprep.subr.bf16.mxu0 0
      %2374 = vmatpush1.bf16.msra.mxu0 %v2322
      %2375 = vmatprep.subr.bf16.mxu0 0
      %2376 = vmatpush1.bf16.msra.mxu0 %v2321
      %2377 = vmatprep.subr.bf16.mxu0 0
      %2378 = vmatpush1.bf16.msra.mxu0 %v2320
      %2379 = vmatprep.subr.bf16.mxu0 0
      %2380 = vmatpush1.bf16.msra.mxu0 %v2319
      %2381 = vmatprep.subr.bf16.mxu0 0
      %2382 = vmatpush2.bf16.msra.mxu0 0
      %2383 = vmatprep.subr.bf16.mxu0 0
      %2384 = vmatpush2.bf16.msra.mxu0 0
      %2385 = vmatprep.subr.bf16.mxu0 0
      %2386 = vmatpush2.bf16.msra.mxu0 0
      %2387 = vmatprep.subr.bf16.mxu0 0
      %2388 = vmatpush2.bf16.msra.mxu0 0
      %2389 = vmatprep.subr.bf16.mxu0 0
      %2390 = vmatpush2.bf16.msra.mxu0 0
      %2391 = vmatprep.subr.bf16.mxu0 0
      %2392 = vmatpush2.bf16.msra.mxu0 0
      %2393 = vmatprep.subr.bf16.mxu0 0
      %2394 = vmatpush2.bf16.msra.mxu0 0
      %2395 = vmatprep.subr.bf16.mxu0 0
      %2396 = vmatpush2.bf16.msra.mxu0 0
      %2397 = vmatprep.mubr.bf16.mxu0 0
      %2398 = vmatmul.mubr.bf16.gmra.mxu0 %v2329
      %v2399 = vpop.f32.mrf.mxu0
      %v2400 = vadd.f32 0.0, %v2399
      %v2401 = vpop.f32.mrf.mxu0
      %v2402 = vpop.f32.mrf.mxu0
      %v2403 = vadd.f32 0.0, %v2402
      %v2404 = vpop.f32.mrf.mxu0
      %2405 = vmatprep.mubr.bf16.mxu0 0
      %2406 = vmatmul.mubr.bf16.gmra.mxu0 %v2331
      %v2407 = vpop.f32.mrf.mxu0
      %v2408 = vadd.f32 0.0, %v2407
      %v2409 = vpop.f32.mrf.mxu0
      %v2410 = vpop.f32.mrf.mxu0
      %v2411 = vadd.f32 0.0, %v2410
      %v2412 = vpop.f32.mrf.mxu0
      %2413 = vmatprep.mubr.bf16.mxu0 0
      %2414 = vmatmul.mubr.bf16.gmra.mxu0 %v2333
      %v2415 = vpop.f32.mrf.mxu0
      %v2416 = vadd.f32 0.0, %v2415
      %v2417 = vpop.f32.mrf.mxu0
      %v2418 = vpop.f32.mrf.mxu0
      %v2419 = vadd.f32 0.0, %v2418
      %v2420 = vpop.f32.mrf.mxu0
      %2421 = vmatprep.mubr.bf16.mxu0 0
      %2422 = vmatmul.mubr.bf16.gmra.mxu0 %v2335
      %v2423 = vpop.f32.mrf.mxu0
      %v2424 = vadd.f32 0.0, %v2423
      %v2425 = vpop.f32.mrf.mxu0
      %v2426 = vpop.f32.mrf.mxu0
      %v2427 = vadd.f32 0.0, %v2426
      %v2428 = vpop.f32.mrf.mxu0
      %2429 = vmatprep.mubr.bf16.mxu0 0
      %2430 = vmatmul.mubr.bf16.gmra.mxu0 %v2337
      %v2431 = vpop.f32.mrf.mxu0
      %v2432 = vadd.f32 0.0, %v2431
      %v2433 = vpop.f32.mrf.mxu0
      %v2434 = vpop.f32.mrf.mxu0
      %v2435 = vadd.f32 0.0, %v2434
      %v2436 = vpop.f32.mrf.mxu0
      %2437 = vmatprep.mubr.bf16.mxu0 0
      %2438 = vmatmul.mubr.bf16.gmra.mxu0 %v2339
      %v2439 = vpop.f32.mrf.mxu0
      %v2440 = vadd.f32 0.0, %v2439
      %v2441 = vpop.f32.mrf.mxu0
      %v2442 = vpop.f32.mrf.mxu0
      %v2443 = vadd.f32 0.0, %v2442
      %v2444 = vpop.f32.mrf.mxu0
      %2445 = vmatprep.mubr.bf16.mxu0 0
      %2446 = vmatmul.mubr.bf16.gmra.mxu0 %v2341
      %v2447 = vpop.f32.mrf.mxu0
      %v2448 = vadd.f32 0.0, %v2447
      %v2449 = vpop.f32.mrf.mxu0
      %v2450 = vpop.f32.mrf.mxu0
      %v2451 = vadd.f32 0.0, %v2450
      %v2452 = vpop.f32.mrf.mxu0
      %2453 = vmatprep.mubr.bf16.mxu0 0
      %2454 = vmatmul.mubr.bf16.gmra.mxu0 %v2343
      %v2455 = vpop.f32.mrf.mxu0
      %v2456 = vadd.f32 0.0, %v2455
      %v2457 = vpop.f32.mrf.mxu0
      %v2458 = vpop.f32.mrf.mxu0
      %v2459 = vadd.f32 0.0, %v2458
      %v2460 = vpop.f32.mrf.mxu0
      %2461 = vmatprep.mubr.bf16.mxu0 0
      %2462 = vmatmul.mubr.bf16.gmra.mxu0 %v2345
      %v2463 = vpop.f32.mrf.mxu0
      %v2464 = vadd.f32 0.0, %v2463
      %v2465 = vpop.f32.mrf.mxu0
      %v2466 = vpop.f32.mrf.mxu0
      %v2467 = vadd.f32 0.0, %v2466
      %v2468 = vpop.f32.mrf.mxu0
      %2469 = vmatprep.mubr.bf16.mxu0 0
      %2470 = vmatmul.mubr.bf16.gmra.mxu0 %v2347
      %v2471 = vpop.f32.mrf.mxu0
      %v2472 = vadd.f32 0.0, %v2471
      %v2473 = vpop.f32.mrf.mxu0
      %v2474 = vpop.f32.mrf.mxu0
      %v2475 = vadd.f32 0.0, %v2474
      %v2476 = vpop.f32.mrf.mxu0
      %2477 = vmatprep.mubr.bf16.mxu0 0
      %2478 = vmatmul.mubr.bf16.gmra.mxu0 %v2349
      %v2479 = vpop.f32.mrf.mxu0
      %v2480 = vadd.f32 0.0, %v2479
      %v2481 = vpop.f32.mrf.mxu0
      %v2482 = vpop.f32.mrf.mxu0
      %v2483 = vadd.f32 0.0, %v2482
      %v2484 = vpop.f32.mrf.mxu0
      %2485 = vmatprep.mubr.bf16.mxu0 0
      %2486 = vmatmul.mubr.bf16.gmra.mxu0 %v2351
      %v2487 = vpop.f32.mrf.mxu0
      %v2488 = vadd.f32 0.0, %v2487
      %v2489 = vpop.f32.mrf.mxu0
      %v2490 = vpop.f32.mrf.mxu0
      %v2491 = vadd.f32 0.0, %v2490
      %v2492 = vpop.f32.mrf.mxu0
      %2493 = vmatprep.mubr.bf16.mxu0 0
      %2494 = vmatmul.mubr.bf16.gmra.mxu0 %v2353
      %v2495 = vpop.f32.mrf.mxu0
      %v2496 = vadd.f32 0.0, %v2495
      %v2497 = vpop.f32.mrf.mxu0
      %v2498 = vpop.f32.mrf.mxu0
      %v2499 = vadd.f32 0.0, %v2498
      %v2500 = vpop.f32.mrf.mxu0
      %2501 = vmatprep.mubr.bf16.mxu0 0
      %2502 = vmatmul.mubr.bf16.gmra.mxu0 %v2355
      %v2503 = vpop.f32.mrf.mxu0
      %v2504 = vadd.f32 0.0, %v2503
      %v2505 = vpop.f32.mrf.mxu0
      %v2506 = vpop.f32.mrf.mxu0
      %v2507 = vadd.f32 0.0, %v2506
      %v2508 = vpop.f32.mrf.mxu0
      %2509 = vmatprep.mubr.bf16.mxu0 0
      %2510 = vmatmul.mubr.bf16.gmra.mxu0 %v2357
      %v2511 = vpop.f32.mrf.mxu0
      %v2512 = vadd.f32 0.0, %v2511
      %v2513 = vpop.f32.mrf.mxu0
      %v2514 = vpop.f32.mrf.mxu0
      %v2515 = vadd.f32 0.0, %v2514
      %v2516 = vpop.f32.mrf.mxu0
      %2517 = vmatprep.mubr.bf16.mxu0 0
      %2518 = vmatmul.mubr.bf16.gmra.mxu0 %v2359
      %v2519 = vpop.f32.mrf.mxu0
      %v2520 = vadd.f32 0.0, %v2519
      %v2521 = vpop.f32.mrf.mxu0
      %v2522 = vpop.f32.mrf.mxu0
      %v2523 = vadd.f32 0.0, %v2522
      %v2524 = vpop.f32.mrf.mxu0
      %2525 = vdwg.mxu0
      %v2526 = vld [vmem:[%s2] sm:$0x1]
      %v2528 = vlaneseq
      %v2529 = vshrl.u32 %v2528, 7
      %v2530 = vsub.s32 0, %v2529
      %v2531 = vrot.slane %v2526, %v2530
      %v2533 = vmul.f32 %v2400, %v2531
      %v2534 = vmul.f32 %v2403, %v2531
      %v2535 = vmul.f32 %v2408, %v2531
      %v2536 = vmul.f32 %v2411, %v2531
      %v2537 = vmul.f32 %v2416, %v2531
      %v2538 = vmul.f32 %v2419, %v2531
      %v2539 = vmul.f32 %v2424, %v2531
      %v2540 = vmul.f32 %v2427, %v2531
      %v2541 = vmul.f32 %v2432, %v2531
      %v2542 = vmul.f32 %v2435, %v2531
      %v2543 = vmul.f32 %v2440, %v2531
      %v2544 = vmul.f32 %v2443, %v2531
      %v2545 = vmul.f32 %v2448, %v2531
      %v2546 = vmul.f32 %v2451, %v2531
      %v2547 = vmul.f32 %v2456, %v2531
      %v2548 = vmul.f32 %v2459, %v2531
      %v2549 = vmul.f32 %v2464, %v2531
      %v2550 = vmul.f32 %v2467, %v2531
      %v2551 = vmul.f32 %v2472, %v2531
      %v2552 = vmul.f32 %v2475, %v2531
      %v2553 = vmul.f32 %v2480, %v2531
      %v2554 = vmul.f32 %v2483, %v2531
      %v2555 = vmul.f32 %v2488, %v2531
      %v2556 = vmul.f32 %v2491, %v2531
      %v2557 = vmul.f32 %v2496, %v2531
      %v2558 = vmul.f32 %v2499, %v2531
      %v2559 = vmul.f32 %v2504, %v2531
      %v2560 = vmul.f32 %v2507, %v2531
      %v2561 = vmul.f32 %v2512, %v2531
      %v2562 = vmul.f32 %v2515, %v2531
      %v2563 = vmul.f32 %v2520, %v2531
      %v2564 = vmul.f32 %v2523, %v2531
      %v2565 = vld [vmem:[%s3] sm:$0x1]
      %v2567 = vlaneseq
      %v2568 = vshrl.u32 %v2567, 7
      %v2569 = vsub.s32 0, %v2568
      %v2570 = vrot.slane %v2565, %v2569
      %v2572 = vadd.f32 %v2533, %v2570
      %v2573 = vadd.f32 %v2534, %v2570
      %v2574 = vadd.f32 %v2535, %v2570
      %v2575 = vadd.f32 %v2536, %v2570
      %v2576 = vadd.f32 %v2537, %v2570
      %v2577 = vadd.f32 %v2538, %v2570
      %v2578 = vadd.f32 %v2539, %v2570
      %v2579 = vadd.f32 %v2540, %v2570
      %v2580 = vadd.f32 %v2541, %v2570
      %v2581 = vadd.f32 %v2542, %v2570
      %v2582 = vadd.f32 %v2543, %v2570
      %v2583 = vadd.f32 %v2544, %v2570
      %v2584 = vadd.f32 %v2545, %v2570
      %v2585 = vadd.f32 %v2546, %v2570
      %v2586 = vadd.f32 %v2547, %v2570
      %v2587 = vadd.f32 %v2548, %v2570
      %v2588 = vadd.f32 %v2549, %v2570
      %v2589 = vadd.f32 %v2550, %v2570
      %v2590 = vadd.f32 %v2551, %v2570
      %v2591 = vadd.f32 %v2552, %v2570
      %v2592 = vadd.f32 %v2553, %v2570
      %v2593 = vadd.f32 %v2554, %v2570
      %v2594 = vadd.f32 %v2555, %v2570
      %v2595 = vadd.f32 %v2556, %v2570
      %v2596 = vadd.f32 %v2557, %v2570
      %v2597 = vadd.f32 %v2558, %v2570
      %v2598 = vadd.f32 %v2559, %v2570
      %v2599 = vadd.f32 %v2560, %v2570
      %v2600 = vadd.f32 %v2561, %v2570
      %v2601 = vadd.f32 %v2562, %v2570
      %v2602 = vadd.f32 %v2563, %v2570
      %v2603 = vadd.f32 %v2564, %v2570
      %s2604 = sld [smem:[#allocation2]]
      %vm2605 = vcmp.ge.f32.partialorder %v2572, 0.0
      %vm2606 = vcmp.ge.f32.partialorder %v2573, 0.0
      %vm2607 = vcmp.ge.f32.partialorder %v2574, 0.0
      %vm2608 = vcmp.ge.f32.partialorder %v2575, 0.0
      %vm2609 = vcmp.ge.f32.partialorder %v2576, 0.0
      %vm2610 = vcmp.ge.f32.partialorder %v2577, 0.0
      %vm2611 = vcmp.ge.f32.partialorder %v2578, 0.0
      %vm2612 = vcmp.ge.f32.partialorder %v2579, 0.0
      %vm2613 = vcmp.ge.f32.partialorder %v2580, 0.0
      %vm2614 = vcmp.ge.f32.partialorder %v2581, 0.0
      %vm2615 = vcmp.ge.f32.partialorder %v2582, 0.0
      %vm2616 = vcmp.ge.f32.partialorder %v2583, 0.0
      %vm2617 = vcmp.ge.f32.partialorder %v2584, 0.0
      %vm2618 = vcmp.ge.f32.partialorder %v2585, 0.0
      %vm2619 = vcmp.ge.f32.partialorder %v2586, 0.0
      %vm2620 = vcmp.ge.f32.partialorder %v2587, 0.0
      %vm2621 = vcmp.ge.f32.partialorder %v2588, 0.0
      %vm2622 = vcmp.ge.f32.partialorder %v2589, 0.0
      %vm2623 = vcmp.ge.f32.partialorder %v2590, 0.0
      %vm2624 = vcmp.ge.f32.partialorder %v2591, 0.0
      %vm2625 = vcmp.ge.f32.partialorder %v2592, 0.0
      %vm2626 = vcmp.ge.f32.partialorder %v2593, 0.0
      %vm2627 = vcmp.ge.f32.partialorder %v2594, 0.0
      %vm2628 = vcmp.ge.f32.partialorder %v2595, 0.0
      %vm2629 = vcmp.ge.f32.partialorder %v2596, 0.0
      %vm2630 = vcmp.ge.f32.partialorder %v2597, 0.0
      %vm2631 = vcmp.ge.f32.partialorder %v2598, 0.0
      %vm2632 = vcmp.ge.f32.partialorder %v2599, 0.0
      %vm2633 = vcmp.ge.f32.partialorder %v2600, 0.0
      %vm2634 = vcmp.ge.f32.partialorder %v2601, 0.0
      %vm2635 = vcmp.ge.f32.partialorder %v2602, 0.0
      %vm2636 = vcmp.ge.f32.partialorder %v2603, 0.0
      %v2637 = vstv %s2604
      %v2638 = vmul.f32 %v2637, %v2572
      %v2639 = vmul.f32 %v2637, %v2573
      %v2640 = vmul.f32 %v2637, %v2574
      %v2641 = vmul.f32 %v2637, %v2575
      %v2642 = vmul.f32 %v2637, %v2576
      %v2643 = vmul.f32 %v2637, %v2577
      %v2644 = vmul.f32 %v2637, %v2578
      %v2645 = vmul.f32 %v2637, %v2579
      %v2646 = vmul.f32 %v2637, %v2580
      %v2647 = vmul.f32 %v2637, %v2581
      %v2648 = vmul.f32 %v2637, %v2582
      %v2649 = vmul.f32 %v2637, %v2583
      %v2650 = vmul.f32 %v2637, %v2584
      %v2651 = vmul.f32 %v2637, %v2585
      %v2652 = vmul.f32 %v2637, %v2586
      %v2653 = vmul.f32 %v2637, %v2587
      %v2654 = vmul.f32 %v2637, %v2588
      %v2655 = vmul.f32 %v2637, %v2589
      %v2656 = vmul.f32 %v2637, %v2590
      %v2657 = vmul.f32 %v2637, %v2591
      %v2658 = vmul.f32 %v2637, %v2592
      %v2659 = vmul.f32 %v2637, %v2593
      %v2660 = vmul.f32 %v2637, %v2594
      %v2661 = vmul.f32 %v2637, %v2595
      %v2662 = vmul.f32 %v2637, %v2596
      %v2663 = vmul.f32 %v2637, %v2597
      %v2664 = vmul.f32 %v2637, %v2598
      %v2665 = vmul.f32 %v2637, %v2599
      %v2666 = vmul.f32 %v2637, %v2600
      %v2667 = vmul.f32 %v2637, %v2601
      %v2668 = vmul.f32 %v2637, %v2602
      %v2669 = vmul.f32 %v2637, %v2603
      %v2670 = vsel %vm2605, %v2572, %v2638
      %v2671 = vsel %vm2606, %v2573, %v2639
      %v2672 = vsel %vm2607, %v2574, %v2640
      %v2673 = vsel %vm2608, %v2575, %v2641
      %v2674 = vsel %vm2609, %v2576, %v2642
      %v2675 = vsel %vm2610, %v2577, %v2643
      %v2676 = vsel %vm2611, %v2578, %v2644
      %v2677 = vsel %vm2612, %v2579, %v2645
      %v2678 = vsel %vm2613, %v2580, %v2646
      %v2679 = vsel %vm2614, %v2581, %v2647
      %v2680 = vsel %vm2615, %v2582, %v2648
      %v2681 = vsel %vm2616, %v2583, %v2649
      %v2682 = vsel %vm2617, %v2584, %v2650
      %v2683 = vsel %vm2618, %v2585, %v2651
      %v2684 = vsel %vm2619, %v2586, %v2652
      %v2685 = vsel %vm2620, %v2587, %v2653
      %v2686 = vsel %vm2621, %v2588, %v2654
      %v2687 = vsel %vm2622, %v2589, %v2655
      %v2688 = vsel %vm2623, %v2590, %v2656
      %v2689 = vsel %vm2624, %v2591, %v2657
      %v2690 = vsel %vm2625, %v2592, %v2658
      %v2691 = vsel %vm2626, %v2593, %v2659
      %v2692 = vsel %vm2627, %v2594, %v2660
      %v2693 = vsel %vm2628, %v2595, %v2661
      %v2694 = vsel %vm2629, %v2596, %v2662
      %v2695 = vsel %vm2630, %v2597, %v2663
      %v2696 = vsel %vm2631, %v2598, %v2664
      %v2697 = vsel %vm2632, %v2599, %v2665
      %v2698 = vsel %vm2633, %v2600, %v2666
      %v2699 = vsel %vm2634, %v2601, %v2667
      %v2700 = vsel %vm2635, %v2602, %v2668
      %v2701 = vsel %vm2636, %v2603, %v2669
      %v2702 = vld [vmem:[%s304] sm:$0xff]
      %v2703 = vld [vmem:[%s304 + $0x8] sm:$0xff]
      %v2704 = vld [vmem:[%s304 + $0x10] sm:$0xff]
      %v2705 = vld [vmem:[%s304 + $0x18] sm:$0xff]
      %v2706 = vld [vmem:[%s304 + $0x20] sm:$0xff]
      %v2707 = vld [vmem:[%s304 + $0x28] sm:$0xff]
      %v2708 = vld [vmem:[%s304 + $0x30] sm:$0xff]
      %v2709 = vld [vmem:[%s304 + $0x38] sm:$0xff]
      %v2710 = vld [vmem:[%s304 + $0x40] sm:$0xff]
      %v2711 = vld [vmem:[%s304 + $0x48] sm:$0xff]
      %v2712 = vld [vmem:[%s304 + $0x50] sm:$0xff]
      %v2713 = vld [vmem:[%s304 + $0x58] sm:$0xff]
      %v2714 = vld [vmem:[%s304 + $0x60] sm:$0xff]
      %v2715 = vld [vmem:[%s304 + $0x68] sm:$0xff]
      %v2716 = vld [vmem:[%s304 + $0x70] sm:$0xff]
      %v2717 = vld [vmem:[%s304 + $0x78] sm:$0xff]
      %v2718 = vld [vmem:[%s304 + $0x80] sm:$0xff]
      %v2719 = vld [vmem:[%s304 + $0x88] sm:$0xff]
      %v2720 = vld [vmem:[%s304 + $0x90] sm:$0xff]
      %v2721 = vld [vmem:[%s304 + $0x98] sm:$0xff]
      %v2722 = vld [vmem:[%s304 + $0xa0] sm:$0xff]
      %v2723 = vld [vmem:[%s304 + $0xa8] sm:$0xff]
      %v2724 = vld [vmem:[%s304 + $0xb0] sm:$0xff]
      %v2725 = vld [vmem:[%s304 + $0xb8] sm:$0xff]
      %v2726 = vld [vmem:[%s304 + $0xc0] sm:$0xff]
      %v2727 = vld [vmem:[%s304 + $0xc8] sm:$0xff]
      %v2728 = vld [vmem:[%s304 + $0xd0] sm:$0xff]
      %v2729 = vld [vmem:[%s304 + $0xd8] sm:$0xff]
      %v2730 = vld [vmem:[%s304 + $0xe0] sm:$0xff]
      %v2731 = vld [vmem:[%s304 + $0xe8] sm:$0xff]
      %v2732 = vld [vmem:[%s304 + $0xf0] sm:$0xff]
      %v2733 = vld [vmem:[%s304 + $0xf8] sm:$0xff]
      %v2734 = vadd.f32 %v2670, %v2702
      %v2735 = vadd.f32 %v2671, %v2703
      %v2736 = vadd.f32 %v2672, %v2704
      %v2737 = vadd.f32 %v2673, %v2705
      %v2738 = vadd.f32 %v2674, %v2706
      %v2739 = vadd.f32 %v2675, %v2707
      %v2740 = vadd.f32 %v2676, %v2708
      %v2741 = vadd.f32 %v2677, %v2709
      %v2742 = vadd.f32 %v2678, %v2710
      %v2743 = vadd.f32 %v2679, %v2711
      %v2744 = vadd.f32 %v2680, %v2712
      %v2745 = vadd.f32 %v2681, %v2713
      %v2746 = vadd.f32 %v2682, %v2714
      %v2747 = vadd.f32 %v2683, %v2715
      %v2748 = vadd.f32 %v2684, %v2716
      %v2749 = vadd.f32 %v2685, %v2717
      %v2750 = vadd.f32 %v2686, %v2718
      %v2751 = vadd.f32 %v2687, %v2719
      %v2752 = vadd.f32 %v2688, %v2720
      %v2753 = vadd.f32 %v2689, %v2721
      %v2754 = vadd.f32 %v2690, %v2722
      %v2755 = vadd.f32 %v2691, %v2723
      %v2756 = vadd.f32 %v2692, %v2724
      %v2757 = vadd.f32 %v2693, %v2725
      %v2758 = vadd.f32 %v2694, %v2726
      %v2759 = vadd.f32 %v2695, %v2727
      %v2760 = vadd.f32 %v2696, %v2728
      %v2761 = vadd.f32 %v2697, %v2729
      %v2762 = vadd.f32 %v2698, %v2730
      %v2763 = vadd.f32 %v2699, %v2731
      %v2764 = vadd.f32 %v2700, %v2732
      %v2765 = vadd.f32 %v2701, %v2733
      %2766 = vst [vmem:[%s315] sm:$0xff] %v2734
      %2767 = vst [vmem:[%s315 + $0x8] sm:$0xff] %v2735
      %2768 = vst [vmem:[%s315 + $0x10] sm:$0xff] %v2736
      %2769 = vst [vmem:[%s315 + $0x18] sm:$0xff] %v2737
      %2770 = vst [vmem:[%s315 + $0x20] sm:$0xff] %v2738
      %2771 = vst [vmem:[%s315 + $0x28] sm:$0xff] %v2739
      %2772 = vst [vmem:[%s315 + $0x30] sm:$0xff] %v2740
      %2773 = vst [vmem:[%s315 + $0x38] sm:$0xff] %v2741
      %2774 = vst [vmem:[%s315 + $0x40] sm:$0xff] %v2742
      %2775 = vst [vmem:[%s315 + $0x48] sm:$0xff] %v2743
      %2776 = vst [vmem:[%s315 + $0x50] sm:$0xff] %v2744
      %2777 = vst [vmem:[%s315 + $0x58] sm:$0xff] %v2745
      %2778 = vst [vmem:[%s315 + $0x60] sm:$0xff] %v2746
      %2779 = vst [vmem:[%s315 + $0x68] sm:$0xff] %v2747
      %2780 = vst [vmem:[%s315 + $0x70] sm:$0xff] %v2748
      %2781 = vst [vmem:[%s315 + $0x78] sm:$0xff] %v2749
      %2782 = vst [vmem:[%s315 + $0x80] sm:$0xff] %v2750
      %2783 = vst [vmem:[%s315 + $0x88] sm:$0xff] %v2751
      %2784 = vst [vmem:[%s315 + $0x90] sm:$0xff] %v2752
      %2785 = vst [vmem:[%s315 + $0x98] sm:$0xff] %v2753
      %2786 = vst [vmem:[%s315 + $0xa0] sm:$0xff] %v2754
      %2787 = vst [vmem:[%s315 + $0xa8] sm:$0xff] %v2755
      %2788 = vst [vmem:[%s315 + $0xb0] sm:$0xff] %v2756
      %2789 = vst [vmem:[%s315 + $0xb8] sm:$0xff] %v2757
      %2790 = vst [vmem:[%s315 + $0xc0] sm:$0xff] %v2758
      %2791 = vst [vmem:[%s315 + $0xc8] sm:$0xff] %v2759
      %2792 = vst [vmem:[%s315 + $0xd0] sm:$0xff] %v2760
      %2793 = vst [vmem:[%s315 + $0xd8] sm:$0xff] %v2761
      %2794 = vst [vmem:[%s315 + $0xe0] sm:$0xff] %v2762
      %2795 = vst [vmem:[%s315 + $0xe8] sm:$0xff] %v2763
      %2796 = vst [vmem:[%s315 + $0xf0] sm:$0xff] %v2764
      %2797 = vst [vmem:[%s315 + $0xf8] sm:$0xff] %v2765
      %s2798 = smul.u32 16, %s23
      %p2799 = scmp.lt.s32.totalorder %s22, 1
      %s2800 = scalar_select %p2799, %s22, 1
      %p2801 = scmp.lt.s32.totalorder %s2798, 15
      %s2802 = scalar_select %p2801, %s2798, 15
      %s2803 = smul.addr %s2802, 2
      %s2804 = smul.addr %s2800, 32
      %s2805 = sadd.s32 %s2803, %s2804
      %s2806 = smul.addr %s2805, 8
      %s2807 = scalar_lea.vmem %s6, %s2806
      // Predicated region
      $region45: #{mcc_block_forward.15} parent=43 // pred_check
        %p2808 = pneg %p188
      $region46: #{mcc_block_forward.15} parent=43 // pred_check_branch
        %2810 = sbr.rel (%p2808) target = $region48
      $region47: #{mcc_block_forward.15} parent=43 // pred_region
        %s2811 = smul.u32 16, %s23
      $region48: #{mcc_block_forward.15} parent=43 // pred_fallthru
        _
    $region44: #{mcc_block_forward.15} parent=5 // pred_fallthru
      _
    %p2812 = scmp.le.s32.totalorder 2, %s13
    // Predicated region
    $region49: #{mcc_block_forward.15} parent=5 // pred_check
      %p2813 = pneg %p2812
    $region50: #{mcc_block_forward.15} parent=5 // pred_check_branch
      %2815 = sbr.rel (%p2813) target = $region52
    $region51: #{mcc_block_forward.15} parent=5 // pred_region
      %s2816 = ssub.s32 %s13, 2
      // Predicated region
      $region53: #{mcc_block_forward.15} parent=51 // pred_check
        %p2817 = pneg %p194
      $region54: #{mcc_block_forward.15} parent=51 // pred_check_branch
        %2819 = sbr.rel (%p2817) target = $region56
      $region55: #{mcc_block_forward.15} parent=51 // pred_region
        %s2820 = smul.u32 16, %s25
        %p2821 = scmp.lt.s32.totalorder %s24, 1
        %s2822 = scalar_select %p2821, %s24, 1
        %p2823 = scmp.lt.s32.totalorder %s2820, 15
        %s2824 = scalar_select %p2823, %s2820, 15
        %s2825 = smul.addr %s2824, 2
        %s2826 = smul.addr %s2822, 32
        %s2827 = sadd.s32 %s2825, %s2826
        %s2828 = smul.addr %s2827, 8
        %s2829 = scalar_lea.vmem %s6, %s2828
      $region56: #{mcc_block_forward.15} parent=51 // pred_fallthru
        _
    $region52: #{mcc_block_forward.15} parent=5 // pred_fallthru
      _
  $region6: #{mcc_block_forward.15} parent=0 // loop_footer
    %s17 = sadd.s32 1, %s13
  $region7: #{mcc_block_forward.15} parent=0 // loop_footer_branch
    %12 = sbr.rel target = $region3
  $region8: #{mcc_block_forward.15} parent=0 // loop_exit
    _

</llo_original>
